<compile_context>
chip_gen: v7x
topology: tpu7x:2x2x1
jax: 0.10.0
libtpu: 0.0.40
codegen_flags: <defaults>
</compile_context>

<pallas_src>
import functools

import jax
import jax.numpy as jnp
from jax.experimental import pallas as pl
from jax.experimental.pallas import tpu as pltpu

LANE = 128  # TPU vreg lane width; gate blocks / hidden dims are padded to it.


def _round_up(n, m=LANE):
    return ((n + m - 1) // m) * m


def _sigmoid_via_tanh(v):
    # sigmoid(x) == 0.5 * (1 + tanh(0.5 x)): one EUP tanh + cheap VPU ops
    # instead of exp -> add -> divide on the recurrence critical path.
    return 0.5 * (jnp.tanh(0.5 * v) + 1.0)


def _encoder_kernel(*refs, seq_len, num_layers, h_activ, out_activ):
    """Fused multi-layer LSTM encoder, batch=1, wavefront-scheduled in VMEM.

    refs = (x_ref, [wih_ref, whh_ref, b_ref] * num_layers, o_ref)
      x_ref:   (T, IP)       lane-padded input sequence (pad cols zero)
      wih_ref: (IP_l, 4*HP)  gate-concat input weights, (i, f, o, g) order,
                             each gate padded to HP lanes, pad rows/cols zero
      whh_ref: (HP, 4*HP)    gate-concat hidden weights, same layout
      b_ref:   (1, 4*HP)     gate-concat bias (b_ih + b_hh), pads zero
      o_ref:   (1, HP)       out_activ(h_n) of the last executed layer
    """
    x_ref = refs[0]
    o_ref = refs[-1]
    w_refs = refs[1:-1]
    wih_refs = [w_refs[3 * l + 0] for l in range(num_layers)]
    whh_refs = [w_refs[3 * l + 1] for l in range(num_layers)]
    b_refs = [w_refs[3 * l + 2] for l in range(num_layers)]

    hp = whh_refs[0].shape[0]
    f32 = jnp.float32

    # Biases are tiny; load once in the prologue.
    bias = [b_refs[l][...] for l in range(num_layers)]

    # Layer-0 input projection is hoisted off the recurrence: x is fully
    # available at t=0, so one (T, IP) @ (IP, 4*HP) matmul up front.
    x_proj0 = jnp.dot(x_ref[...], wih_refs[0][...],
                      preferred_element_type=f32) + bias[0]

    def lstm_cell(proj_in, h, c, w_hh):
        # proj_in already holds x_t @ W_ih + bias.
        gates = proj_in + jnp.dot(h, w_hh, preferred_element_type=f32)  # (1,4HP)
        ifo = _sigmoid_via_tanh(gates[:, :3 * hp])      # lane-aligned slices
        i_g = ifo[:, 0 * hp:1 * hp]
        f_g = ifo[:, 1 * hp:2 * hp]
        o_g = ifo[:, 2 * hp:3 * hp]
        g_g = jnp.tanh(gates[:, 3 * hp:4 * hp])
        c_new = f_g * c + i_g * g_g
        h_new = o_g * jnp.tanh(c_new)
        return h_new, c_new

    zero = jnp.zeros((1, hp), f32)
    h_st = [zero] * num_layers        # h_{l, t-1}
    c_st = [zero] * num_layers        # c_{l, t-1}
    prev_out = [zero] * num_layers    # h_{l, t} most recently emitted by layer l

    # Wavefront schedule: cell (l, t) depends only on (l, t-1) and (l-1, t), so
    # super-step s = l + t exposes up to min(L, T) independent cells and the
    # dependent chain is T + L - 1 cells instead of T*L.  Layers are visited in
    # descending order so layer l reads prev_out[l-1] (written at super-step
    # s-1) before layer l-1 overwrites it this super-step.
    for s in range(seq_len + num_layers - 1):
        for l in range(num_layers - 1, -1, -1):
            t = s - l
            if t < 0 or t >= seq_len:
                continue
            if l == 0:
                proj_in = x_proj0[t:t + 1, :]
            else:
                x_in = prev_out[l - 1]
                if h_activ == "sigmoid":              # inter-layer h_activ,
                    x_in = _sigmoid_via_tanh(x_in)    # per row, 1 cell of slack
                proj_in = jnp.dot(x_in, wih_refs[l][...],
                                  preferred_element_type=f32) + bias[l]
            h_new, c_new = lstm_cell(proj_in, h_st[l], c_st[l], whh_refs[l][...])
            h_st[l] = h_new
            c_st[l] = c_new
            prev_out[l] = h_new

    h_n = h_st[num_layers - 1]
    if out_activ == "tanh":
        h_n = jnp.tanh(h_n)
    o_ref[...] = h_n                  # lane-dense (1, HP) unmasked store


@functools.partial(jax.jit, static_argnames=("h_activ", "out_activ"))
def encoder_forward(x, layer_params, *, h_activ="sigmoid", out_activ="tanh"):
    """Whole (executed) encoder stack in a single grid-less pallas_call."""
    seq_len, in_dim = x.shape
    num_layers = len(layer_params)
    in_pad = layer_params[0][0].shape[0]      # w_ih0: (IP, 4*HP)
    hp = layer_params[0][1].shape[0]          # w_hh:  (HP, 4*HP)
    assert all(w_hh.shape[0] == hp for _, w_hh, _ in layer_params)

    # Zero-pad the raw input to the padded layer-0 input width; the matching
    # w_ih rows are zero so pad columns cannot contribute.
    x_p = jnp.zeros((seq_len, in_pad), jnp.float32).at[:, :in_dim].set(
        x.astype(jnp.float32))

    kernel = functools.partial(
        _encoder_kernel, seq_len=seq_len, num_layers=num_layers,
        h_activ=h_activ, out_activ=out_activ)
    vmem = pl.BlockSpec(memory_space=pltpu.MemorySpace.VMEM)

    flat_inputs = [x_p]
    for w_ih, w_hh, b in layer_params:
        flat_inputs += [w_ih, w_hh, b]

    return pl.pallas_call(
        kernel,
        out_shape=jax.ShapeDtypeStruct((1, hp), jnp.float32),
        in_specs=[vmem] * len(flat_inputs),
        out_specs=vmem,
    )(*flat_inputs)


def init_lstm_params(key, in_dim, hidden, *, in_pad, h_pad):
    """Synthetic init matching PyTorch U(-1/sqrt(H), 1/sqrt(H)), repacked into
    the kernel's lane-aligned layout:

        w_ih: (in_pad, 4*h_pad)   w_hh: (h_pad, 4*h_pad)   bias: (1, 4*h_pad)

    Gate order is (i, f, o, g) (PyTorch is (i, f, g, o)), each gate occupies a
    h_pad-wide lane block, bias = b_ih + b_hh, and all pad rows/cols are zero.
    The zero w_ih pad rows guarantee sigmoid(0)=0.5 pad lanes of the previous
    layer's output cannot leak into this layer.  Any import of real PyTorch
    weights must apply this exact transform.
    """
    bound = float(hidden) ** -0.5
    k0, k1, k2, k3 = jax.random.split(key, 4)
    w_ih = jax.random.uniform(k0, (4, in_dim, hidden), jnp.float32, -bound, bound)
    w_hh = jax.random.uniform(k1, (4, hidden, hidden), jnp.float32, -bound, bound)
    b = (jax.random.uniform(k2, (4, hidden), jnp.float32, -bound, bound) +
         jax.random.uniform(k3, (4, hidden), jnp.float32, -bound, bound))
    order = (0, 1, 3, 2)   # PyTorch (i, f, g, o) -> kernel (i, f, o, g)
    w_ih_p = jnp.zeros((in_pad, 4 * h_pad), jnp.float32)
    w_hh_p = jnp.zeros((h_pad, 4 * h_pad), jnp.float32)
    b_p = jnp.zeros((1, 4 * h_pad), jnp.float32)
    for j, g in enumerate(order):
        col = j * h_pad
        w_ih_p = w_ih_p.at[:in_dim, col:col + hidden].set(w_ih[g])
        w_hh_p = w_hh_p.at[:hidden, col:col + hidden].set(w_hh[g])
        b_p = b_p.at[:, col:col + hidden].set(b[g][None, :])
    return w_ih_p, w_hh_p, b_p


class Encoder:
    """Pallas port of LSTM_AE.Encoder (h_activ=Sigmoid, out_activ=Tanh)."""

    def __init__(self, input_dim, out_dim, key,
                 h_activ="sigmoid", out_activ="tanh"):
        # With out_activ set, the original forward early-returns
        # out_activ(h_n).squeeze() at index == num_layers - 1 (the
        # LSTM(input_dim, 40) layer); the trailing LSTM(40, out_dim) never
        # executes.  Only that path is implemented.
        assert out_activ, "out_activ=None path (runs LSTM(40, out_dim)) not implemented"
        self.num_layers = input_dim
        self.h_activ, self.out_activ = h_activ, out_activ
        # Executed layer sizes; the dead trailing LSTM(40, out_dim) is not built.
        # TODO(synk): the original forward also prints h_n.shape per layer (debug only).
        sizes = [(input_dim, input_dim)] * (input_dim - 1) + [(input_dim, 40)]
        self.out_hidden = sizes[-1][1]                    # 40
        h_pad = _round_up(max(h for _, h in sizes))       # uniform padded hidden
        keys = jax.random.split(key, len(sizes))
        params = []
        for idx, (k, (i, h)) in enumerate(zip(keys, sizes)):
            in_pad = _round_up(i) if idx == 0 else h_pad
            params.append(init_lstm_params(k, i, h, in_pad=in_pad, h_pad=h_pad))
        self.params = tuple(params)

    def __call__(self, x):
        # x: (T, input_dim) float32; batch=1 (the unsqueeze(0)) kept implicit.
        h_n = encoder_forward(x, self.params,
                              h_activ=self.h_activ, out_activ=self.out_activ)
        return h_n[0, :self.out_hidden]   # tanh(h_n).squeeze() -> (40,)


def _encoder_reference(x_pad, layer_params, h_activ, out_activ):
    """Plain-JAX (no Pallas) sequential reference on the packed weights."""
    hi = jax.lax.Precision.HIGHEST
    xs = x_pad
    h = None
    for l, (w_ih, w_hh, b) in enumerate(layer_params):
        hp = w_hh.shape[0]
        if l > 0 and h_activ == "sigmoid":
            xs = jax.nn.sigmoid(xs)
        h = jnp.zeros((1, hp), jnp.float32)
        c = jnp.zeros((1, hp), jnp.float32)
        rows = []
        for t in range(xs.shape[0]):
            g = (jnp.dot(xs[t:t + 1, :], w_ih, precision=hi)
                 + jnp.dot(h, w_hh, precision=hi) + b)
            i = jax.nn.sigmoid(g[:, 0 * hp:1 * hp])
            f = jax.nn.sigmoid(g[:, 1 * hp:2 * hp])
            o = jax.nn.sigmoid(g[:, 2 * hp:3 * hp])
            gg = jnp.tanh(g[:, 3 * hp:4 * hp])
            c = f * c + i * gg
            h = o * jnp.tanh(c)
            rows.append(h)
        xs = jnp.concatenate(rows, axis=0)
    if out_activ == "tanh":
        h = jnp.tanh(h)
    return h


if __name__ == "__main__":
    key = jax.random.PRNGKey(0)
    k_params, k_x = jax.random.split(key)

    input_dim, out_dim, seq_len = 4, 8, 8
    enc = Encoder(input_dim, out_dim, k_params)

    x = jax.random.normal(k_x, (seq_len, input_dim), jnp.float32)
    out = jax.block_until_ready(enc(x))

    assert out.shape == (40,), out.shape
    assert bool(jnp.all(jnp.isfinite(out)))

    # Numerical check against a plain-JAX reference of the same forward pass.
    in_pad = enc.params[0][0].shape[0]
    x_pad = jnp.zeros((seq_len, in_pad), jnp.float32).at[:, :input_dim].set(x)
    ref = _encoder_reference(x_pad, enc.params, enc.h_activ, enc.out_activ)
    ref = ref[0, :enc.out_hidden]
    max_err = float(jnp.max(jnp.abs(out - ref)))
    assert max_err < 1e-2, f"max abs error vs reference: {max_err}"

    print("KERNEL_OK")
</pallas_src>

<mosaic_0001>
module attributes {stable_mosaic.version = 11 : i64} {
  func.func @_encoder_kernel(%arg0: memref<8x128xf32, #tpu.memory_space<vmem>>, %arg1: memref<128x512xf32, #tpu.memory_space<vmem>>, %arg2: memref<128x512xf32, #tpu.memory_space<vmem>>, %arg3: memref<1x512xf32, #tpu.memory_space<vmem>>, %arg4: memref<128x512xf32, #tpu.memory_space<vmem>>, %arg5: memref<128x512xf32, #tpu.memory_space<vmem>>, %arg6: memref<1x512xf32, #tpu.memory_space<vmem>>, %arg7: memref<128x512xf32, #tpu.memory_space<vmem>>, %arg8: memref<128x512xf32, #tpu.memory_space<vmem>>, %arg9: memref<1x512xf32, #tpu.memory_space<vmem>>, %arg10: memref<128x512xf32, #tpu.memory_space<vmem>>, %arg11: memref<128x512xf32, #tpu.memory_space<vmem>>, %arg12: memref<1x512xf32, #tpu.memory_space<vmem>>, %arg13: memref<1x128xf32, #tpu.memory_space<vmem>>) attributes {dimension_semantics = [], scalar_prefetch = 0 : i64, scratch_operands = 0 : i64, tpu.core_type = #tpu.core_type<tc>} {
    %c0 = arith.constant 0 : index
    %c0_0 = arith.constant 0 : index
    %0 = vector.load %arg3[%c0, %c0_0] : memref<1x512xf32, #tpu.memory_space<vmem>>, vector<1x512xf32>
    %c0_1 = arith.constant 0 : index
    %c0_2 = arith.constant 0 : index
    %1 = vector.load %arg6[%c0_1, %c0_2] : memref<1x512xf32, #tpu.memory_space<vmem>>, vector<1x512xf32>
    %c0_3 = arith.constant 0 : index
    %c0_4 = arith.constant 0 : index
    %2 = vector.load %arg9[%c0_3, %c0_4] : memref<1x512xf32, #tpu.memory_space<vmem>>, vector<1x512xf32>
    %c0_5 = arith.constant 0 : index
    %c0_6 = arith.constant 0 : index
    %3 = vector.load %arg12[%c0_5, %c0_6] : memref<1x512xf32, #tpu.memory_space<vmem>>, vector<1x512xf32>
    %c0_7 = arith.constant 0 : index
    %c0_8 = arith.constant 0 : index
    %4 = vector.load %arg0[%c0_7, %c0_8] : memref<8x128xf32, #tpu.memory_space<vmem>>, vector<8x128xf32>
    %c0_9 = arith.constant 0 : index
    %c0_10 = arith.constant 0 : index
    %5 = vector.load %arg1[%c0_9, %c0_10] : memref<128x512xf32, #tpu.memory_space<vmem>>, vector<128x512xf32>
    %cst = arith.constant dense<0.000000e+00> : vector<8x512xf32>
    %6 = tpu.matmul %4, %5, %cst {dimension_numbers = #tpu.dot_dimension_numbers<[1], [0], [0], [1], [0, 0, 1, 1], [], []>} : vector<8x128xf32>, vector<128x512xf32>, vector<8x512xf32> -> vector<8x512xf32>
    %7 = vector.broadcast %0 : vector<1x512xf32> to vector<8x512xf32>
    %8 = arith.addf %6, %7 : vector<8x512xf32>
    %cst_11 = arith.constant 0.000000e+00 : f32
    %9 = vector.broadcast %cst_11 : f32 to vector<1x128xf32>
    %10 = vector.extract_strided_slice %8 {offsets = [0, 0], sizes = [1, 512], strides = [1, 1]} : vector<8x512xf32> to vector<1x512xf32>
    %c0_12 = arith.constant 0 : index
    %c0_13 = arith.constant 0 : index
    %11 = vector.load %arg2[%c0_12, %c0_13] : memref<128x512xf32, #tpu.memory_space<vmem>>, vector<128x512xf32>
    %cst_14 = arith.constant dense<0.000000e+00> : vector<1x512xf32>
    %12 = tpu.matmul %9, %11, %cst_14 {dimension_numbers = #tpu.dot_dimension_numbers<[1], [0], [0], [1], [0, 0, 1, 1], [], []>} : vector<1x128xf32>, vector<128x512xf32>, vector<1x512xf32> -> vector<1x512xf32>
    %13 = arith.addf %10, %12 : vector<1x512xf32>
    %14 = vector.extract_strided_slice %13 {offsets = [0, 0], sizes = [1, 384], strides = [1, 1]} : vector<1x512xf32> to vector<1x384xf32>
    %cst_15 = arith.constant 5.000000e-01 : f32
    %15 = vector.broadcast %cst_15 : f32 to vector<1x384xf32>
    %16 = arith.mulf %15, %14 : vector<1x384xf32>
    %17 = math.tanh %16 : vector<1x384xf32>
    %cst_16 = arith.constant 1.000000e+00 : f32
    %18 = vector.broadcast %cst_16 : f32 to vector<1x384xf32>
    %19 = arith.addf %17, %18 : vector<1x384xf32>
    %cst_17 = arith.constant 5.000000e-01 : f32
    %20 = vector.broadcast %cst_17 : f32 to vector<1x384xf32>
    %21 = arith.mulf %20, %19 : vector<1x384xf32>
    %22 = vector.extract_strided_slice %21 {offsets = [0, 0], sizes = [1, 128], strides = [1, 1]} : vector<1x384xf32> to vector<1x128xf32>
    %23 = vector.extract_strided_slice %21 {offsets = [0, 128], sizes = [1, 128], strides = [1, 1]} : vector<1x384xf32> to vector<1x128xf32>
    %24 = vector.extract_strided_slice %21 {offsets = [0, 256], sizes = [1, 128], strides = [1, 1]} : vector<1x384xf32> to vector<1x128xf32>
    %25 = vector.extract_strided_slice %13 {offsets = [0, 384], sizes = [1, 128], strides = [1, 1]} : vector<1x512xf32> to vector<1x128xf32>
    %26 = math.tanh %25 : vector<1x128xf32>
    %27 = arith.mulf %23, %9 : vector<1x128xf32>
    %28 = arith.mulf %22, %26 : vector<1x128xf32>
    %29 = arith.addf %27, %28 : vector<1x128xf32>
    %30 = math.tanh %29 : vector<1x128xf32>
    %31 = arith.mulf %24, %30 : vector<1x128xf32>
    %cst_18 = arith.constant 5.000000e-01 : f32
    %32 = vector.broadcast %cst_18 : f32 to vector<1x128xf32>
    %33 = arith.mulf %32, %31 : vector<1x128xf32>
    %34 = math.tanh %33 : vector<1x128xf32>
    %cst_19 = arith.constant 1.000000e+00 : f32
    %35 = vector.broadcast %cst_19 : f32 to vector<1x128xf32>
    %36 = arith.addf %34, %35 : vector<1x128xf32>
    %cst_20 = arith.constant 5.000000e-01 : f32
    %37 = vector.broadcast %cst_20 : f32 to vector<1x128xf32>
    %38 = arith.mulf %37, %36 : vector<1x128xf32>
    %c0_21 = arith.constant 0 : index
    %c0_22 = arith.constant 0 : index
    %39 = vector.load %arg4[%c0_21, %c0_22] : memref<128x512xf32, #tpu.memory_space<vmem>>, vector<128x512xf32>
    %cst_23 = arith.constant dense<0.000000e+00> : vector<1x512xf32>
    %40 = tpu.matmul %38, %39, %cst_23 {dimension_numbers = #tpu.dot_dimension_numbers<[1], [0], [0], [1], [0, 0, 1, 1], [], []>} : vector<1x128xf32>, vector<128x512xf32>, vector<1x512xf32> -> vector<1x512xf32>
    %41 = arith.addf %40, %1 : vector<1x512xf32>
    %c0_24 = arith.constant 0 : index
    %c0_25 = arith.constant 0 : index
    %42 = vector.load %arg5[%c0_24, %c0_25] : memref<128x512xf32, #tpu.memory_space<vmem>>, vector<128x512xf32>
    %cst_26 = arith.constant dense<0.000000e+00> : vector<1x512xf32>
    %43 = tpu.matmul %9, %42, %cst_26 {dimension_numbers = #tpu.dot_dimension_numbers<[1], [0], [0], [1], [0, 0, 1, 1], [], []>} : vector<1x128xf32>, vector<128x512xf32>, vector<1x512xf32> -> vector<1x512xf32>
    %44 = arith.addf %41, %43 : vector<1x512xf32>
    %45 = vector.extract_strided_slice %44 {offsets = [0, 0], sizes = [1, 384], strides = [1, 1]} : vector<1x512xf32> to vector<1x384xf32>
    %cst_27 = arith.constant 5.000000e-01 : f32
    %46 = vector.broadcast %cst_27 : f32 to vector<1x384xf32>
    %47 = arith.mulf %46, %45 : vector<1x384xf32>
    %48 = math.tanh %47 : vector<1x384xf32>
    %cst_28 = arith.constant 1.000000e+00 : f32
    %49 = vector.broadcast %cst_28 : f32 to vector<1x384xf32>
    %50 = arith.addf %48, %49 : vector<1x384xf32>
    %cst_29 = arith.constant 5.000000e-01 : f32
    %51 = vector.broadcast %cst_29 : f32 to vector<1x384xf32>
    %52 = arith.mulf %51, %50 : vector<1x384xf32>
    %53 = vector.extract_strided_slice %52 {offsets = [0, 0], sizes = [1, 128], strides = [1, 1]} : vector<1x384xf32> to vector<1x128xf32>
    %54 = vector.extract_strided_slice %52 {offsets = [0, 128], sizes = [1, 128], strides = [1, 1]} : vector<1x384xf32> to vector<1x128xf32>
    %55 = vector.extract_strided_slice %52 {offsets = [0, 256], sizes = [1, 128], strides = [1, 1]} : vector<1x384xf32> to vector<1x128xf32>
    %56 = vector.extract_strided_slice %44 {offsets = [0, 384], sizes = [1, 128], strides = [1, 1]} : vector<1x512xf32> to vector<1x128xf32>
    %57 = math.tanh %56 : vector<1x128xf32>
    %58 = arith.mulf %54, %9 : vector<1x128xf32>
    %59 = arith.mulf %53, %57 : vector<1x128xf32>
    %60 = arith.addf %58, %59 : vector<1x128xf32>
    %61 = math.tanh %60 : vector<1x128xf32>
    %62 = arith.mulf %55, %61 : vector<1x128xf32>
    %63 = vector.extract_strided_slice %8 {offsets = [1, 0], sizes = [1, 512], strides = [1, 1]} : vector<8x512xf32> to vector<1x512xf32>
    %c0_30 = arith.constant 0 : index
    %c0_31 = arith.constant 0 : index
    %64 = vector.load %arg2[%c0_30, %c0_31] : memref<128x512xf32, #tpu.memory_space<vmem>>, vector<128x512xf32>
    %cst_32 = arith.constant dense<0.000000e+00> : vector<1x512xf32>
    %65 = tpu.matmul %31, %64, %cst_32 {dimension_numbers = #tpu.dot_dimension_numbers<[1], [0], [0], [1], [0, 0, 1, 1], [], []>} : vector<1x128xf32>, vector<128x512xf32>, vector<1x512xf32> -> vector<1x512xf32>
    %66 = arith.addf %63, %65 : vector<1x512xf32>
    %67 = vector.extract_strided_slice %66 {offsets = [0, 0], sizes = [1, 384], strides = [1, 1]} : vector<1x512xf32> to vector<1x384xf32>
    %cst_33 = arith.constant 5.000000e-01 : f32
    %68 = vector.broadcast %cst_33 : f32 to vector<1x384xf32>
    %69 = arith.mulf %68, %67 : vector<1x384xf32>
    %70 = math.tanh %69 : vector<1x384xf32>
    %cst_34 = arith.constant 1.000000e+00 : f32
    %71 = vector.broadcast %cst_34 : f32 to vector<1x384xf32>
    %72 = arith.addf %70, %71 : vector<1x384xf32>
    %cst_35 = arith.constant 5.000000e-01 : f32
    %73 = vector.broadcast %cst_35 : f32 to vector<1x384xf32>
    %74 = arith.mulf %73, %72 : vector<1x384xf32>
    %75 = vector.extract_strided_slice %74 {offsets = [0, 0], sizes = [1, 128], strides = [1, 1]} : vector<1x384xf32> to vector<1x128xf32>
    %76 = vector.extract_strided_slice %74 {offsets = [0, 128], sizes = [1, 128], strides = [1, 1]} : vector<1x384xf32> to vector<1x128xf32>
    %77 = vector.extract_strided_slice %74 {offsets = [0, 256], sizes = [1, 128], strides = [1, 1]} : vector<1x384xf32> to vector<1x128xf32>
    %78 = vector.extract_strided_slice %66 {offsets = [0, 384], sizes = [1, 128], strides = [1, 1]} : vector<1x512xf32> to vector<1x128xf32>
    %79 = math.tanh %78 : vector<1x128xf32>
    %80 = arith.mulf %76, %29 : vector<1x128xf32>
    %81 = arith.mulf %75, %79 : vector<1x128xf32>
    %82 = arith.addf %80, %81 : vector<1x128xf32>
    %83 = math.tanh %82 : vector<1x128xf32>
    %84 = arith.mulf %77, %83 : vector<1x128xf32>
    %cst_36 = arith.constant 5.000000e-01 : f32
    %85 = vector.broadcast %cst_36 : f32 to vector<1x128xf32>
    %86 = arith.mulf %85, %62 : vector<1x128xf32>
    %87 = math.tanh %86 : vector<1x128xf32>
    %cst_37 = arith.constant 1.000000e+00 : f32
    %88 = vector.broadcast %cst_37 : f32 to vector<1x128xf32>
    %89 = arith.addf %87, %88 : vector<1x128xf32>
    %cst_38 = arith.constant 5.000000e-01 : f32
    %90 = vector.broadcast %cst_38 : f32 to vector<1x128xf32>
    %91 = arith.mulf %90, %89 : vector<1x128xf32>
    %c0_39 = arith.constant 0 : index
    %c0_40 = arith.constant 0 : index
    %92 = vector.load %arg7[%c0_39, %c0_40] : memref<128x512xf32, #tpu.memory_space<vmem>>, vector<128x512xf32>
    %cst_41 = arith.constant dense<0.000000e+00> : vector<1x512xf32>
    %93 = tpu.matmul %91, %92, %cst_41 {dimension_numbers = #tpu.dot_dimension_numbers<[1], [0], [0], [1], [0, 0, 1, 1], [], []>} : vector<1x128xf32>, vector<128x512xf32>, vector<1x512xf32> -> vector<1x512xf32>
    %94 = arith.addf %93, %2 : vector<1x512xf32>
    %c0_42 = arith.constant 0 : index
    %c0_43 = arith.constant 0 : index
    %95 = vector.load %arg8[%c0_42, %c0_43] : memref<128x512xf32, #tpu.memory_space<vmem>>, vector<128x512xf32>
    %cst_44 = arith.constant dense<0.000000e+00> : vector<1x512xf32>
    %96 = tpu.matmul %9, %95, %cst_44 {dimension_numbers = #tpu.dot_dimension_numbers<[1], [0], [0], [1], [0, 0, 1, 1], [], []>} : vector<1x128xf32>, vector<128x512xf32>, vector<1x512xf32> -> vector<1x512xf32>
    %97 = arith.addf %94, %96 : vector<1x512xf32>
    %98 = vector.extract_strided_slice %97 {offsets = [0, 0], sizes = [1, 384], strides = [1, 1]} : vector<1x512xf32> to vector<1x384xf32>
    %cst_45 = arith.constant 5.000000e-01 : f32
    %99 = vector.broadcast %cst_45 : f32 to vector<1x384xf32>
    %100 = arith.mulf %99, %98 : vector<1x384xf32>
    %101 = math.tanh %100 : vector<1x384xf32>
    %cst_46 = arith.constant 1.000000e+00 : f32
    %102 = vector.broadcast %cst_46 : f32 to vector<1x384xf32>
    %103 = arith.addf %101, %102 : vector<1x384xf32>
    %cst_47 = arith.constant 5.000000e-01 : f32
    %104 = vector.broadcast %cst_47 : f32 to vector<1x384xf32>
    %105 = arith.mulf %104, %103 : vector<1x384xf32>
    %106 = vector.extract_strided_slice %105 {offsets = [0, 0], sizes = [1, 128], strides = [1, 1]} : vector<1x384xf32> to vector<1x128xf32>
    %107 = vector.extract_strided_slice %105 {offsets = [0, 128], sizes = [1, 128], strides = [1, 1]} : vector<1x384xf32> to vector<1x128xf32>
    %108 = vector.extract_strided_slice %105 {offsets = [0, 256], sizes = [1, 128], strides = [1, 1]} : vector<1x384xf32> to vector<1x128xf32>
    %109 = vector.extract_strided_slice %97 {offsets = [0, 384], sizes = [1, 128], strides = [1, 1]} : vector<1x512xf32> to vector<1x128xf32>
    %110 = math.tanh %109 : vector<1x128xf32>
    %111 = arith.mulf %107, %9 : vector<1x128xf32>
    %112 = arith.mulf %106, %110 : vector<1x128xf32>
    %113 = arith.addf %111, %112 : vector<1x128xf32>
    %114 = math.tanh %113 : vector<1x128xf32>
    %115 = arith.mulf %108, %114 : vector<1x128xf32>
    %cst_48 = arith.constant 5.000000e-01 : f32
    %116 = vector.broadcast %cst_48 : f32 to vector<1x128xf32>
    %117 = arith.mulf %116, %84 : vector<1x128xf32>
    %118 = math.tanh %117 : vector<1x128xf32>
    %cst_49 = arith.constant 1.000000e+00 : f32
    %119 = vector.broadcast %cst_49 : f32 to vector<1x128xf32>
    %120 = arith.addf %118, %119 : vector<1x128xf32>
    %cst_50 = arith.constant 5.000000e-01 : f32
    %121 = vector.broadcast %cst_50 : f32 to vector<1x128xf32>
    %122 = arith.mulf %121, %120 : vector<1x128xf32>
    %c0_51 = arith.constant 0 : index
    %c0_52 = arith.constant 0 : index
    %123 = vector.load %arg4[%c0_51, %c0_52] : memref<128x512xf32, #tpu.memory_space<vmem>>, vector<128x512xf32>
    %cst_53 = arith.constant dense<0.000000e+00> : vector<1x512xf32>
    %124 = tpu.matmul %122, %123, %cst_53 {dimension_numbers = #tpu.dot_dimension_numbers<[1], [0], [0], [1], [0, 0, 1, 1], [], []>} : vector<1x128xf32>, vector<128x512xf32>, vector<1x512xf32> -> vector<1x512xf32>
    %125 = arith.addf %124, %1 : vector<1x512xf32>
    %c0_54 = arith.constant 0 : index
    %c0_55 = arith.constant 0 : index
    %126 = vector.load %arg5[%c0_54, %c0_55] : memref<128x512xf32, #tpu.memory_space<vmem>>, vector<128x512xf32>
    %cst_56 = arith.constant dense<0.000000e+00> : vector<1x512xf32>
    %127 = tpu.matmul %62, %126, %cst_56 {dimension_numbers = #tpu.dot_dimension_numbers<[1], [0], [0], [1], [0, 0, 1, 1], [], []>} : vector<1x128xf32>, vector<128x512xf32>, vector<1x512xf32> -> vector<1x512xf32>
    %128 = arith.addf %125, %127 : vector<1x512xf32>
    %129 = vector.extract_strided_slice %128 {offsets = [0, 0], sizes = [1, 384], strides = [1, 1]} : vector<1x512xf32> to vector<1x384xf32>
    %cst_57 = arith.constant 5.000000e-01 : f32
    %130 = vector.broadcast %cst_57 : f32 to vector<1x384xf32>
    %131 = arith.mulf %130, %129 : vector<1x384xf32>
    %132 = math.tanh %131 : vector<1x384xf32>
    %cst_58 = arith.constant 1.000000e+00 : f32
    %133 = vector.broadcast %cst_58 : f32 to vector<1x384xf32>
    %134 = arith.addf %132, %133 : vector<1x384xf32>
    %cst_59 = arith.constant 5.000000e-01 : f32
    %135 = vector.broadcast %cst_59 : f32 to vector<1x384xf32>
    %136 = arith.mulf %135, %134 : vector<1x384xf32>
    %137 = vector.extract_strided_slice %136 {offsets = [0, 0], sizes = [1, 128], strides = [1, 1]} : vector<1x384xf32> to vector<1x128xf32>
    %138 = vector.extract_strided_slice %136 {offsets = [0, 128], sizes = [1, 128], strides = [1, 1]} : vector<1x384xf32> to vector<1x128xf32>
    %139 = vector.extract_strided_slice %136 {offsets = [0, 256], sizes = [1, 128], strides = [1, 1]} : vector<1x384xf32> to vector<1x128xf32>
    %140 = vector.extract_strided_slice %128 {offsets = [0, 384], sizes = [1, 128], strides = [1, 1]} : vector<1x512xf32> to vector<1x128xf32>
    %141 = math.tanh %140 : vector<1x128xf32>
    %142 = arith.mulf %138, %60 : vector<1x128xf32>
    %143 = arith.mulf %137, %141 : vector<1x128xf32>
    %144 = arith.addf %142, %143 : vector<1x128xf32>
    %145 = math.tanh %144 : vector<1x128xf32>
    %146 = arith.mulf %139, %145 : vector<1x128xf32>
    %147 = vector.extract_strided_slice %8 {offsets = [2, 0], sizes = [1, 512], strides = [1, 1]} : vector<8x512xf32> to vector<1x512xf32>
    %c0_60 = arith.constant 0 : index
    %c0_61 = arith.constant 0 : index
    %148 = vector.load %arg2[%c0_60, %c0_61] : memref<128x512xf32, #tpu.memory_space<vmem>>, vector<128x512xf32>
    %cst_62 = arith.constant dense<0.000000e+00> : vector<1x512xf32>
    %149 = tpu.matmul %84, %148, %cst_62 {dimension_numbers = #tpu.dot_dimension_numbers<[1], [0], [0], [1], [0, 0, 1, 1], [], []>} : vector<1x128xf32>, vector<128x512xf32>, vector<1x512xf32> -> vector<1x512xf32>
    %150 = arith.addf %147, %149 : vector<1x512xf32>
    %151 = vector.extract_strided_slice %150 {offsets = [0, 0], sizes = [1, 384], strides = [1, 1]} : vector<1x512xf32> to vector<1x384xf32>
    %cst_63 = arith.constant 5.000000e-01 : f32
    %152 = vector.broadcast %cst_63 : f32 to vector<1x384xf32>
    %153 = arith.mulf %152, %151 : vector<1x384xf32>
    %154 = math.tanh %153 : vector<1x384xf32>
    %cst_64 = arith.constant 1.000000e+00 : f32
    %155 = vector.broadcast %cst_64 : f32 to vector<1x384xf32>
    %156 = arith.addf %154, %155 : vector<1x384xf32>
    %cst_65 = arith.constant 5.000000e-01 : f32
    %157 = vector.broadcast %cst_65 : f32 to vector<1x384xf32>
    %158 = arith.mulf %157, %156 : vector<1x384xf32>
    %159 = vector.extract_strided_slice %158 {offsets = [0, 0], sizes = [1, 128], strides = [1, 1]} : vector<1x384xf32> to vector<1x128xf32>
    %160 = vector.extract_strided_slice %158 {offsets = [0, 128], sizes = [1, 128], strides = [1, 1]} : vector<1x384xf32> to vector<1x128xf32>
    %161 = vector.extract_strided_slice %158 {offsets = [0, 256], sizes = [1, 128], strides = [1, 1]} : vector<1x384xf32> to vector<1x128xf32>
    %162 = vector.extract_strided_slice %150 {offsets = [0, 384], sizes = [1, 128], strides = [1, 1]} : vector<1x512xf32> to vector<1x128xf32>
    %163 = math.tanh %162 : vector<1x128xf32>
    %164 = arith.mulf %160, %82 : vector<1x128xf32>
    %165 = arith.mulf %159, %163 : vector<1x128xf32>
    %166 = arith.addf %164, %165 : vector<1x128xf32>
    %167 = math.tanh %166 : vector<1x128xf32>
    %168 = arith.mulf %161, %167 : vector<1x128xf32>
    %cst_66 = arith.constant 5.000000e-01 : f32
    %169 = vector.broadcast %cst_66 : f32 to vector<1x128xf32>
    %170 = arith.mulf %169, %115 : vector<1x128xf32>
    %171 = math.tanh %170 : vector<1x128xf32>
    %cst_67 = arith.constant 1.000000e+00 : f32
    %172 = vector.broadcast %cst_67 : f32 to vector<1x128xf32>
    %173 = arith.addf %171, %172 : vector<1x128xf32>
    %cst_68 = arith.constant 5.000000e-01 : f32
    %174 = vector.broadcast %cst_68 : f32 to vector<1x128xf32>
    %175 = arith.mulf %174, %173 : vector<1x128xf32>
    %c0_69 = arith.constant 0 : index
    %c0_70 = arith.constant 0 : index
    %176 = vector.load %arg10[%c0_69, %c0_70] : memref<128x512xf32, #tpu.memory_space<vmem>>, vector<128x512xf32>
    %cst_71 = arith.constant dense<0.000000e+00> : vector<1x512xf32>
    %177 = tpu.matmul %175, %176, %cst_71 {dimension_numbers = #tpu.dot_dimension_numbers<[1], [0], [0], [1], [0, 0, 1, 1], [], []>} : vector<1x128xf32>, vector<128x512xf32>, vector<1x512xf32> -> vector<1x512xf32>
    %178 = arith.addf %177, %3 : vector<1x512xf32>
    %c0_72 = arith.constant 0 : index
    %c0_73 = arith.constant 0 : index
    %179 = vector.load %arg11[%c0_72, %c0_73] : memref<128x512xf32, #tpu.memory_space<vmem>>, vector<128x512xf32>
    %cst_74 = arith.constant dense<0.000000e+00> : vector<1x512xf32>
    %180 = tpu.matmul %9, %179, %cst_74 {dimension_numbers = #tpu.dot_dimension_numbers<[1], [0], [0], [1], [0, 0, 1, 1], [], []>} : vector<1x128xf32>, vector<128x512xf32>, vector<1x512xf32> -> vector<1x512xf32>
    %181 = arith.addf %178, %180 : vector<1x512xf32>
    %182 = vector.extract_strided_slice %181 {offsets = [0, 0], sizes = [1, 384], strides = [1, 1]} : vector<1x512xf32> to vector<1x384xf32>
    %cst_75 = arith.constant 5.000000e-01 : f32
    %183 = vector.broadcast %cst_75 : f32 to vector<1x384xf32>
    %184 = arith.mulf %183, %182 : vector<1x384xf32>
    %185 = math.tanh %184 : vector<1x384xf32>
    %cst_76 = arith.constant 1.000000e+00 : f32
    %186 = vector.broadcast %cst_76 : f32 to vector<1x384xf32>
    %187 = arith.addf %185, %186 : vector<1x384xf32>
    %cst_77 = arith.constant 5.000000e-01 : f32
    %188 = vector.broadcast %cst_77 : f32 to vector<1x384xf32>
    %189 = arith.mulf %188, %187 : vector<1x384xf32>
    %190 = vector.extract_strided_slice %189 {offsets = [0, 0], sizes = [1, 128], strides = [1, 1]} : vector<1x384xf32> to vector<1x128xf32>
    %191 = vector.extract_strided_slice %189 {offsets = [0, 128], sizes = [1, 128], strides = [1, 1]} : vector<1x384xf32> to vector<1x128xf32>
    %192 = vector.extract_strided_slice %189 {offsets = [0, 256], sizes = [1, 128], strides = [1, 1]} : vector<1x384xf32> to vector<1x128xf32>
    %193 = vector.extract_strided_slice %181 {offsets = [0, 384], sizes = [1, 128], strides = [1, 1]} : vector<1x512xf32> to vector<1x128xf32>
    %194 = math.tanh %193 : vector<1x128xf32>
    %195 = arith.mulf %191, %9 : vector<1x128xf32>
    %196 = arith.mulf %190, %194 : vector<1x128xf32>
    %197 = arith.addf %195, %196 : vector<1x128xf32>
    %198 = math.tanh %197 : vector<1x128xf32>
    %199 = arith.mulf %192, %198 : vector<1x128xf32>
    %cst_78 = arith.constant 5.000000e-01 : f32
    %200 = vector.broadcast %cst_78 : f32 to vector<1x128xf32>
    %201 = arith.mulf %200, %146 : vector<1x128xf32>
    %202 = math.tanh %201 : vector<1x128xf32>
    %cst_79 = arith.constant 1.000000e+00 : f32
    %203 = vector.broadcast %cst_79 : f32 to vector<1x128xf32>
    %204 = arith.addf %202, %203 : vector<1x128xf32>
    %cst_80 = arith.constant 5.000000e-01 : f32
    %205 = vector.broadcast %cst_80 : f32 to vector<1x128xf32>
    %206 = arith.mulf %205, %204 : vector<1x128xf32>
    %c0_81 = arith.constant 0 : index
    %c0_82 = arith.constant 0 : index
    %207 = vector.load %arg7[%c0_81, %c0_82] : memref<128x512xf32, #tpu.memory_space<vmem>>, vector<128x512xf32>
    %cst_83 = arith.constant dense<0.000000e+00> : vector<1x512xf32>
    %208 = tpu.matmul %206, %207, %cst_83 {dimension_numbers = #tpu.dot_dimension_numbers<[1], [0], [0], [1], [0, 0, 1, 1], [], []>} : vector<1x128xf32>, vector<128x512xf32>, vector<1x512xf32> -> vector<1x512xf32>
    %209 = arith.addf %208, %2 : vector<1x512xf32>
    %c0_84 = arith.constant 0 : index
    %c0_85 = arith.constant 0 : index
    %210 = vector.load %arg8[%c0_84, %c0_85] : memref<128x512xf32, #tpu.memory_space<vmem>>, vector<128x512xf32>
    %cst_86 = arith.constant dense<0.000000e+00> : vector<1x512xf32>
    %211 = tpu.matmul %115, %210, %cst_86 {dimension_numbers = #tpu.dot_dimension_numbers<[1], [0], [0], [1], [0, 0, 1, 1], [], []>} : vector<1x128xf32>, vector<128x512xf32>, vector<1x512xf32> -> vector<1x512xf32>
    %212 = arith.addf %209, %211 : vector<1x512xf32>
    %213 = vector.extract_strided_slice %212 {offsets = [0, 0], sizes = [1, 384], strides = [1, 1]} : vector<1x512xf32> to vector<1x384xf32>
    %cst_87 = arith.constant 5.000000e-01 : f32
    %214 = vector.broadcast %cst_87 : f32 to vector<1x384xf32>
    %215 = arith.mulf %214, %213 : vector<1x384xf32>
    %216 = math.tanh %215 : vector<1x384xf32>
    %cst_88 = arith.constant 1.000000e+00 : f32
    %217 = vector.broadcast %cst_88 : f32 to vector<1x384xf32>
    %218 = arith.addf %216, %217 : vector<1x384xf32>
    %cst_89 = arith.constant 5.000000e-01 : f32
    %219 = vector.broadcast %cst_89 : f32 to vector<1x384xf32>
    %220 = arith.mulf %219, %218 : vector<1x384xf32>
    %221 = vector.extract_strided_slice %220 {offsets = [0, 0], sizes = [1, 128], strides = [1, 1]} : vector<1x384xf32> to vector<1x128xf32>
    %222 = vector.extract_strided_slice %220 {offsets = [0, 128], sizes = [1, 128], strides = [1, 1]} : vector<1x384xf32> to vector<1x128xf32>
    %223 = vector.extract_strided_slice %220 {offsets = [0, 256], sizes = [1, 128], strides = [1, 1]} : vector<1x384xf32> to vector<1x128xf32>
    %224 = vector.extract_strided_slice %212 {offsets = [0, 384], sizes = [1, 128], strides = [1, 1]} : vector<1x512xf32> to vector<1x128xf32>
    %225 = math.tanh %224 : vector<1x128xf32>
    %226 = arith.mulf %222, %113 : vector<1x128xf32>
    %227 = arith.mulf %221, %225 : vector<1x128xf32>
    %228 = arith.addf %226, %227 : vector<1x128xf32>
    %229 = math.tanh %228 : vector<1x128xf32>
    %230 = arith.mulf %223, %229 : vector<1x128xf32>
    %cst_90 = arith.constant 5.000000e-01 : f32
    %231 = vector.broadcast %cst_90 : f32 to vector<1x128xf32>
    %232 = arith.mulf %231, %168 : vector<1x128xf32>
    %233 = math.tanh %232 : vector<1x128xf32>
    %cst_91 = arith.constant 1.000000e+00 : f32
    %234 = vector.broadcast %cst_91 : f32 to vector<1x128xf32>
    %235 = arith.addf %233, %234 : vector<1x128xf32>
    %cst_92 = arith.constant 5.000000e-01 : f32
    %236 = vector.broadcast %cst_92 : f32 to vector<1x128xf32>
    %237 = arith.mulf %236, %235 : vector<1x128xf32>
    %c0_93 = arith.constant 0 : index
    %c0_94 = arith.constant 0 : index
    %238 = vector.load %arg4[%c0_93, %c0_94] : memref<128x512xf32, #tpu.memory_space<vmem>>, vector<128x512xf32>
    %cst_95 = arith.constant dense<0.000000e+00> : vector<1x512xf32>
    %239 = tpu.matmul %237, %238, %cst_95 {dimension_numbers = #tpu.dot_dimension_numbers<[1], [0], [0], [1], [0, 0, 1, 1], [], []>} : vector<1x128xf32>, vector<128x512xf32>, vector<1x512xf32> -> vector<1x512xf32>
    %240 = arith.addf %239, %1 : vector<1x512xf32>
    %c0_96 = arith.constant 0 : index
    %c0_97 = arith.constant 0 : index
    %241 = vector.load %arg5[%c0_96, %c0_97] : memref<128x512xf32, #tpu.memory_space<vmem>>, vector<128x512xf32>
    %cst_98 = arith.constant dense<0.000000e+00> : vector<1x512xf32>
    %242 = tpu.matmul %146, %241, %cst_98 {dimension_numbers = #tpu.dot_dimension_numbers<[1], [0], [0], [1], [0, 0, 1, 1], [], []>} : vector<1x128xf32>, vector<128x512xf32>, vector<1x512xf32> -> vector<1x512xf32>
    %243 = arith.addf %240, %242 : vector<1x512xf32>
    %244 = vector.extract_strided_slice %243 {offsets = [0, 0], sizes = [1, 384], strides = [1, 1]} : vector<1x512xf32> to vector<1x384xf32>
    %cst_99 = arith.constant 5.000000e-01 : f32
    %245 = vector.broadcast %cst_99 : f32 to vector<1x384xf32>
    %246 = arith.mulf %245, %244 : vector<1x384xf32>
    %247 = math.tanh %246 : vector<1x384xf32>
    %cst_100 = arith.constant 1.000000e+00 : f32
    %248 = vector.broadcast %cst_100 : f32 to vector<1x384xf32>
    %249 = arith.addf %247, %248 : vector<1x384xf32>
    %cst_101 = arith.constant 5.000000e-01 : f32
    %250 = vector.broadcast %cst_101 : f32 to vector<1x384xf32>
    %251 = arith.mulf %250, %249 : vector<1x384xf32>
    %252 = vector.extract_strided_slice %251 {offsets = [0, 0], sizes = [1, 128], strides = [1, 1]} : vector<1x384xf32> to vector<1x128xf32>
    %253 = vector.extract_strided_slice %251 {offsets = [0, 128], sizes = [1, 128], strides = [1, 1]} : vector<1x384xf32> to vector<1x128xf32>
    %254 = vector.extract_strided_slice %251 {offsets = [0, 256], sizes = [1, 128], strides = [1, 1]} : vector<1x384xf32> to vector<1x128xf32>
    %255 = vector.extract_strided_slice %243 {offsets = [0, 384], sizes = [1, 128], strides = [1, 1]} : vector<1x512xf32> to vector<1x128xf32>
    %256 = math.tanh %255 : vector<1x128xf32>
    %257 = arith.mulf %253, %144 : vector<1x128xf32>
    %258 = arith.mulf %252, %256 : vector<1x128xf32>
    %259 = arith.addf %257, %258 : vector<1x128xf32>
    %260 = math.tanh %259 : vector<1x128xf32>
    %261 = arith.mulf %254, %260 : vector<1x128xf32>
    %262 = vector.extract_strided_slice %8 {offsets = [3, 0], sizes = [1, 512], strides = [1, 1]} : vector<8x512xf32> to vector<1x512xf32>
    %c0_102 = arith.constant 0 : index
    %c0_103 = arith.constant 0 : index
    %263 = vector.load %arg2[%c0_102, %c0_103] : memref<128x512xf32, #tpu.memory_space<vmem>>, vector<128x512xf32>
    %cst_104 = arith.constant dense<0.000000e+00> : vector<1x512xf32>
    %264 = tpu.matmul %168, %263, %cst_104 {dimension_numbers = #tpu.dot_dimension_numbers<[1], [0], [0], [1], [0, 0, 1, 1], [], []>} : vector<1x128xf32>, vector<128x512xf32>, vector<1x512xf32> -> vector<1x512xf32>
    %265 = arith.addf %262, %264 : vector<1x512xf32>
    %266 = vector.extract_strided_slice %265 {offsets = [0, 0], sizes = [1, 384], strides = [1, 1]} : vector<1x512xf32> to vector<1x384xf32>
    %cst_105 = arith.constant 5.000000e-01 : f32
    %267 = vector.broadcast %cst_105 : f32 to vector<1x384xf32>
    %268 = arith.mulf %267, %266 : vector<1x384xf32>
    %269 = math.tanh %268 : vector<1x384xf32>
    %cst_106 = arith.constant 1.000000e+00 : f32
    %270 = vector.broadcast %cst_106 : f32 to vector<1x384xf32>
    %271 = arith.addf %269, %270 : vector<1x384xf32>
    %cst_107 = arith.constant 5.000000e-01 : f32
    %272 = vector.broadcast %cst_107 : f32 to vector<1x384xf32>
    %273 = arith.mulf %272, %271 : vector<1x384xf32>
    %274 = vector.extract_strided_slice %273 {offsets = [0, 0], sizes = [1, 128], strides = [1, 1]} : vector<1x384xf32> to vector<1x128xf32>
    %275 = vector.extract_strided_slice %273 {offsets = [0, 128], sizes = [1, 128], strides = [1, 1]} : vector<1x384xf32> to vector<1x128xf32>
    %276 = vector.extract_strided_slice %273 {offsets = [0, 256], sizes = [1, 128], strides = [1, 1]} : vector<1x384xf32> to vector<1x128xf32>
    %277 = vector.extract_strided_slice %265 {offsets = [0, 384], sizes = [1, 128], strides = [1, 1]} : vector<1x512xf32> to vector<1x128xf32>
    %278 = math.tanh %277 : vector<1x128xf32>
    %279 = arith.mulf %275, %166 : vector<1x128xf32>
    %280 = arith.mulf %274, %278 : vector<1x128xf32>
    %281 = arith.addf %279, %280 : vector<1x128xf32>
    %282 = math.tanh %281 : vector<1x128xf32>
    %283 = arith.mulf %276, %282 : vector<1x128xf32>
    %cst_108 = arith.constant 5.000000e-01 : f32
    %284 = vector.broadcast %cst_108 : f32 to vector<1x128xf32>
    %285 = arith.mulf %284, %230 : vector<1x128xf32>
    %286 = math.tanh %285 : vector<1x128xf32>
    %cst_109 = arith.constant 1.000000e+00 : f32
    %287 = vector.broadcast %cst_109 : f32 to vector<1x128xf32>
    %288 = arith.addf %286, %287 : vector<1x128xf32>
    %cst_110 = arith.constant 5.000000e-01 : f32
    %289 = vector.broadcast %cst_110 : f32 to vector<1x128xf32>
    %290 = arith.mulf %289, %288 : vector<1x128xf32>
    %c0_111 = arith.constant 0 : index
    %c0_112 = arith.constant 0 : index
    %291 = vector.load %arg10[%c0_111, %c0_112] : memref<128x512xf32, #tpu.memory_space<vmem>>, vector<128x512xf32>
    %cst_113 = arith.constant dense<0.000000e+00> : vector<1x512xf32>
    %292 = tpu.matmul %290, %291, %cst_113 {dimension_numbers = #tpu.dot_dimension_numbers<[1], [0], [0], [1], [0, 0, 1, 1], [], []>} : vector<1x128xf32>, vector<128x512xf32>, vector<1x512xf32> -> vector<1x512xf32>
    %293 = arith.addf %292, %3 : vector<1x512xf32>
    %c0_114 = arith.constant 0 : index
    %c0_115 = arith.constant 0 : index
    %294 = vector.load %arg11[%c0_114, %c0_115] : memref<128x512xf32, #tpu.memory_space<vmem>>, vector<128x512xf32>
    %cst_116 = arith.constant dense<0.000000e+00> : vector<1x512xf32>
    %295 = tpu.matmul %199, %294, %cst_116 {dimension_numbers = #tpu.dot_dimension_numbers<[1], [0], [0], [1], [0, 0, 1, 1], [], []>} : vector<1x128xf32>, vector<128x512xf32>, vector<1x512xf32> -> vector<1x512xf32>
    %296 = arith.addf %293, %295 : vector<1x512xf32>
    %297 = vector.extract_strided_slice %296 {offsets = [0, 0], sizes = [1, 384], strides = [1, 1]} : vector<1x512xf32> to vector<1x384xf32>
    %cst_117 = arith.constant 5.000000e-01 : f32
    %298 = vector.broadcast %cst_117 : f32 to vector<1x384xf32>
    %299 = arith.mulf %298, %297 : vector<1x384xf32>
    %300 = math.tanh %299 : vector<1x384xf32>
    %cst_118 = arith.constant 1.000000e+00 : f32
    %301 = vector.broadcast %cst_118 : f32 to vector<1x384xf32>
    %302 = arith.addf %300, %301 : vector<1x384xf32>
    %cst_119 = arith.constant 5.000000e-01 : f32
    %303 = vector.broadcast %cst_119 : f32 to vector<1x384xf32>
    %304 = arith.mulf %303, %302 : vector<1x384xf32>
    %305 = vector.extract_strided_slice %304 {offsets = [0, 0], sizes = [1, 128], strides = [1, 1]} : vector<1x384xf32> to vector<1x128xf32>
    %306 = vector.extract_strided_slice %304 {offsets = [0, 128], sizes = [1, 128], strides = [1, 1]} : vector<1x384xf32> to vector<1x128xf32>
    %307 = vector.extract_strided_slice %304 {offsets = [0, 256], sizes = [1, 128], strides = [1, 1]} : vector<1x384xf32> to vector<1x128xf32>
    %308 = vector.extract_strided_slice %296 {offsets = [0, 384], sizes = [1, 128], strides = [1, 1]} : vector<1x512xf32> to vector<1x128xf32>
    %309 = math.tanh %308 : vector<1x128xf32>
    %310 = arith.mulf %306, %197 : vector<1x128xf32>
    %311 = arith.mulf %305, %309 : vector<1x128xf32>
    %312 = arith.addf %310, %311 : vector<1x128xf32>
    %313 = math.tanh %312 : vector<1x128xf32>
    %314 = arith.mulf %307, %313 : vector<1x128xf32>
    %cst_120 = arith.constant 5.000000e-01 : f32
    %315 = vector.broadcast %cst_120 : f32 to vector<1x128xf32>
    %316 = arith.mulf %315, %261 : vector<1x128xf32>
    %317 = math.tanh %316 : vector<1x128xf32>
    %cst_121 = arith.constant 1.000000e+00 : f32
    %318 = vector.broadcast %cst_121 : f32 to vector<1x128xf32>
    %319 = arith.addf %317, %318 : vector<1x128xf32>
    %cst_122 = arith.constant 5.000000e-01 : f32
    %320 = vector.broadcast %cst_122 : f32 to vector<1x128xf32>
    %321 = arith.mulf %320, %319 : vector<1x128xf32>
    %c0_123 = arith.constant 0 : index
    %c0_124 = arith.constant 0 : index
    %322 = vector.load %arg7[%c0_123, %c0_124] : memref<128x512xf32, #tpu.memory_space<vmem>>, vector<128x512xf32>
    %cst_125 = arith.constant dense<0.000000e+00> : vector<1x512xf32>
    %323 = tpu.matmul %321, %322, %cst_125 {dimension_numbers = #tpu.dot_dimension_numbers<[1], [0], [0], [1], [0, 0, 1, 1], [], []>} : vector<1x128xf32>, vector<128x512xf32>, vector<1x512xf32> -> vector<1x512xf32>
    %324 = arith.addf %323, %2 : vector<1x512xf32>
    %c0_126 = arith.constant 0 : index
    %c0_127 = arith.constant 0 : index
    %325 = vector.load %arg8[%c0_126, %c0_127] : memref<128x512xf32, #tpu.memory_space<vmem>>, vector<128x512xf32>
    %cst_128 = arith.constant dense<0.000000e+00> : vector<1x512xf32>
    %326 = tpu.matmul %230, %325, %cst_128 {dimension_numbers = #tpu.dot_dimension_numbers<[1], [0], [0], [1], [0, 0, 1, 1], [], []>} : vector<1x128xf32>, vector<128x512xf32>, vector<1x512xf32> -> vector<1x512xf32>
    %327 = arith.addf %324, %326 : vector<1x512xf32>
    %328 = vector.extract_strided_slice %327 {offsets = [0, 0], sizes = [1, 384], strides = [1, 1]} : vector<1x512xf32> to vector<1x384xf32>
    %cst_129 = arith.constant 5.000000e-01 : f32
    %329 = vector.broadcast %cst_129 : f32 to vector<1x384xf32>
    %330 = arith.mulf %329, %328 : vector<1x384xf32>
    %331 = math.tanh %330 : vector<1x384xf32>
    %cst_130 = arith.constant 1.000000e+00 : f32
    %332 = vector.broadcast %cst_130 : f32 to vector<1x384xf32>
    %333 = arith.addf %331, %332 : vector<1x384xf32>
    %cst_131 = arith.constant 5.000000e-01 : f32
    %334 = vector.broadcast %cst_131 : f32 to vector<1x384xf32>
    %335 = arith.mulf %334, %333 : vector<1x384xf32>
    %336 = vector.extract_strided_slice %335 {offsets = [0, 0], sizes = [1, 128], strides = [1, 1]} : vector<1x384xf32> to vector<1x128xf32>
    %337 = vector.extract_strided_slice %335 {offsets = [0, 128], sizes = [1, 128], strides = [1, 1]} : vector<1x384xf32> to vector<1x128xf32>
    %338 = vector.extract_strided_slice %335 {offsets = [0, 256], sizes = [1, 128], strides = [1, 1]} : vector<1x384xf32> to vector<1x128xf32>
    %339 = vector.extract_strided_slice %327 {offsets = [0, 384], sizes = [1, 128], strides = [1, 1]} : vector<1x512xf32> to vector<1x128xf32>
    %340 = math.tanh %339 : vector<1x128xf32>
    %341 = arith.mulf %337, %228 : vector<1x128xf32>
    %342 = arith.mulf %336, %340 : vector<1x128xf32>
    %343 = arith.addf %341, %342 : vector<1x128xf32>
    %344 = math.tanh %343 : vector<1x128xf32>
    %345 = arith.mulf %338, %344 : vector<1x128xf32>
    %cst_132 = arith.constant 5.000000e-01 : f32
    %346 = vector.broadcast %cst_132 : f32 to vector<1x128xf32>
    %347 = arith.mulf %346, %283 : vector<1x128xf32>
    %348 = math.tanh %347 : vector<1x128xf32>
    %cst_133 = arith.constant 1.000000e+00 : f32
    %349 = vector.broadcast %cst_133 : f32 to vector<1x128xf32>
    %350 = arith.addf %348, %349 : vector<1x128xf32>
    %cst_134 = arith.constant 5.000000e-01 : f32
    %351 = vector.broadcast %cst_134 : f32 to vector<1x128xf32>
    %352 = arith.mulf %351, %350 : vector<1x128xf32>
    %c0_135 = arith.constant 0 : index
    %c0_136 = arith.constant 0 : index
    %353 = vector.load %arg4[%c0_135, %c0_136] : memref<128x512xf32, #tpu.memory_space<vmem>>, vector<128x512xf32>
    %cst_137 = arith.constant dense<0.000000e+00> : vector<1x512xf32>
    %354 = tpu.matmul %352, %353, %cst_137 {dimension_numbers = #tpu.dot_dimension_numbers<[1], [0], [0], [1], [0, 0, 1, 1], [], []>} : vector<1x128xf32>, vector<128x512xf32>, vector<1x512xf32> -> vector<1x512xf32>
    %355 = arith.addf %354, %1 : vector<1x512xf32>
    %c0_138 = arith.constant 0 : index
    %c0_139 = arith.constant 0 : index
    %356 = vector.load %arg5[%c0_138, %c0_139] : memref<128x512xf32, #tpu.memory_space<vmem>>, vector<128x512xf32>
    %cst_140 = arith.constant dense<0.000000e+00> : vector<1x512xf32>
    %357 = tpu.matmul %261, %356, %cst_140 {dimension_numbers = #tpu.dot_dimension_numbers<[1], [0], [0], [1], [0, 0, 1, 1], [], []>} : vector<1x128xf32>, vector<128x512xf32>, vector<1x512xf32> -> vector<1x512xf32>
    %358 = arith.addf %355, %357 : vector<1x512xf32>
    %359 = vector.extract_strided_slice %358 {offsets = [0, 0], sizes = [1, 384], strides = [1, 1]} : vector<1x512xf32> to vector<1x384xf32>
    %cst_141 = arith.constant 5.000000e-01 : f32
    %360 = vector.broadcast %cst_141 : f32 to vector<1x384xf32>
    %361 = arith.mulf %360, %359 : vector<1x384xf32>
    %362 = math.tanh %361 : vector<1x384xf32>
    %cst_142 = arith.constant 1.000000e+00 : f32
    %363 = vector.broadcast %cst_142 : f32 to vector<1x384xf32>
    %364 = arith.addf %362, %363 : vector<1x384xf32>
    %cst_143 = arith.constant 5.000000e-01 : f32
    %365 = vector.broadcast %cst_143 : f32 to vector<1x384xf32>
    %366 = arith.mulf %365, %364 : vector<1x384xf32>
    %367 = vector.extract_strided_slice %366 {offsets = [0, 0], sizes = [1, 128], strides = [1, 1]} : vector<1x384xf32> to vector<1x128xf32>
    %368 = vector.extract_strided_slice %366 {offsets = [0, 128], sizes = [1, 128], strides = [1, 1]} : vector<1x384xf32> to vector<1x128xf32>
    %369 = vector.extract_strided_slice %366 {offsets = [0, 256], sizes = [1, 128], strides = [1, 1]} : vector<1x384xf32> to vector<1x128xf32>
    %370 = vector.extract_strided_slice %358 {offsets = [0, 384], sizes = [1, 128], strides = [1, 1]} : vector<1x512xf32> to vector<1x128xf32>
    %371 = math.tanh %370 : vector<1x128xf32>
    %372 = arith.mulf %368, %259 : vector<1x128xf32>
    %373 = arith.mulf %367, %371 : vector<1x128xf32>
    %374 = arith.addf %372, %373 : vector<1x128xf32>
    %375 = math.tanh %374 : vector<1x128xf32>
    %376 = arith.mulf %369, %375 : vector<1x128xf32>
    %377 = vector.extract_strided_slice %8 {offsets = [4, 0], sizes = [1, 512], strides = [1, 1]} : vector<8x512xf32> to vector<1x512xf32>
    %c0_144 = arith.constant 0 : index
    %c0_145 = arith.constant 0 : index
    %378 = vector.load %arg2[%c0_144, %c0_145] : memref<128x512xf32, #tpu.memory_space<vmem>>, vector<128x512xf32>
    %cst_146 = arith.constant dense<0.000000e+00> : vector<1x512xf32>
    %379 = tpu.matmul %283, %378, %cst_146 {dimension_numbers = #tpu.dot_dimension_numbers<[1], [0], [0], [1], [0, 0, 1, 1], [], []>} : vector<1x128xf32>, vector<128x512xf32>, vector<1x512xf32> -> vector<1x512xf32>
    %380 = arith.addf %377, %379 : vector<1x512xf32>
    %381 = vector.extract_strided_slice %380 {offsets = [0, 0], sizes = [1, 384], strides = [1, 1]} : vector<1x512xf32> to vector<1x384xf32>
    %cst_147 = arith.constant 5.000000e-01 : f32
    %382 = vector.broadcast %cst_147 : f32 to vector<1x384xf32>
    %383 = arith.mulf %382, %381 : vector<1x384xf32>
    %384 = math.tanh %383 : vector<1x384xf32>
    %cst_148 = arith.constant 1.000000e+00 : f32
    %385 = vector.broadcast %cst_148 : f32 to vector<1x384xf32>
    %386 = arith.addf %384, %385 : vector<1x384xf32>
    %cst_149 = arith.constant 5.000000e-01 : f32
    %387 = vector.broadcast %cst_149 : f32 to vector<1x384xf32>
    %388 = arith.mulf %387, %386 : vector<1x384xf32>
    %389 = vector.extract_strided_slice %388 {offsets = [0, 0], sizes = [1, 128], strides = [1, 1]} : vector<1x384xf32> to vector<1x128xf32>
    %390 = vector.extract_strided_slice %388 {offsets = [0, 128], sizes = [1, 128], strides = [1, 1]} : vector<1x384xf32> to vector<1x128xf32>
    %391 = vector.extract_strided_slice %388 {offsets = [0, 256], sizes = [1, 128], strides = [1, 1]} : vector<1x384xf32> to vector<1x128xf32>
    %392 = vector.extract_strided_slice %380 {offsets = [0, 384], sizes = [1, 128], strides = [1, 1]} : vector<1x512xf32> to vector<1x128xf32>
    %393 = math.tanh %392 : vector<1x128xf32>
    %394 = arith.mulf %390, %281 : vector<1x128xf32>
    %395 = arith.mulf %389, %393 : vector<1x128xf32>
    %396 = arith.addf %394, %395 : vector<1x128xf32>
    %397 = math.tanh %396 : vector<1x128xf32>
    %398 = arith.mulf %391, %397 : vector<1x128xf32>
    %cst_150 = arith.constant 5.000000e-01 : f32
    %399 = vector.broadcast %cst_150 : f32 to vector<1x128xf32>
    %400 = arith.mulf %399, %345 : vector<1x128xf32>
    %401 = math.tanh %400 : vector<1x128xf32>
    %cst_151 = arith.constant 1.000000e+00 : f32
    %402 = vector.broadcast %cst_151 : f32 to vector<1x128xf32>
    %403 = arith.addf %401, %402 : vector<1x128xf32>
    %cst_152 = arith.constant 5.000000e-01 : f32
    %404 = vector.broadcast %cst_152 : f32 to vector<1x128xf32>
    %405 = arith.mulf %404, %403 : vector<1x128xf32>
    %c0_153 = arith.constant 0 : index
    %c0_154 = arith.constant 0 : index
    %406 = vector.load %arg10[%c0_153, %c0_154] : memref<128x512xf32, #tpu.memory_space<vmem>>, vector<128x512xf32>
    %cst_155 = arith.constant dense<0.000000e+00> : vector<1x512xf32>
    %407 = tpu.matmul %405, %406, %cst_155 {dimension_numbers = #tpu.dot_dimension_numbers<[1], [0], [0], [1], [0, 0, 1, 1], [], []>} : vector<1x128xf32>, vector<128x512xf32>, vector<1x512xf32> -> vector<1x512xf32>
    %408 = arith.addf %407, %3 : vector<1x512xf32>
    %c0_156 = arith.constant 0 : index
    %c0_157 = arith.constant 0 : index
    %409 = vector.load %arg11[%c0_156, %c0_157] : memref<128x512xf32, #tpu.memory_space<vmem>>, vector<128x512xf32>
    %cst_158 = arith.constant dense<0.000000e+00> : vector<1x512xf32>
    %410 = tpu.matmul %314, %409, %cst_158 {dimension_numbers = #tpu.dot_dimension_numbers<[1], [0], [0], [1], [0, 0, 1, 1], [], []>} : vector<1x128xf32>, vector<128x512xf32>, vector<1x512xf32> -> vector<1x512xf32>
    %411 = arith.addf %408, %410 : vector<1x512xf32>
    %412 = vector.extract_strided_slice %411 {offsets = [0, 0], sizes = [1, 384], strides = [1, 1]} : vector<1x512xf32> to vector<1x384xf32>
    %cst_159 = arith.constant 5.000000e-01 : f32
    %413 = vector.broadcast %cst_159 : f32 to vector<1x384xf32>
    %414 = arith.mulf %413, %412 : vector<1x384xf32>
    %415 = math.tanh %414 : vector<1x384xf32>
    %cst_160 = arith.constant 1.000000e+00 : f32
    %416 = vector.broadcast %cst_160 : f32 to vector<1x384xf32>
    %417 = arith.addf %415, %416 : vector<1x384xf32>
    %cst_161 = arith.constant 5.000000e-01 : f32
    %418 = vector.broadcast %cst_161 : f32 to vector<1x384xf32>
    %419 = arith.mulf %418, %417 : vector<1x384xf32>
    %420 = vector.extract_strided_slice %419 {offsets = [0, 0], sizes = [1, 128], strides = [1, 1]} : vector<1x384xf32> to vector<1x128xf32>
    %421 = vector.extract_strided_slice %419 {offsets = [0, 128], sizes = [1, 128], strides = [1, 1]} : vector<1x384xf32> to vector<1x128xf32>
    %422 = vector.extract_strided_slice %419 {offsets = [0, 256], sizes = [1, 128], strides = [1, 1]} : vector<1x384xf32> to vector<1x128xf32>
    %423 = vector.extract_strided_slice %411 {offsets = [0, 384], sizes = [1, 128], strides = [1, 1]} : vector<1x512xf32> to vector<1x128xf32>
    %424 = math.tanh %423 : vector<1x128xf32>
    %425 = arith.mulf %421, %312 : vector<1x128xf32>
    %426 = arith.mulf %420, %424 : vector<1x128xf32>
    %427 = arith.addf %425, %426 : vector<1x128xf32>
    %428 = math.tanh %427 : vector<1x128xf32>
    %429 = arith.mulf %422, %428 : vector<1x128xf32>
    %cst_162 = arith.constant 5.000000e-01 : f32
    %430 = vector.broadcast %cst_162 : f32 to vector<1x128xf32>
    %431 = arith.mulf %430, %376 : vector<1x128xf32>
    %432 = math.tanh %431 : vector<1x128xf32>
    %cst_163 = arith.constant 1.000000e+00 : f32
    %433 = vector.broadcast %cst_163 : f32 to vector<1x128xf32>
    %434 = arith.addf %432, %433 : vector<1x128xf32>
    %cst_164 = arith.constant 5.000000e-01 : f32
    %435 = vector.broadcast %cst_164 : f32 to vector<1x128xf32>
    %436 = arith.mulf %435, %434 : vector<1x128xf32>
    %c0_165 = arith.constant 0 : index
    %c0_166 = arith.constant 0 : index
    %437 = vector.load %arg7[%c0_165, %c0_166] : memref<128x512xf32, #tpu.memory_space<vmem>>, vector<128x512xf32>
    %cst_167 = arith.constant dense<0.000000e+00> : vector<1x512xf32>
    %438 = tpu.matmul %436, %437, %cst_167 {dimension_numbers = #tpu.dot_dimension_numbers<[1], [0], [0], [1], [0, 0, 1, 1], [], []>} : vector<1x128xf32>, vector<128x512xf32>, vector<1x512xf32> -> vector<1x512xf32>
    %439 = arith.addf %438, %2 : vector<1x512xf32>
    %c0_168 = arith.constant 0 : index
    %c0_169 = arith.constant 0 : index
    %440 = vector.load %arg8[%c0_168, %c0_169] : memref<128x512xf32, #tpu.memory_space<vmem>>, vector<128x512xf32>
    %cst_170 = arith.constant dense<0.000000e+00> : vector<1x512xf32>
    %441 = tpu.matmul %345, %440, %cst_170 {dimension_numbers = #tpu.dot_dimension_numbers<[1], [0], [0], [1], [0, 0, 1, 1], [], []>} : vector<1x128xf32>, vector<128x512xf32>, vector<1x512xf32> -> vector<1x512xf32>
    %442 = arith.addf %439, %441 : vector<1x512xf32>
    %443 = vector.extract_strided_slice %442 {offsets = [0, 0], sizes = [1, 384], strides = [1, 1]} : vector<1x512xf32> to vector<1x384xf32>
    %cst_171 = arith.constant 5.000000e-01 : f32
    %444 = vector.broadcast %cst_171 : f32 to vector<1x384xf32>
    %445 = arith.mulf %444, %443 : vector<1x384xf32>
    %446 = math.tanh %445 : vector<1x384xf32>
    %cst_172 = arith.constant 1.000000e+00 : f32
    %447 = vector.broadcast %cst_172 : f32 to vector<1x384xf32>
    %448 = arith.addf %446, %447 : vector<1x384xf32>
    %cst_173 = arith.constant 5.000000e-01 : f32
    %449 = vector.broadcast %cst_173 : f32 to vector<1x384xf32>
    %450 = arith.mulf %449, %448 : vector<1x384xf32>
    %451 = vector.extract_strided_slice %450 {offsets = [0, 0], sizes = [1, 128], strides = [1, 1]} : vector<1x384xf32> to vector<1x128xf32>
    %452 = vector.extract_strided_slice %450 {offsets = [0, 128], sizes = [1, 128], strides = [1, 1]} : vector<1x384xf32> to vector<1x128xf32>
    %453 = vector.extract_strided_slice %450 {offsets = [0, 256], sizes = [1, 128], strides = [1, 1]} : vector<1x384xf32> to vector<1x128xf32>
    %454 = vector.extract_strided_slice %442 {offsets = [0, 384], sizes = [1, 128], strides = [1, 1]} : vector<1x512xf32> to vector<1x128xf32>
    %455 = math.tanh %454 : vector<1x128xf32>
    %456 = arith.mulf %452, %343 : vector<1x128xf32>
    %457 = arith.mulf %451, %455 : vector<1x128xf32>
    %458 = arith.addf %456, %457 : vector<1x128xf32>
    %459 = math.tanh %458 : vector<1x128xf32>
    %460 = arith.mulf %453, %459 : vector<1x128xf32>
    %cst_174 = arith.constant 5.000000e-01 : f32
    %461 = vector.broadcast %cst_174 : f32 to vector<1x128xf32>
    %462 = arith.mulf %461, %398 : vector<1x128xf32>
    %463 = math.tanh %462 : vector<1x128xf32>
    %cst_175 = arith.constant 1.000000e+00 : f32
    %464 = vector.broadcast %cst_175 : f32 to vector<1x128xf32>
    %465 = arith.addf %463, %464 : vector<1x128xf32>
    %cst_176 = arith.constant 5.000000e-01 : f32
    %466 = vector.broadcast %cst_176 : f32 to vector<1x128xf32>
    %467 = arith.mulf %466, %465 : vector<1x128xf32>
    %c0_177 = arith.constant 0 : index
    %c0_178 = arith.constant 0 : index
    %468 = vector.load %arg4[%c0_177, %c0_178] : memref<128x512xf32, #tpu.memory_space<vmem>>, vector<128x512xf32>
    %cst_179 = arith.constant dense<0.000000e+00> : vector<1x512xf32>
    %469 = tpu.matmul %467, %468, %cst_179 {dimension_numbers = #tpu.dot_dimension_numbers<[1], [0], [0], [1], [0, 0, 1, 1], [], []>} : vector<1x128xf32>, vector<128x512xf32>, vector<1x512xf32> -> vector<1x512xf32>
    %470 = arith.addf %469, %1 : vector<1x512xf32>
    %c0_180 = arith.constant 0 : index
    %c0_181 = arith.constant 0 : index
    %471 = vector.load %arg5[%c0_180, %c0_181] : memref<128x512xf32, #tpu.memory_space<vmem>>, vector<128x512xf32>
    %cst_182 = arith.constant dense<0.000000e+00> : vector<1x512xf32>
    %472 = tpu.matmul %376, %471, %cst_182 {dimension_numbers = #tpu.dot_dimension_numbers<[1], [0], [0], [1], [0, 0, 1, 1], [], []>} : vector<1x128xf32>, vector<128x512xf32>, vector<1x512xf32> -> vector<1x512xf32>
    %473 = arith.addf %470, %472 : vector<1x512xf32>
    %474 = vector.extract_strided_slice %473 {offsets = [0, 0], sizes = [1, 384], strides = [1, 1]} : vector<1x512xf32> to vector<1x384xf32>
    %cst_183 = arith.constant 5.000000e-01 : f32
    %475 = vector.broadcast %cst_183 : f32 to vector<1x384xf32>
    %476 = arith.mulf %475, %474 : vector<1x384xf32>
    %477 = math.tanh %476 : vector<1x384xf32>
    %cst_184 = arith.constant 1.000000e+00 : f32
    %478 = vector.broadcast %cst_184 : f32 to vector<1x384xf32>
    %479 = arith.addf %477, %478 : vector<1x384xf32>
    %cst_185 = arith.constant 5.000000e-01 : f32
    %480 = vector.broadcast %cst_185 : f32 to vector<1x384xf32>
    %481 = arith.mulf %480, %479 : vector<1x384xf32>
    %482 = vector.extract_strided_slice %481 {offsets = [0, 0], sizes = [1, 128], strides = [1, 1]} : vector<1x384xf32> to vector<1x128xf32>
    %483 = vector.extract_strided_slice %481 {offsets = [0, 128], sizes = [1, 128], strides = [1, 1]} : vector<1x384xf32> to vector<1x128xf32>
    %484 = vector.extract_strided_slice %481 {offsets = [0, 256], sizes = [1, 128], strides = [1, 1]} : vector<1x384xf32> to vector<1x128xf32>
    %485 = vector.extract_strided_slice %473 {offsets = [0, 384], sizes = [1, 128], strides = [1, 1]} : vector<1x512xf32> to vector<1x128xf32>
    %486 = math.tanh %485 : vector<1x128xf32>
    %487 = arith.mulf %483, %374 : vector<1x128xf32>
    %488 = arith.mulf %482, %486 : vector<1x128xf32>
    %489 = arith.addf %487, %488 : vector<1x128xf32>
    %490 = math.tanh %489 : vector<1x128xf32>
    %491 = arith.mulf %484, %490 : vector<1x128xf32>
    %492 = vector.extract_strided_slice %8 {offsets = [5, 0], sizes = [1, 512], strides = [1, 1]} : vector<8x512xf32> to vector<1x512xf32>
    %c0_186 = arith.constant 0 : index
    %c0_187 = arith.constant 0 : index
    %493 = vector.load %arg2[%c0_186, %c0_187] : memref<128x512xf32, #tpu.memory_space<vmem>>, vector<128x512xf32>
    %cst_188 = arith.constant dense<0.000000e+00> : vector<1x512xf32>
    %494 = tpu.matmul %398, %493, %cst_188 {dimension_numbers = #tpu.dot_dimension_numbers<[1], [0], [0], [1], [0, 0, 1, 1], [], []>} : vector<1x128xf32>, vector<128x512xf32>, vector<1x512xf32> -> vector<1x512xf32>
    %495 = arith.addf %492, %494 : vector<1x512xf32>
    %496 = vector.extract_strided_slice %495 {offsets = [0, 0], sizes = [1, 384], strides = [1, 1]} : vector<1x512xf32> to vector<1x384xf32>
    %cst_189 = arith.constant 5.000000e-01 : f32
    %497 = vector.broadcast %cst_189 : f32 to vector<1x384xf32>
    %498 = arith.mulf %497, %496 : vector<1x384xf32>
    %499 = math.tanh %498 : vector<1x384xf32>
    %cst_190 = arith.constant 1.000000e+00 : f32
    %500 = vector.broadcast %cst_190 : f32 to vector<1x384xf32>
    %501 = arith.addf %499, %500 : vector<1x384xf32>
    %cst_191 = arith.constant 5.000000e-01 : f32
    %502 = vector.broadcast %cst_191 : f32 to vector<1x384xf32>
    %503 = arith.mulf %502, %501 : vector<1x384xf32>
    %504 = vector.extract_strided_slice %503 {offsets = [0, 0], sizes = [1, 128], strides = [1, 1]} : vector<1x384xf32> to vector<1x128xf32>
    %505 = vector.extract_strided_slice %503 {offsets = [0, 128], sizes = [1, 128], strides = [1, 1]} : vector<1x384xf32> to vector<1x128xf32>
    %506 = vector.extract_strided_slice %503 {offsets = [0, 256], sizes = [1, 128], strides = [1, 1]} : vector<1x384xf32> to vector<1x128xf32>
    %507 = vector.extract_strided_slice %495 {offsets = [0, 384], sizes = [1, 128], strides = [1, 1]} : vector<1x512xf32> to vector<1x128xf32>
    %508 = math.tanh %507 : vector<1x128xf32>
    %509 = arith.mulf %505, %396 : vector<1x128xf32>
    %510 = arith.mulf %504, %508 : vector<1x128xf32>
    %511 = arith.addf %509, %510 : vector<1x128xf32>
    %512 = math.tanh %511 : vector<1x128xf32>
    %513 = arith.mulf %506, %512 : vector<1x128xf32>
    %cst_192 = arith.constant 5.000000e-01 : f32
    %514 = vector.broadcast %cst_192 : f32 to vector<1x128xf32>
    %515 = arith.mulf %514, %460 : vector<1x128xf32>
    %516 = math.tanh %515 : vector<1x128xf32>
    %cst_193 = arith.constant 1.000000e+00 : f32
    %517 = vector.broadcast %cst_193 : f32 to vector<1x128xf32>
    %518 = arith.addf %516, %517 : vector<1x128xf32>
    %cst_194 = arith.constant 5.000000e-01 : f32
    %519 = vector.broadcast %cst_194 : f32 to vector<1x128xf32>
    %520 = arith.mulf %519, %518 : vector<1x128xf32>
    %c0_195 = arith.constant 0 : index
    %c0_196 = arith.constant 0 : index
    %521 = vector.load %arg10[%c0_195, %c0_196] : memref<128x512xf32, #tpu.memory_space<vmem>>, vector<128x512xf32>
    %cst_197 = arith.constant dense<0.000000e+00> : vector<1x512xf32>
    %522 = tpu.matmul %520, %521, %cst_197 {dimension_numbers = #tpu.dot_dimension_numbers<[1], [0], [0], [1], [0, 0, 1, 1], [], []>} : vector<1x128xf32>, vector<128x512xf32>, vector<1x512xf32> -> vector<1x512xf32>
    %523 = arith.addf %522, %3 : vector<1x512xf32>
    %c0_198 = arith.constant 0 : index
    %c0_199 = arith.constant 0 : index
    %524 = vector.load %arg11[%c0_198, %c0_199] : memref<128x512xf32, #tpu.memory_space<vmem>>, vector<128x512xf32>
    %cst_200 = arith.constant dense<0.000000e+00> : vector<1x512xf32>
    %525 = tpu.matmul %429, %524, %cst_200 {dimension_numbers = #tpu.dot_dimension_numbers<[1], [0], [0], [1], [0, 0, 1, 1], [], []>} : vector<1x128xf32>, vector<128x512xf32>, vector<1x512xf32> -> vector<1x512xf32>
    %526 = arith.addf %523, %525 : vector<1x512xf32>
    %527 = vector.extract_strided_slice %526 {offsets = [0, 0], sizes = [1, 384], strides = [1, 1]} : vector<1x512xf32> to vector<1x384xf32>
    %cst_201 = arith.constant 5.000000e-01 : f32
    %528 = vector.broadcast %cst_201 : f32 to vector<1x384xf32>
    %529 = arith.mulf %528, %527 : vector<1x384xf32>
    %530 = math.tanh %529 : vector<1x384xf32>
    %cst_202 = arith.constant 1.000000e+00 : f32
    %531 = vector.broadcast %cst_202 : f32 to vector<1x384xf32>
    %532 = arith.addf %530, %531 : vector<1x384xf32>
    %cst_203 = arith.constant 5.000000e-01 : f32
    %533 = vector.broadcast %cst_203 : f32 to vector<1x384xf32>
    %534 = arith.mulf %533, %532 : vector<1x384xf32>
    %535 = vector.extract_strided_slice %534 {offsets = [0, 0], sizes = [1, 128], strides = [1, 1]} : vector<1x384xf32> to vector<1x128xf32>
    %536 = vector.extract_strided_slice %534 {offsets = [0, 128], sizes = [1, 128], strides = [1, 1]} : vector<1x384xf32> to vector<1x128xf32>
    %537 = vector.extract_strided_slice %534 {offsets = [0, 256], sizes = [1, 128], strides = [1, 1]} : vector<1x384xf32> to vector<1x128xf32>
    %538 = vector.extract_strided_slice %526 {offsets = [0, 384], sizes = [1, 128], strides = [1, 1]} : vector<1x512xf32> to vector<1x128xf32>
    %539 = math.tanh %538 : vector<1x128xf32>
    %540 = arith.mulf %536, %427 : vector<1x128xf32>
    %541 = arith.mulf %535, %539 : vector<1x128xf32>
    %542 = arith.addf %540, %541 : vector<1x128xf32>
    %543 = math.tanh %542 : vector<1x128xf32>
    %544 = arith.mulf %537, %543 : vector<1x128xf32>
    %cst_204 = arith.constant 5.000000e-01 : f32
    %545 = vector.broadcast %cst_204 : f32 to vector<1x128xf32>
    %546 = arith.mulf %545, %491 : vector<1x128xf32>
    %547 = math.tanh %546 : vector<1x128xf32>
    %cst_205 = arith.constant 1.000000e+00 : f32
    %548 = vector.broadcast %cst_205 : f32 to vector<1x128xf32>
    %549 = arith.addf %547, %548 : vector<1x128xf32>
    %cst_206 = arith.constant 5.000000e-01 : f32
    %550 = vector.broadcast %cst_206 : f32 to vector<1x128xf32>
    %551 = arith.mulf %550, %549 : vector<1x128xf32>
    %c0_207 = arith.constant 0 : index
    %c0_208 = arith.constant 0 : index
    %552 = vector.load %arg7[%c0_207, %c0_208] : memref<128x512xf32, #tpu.memory_space<vmem>>, vector<128x512xf32>
    %cst_209 = arith.constant dense<0.000000e+00> : vector<1x512xf32>
    %553 = tpu.matmul %551, %552, %cst_209 {dimension_numbers = #tpu.dot_dimension_numbers<[1], [0], [0], [1], [0, 0, 1, 1], [], []>} : vector<1x128xf32>, vector<128x512xf32>, vector<1x512xf32> -> vector<1x512xf32>
    %554 = arith.addf %553, %2 : vector<1x512xf32>
    %c0_210 = arith.constant 0 : index
    %c0_211 = arith.constant 0 : index
    %555 = vector.load %arg8[%c0_210, %c0_211] : memref<128x512xf32, #tpu.memory_space<vmem>>, vector<128x512xf32>
    %cst_212 = arith.constant dense<0.000000e+00> : vector<1x512xf32>
    %556 = tpu.matmul %460, %555, %cst_212 {dimension_numbers = #tpu.dot_dimension_numbers<[1], [0], [0], [1], [0, 0, 1, 1], [], []>} : vector<1x128xf32>, vector<128x512xf32>, vector<1x512xf32> -> vector<1x512xf32>
    %557 = arith.addf %554, %556 : vector<1x512xf32>
    %558 = vector.extract_strided_slice %557 {offsets = [0, 0], sizes = [1, 384], strides = [1, 1]} : vector<1x512xf32> to vector<1x384xf32>
    %cst_213 = arith.constant 5.000000e-01 : f32
    %559 = vector.broadcast %cst_213 : f32 to vector<1x384xf32>
    %560 = arith.mulf %559, %558 : vector<1x384xf32>
    %561 = math.tanh %560 : vector<1x384xf32>
    %cst_214 = arith.constant 1.000000e+00 : f32
    %562 = vector.broadcast %cst_214 : f32 to vector<1x384xf32>
    %563 = arith.addf %561, %562 : vector<1x384xf32>
    %cst_215 = arith.constant 5.000000e-01 : f32
    %564 = vector.broadcast %cst_215 : f32 to vector<1x384xf32>
    %565 = arith.mulf %564, %563 : vector<1x384xf32>
    %566 = vector.extract_strided_slice %565 {offsets = [0, 0], sizes = [1, 128], strides = [1, 1]} : vector<1x384xf32> to vector<1x128xf32>
    %567 = vector.extract_strided_slice %565 {offsets = [0, 128], sizes = [1, 128], strides = [1, 1]} : vector<1x384xf32> to vector<1x128xf32>
    %568 = vector.extract_strided_slice %565 {offsets = [0, 256], sizes = [1, 128], strides = [1, 1]} : vector<1x384xf32> to vector<1x128xf32>
    %569 = vector.extract_strided_slice %557 {offsets = [0, 384], sizes = [1, 128], strides = [1, 1]} : vector<1x512xf32> to vector<1x128xf32>
    %570 = math.tanh %569 : vector<1x128xf32>
    %571 = arith.mulf %567, %458 : vector<1x128xf32>
    %572 = arith.mulf %566, %570 : vector<1x128xf32>
    %573 = arith.addf %571, %572 : vector<1x128xf32>
    %574 = math.tanh %573 : vector<1x128xf32>
    %575 = arith.mulf %568, %574 : vector<1x128xf32>
    %cst_216 = arith.constant 5.000000e-01 : f32
    %576 = vector.broadcast %cst_216 : f32 to vector<1x128xf32>
    %577 = arith.mulf %576, %513 : vector<1x128xf32>
    %578 = math.tanh %577 : vector<1x128xf32>
    %cst_217 = arith.constant 1.000000e+00 : f32
    %579 = vector.broadcast %cst_217 : f32 to vector<1x128xf32>
    %580 = arith.addf %578, %579 : vector<1x128xf32>
    %cst_218 = arith.constant 5.000000e-01 : f32
    %581 = vector.broadcast %cst_218 : f32 to vector<1x128xf32>
    %582 = arith.mulf %581, %580 : vector<1x128xf32>
    %c0_219 = arith.constant 0 : index
    %c0_220 = arith.constant 0 : index
    %583 = vector.load %arg4[%c0_219, %c0_220] : memref<128x512xf32, #tpu.memory_space<vmem>>, vector<128x512xf32>
    %cst_221 = arith.constant dense<0.000000e+00> : vector<1x512xf32>
    %584 = tpu.matmul %582, %583, %cst_221 {dimension_numbers = #tpu.dot_dimension_numbers<[1], [0], [0], [1], [0, 0, 1, 1], [], []>} : vector<1x128xf32>, vector<128x512xf32>, vector<1x512xf32> -> vector<1x512xf32>
    %585 = arith.addf %584, %1 : vector<1x512xf32>
    %c0_222 = arith.constant 0 : index
    %c0_223 = arith.constant 0 : index
    %586 = vector.load %arg5[%c0_222, %c0_223] : memref<128x512xf32, #tpu.memory_space<vmem>>, vector<128x512xf32>
    %cst_224 = arith.constant dense<0.000000e+00> : vector<1x512xf32>
    %587 = tpu.matmul %491, %586, %cst_224 {dimension_numbers = #tpu.dot_dimension_numbers<[1], [0], [0], [1], [0, 0, 1, 1], [], []>} : vector<1x128xf32>, vector<128x512xf32>, vector<1x512xf32> -> vector<1x512xf32>
    %588 = arith.addf %585, %587 : vector<1x512xf32>
    %589 = vector.extract_strided_slice %588 {offsets = [0, 0], sizes = [1, 384], strides = [1, 1]} : vector<1x512xf32> to vector<1x384xf32>
    %cst_225 = arith.constant 5.000000e-01 : f32
    %590 = vector.broadcast %cst_225 : f32 to vector<1x384xf32>
    %591 = arith.mulf %590, %589 : vector<1x384xf32>
    %592 = math.tanh %591 : vector<1x384xf32>
    %cst_226 = arith.constant 1.000000e+00 : f32
    %593 = vector.broadcast %cst_226 : f32 to vector<1x384xf32>
    %594 = arith.addf %592, %593 : vector<1x384xf32>
    %cst_227 = arith.constant 5.000000e-01 : f32
    %595 = vector.broadcast %cst_227 : f32 to vector<1x384xf32>
    %596 = arith.mulf %595, %594 : vector<1x384xf32>
    %597 = vector.extract_strided_slice %596 {offsets = [0, 0], sizes = [1, 128], strides = [1, 1]} : vector<1x384xf32> to vector<1x128xf32>
    %598 = vector.extract_strided_slice %596 {offsets = [0, 128], sizes = [1, 128], strides = [1, 1]} : vector<1x384xf32> to vector<1x128xf32>
    %599 = vector.extract_strided_slice %596 {offsets = [0, 256], sizes = [1, 128], strides = [1, 1]} : vector<1x384xf32> to vector<1x128xf32>
    %600 = vector.extract_strided_slice %588 {offsets = [0, 384], sizes = [1, 128], strides = [1, 1]} : vector<1x512xf32> to vector<1x128xf32>
    %601 = math.tanh %600 : vector<1x128xf32>
    %602 = arith.mulf %598, %489 : vector<1x128xf32>
    %603 = arith.mulf %597, %601 : vector<1x128xf32>
    %604 = arith.addf %602, %603 : vector<1x128xf32>
    %605 = math.tanh %604 : vector<1x128xf32>
    %606 = arith.mulf %599, %605 : vector<1x128xf32>
    %607 = vector.extract_strided_slice %8 {offsets = [6, 0], sizes = [1, 512], strides = [1, 1]} : vector<8x512xf32> to vector<1x512xf32>
    %c0_228 = arith.constant 0 : index
    %c0_229 = arith.constant 0 : index
    %608 = vector.load %arg2[%c0_228, %c0_229] : memref<128x512xf32, #tpu.memory_space<vmem>>, vector<128x512xf32>
    %cst_230 = arith.constant dense<0.000000e+00> : vector<1x512xf32>
    %609 = tpu.matmul %513, %608, %cst_230 {dimension_numbers = #tpu.dot_dimension_numbers<[1], [0], [0], [1], [0, 0, 1, 1], [], []>} : vector<1x128xf32>, vector<128x512xf32>, vector<1x512xf32> -> vector<1x512xf32>
    %610 = arith.addf %607, %609 : vector<1x512xf32>
    %611 = vector.extract_strided_slice %610 {offsets = [0, 0], sizes = [1, 384], strides = [1, 1]} : vector<1x512xf32> to vector<1x384xf32>
    %cst_231 = arith.constant 5.000000e-01 : f32
    %612 = vector.broadcast %cst_231 : f32 to vector<1x384xf32>
    %613 = arith.mulf %612, %611 : vector<1x384xf32>
    %614 = math.tanh %613 : vector<1x384xf32>
    %cst_232 = arith.constant 1.000000e+00 : f32
    %615 = vector.broadcast %cst_232 : f32 to vector<1x384xf32>
    %616 = arith.addf %614, %615 : vector<1x384xf32>
    %cst_233 = arith.constant 5.000000e-01 : f32
    %617 = vector.broadcast %cst_233 : f32 to vector<1x384xf32>
    %618 = arith.mulf %617, %616 : vector<1x384xf32>
    %619 = vector.extract_strided_slice %618 {offsets = [0, 0], sizes = [1, 128], strides = [1, 1]} : vector<1x384xf32> to vector<1x128xf32>
    %620 = vector.extract_strided_slice %618 {offsets = [0, 128], sizes = [1, 128], strides = [1, 1]} : vector<1x384xf32> to vector<1x128xf32>
    %621 = vector.extract_strided_slice %618 {offsets = [0, 256], sizes = [1, 128], strides = [1, 1]} : vector<1x384xf32> to vector<1x128xf32>
    %622 = vector.extract_strided_slice %610 {offsets = [0, 384], sizes = [1, 128], strides = [1, 1]} : vector<1x512xf32> to vector<1x128xf32>
    %623 = math.tanh %622 : vector<1x128xf32>
    %624 = arith.mulf %620, %511 : vector<1x128xf32>
    %625 = arith.mulf %619, %623 : vector<1x128xf32>
    %626 = arith.addf %624, %625 : vector<1x128xf32>
    %627 = math.tanh %626 : vector<1x128xf32>
    %628 = arith.mulf %621, %627 : vector<1x128xf32>
    %cst_234 = arith.constant 5.000000e-01 : f32
    %629 = vector.broadcast %cst_234 : f32 to vector<1x128xf32>
    %630 = arith.mulf %629, %575 : vector<1x128xf32>
    %631 = math.tanh %630 : vector<1x128xf32>
    %cst_235 = arith.constant 1.000000e+00 : f32
    %632 = vector.broadcast %cst_235 : f32 to vector<1x128xf32>
    %633 = arith.addf %631, %632 : vector<1x128xf32>
    %cst_236 = arith.constant 5.000000e-01 : f32
    %634 = vector.broadcast %cst_236 : f32 to vector<1x128xf32>
    %635 = arith.mulf %634, %633 : vector<1x128xf32>
    %c0_237 = arith.constant 0 : index
    %c0_238 = arith.constant 0 : index
    %636 = vector.load %arg10[%c0_237, %c0_238] : memref<128x512xf32, #tpu.memory_space<vmem>>, vector<128x512xf32>
    %cst_239 = arith.constant dense<0.000000e+00> : vector<1x512xf32>
    %637 = tpu.matmul %635, %636, %cst_239 {dimension_numbers = #tpu.dot_dimension_numbers<[1], [0], [0], [1], [0, 0, 1, 1], [], []>} : vector<1x128xf32>, vector<128x512xf32>, vector<1x512xf32> -> vector<1x512xf32>
    %638 = arith.addf %637, %3 : vector<1x512xf32>
    %c0_240 = arith.constant 0 : index
    %c0_241 = arith.constant 0 : index
    %639 = vector.load %arg11[%c0_240, %c0_241] : memref<128x512xf32, #tpu.memory_space<vmem>>, vector<128x512xf32>
    %cst_242 = arith.constant dense<0.000000e+00> : vector<1x512xf32>
    %640 = tpu.matmul %544, %639, %cst_242 {dimension_numbers = #tpu.dot_dimension_numbers<[1], [0], [0], [1], [0, 0, 1, 1], [], []>} : vector<1x128xf32>, vector<128x512xf32>, vector<1x512xf32> -> vector<1x512xf32>
    %641 = arith.addf %638, %640 : vector<1x512xf32>
    %642 = vector.extract_strided_slice %641 {offsets = [0, 0], sizes = [1, 384], strides = [1, 1]} : vector<1x512xf32> to vector<1x384xf32>
    %cst_243 = arith.constant 5.000000e-01 : f32
    %643 = vector.broadcast %cst_243 : f32 to vector<1x384xf32>
    %644 = arith.mulf %643, %642 : vector<1x384xf32>
    %645 = math.tanh %644 : vector<1x384xf32>
    %cst_244 = arith.constant 1.000000e+00 : f32
    %646 = vector.broadcast %cst_244 : f32 to vector<1x384xf32>
    %647 = arith.addf %645, %646 : vector<1x384xf32>
    %cst_245 = arith.constant 5.000000e-01 : f32
    %648 = vector.broadcast %cst_245 : f32 to vector<1x384xf32>
    %649 = arith.mulf %648, %647 : vector<1x384xf32>
    %650 = vector.extract_strided_slice %649 {offsets = [0, 0], sizes = [1, 128], strides = [1, 1]} : vector<1x384xf32> to vector<1x128xf32>
    %651 = vector.extract_strided_slice %649 {offsets = [0, 128], sizes = [1, 128], strides = [1, 1]} : vector<1x384xf32> to vector<1x128xf32>
    %652 = vector.extract_strided_slice %649 {offsets = [0, 256], sizes = [1, 128], strides = [1, 1]} : vector<1x384xf32> to vector<1x128xf32>
    %653 = vector.extract_strided_slice %641 {offsets = [0, 384], sizes = [1, 128], strides = [1, 1]} : vector<1x512xf32> to vector<1x128xf32>
    %654 = math.tanh %653 : vector<1x128xf32>
    %655 = arith.mulf %651, %542 : vector<1x128xf32>
    %656 = arith.mulf %650, %654 : vector<1x128xf32>
    %657 = arith.addf %655, %656 : vector<1x128xf32>
    %658 = math.tanh %657 : vector<1x128xf32>
    %659 = arith.mulf %652, %658 : vector<1x128xf32>
    %cst_246 = arith.constant 5.000000e-01 : f32
    %660 = vector.broadcast %cst_246 : f32 to vector<1x128xf32>
    %661 = arith.mulf %660, %606 : vector<1x128xf32>
    %662 = math.tanh %661 : vector<1x128xf32>
    %cst_247 = arith.constant 1.000000e+00 : f32
    %663 = vector.broadcast %cst_247 : f32 to vector<1x128xf32>
    %664 = arith.addf %662, %663 : vector<1x128xf32>
    %cst_248 = arith.constant 5.000000e-01 : f32
    %665 = vector.broadcast %cst_248 : f32 to vector<1x128xf32>
    %666 = arith.mulf %665, %664 : vector<1x128xf32>
    %c0_249 = arith.constant 0 : index
    %c0_250 = arith.constant 0 : index
    %667 = vector.load %arg7[%c0_249, %c0_250] : memref<128x512xf32, #tpu.memory_space<vmem>>, vector<128x512xf32>
    %cst_251 = arith.constant dense<0.000000e+00> : vector<1x512xf32>
    %668 = tpu.matmul %666, %667, %cst_251 {dimension_numbers = #tpu.dot_dimension_numbers<[1], [0], [0], [1], [0, 0, 1, 1], [], []>} : vector<1x128xf32>, vector<128x512xf32>, vector<1x512xf32> -> vector<1x512xf32>
    %669 = arith.addf %668, %2 : vector<1x512xf32>
    %c0_252 = arith.constant 0 : index
    %c0_253 = arith.constant 0 : index
    %670 = vector.load %arg8[%c0_252, %c0_253] : memref<128x512xf32, #tpu.memory_space<vmem>>, vector<128x512xf32>
    %cst_254 = arith.constant dense<0.000000e+00> : vector<1x512xf32>
    %671 = tpu.matmul %575, %670, %cst_254 {dimension_numbers = #tpu.dot_dimension_numbers<[1], [0], [0], [1], [0, 0, 1, 1], [], []>} : vector<1x128xf32>, vector<128x512xf32>, vector<1x512xf32> -> vector<1x512xf32>
    %672 = arith.addf %669, %671 : vector<1x512xf32>
    %673 = vector.extract_strided_slice %672 {offsets = [0, 0], sizes = [1, 384], strides = [1, 1]} : vector<1x512xf32> to vector<1x384xf32>
    %cst_255 = arith.constant 5.000000e-01 : f32
    %674 = vector.broadcast %cst_255 : f32 to vector<1x384xf32>
    %675 = arith.mulf %674, %673 : vector<1x384xf32>
    %676 = math.tanh %675 : vector<1x384xf32>
    %cst_256 = arith.constant 1.000000e+00 : f32
    %677 = vector.broadcast %cst_256 : f32 to vector<1x384xf32>
    %678 = arith.addf %676, %677 : vector<1x384xf32>
    %cst_257 = arith.constant 5.000000e-01 : f32
    %679 = vector.broadcast %cst_257 : f32 to vector<1x384xf32>
    %680 = arith.mulf %679, %678 : vector<1x384xf32>
    %681 = vector.extract_strided_slice %680 {offsets = [0, 0], sizes = [1, 128], strides = [1, 1]} : vector<1x384xf32> to vector<1x128xf32>
    %682 = vector.extract_strided_slice %680 {offsets = [0, 128], sizes = [1, 128], strides = [1, 1]} : vector<1x384xf32> to vector<1x128xf32>
    %683 = vector.extract_strided_slice %680 {offsets = [0, 256], sizes = [1, 128], strides = [1, 1]} : vector<1x384xf32> to vector<1x128xf32>
    %684 = vector.extract_strided_slice %672 {offsets = [0, 384], sizes = [1, 128], strides = [1, 1]} : vector<1x512xf32> to vector<1x128xf32>
    %685 = math.tanh %684 : vector<1x128xf32>
    %686 = arith.mulf %682, %573 : vector<1x128xf32>
    %687 = arith.mulf %681, %685 : vector<1x128xf32>
    %688 = arith.addf %686, %687 : vector<1x128xf32>
    %689 = math.tanh %688 : vector<1x128xf32>
    %690 = arith.mulf %683, %689 : vector<1x128xf32>
    %cst_258 = arith.constant 5.000000e-01 : f32
    %691 = vector.broadcast %cst_258 : f32 to vector<1x128xf32>
    %692 = arith.mulf %691, %628 : vector<1x128xf32>
    %693 = math.tanh %692 : vector<1x128xf32>
    %cst_259 = arith.constant 1.000000e+00 : f32
    %694 = vector.broadcast %cst_259 : f32 to vector<1x128xf32>
    %695 = arith.addf %693, %694 : vector<1x128xf32>
    %cst_260 = arith.constant 5.000000e-01 : f32
    %696 = vector.broadcast %cst_260 : f32 to vector<1x128xf32>
    %697 = arith.mulf %696, %695 : vector<1x128xf32>
    %c0_261 = arith.constant 0 : index
    %c0_262 = arith.constant 0 : index
    %698 = vector.load %arg4[%c0_261, %c0_262] : memref<128x512xf32, #tpu.memory_space<vmem>>, vector<128x512xf32>
    %cst_263 = arith.constant dense<0.000000e+00> : vector<1x512xf32>
    %699 = tpu.matmul %697, %698, %cst_263 {dimension_numbers = #tpu.dot_dimension_numbers<[1], [0], [0], [1], [0, 0, 1, 1], [], []>} : vector<1x128xf32>, vector<128x512xf32>, vector<1x512xf32> -> vector<1x512xf32>
    %700 = arith.addf %699, %1 : vector<1x512xf32>
    %c0_264 = arith.constant 0 : index
    %c0_265 = arith.constant 0 : index
    %701 = vector.load %arg5[%c0_264, %c0_265] : memref<128x512xf32, #tpu.memory_space<vmem>>, vector<128x512xf32>
    %cst_266 = arith.constant dense<0.000000e+00> : vector<1x512xf32>
    %702 = tpu.matmul %606, %701, %cst_266 {dimension_numbers = #tpu.dot_dimension_numbers<[1], [0], [0], [1], [0, 0, 1, 1], [], []>} : vector<1x128xf32>, vector<128x512xf32>, vector<1x512xf32> -> vector<1x512xf32>
    %703 = arith.addf %700, %702 : vector<1x512xf32>
    %704 = vector.extract_strided_slice %703 {offsets = [0, 0], sizes = [1, 384], strides = [1, 1]} : vector<1x512xf32> to vector<1x384xf32>
    %cst_267 = arith.constant 5.000000e-01 : f32
    %705 = vector.broadcast %cst_267 : f32 to vector<1x384xf32>
    %706 = arith.mulf %705, %704 : vector<1x384xf32>
    %707 = math.tanh %706 : vector<1x384xf32>
    %cst_268 = arith.constant 1.000000e+00 : f32
    %708 = vector.broadcast %cst_268 : f32 to vector<1x384xf32>
    %709 = arith.addf %707, %708 : vector<1x384xf32>
    %cst_269 = arith.constant 5.000000e-01 : f32
    %710 = vector.broadcast %cst_269 : f32 to vector<1x384xf32>
    %711 = arith.mulf %710, %709 : vector<1x384xf32>
    %712 = vector.extract_strided_slice %711 {offsets = [0, 0], sizes = [1, 128], strides = [1, 1]} : vector<1x384xf32> to vector<1x128xf32>
    %713 = vector.extract_strided_slice %711 {offsets = [0, 128], sizes = [1, 128], strides = [1, 1]} : vector<1x384xf32> to vector<1x128xf32>
    %714 = vector.extract_strided_slice %711 {offsets = [0, 256], sizes = [1, 128], strides = [1, 1]} : vector<1x384xf32> to vector<1x128xf32>
    %715 = vector.extract_strided_slice %703 {offsets = [0, 384], sizes = [1, 128], strides = [1, 1]} : vector<1x512xf32> to vector<1x128xf32>
    %716 = math.tanh %715 : vector<1x128xf32>
    %717 = arith.mulf %713, %604 : vector<1x128xf32>
    %718 = arith.mulf %712, %716 : vector<1x128xf32>
    %719 = arith.addf %717, %718 : vector<1x128xf32>
    %720 = math.tanh %719 : vector<1x128xf32>
    %721 = arith.mulf %714, %720 : vector<1x128xf32>
    %722 = vector.extract_strided_slice %8 {offsets = [7, 0], sizes = [1, 512], strides = [1, 1]} : vector<8x512xf32> to vector<1x512xf32>
    %c0_270 = arith.constant 0 : index
    %c0_271 = arith.constant 0 : index
    %723 = vector.load %arg2[%c0_270, %c0_271] : memref<128x512xf32, #tpu.memory_space<vmem>>, vector<128x512xf32>
    %cst_272 = arith.constant dense<0.000000e+00> : vector<1x512xf32>
    %724 = tpu.matmul %628, %723, %cst_272 {dimension_numbers = #tpu.dot_dimension_numbers<[1], [0], [0], [1], [0, 0, 1, 1], [], []>} : vector<1x128xf32>, vector<128x512xf32>, vector<1x512xf32> -> vector<1x512xf32>
    %725 = arith.addf %722, %724 : vector<1x512xf32>
    %726 = vector.extract_strided_slice %725 {offsets = [0, 0], sizes = [1, 384], strides = [1, 1]} : vector<1x512xf32> to vector<1x384xf32>
    %cst_273 = arith.constant 5.000000e-01 : f32
    %727 = vector.broadcast %cst_273 : f32 to vector<1x384xf32>
    %728 = arith.mulf %727, %726 : vector<1x384xf32>
    %729 = math.tanh %728 : vector<1x384xf32>
    %cst_274 = arith.constant 1.000000e+00 : f32
    %730 = vector.broadcast %cst_274 : f32 to vector<1x384xf32>
    %731 = arith.addf %729, %730 : vector<1x384xf32>
    %cst_275 = arith.constant 5.000000e-01 : f32
    %732 = vector.broadcast %cst_275 : f32 to vector<1x384xf32>
    %733 = arith.mulf %732, %731 : vector<1x384xf32>
    %734 = vector.extract_strided_slice %733 {offsets = [0, 0], sizes = [1, 128], strides = [1, 1]} : vector<1x384xf32> to vector<1x128xf32>
    %735 = vector.extract_strided_slice %733 {offsets = [0, 128], sizes = [1, 128], strides = [1, 1]} : vector<1x384xf32> to vector<1x128xf32>
    %736 = vector.extract_strided_slice %733 {offsets = [0, 256], sizes = [1, 128], strides = [1, 1]} : vector<1x384xf32> to vector<1x128xf32>
    %737 = vector.extract_strided_slice %725 {offsets = [0, 384], sizes = [1, 128], strides = [1, 1]} : vector<1x512xf32> to vector<1x128xf32>
    %738 = math.tanh %737 : vector<1x128xf32>
    %739 = arith.mulf %735, %626 : vector<1x128xf32>
    %740 = arith.mulf %734, %738 : vector<1x128xf32>
    %741 = arith.addf %739, %740 : vector<1x128xf32>
    %742 = math.tanh %741 : vector<1x128xf32>
    %743 = arith.mulf %736, %742 : vector<1x128xf32>
    %cst_276 = arith.constant 5.000000e-01 : f32
    %744 = vector.broadcast %cst_276 : f32 to vector<1x128xf32>
    %745 = arith.mulf %744, %690 : vector<1x128xf32>
    %746 = math.tanh %745 : vector<1x128xf32>
    %cst_277 = arith.constant 1.000000e+00 : f32
    %747 = vector.broadcast %cst_277 : f32 to vector<1x128xf32>
    %748 = arith.addf %746, %747 : vector<1x128xf32>
    %cst_278 = arith.constant 5.000000e-01 : f32
    %749 = vector.broadcast %cst_278 : f32 to vector<1x128xf32>
    %750 = arith.mulf %749, %748 : vector<1x128xf32>
    %c0_279 = arith.constant 0 : index
    %c0_280 = arith.constant 0 : index
    %751 = vector.load %arg10[%c0_279, %c0_280] : memref<128x512xf32, #tpu.memory_space<vmem>>, vector<128x512xf32>
    %cst_281 = arith.constant dense<0.000000e+00> : vector<1x512xf32>
    %752 = tpu.matmul %750, %751, %cst_281 {dimension_numbers = #tpu.dot_dimension_numbers<[1], [0], [0], [1], [0, 0, 1, 1], [], []>} : vector<1x128xf32>, vector<128x512xf32>, vector<1x512xf32> -> vector<1x512xf32>
    %753 = arith.addf %752, %3 : vector<1x512xf32>
    %c0_282 = arith.constant 0 : index
    %c0_283 = arith.constant 0 : index
    %754 = vector.load %arg11[%c0_282, %c0_283] : memref<128x512xf32, #tpu.memory_space<vmem>>, vector<128x512xf32>
    %cst_284 = arith.constant dense<0.000000e+00> : vector<1x512xf32>
    %755 = tpu.matmul %659, %754, %cst_284 {dimension_numbers = #tpu.dot_dimension_numbers<[1], [0], [0], [1], [0, 0, 1, 1], [], []>} : vector<1x128xf32>, vector<128x512xf32>, vector<1x512xf32> -> vector<1x512xf32>
    %756 = arith.addf %753, %755 : vector<1x512xf32>
    %757 = vector.extract_strided_slice %756 {offsets = [0, 0], sizes = [1, 384], strides = [1, 1]} : vector<1x512xf32> to vector<1x384xf32>
    %cst_285 = arith.constant 5.000000e-01 : f32
    %758 = vector.broadcast %cst_285 : f32 to vector<1x384xf32>
    %759 = arith.mulf %758, %757 : vector<1x384xf32>
    %760 = math.tanh %759 : vector<1x384xf32>
    %cst_286 = arith.constant 1.000000e+00 : f32
    %761 = vector.broadcast %cst_286 : f32 to vector<1x384xf32>
    %762 = arith.addf %760, %761 : vector<1x384xf32>
    %cst_287 = arith.constant 5.000000e-01 : f32
    %763 = vector.broadcast %cst_287 : f32 to vector<1x384xf32>
    %764 = arith.mulf %763, %762 : vector<1x384xf32>
    %765 = vector.extract_strided_slice %764 {offsets = [0, 0], sizes = [1, 128], strides = [1, 1]} : vector<1x384xf32> to vector<1x128xf32>
    %766 = vector.extract_strided_slice %764 {offsets = [0, 128], sizes = [1, 128], strides = [1, 1]} : vector<1x384xf32> to vector<1x128xf32>
    %767 = vector.extract_strided_slice %764 {offsets = [0, 256], sizes = [1, 128], strides = [1, 1]} : vector<1x384xf32> to vector<1x128xf32>
    %768 = vector.extract_strided_slice %756 {offsets = [0, 384], sizes = [1, 128], strides = [1, 1]} : vector<1x512xf32> to vector<1x128xf32>
    %769 = math.tanh %768 : vector<1x128xf32>
    %770 = arith.mulf %766, %657 : vector<1x128xf32>
    %771 = arith.mulf %765, %769 : vector<1x128xf32>
    %772 = arith.addf %770, %771 : vector<1x128xf32>
    %773 = math.tanh %772 : vector<1x128xf32>
    %774 = arith.mulf %767, %773 : vector<1x128xf32>
    %cst_288 = arith.constant 5.000000e-01 : f32
    %775 = vector.broadcast %cst_288 : f32 to vector<1x128xf32>
    %776 = arith.mulf %775, %721 : vector<1x128xf32>
    %777 = math.tanh %776 : vector<1x128xf32>
    %cst_289 = arith.constant 1.000000e+00 : f32
    %778 = vector.broadcast %cst_289 : f32 to vector<1x128xf32>
    %779 = arith.addf %777, %778 : vector<1x128xf32>
    %cst_290 = arith.constant 5.000000e-01 : f32
    %780 = vector.broadcast %cst_290 : f32 to vector<1x128xf32>
    %781 = arith.mulf %780, %779 : vector<1x128xf32>
    %c0_291 = arith.constant 0 : index
    %c0_292 = arith.constant 0 : index
    %782 = vector.load %arg7[%c0_291, %c0_292] : memref<128x512xf32, #tpu.memory_space<vmem>>, vector<128x512xf32>
    %cst_293 = arith.constant dense<0.000000e+00> : vector<1x512xf32>
    %783 = tpu.matmul %781, %782, %cst_293 {dimension_numbers = #tpu.dot_dimension_numbers<[1], [0], [0], [1], [0, 0, 1, 1], [], []>} : vector<1x128xf32>, vector<128x512xf32>, vector<1x512xf32> -> vector<1x512xf32>
    %784 = arith.addf %783, %2 : vector<1x512xf32>
    %c0_294 = arith.constant 0 : index
    %c0_295 = arith.constant 0 : index
    %785 = vector.load %arg8[%c0_294, %c0_295] : memref<128x512xf32, #tpu.memory_space<vmem>>, vector<128x512xf32>
    %cst_296 = arith.constant dense<0.000000e+00> : vector<1x512xf32>
    %786 = tpu.matmul %690, %785, %cst_296 {dimension_numbers = #tpu.dot_dimension_numbers<[1], [0], [0], [1], [0, 0, 1, 1], [], []>} : vector<1x128xf32>, vector<128x512xf32>, vector<1x512xf32> -> vector<1x512xf32>
    %787 = arith.addf %784, %786 : vector<1x512xf32>
    %788 = vector.extract_strided_slice %787 {offsets = [0, 0], sizes = [1, 384], strides = [1, 1]} : vector<1x512xf32> to vector<1x384xf32>
    %cst_297 = arith.constant 5.000000e-01 : f32
    %789 = vector.broadcast %cst_297 : f32 to vector<1x384xf32>
    %790 = arith.mulf %789, %788 : vector<1x384xf32>
    %791 = math.tanh %790 : vector<1x384xf32>
    %cst_298 = arith.constant 1.000000e+00 : f32
    %792 = vector.broadcast %cst_298 : f32 to vector<1x384xf32>
    %793 = arith.addf %791, %792 : vector<1x384xf32>
    %cst_299 = arith.constant 5.000000e-01 : f32
    %794 = vector.broadcast %cst_299 : f32 to vector<1x384xf32>
    %795 = arith.mulf %794, %793 : vector<1x384xf32>
    %796 = vector.extract_strided_slice %795 {offsets = [0, 0], sizes = [1, 128], strides = [1, 1]} : vector<1x384xf32> to vector<1x128xf32>
    %797 = vector.extract_strided_slice %795 {offsets = [0, 128], sizes = [1, 128], strides = [1, 1]} : vector<1x384xf32> to vector<1x128xf32>
    %798 = vector.extract_strided_slice %795 {offsets = [0, 256], sizes = [1, 128], strides = [1, 1]} : vector<1x384xf32> to vector<1x128xf32>
    %799 = vector.extract_strided_slice %787 {offsets = [0, 384], sizes = [1, 128], strides = [1, 1]} : vector<1x512xf32> to vector<1x128xf32>
    %800 = math.tanh %799 : vector<1x128xf32>
    %801 = arith.mulf %797, %688 : vector<1x128xf32>
    %802 = arith.mulf %796, %800 : vector<1x128xf32>
    %803 = arith.addf %801, %802 : vector<1x128xf32>
    %804 = math.tanh %803 : vector<1x128xf32>
    %805 = arith.mulf %798, %804 : vector<1x128xf32>
    %cst_300 = arith.constant 5.000000e-01 : f32
    %806 = vector.broadcast %cst_300 : f32 to vector<1x128xf32>
    %807 = arith.mulf %806, %743 : vector<1x128xf32>
    %808 = math.tanh %807 : vector<1x128xf32>
    %cst_301 = arith.constant 1.000000e+00 : f32
    %809 = vector.broadcast %cst_301 : f32 to vector<1x128xf32>
    %810 = arith.addf %808, %809 : vector<1x128xf32>
    %cst_302 = arith.constant 5.000000e-01 : f32
    %811 = vector.broadcast %cst_302 : f32 to vector<1x128xf32>
    %812 = arith.mulf %811, %810 : vector<1x128xf32>
    %c0_303 = arith.constant 0 : index
    %c0_304 = arith.constant 0 : index
    %813 = vector.load %arg4[%c0_303, %c0_304] : memref<128x512xf32, #tpu.memory_space<vmem>>, vector<128x512xf32>
    %cst_305 = arith.constant dense<0.000000e+00> : vector<1x512xf32>
    %814 = tpu.matmul %812, %813, %cst_305 {dimension_numbers = #tpu.dot_dimension_numbers<[1], [0], [0], [1], [0, 0, 1, 1], [], []>} : vector<1x128xf32>, vector<128x512xf32>, vector<1x512xf32> -> vector<1x512xf32>
    %815 = arith.addf %814, %1 : vector<1x512xf32>
    %c0_306 = arith.constant 0 : index
    %c0_307 = arith.constant 0 : index
    %816 = vector.load %arg5[%c0_306, %c0_307] : memref<128x512xf32, #tpu.memory_space<vmem>>, vector<128x512xf32>
    %cst_308 = arith.constant dense<0.000000e+00> : vector<1x512xf32>
    %817 = tpu.matmul %721, %816, %cst_308 {dimension_numbers = #tpu.dot_dimension_numbers<[1], [0], [0], [1], [0, 0, 1, 1], [], []>} : vector<1x128xf32>, vector<128x512xf32>, vector<1x512xf32> -> vector<1x512xf32>
    %818 = arith.addf %815, %817 : vector<1x512xf32>
    %819 = vector.extract_strided_slice %818 {offsets = [0, 0], sizes = [1, 384], strides = [1, 1]} : vector<1x512xf32> to vector<1x384xf32>
    %cst_309 = arith.constant 5.000000e-01 : f32
    %820 = vector.broadcast %cst_309 : f32 to vector<1x384xf32>
    %821 = arith.mulf %820, %819 : vector<1x384xf32>
    %822 = math.tanh %821 : vector<1x384xf32>
    %cst_310 = arith.constant 1.000000e+00 : f32
    %823 = vector.broadcast %cst_310 : f32 to vector<1x384xf32>
    %824 = arith.addf %822, %823 : vector<1x384xf32>
    %cst_311 = arith.constant 5.000000e-01 : f32
    %825 = vector.broadcast %cst_311 : f32 to vector<1x384xf32>
    %826 = arith.mulf %825, %824 : vector<1x384xf32>
    %827 = vector.extract_strided_slice %826 {offsets = [0, 0], sizes = [1, 128], strides = [1, 1]} : vector<1x384xf32> to vector<1x128xf32>
    %828 = vector.extract_strided_slice %826 {offsets = [0, 128], sizes = [1, 128], strides = [1, 1]} : vector<1x384xf32> to vector<1x128xf32>
    %829 = vector.extract_strided_slice %826 {offsets = [0, 256], sizes = [1, 128], strides = [1, 1]} : vector<1x384xf32> to vector<1x128xf32>
    %830 = vector.extract_strided_slice %818 {offsets = [0, 384], sizes = [1, 128], strides = [1, 1]} : vector<1x512xf32> to vector<1x128xf32>
    %831 = math.tanh %830 : vector<1x128xf32>
    %832 = arith.mulf %828, %719 : vector<1x128xf32>
    %833 = arith.mulf %827, %831 : vector<1x128xf32>
    %834 = arith.addf %832, %833 : vector<1x128xf32>
    %835 = math.tanh %834 : vector<1x128xf32>
    %836 = arith.mulf %829, %835 : vector<1x128xf32>
    %cst_312 = arith.constant 5.000000e-01 : f32
    %837 = vector.broadcast %cst_312 : f32 to vector<1x128xf32>
    %838 = arith.mulf %837, %805 : vector<1x128xf32>
    %839 = math.tanh %838 : vector<1x128xf32>
    %cst_313 = arith.constant 1.000000e+00 : f32
    %840 = vector.broadcast %cst_313 : f32 to vector<1x128xf32>
    %841 = arith.addf %839, %840 : vector<1x128xf32>
    %cst_314 = arith.constant 5.000000e-01 : f32
    %842 = vector.broadcast %cst_314 : f32 to vector<1x128xf32>
    %843 = arith.mulf %842, %841 : vector<1x128xf32>
    %c0_315 = arith.constant 0 : index
    %c0_316 = arith.constant 0 : index
    %844 = vector.load %arg10[%c0_315, %c0_316] : memref<128x512xf32, #tpu.memory_space<vmem>>, vector<128x512xf32>
    %cst_317 = arith.constant dense<0.000000e+00> : vector<1x512xf32>
    %845 = tpu.matmul %843, %844, %cst_317 {dimension_numbers = #tpu.dot_dimension_numbers<[1], [0], [0], [1], [0, 0, 1, 1], [], []>} : vector<1x128xf32>, vector<128x512xf32>, vector<1x512xf32> -> vector<1x512xf32>
    %846 = arith.addf %845, %3 : vector<1x512xf32>
    %c0_318 = arith.constant 0 : index
    %c0_319 = arith.constant 0 : index
    %847 = vector.load %arg11[%c0_318, %c0_319] : memref<128x512xf32, #tpu.memory_space<vmem>>, vector<128x512xf32>
    %cst_320 = arith.constant dense<0.000000e+00> : vector<1x512xf32>
    %848 = tpu.matmul %774, %847, %cst_320 {dimension_numbers = #tpu.dot_dimension_numbers<[1], [0], [0], [1], [0, 0, 1, 1], [], []>} : vector<1x128xf32>, vector<128x512xf32>, vector<1x512xf32> -> vector<1x512xf32>
    %849 = arith.addf %846, %848 : vector<1x512xf32>
    %850 = vector.extract_strided_slice %849 {offsets = [0, 0], sizes = [1, 384], strides = [1, 1]} : vector<1x512xf32> to vector<1x384xf32>
    %cst_321 = arith.constant 5.000000e-01 : f32
    %851 = vector.broadcast %cst_321 : f32 to vector<1x384xf32>
    %852 = arith.mulf %851, %850 : vector<1x384xf32>
    %853 = math.tanh %852 : vector<1x384xf32>
    %cst_322 = arith.constant 1.000000e+00 : f32
    %854 = vector.broadcast %cst_322 : f32 to vector<1x384xf32>
    %855 = arith.addf %853, %854 : vector<1x384xf32>
    %cst_323 = arith.constant 5.000000e-01 : f32
    %856 = vector.broadcast %cst_323 : f32 to vector<1x384xf32>
    %857 = arith.mulf %856, %855 : vector<1x384xf32>
    %858 = vector.extract_strided_slice %857 {offsets = [0, 0], sizes = [1, 128], strides = [1, 1]} : vector<1x384xf32> to vector<1x128xf32>
    %859 = vector.extract_strided_slice %857 {offsets = [0, 128], sizes = [1, 128], strides = [1, 1]} : vector<1x384xf32> to vector<1x128xf32>
    %860 = vector.extract_strided_slice %857 {offsets = [0, 256], sizes = [1, 128], strides = [1, 1]} : vector<1x384xf32> to vector<1x128xf32>
    %861 = vector.extract_strided_slice %849 {offsets = [0, 384], sizes = [1, 128], strides = [1, 1]} : vector<1x512xf32> to vector<1x128xf32>
    %862 = math.tanh %861 : vector<1x128xf32>
    %863 = arith.mulf %859, %772 : vector<1x128xf32>
    %864 = arith.mulf %858, %862 : vector<1x128xf32>
    %865 = arith.addf %863, %864 : vector<1x128xf32>
    %866 = math.tanh %865 : vector<1x128xf32>
    %867 = arith.mulf %860, %866 : vector<1x128xf32>
    %cst_324 = arith.constant 5.000000e-01 : f32
    %868 = vector.broadcast %cst_324 : f32 to vector<1x128xf32>
    %869 = arith.mulf %868, %836 : vector<1x128xf32>
    %870 = math.tanh %869 : vector<1x128xf32>
    %cst_325 = arith.constant 1.000000e+00 : f32
    %871 = vector.broadcast %cst_325 : f32 to vector<1x128xf32>
    %872 = arith.addf %870, %871 : vector<1x128xf32>
    %cst_326 = arith.constant 5.000000e-01 : f32
    %873 = vector.broadcast %cst_326 : f32 to vector<1x128xf32>
    %874 = arith.mulf %873, %872 : vector<1x128xf32>
    %c0_327 = arith.constant 0 : index
    %c0_328 = arith.constant 0 : index
    %875 = vector.load %arg7[%c0_327, %c0_328] : memref<128x512xf32, #tpu.memory_space<vmem>>, vector<128x512xf32>
    %cst_329 = arith.constant dense<0.000000e+00> : vector<1x512xf32>
    %876 = tpu.matmul %874, %875, %cst_329 {dimension_numbers = #tpu.dot_dimension_numbers<[1], [0], [0], [1], [0, 0, 1, 1], [], []>} : vector<1x128xf32>, vector<128x512xf32>, vector<1x512xf32> -> vector<1x512xf32>
    %877 = arith.addf %876, %2 : vector<1x512xf32>
    %c0_330 = arith.constant 0 : index
    %c0_331 = arith.constant 0 : index
    %878 = vector.load %arg8[%c0_330, %c0_331] : memref<128x512xf32, #tpu.memory_space<vmem>>, vector<128x512xf32>
    %cst_332 = arith.constant dense<0.000000e+00> : vector<1x512xf32>
    %879 = tpu.matmul %805, %878, %cst_332 {dimension_numbers = #tpu.dot_dimension_numbers<[1], [0], [0], [1], [0, 0, 1, 1], [], []>} : vector<1x128xf32>, vector<128x512xf32>, vector<1x512xf32> -> vector<1x512xf32>
    %880 = arith.addf %877, %879 : vector<1x512xf32>
    %881 = vector.extract_strided_slice %880 {offsets = [0, 0], sizes = [1, 384], strides = [1, 1]} : vector<1x512xf32> to vector<1x384xf32>
    %cst_333 = arith.constant 5.000000e-01 : f32
    %882 = vector.broadcast %cst_333 : f32 to vector<1x384xf32>
    %883 = arith.mulf %882, %881 : vector<1x384xf32>
    %884 = math.tanh %883 : vector<1x384xf32>
    %cst_334 = arith.constant 1.000000e+00 : f32
    %885 = vector.broadcast %cst_334 : f32 to vector<1x384xf32>
    %886 = arith.addf %884, %885 : vector<1x384xf32>
    %cst_335 = arith.constant 5.000000e-01 : f32
    %887 = vector.broadcast %cst_335 : f32 to vector<1x384xf32>
    %888 = arith.mulf %887, %886 : vector<1x384xf32>
    %889 = vector.extract_strided_slice %888 {offsets = [0, 0], sizes = [1, 128], strides = [1, 1]} : vector<1x384xf32> to vector<1x128xf32>
    %890 = vector.extract_strided_slice %888 {offsets = [0, 128], sizes = [1, 128], strides = [1, 1]} : vector<1x384xf32> to vector<1x128xf32>
    %891 = vector.extract_strided_slice %888 {offsets = [0, 256], sizes = [1, 128], strides = [1, 1]} : vector<1x384xf32> to vector<1x128xf32>
    %892 = vector.extract_strided_slice %880 {offsets = [0, 384], sizes = [1, 128], strides = [1, 1]} : vector<1x512xf32> to vector<1x128xf32>
    %893 = math.tanh %892 : vector<1x128xf32>
    %894 = arith.mulf %890, %803 : vector<1x128xf32>
    %895 = arith.mulf %889, %893 : vector<1x128xf32>
    %896 = arith.addf %894, %895 : vector<1x128xf32>
    %897 = math.tanh %896 : vector<1x128xf32>
    %898 = arith.mulf %891, %897 : vector<1x128xf32>
    %cst_336 = arith.constant 5.000000e-01 : f32
    %899 = vector.broadcast %cst_336 : f32 to vector<1x128xf32>
    %900 = arith.mulf %899, %898 : vector<1x128xf32>
    %901 = math.tanh %900 : vector<1x128xf32>
    %cst_337 = arith.constant 1.000000e+00 : f32
    %902 = vector.broadcast %cst_337 : f32 to vector<1x128xf32>
    %903 = arith.addf %901, %902 : vector<1x128xf32>
    %cst_338 = arith.constant 5.000000e-01 : f32
    %904 = vector.broadcast %cst_338 : f32 to vector<1x128xf32>
    %905 = arith.mulf %904, %903 : vector<1x128xf32>
    %c0_339 = arith.constant 0 : index
    %c0_340 = arith.constant 0 : index
    %906 = vector.load %arg10[%c0_339, %c0_340] : memref<128x512xf32, #tpu.memory_space<vmem>>, vector<128x512xf32>
    %cst_341 = arith.constant dense<0.000000e+00> : vector<1x512xf32>
    %907 = tpu.matmul %905, %906, %cst_341 {dimension_numbers = #tpu.dot_dimension_numbers<[1], [0], [0], [1], [0, 0, 1, 1], [], []>} : vector<1x128xf32>, vector<128x512xf32>, vector<1x512xf32> -> vector<1x512xf32>
    %908 = arith.addf %907, %3 : vector<1x512xf32>
    %c0_342 = arith.constant 0 : index
    %c0_343 = arith.constant 0 : index
    %909 = vector.load %arg11[%c0_342, %c0_343] : memref<128x512xf32, #tpu.memory_space<vmem>>, vector<128x512xf32>
    %cst_344 = arith.constant dense<0.000000e+00> : vector<1x512xf32>
    %910 = tpu.matmul %867, %909, %cst_344 {dimension_numbers = #tpu.dot_dimension_numbers<[1], [0], [0], [1], [0, 0, 1, 1], [], []>} : vector<1x128xf32>, vector<128x512xf32>, vector<1x512xf32> -> vector<1x512xf32>
    %911 = arith.addf %908, %910 : vector<1x512xf32>
    %912 = vector.extract_strided_slice %911 {offsets = [0, 0], sizes = [1, 384], strides = [1, 1]} : vector<1x512xf32> to vector<1x384xf32>
    %cst_345 = arith.constant 5.000000e-01 : f32
    %913 = vector.broadcast %cst_345 : f32 to vector<1x384xf32>
    %914 = arith.mulf %913, %912 : vector<1x384xf32>
    %915 = math.tanh %914 : vector<1x384xf32>
    %cst_346 = arith.constant 1.000000e+00 : f32
    %916 = vector.broadcast %cst_346 : f32 to vector<1x384xf32>
    %917 = arith.addf %915, %916 : vector<1x384xf32>
    %cst_347 = arith.constant 5.000000e-01 : f32
    %918 = vector.broadcast %cst_347 : f32 to vector<1x384xf32>
    %919 = arith.mulf %918, %917 : vector<1x384xf32>
    %920 = vector.extract_strided_slice %919 {offsets = [0, 0], sizes = [1, 128], strides = [1, 1]} : vector<1x384xf32> to vector<1x128xf32>
    %921 = vector.extract_strided_slice %919 {offsets = [0, 128], sizes = [1, 128], strides = [1, 1]} : vector<1x384xf32> to vector<1x128xf32>
    %922 = vector.extract_strided_slice %919 {offsets = [0, 256], sizes = [1, 128], strides = [1, 1]} : vector<1x384xf32> to vector<1x128xf32>
    %923 = vector.extract_strided_slice %911 {offsets = [0, 384], sizes = [1, 128], strides = [1, 1]} : vector<1x512xf32> to vector<1x128xf32>
    %924 = math.tanh %923 : vector<1x128xf32>
    %925 = arith.mulf %921, %865 : vector<1x128xf32>
    %926 = arith.mulf %920, %924 : vector<1x128xf32>
    %927 = arith.addf %925, %926 : vector<1x128xf32>
    %928 = math.tanh %927 : vector<1x128xf32>
    %929 = arith.mulf %922, %928 : vector<1x128xf32>
    %930 = math.tanh %929 : vector<1x128xf32>
    %c0_348 = arith.constant 0 : index
    %c0_349 = arith.constant 0 : index
    %931 = vector.load %arg13[%c0_348, %c0_349] : memref<1x128xf32, #tpu.memory_space<vmem>>, vector<1x128xf32>
    tpu.vector_store %arg13[%c0_348, %c0_349], %930 {strides = array<i32>} : memref<1x128xf32, #tpu.memory_space<vmem>>, vector<1x128xf32>,
    return
  }
}

</mosaic_0001>

<llo_original>
// kernel: encoder_forward.1
$region0: #{encoder_forward.1}
  #allocation0 [shape = 'u32[]', space=smem, size = 0x4, offset = 0x4, fixed_abs, tag = 'smem constant byte address 0x4 - core index']
  #allocation1 [shape = 'u32[144,128]{1,0:T(1,128)}', space=vmem, size = 0x12000, scoped, tag = 'internal scratch']
  %s0 = inlined_call_operand.vmem [shape: f32[8,128], index: 0, kind: input, shape index: {}]
  %s1 = inlined_call_operand.hbm [shape: f32[128,512], index: 1, kind: input, shape index: {}]
  %s2 = inlined_call_operand.hbm [shape: f32[128,512], index: 2, kind: input, shape index: {}]
  %s3 = inlined_call_operand.vmem [shape: f32[1,512], index: 3, kind: input, shape index: {}]
  %s4 = inlined_call_operand.hbm [shape: f32[128,512], index: 4, kind: input, shape index: {}]
  %s5 = inlined_call_operand.hbm [shape: f32[128,512], index: 5, kind: input, shape index: {}]
  %s6 = inlined_call_operand.vmem [shape: f32[1,512], index: 6, kind: input, shape index: {}]
  %s7 = inlined_call_operand.hbm [shape: f32[128,512], index: 7, kind: input, shape index: {}]
  %s8 = inlined_call_operand.hbm [shape: f32[128,512], index: 8, kind: input, shape index: {}]
  %s9 = inlined_call_operand.vmem [shape: f32[1,512], index: 9, kind: input, shape index: {}]
  %s10 = inlined_call_operand.hbm [shape: f32[128,512], index: 10, kind: input, shape index: {}]
  %s11 = inlined_call_operand.hbm [shape: f32[128,512], index: 11, kind: input, shape index: {}]
  %s12 = inlined_call_operand.vmem [shape: f32[1,512], index: 12, kind: input, shape index: {}]
  %s13 = inlined_call_operand.hbm [shape: f32[1,128], index: 13, kind: output, shape index: {}]
  %s14 = sld [smem:[#allocation0]]
  $region94: #{encoder_forward.1} parent=0
    _
  %s16 = ssub.s32 1, %s14
  %s17 = scalar_select 0, %s16, %s14
  $region1: #{encoder_forward.1} parent=0
    #allocation2 [shape = 'u8[262144]{0}', space=vmem, size = 0x40000, scoped, tag = 'input window, operand 1, single buffered']
    #allocation3 [shape = 's32[1]{0}', space=sflag, size = 0x4, scoped, tag = 'scoped memory for encoder_forward.1']
    #allocation4 [shape = 's32[1]{0}', space=sflag, size = 0x4, scoped, tag = 'scoped memory for encoder_forward.1']
    #allocation5 [shape = 'u8[262144]{0}', space=vmem, size = 0x40000, scoped, tag = 'input window, operand 2, single buffered']
    #allocation6 [shape = 's32[1]{0}', space=sflag, size = 0x4, scoped, tag = 'scoped memory for encoder_forward.1']
    #allocation7 [shape = 'u8[262144]{0}', space=vmem, size = 0x40000, scoped, tag = 'input window, operand 4, single buffered']
    #allocation8 [shape = 'u8[262144]{0}', space=vmem, size = 0x40000, scoped, tag = 'input window, operand 5, single buffered']
    #allocation9 [shape = 's32[1]{0}', space=sflag, size = 0x4, scoped, tag = 'scoped memory for encoder_forward.1']
    #allocation10 [shape = 'u8[262144]{0}', space=vmem, size = 0x40000, scoped, tag = 'input window, operand 7, single buffered']
    #allocation11 [shape = 'u8[262144]{0}', space=vmem, size = 0x40000, scoped, tag = 'input window, operand 8, single buffered']
    #allocation12 [shape = 's32[1]{0}', space=sflag, size = 0x4, scoped, tag = 'scoped memory for encoder_forward.1']
    #allocation13 [shape = 'u8[262144]{0}', space=vmem, size = 0x40000, scoped, tag = 'input window, operand 10, single buffered']
    #allocation14 [shape = 'u8[262144]{0}', space=vmem, size = 0x40000, scoped, tag = 'input window, operand 11, single buffered']
    #allocation15 [shape = 's32[1]{0}', space=sflag, size = 0x4, scoped, tag = 'scoped memory for encoder_forward.1']
    #allocation16 [shape = 'u8[512]{0}', space=vmem, size = 0x400, scoped, tag = 'output window, operand 0, single buffered']
    %18 = vsyncpa [#allocation3], 0
    %19 = vsyncpa [#allocation6], 0
    %20 = vsyncpa [#allocation9], 0
    %21 = vsyncpa [#allocation12], 0
    %22 = vsyncpa [#allocation15], 0
    %23 = vsyncpa [#allocation4], 0
    // Predicated region
    $region2: #{encoder_forward.1} parent=1 // pred_check
      _
    $region3: #{encoder_forward.1} parent=1 // pred_check_branch
      %25 = sbr.rel (0) target = $region5
    $region4: #{encoder_forward.1} parent=1 // pred_region
      _
    $region5: #{encoder_forward.1} parent=1 // pred_fallthru
      _
    // Predicated region
    $region6: #{encoder_forward.1} parent=1 // pred_check
      _
    $region7: #{encoder_forward.1} parent=1 // pred_check_branch
      %27 = sbr.rel (0) target = $region9
    $region8: #{encoder_forward.1} parent=1 // pred_region
      %s29 = ssub.s32 8192, 8192
      %30 = vsyncadd [#allocation3], %s29
      %s31 = sshll.u32 [#allocation2], 4
      %s32 = int_to_ptr.vmem [resolvable:$true] %s31
      %37 = dma.hbm_to_vmem [thread:$0]  %s1, 8192, %s32, [#allocation3], 512, 512, 32
    $region9: #{encoder_forward.1} parent=1 // pred_fallthru
      _
    // Predicated region
    $region10: #{encoder_forward.1} parent=1 // pred_check
      _
    $region11: #{encoder_forward.1} parent=1 // pred_check_branch
      %39 = sbr.rel (0) target = $region13
    $region12: #{encoder_forward.1} parent=1 // pred_region
      %s41 = ssub.s32 8192, 8192
      %42 = vsyncadd [#allocation6], %s41
      %s43 = sshll.u32 [#allocation5], 4
      %s44 = int_to_ptr.vmem [resolvable:$true] %s43
      %49 = dma.hbm_to_vmem [thread:$0]  %s2, 8192, %s44, [#allocation6], 512, 512, 32
    $region13: #{encoder_forward.1} parent=1 // pred_fallthru
      _
    // Predicated region
    $region14: #{encoder_forward.1} parent=1 // pred_check
      _
    $region15: #{encoder_forward.1} parent=1 // pred_check_branch
      %51 = sbr.rel (0) target = $region17
    $region16: #{encoder_forward.1} parent=1 // pred_region
      _
    $region17: #{encoder_forward.1} parent=1 // pred_fallthru
      _
    // Predicated region
    $region18: #{encoder_forward.1} parent=1 // pred_check
      _
    $region19: #{encoder_forward.1} parent=1 // pred_check_branch
      %53 = sbr.rel (0) target = $region21
    $region20: #{encoder_forward.1} parent=1 // pred_region
      %s55 = ssub.s32 8192, 8192
      %56 = vsyncadd [#allocation6], %s55
      %s57 = sshll.u32 [#allocation7], 4
      %s58 = int_to_ptr.vmem [resolvable:$true] %s57
      %63 = dma.hbm_to_vmem [thread:$0]  %s4, 8192, %s58, [#allocation6], 512, 512, 32
    $region21: #{encoder_forward.1} parent=1 // pred_fallthru
      _
    // Predicated region
    $region22: #{encoder_forward.1} parent=1 // pred_check
      _
    $region23: #{encoder_forward.1} parent=1 // pred_check_branch
      %65 = sbr.rel (0) target = $region25
    $region24: #{encoder_forward.1} parent=1 // pred_region
      %s67 = ssub.s32 8192, 8192
      %68 = vsyncadd [#allocation9], %s67
      %s69 = sshll.u32 [#allocation8], 4
      %s70 = int_to_ptr.vmem [resolvable:$true] %s69
      %75 = dma.hbm_to_vmem [thread:$0]  %s5, 8192, %s70, [#allocation9], 512, 512, 32
    $region25: #{encoder_forward.1} parent=1 // pred_fallthru
      _
    // Predicated region
    $region26: #{encoder_forward.1} parent=1 // pred_check
      _
    $region27: #{encoder_forward.1} parent=1 // pred_check_branch
      %77 = sbr.rel (0) target = $region29
    $region28: #{encoder_forward.1} parent=1 // pred_region
      _
    $region29: #{encoder_forward.1} parent=1 // pred_fallthru
      _
    // Predicated region
    $region30: #{encoder_forward.1} parent=1 // pred_check
      _
    $region31: #{encoder_forward.1} parent=1 // pred_check_branch
      %79 = sbr.rel (0) target = $region33
    $region32: #{encoder_forward.1} parent=1 // pred_region
      %s81 = ssub.s32 8192, 8192
      %82 = vsyncadd [#allocation9], %s81
      %s83 = sshll.u32 [#allocation10], 4
      %s84 = int_to_ptr.vmem [resolvable:$true] %s83
      %89 = dma.hbm_to_vmem [thread:$0]  %s7, 8192, %s84, [#allocation9], 512, 512, 32
    $region33: #{encoder_forward.1} parent=1 // pred_fallthru
      _
    // Predicated region
    $region34: #{encoder_forward.1} parent=1 // pred_check
      _
    $region35: #{encoder_forward.1} parent=1 // pred_check_branch
      %91 = sbr.rel (0) target = $region37
    $region36: #{encoder_forward.1} parent=1 // pred_region
      %s93 = ssub.s32 8192, 8192
      %94 = vsyncadd [#allocation12], %s93
      %s95 = sshll.u32 [#allocation11], 4
      %s96 = int_to_ptr.vmem [resolvable:$true] %s95
      %101 = dma.hbm_to_vmem [thread:$0]  %s8, 8192, %s96, [#allocation12], 512, 512, 32
    $region37: #{encoder_forward.1} parent=1 // pred_fallthru
      _
    // Predicated region
    $region38: #{encoder_forward.1} parent=1 // pred_check
      _
    $region39: #{encoder_forward.1} parent=1 // pred_check_branch
      %103 = sbr.rel (0) target = $region41
    $region40: #{encoder_forward.1} parent=1 // pred_region
      _
    $region41: #{encoder_forward.1} parent=1 // pred_fallthru
      _
    // Predicated region
    $region42: #{encoder_forward.1} parent=1 // pred_check
      _
    $region43: #{encoder_forward.1} parent=1 // pred_check_branch
      %105 = sbr.rel (0) target = $region45
    $region44: #{encoder_forward.1} parent=1 // pred_region
      %s107 = ssub.s32 8192, 8192
      %108 = vsyncadd [#allocation12], %s107
      %s109 = sshll.u32 [#allocation13], 4
      %s110 = int_to_ptr.vmem [resolvable:$true] %s109
      %115 = dma.hbm_to_vmem [thread:$0]  %s10, 8192, %s110, [#allocation12], 512, 512, 32
    $region45: #{encoder_forward.1} parent=1 // pred_fallthru
      _
    // Predicated region
    $region46: #{encoder_forward.1} parent=1 // pred_check
      _
    $region47: #{encoder_forward.1} parent=1 // pred_check_branch
      %117 = sbr.rel (0) target = $region49
    $region48: #{encoder_forward.1} parent=1 // pred_region
      %s119 = ssub.s32 8192, 8192
      %120 = vsyncadd [#allocation15], %s119
      %s121 = sshll.u32 [#allocation14], 4
      %s122 = int_to_ptr.vmem [resolvable:$true] %s121
      %127 = dma.hbm_to_vmem [thread:$0]  %s11, 8192, %s122, [#allocation15], 512, 512, 32
    $region49: #{encoder_forward.1} parent=1 // pred_fallthru
      _
    // Predicated region
    $region50: #{encoder_forward.1} parent=1 // pred_check
      _
    $region51: #{encoder_forward.1} parent=1 // pred_check_branch
      %129 = sbr.rel (0) target = $region53
    $region52: #{encoder_forward.1} parent=1 // pred_region
      _
    $region53: #{encoder_forward.1} parent=1 // pred_fallthru
      _
    // Predicated region
    $region54: #{encoder_forward.1} parent=1 // pred_check
      _
    $region55: #{encoder_forward.1} parent=1 // pred_check_branch
      %131 = sbr.rel (0) target = $region57
    $region56: #{encoder_forward.1} parent=1 // pred_region
      %132 = dma.done [#allocation3], 8192
    $region57: #{encoder_forward.1} parent=1 // pred_fallthru
      _
    // Predicated region
    $region58: #{encoder_forward.1} parent=1 // pred_check
      _
    $region59: #{encoder_forward.1} parent=1 // pred_check_branch
      %134 = sbr.rel (0) target = $region61
    $region60: #{encoder_forward.1} parent=1 // pred_region
      %135 = dma.done [#allocation6], 8192
    $region61: #{encoder_forward.1} parent=1 // pred_fallthru
      _
    // Predicated region
    $region62: #{encoder_forward.1} parent=1 // pred_check
      _
    $region63: #{encoder_forward.1} parent=1 // pred_check_branch
      %137 = sbr.rel (0) target = $region65
    $region64: #{encoder_forward.1} parent=1 // pred_region
      %138 = dma.done [#allocation6], 8192
    $region65: #{encoder_forward.1} parent=1 // pred_fallthru
      _
    // Predicated region
    $region66: #{encoder_forward.1} parent=1 // pred_check
      _
    $region67: #{encoder_forward.1} parent=1 // pred_check_branch
      %140 = sbr.rel (0) target = $region69
    $region68: #{encoder_forward.1} parent=1 // pred_region
      %141 = dma.done [#allocation9], 8192
    $region69: #{encoder_forward.1} parent=1 // pred_fallthru
      _
    // Predicated region
    $region70: #{encoder_forward.1} parent=1 // pred_check
      _
    $region71: #{encoder_forward.1} parent=1 // pred_check_branch
      %143 = sbr.rel (0) target = $region73
    $region72: #{encoder_forward.1} parent=1 // pred_region
      %144 = dma.done [#allocation9], 8192
    $region73: #{encoder_forward.1} parent=1 // pred_fallthru
      _
    // Predicated region
    $region74: #{encoder_forward.1} parent=1 // pred_check
      _
    $region75: #{encoder_forward.1} parent=1 // pred_check_branch
      %146 = sbr.rel (0) target = $region77
    $region76: #{encoder_forward.1} parent=1 // pred_region
      %147 = dma.done [#allocation12], 8192
    $region77: #{encoder_forward.1} parent=1 // pred_fallthru
      _
    // Predicated region
    $region78: #{encoder_forward.1} parent=1 // pred_check
      _
    $region79: #{encoder_forward.1} parent=1 // pred_check_branch
      %149 = sbr.rel (0) target = $region81
    $region80: #{encoder_forward.1} parent=1 // pred_region
      %150 = dma.done [#allocation12], 8192
    $region81: #{encoder_forward.1} parent=1 // pred_fallthru
      _
    // Predicated region
    $region82: #{encoder_forward.1} parent=1 // pred_check
      _
    $region83: #{encoder_forward.1} parent=1 // pred_check_branch
      %152 = sbr.rel (0) target = $region85
    $region84: #{encoder_forward.1} parent=1 // pred_region
      %153 = dma.done [#allocation15], 8192
    $region85: #{encoder_forward.1} parent=1 // pred_fallthru
      _
    %v154 = vld [vmem:[%s3] sm:$0xf]
    %v155 = vld [vmem:[%s6] sm:$0xf]
    %v156 = vld [vmem:[%s9] sm:$0xf]
    %v157 = vld [vmem:[%s12] sm:$0xf]
    %v158 = vld [vmem:[%s0] sm:$0xff]
    %v159 = vld [vmem:[#allocation2] sm:$0xff]
    %v160 = vld [vmem:[#allocation2 + $0x8] sm:$0xff]
    %v161 = vld [vmem:[#allocation2 + $0x10] sm:$0xff]
    %v162 = vld [vmem:[#allocation2 + $0x18] sm:$0xff]
    %v163 = vld [vmem:[#allocation2 + $0x20] sm:$0xff]
    %v164 = vld [vmem:[#allocation2 + $0x28] sm:$0xff]
    %v165 = vld [vmem:[#allocation2 + $0x30] sm:$0xff]
    %v166 = vld [vmem:[#allocation2 + $0x38] sm:$0xff]
    %v167 = vld [vmem:[#allocation2 + $0x40] sm:$0xff]
    %v168 = vld [vmem:[#allocation2 + $0x48] sm:$0xff]
    %v169 = vld [vmem:[#allocation2 + $0x50] sm:$0xff]
    %v170 = vld [vmem:[#allocation2 + $0x58] sm:$0xff]
    %v171 = vld [vmem:[#allocation2 + $0x60] sm:$0xff]
    %v172 = vld [vmem:[#allocation2 + $0x68] sm:$0xff]
    %v173 = vld [vmem:[#allocation2 + $0x70] sm:$0xff]
    %v174 = vld [vmem:[#allocation2 + $0x78] sm:$0xff]
    %v175 = vld [vmem:[#allocation2 + $0x80] sm:$0xff]
    %v176 = vld [vmem:[#allocation2 + $0x88] sm:$0xff]
    %v177 = vld [vmem:[#allocation2 + $0x90] sm:$0xff]
    %v178 = vld [vmem:[#allocation2 + $0x98] sm:$0xff]
    %v179 = vld [vmem:[#allocation2 + $0xa0] sm:$0xff]
    %v180 = vld [vmem:[#allocation2 + $0xa8] sm:$0xff]
    %v181 = vld [vmem:[#allocation2 + $0xb0] sm:$0xff]
    %v182 = vld [vmem:[#allocation2 + $0xb8] sm:$0xff]
    %v183 = vld [vmem:[#allocation2 + $0xc0] sm:$0xff]
    %v184 = vld [vmem:[#allocation2 + $0xc8] sm:$0xff]
    %v185 = vld [vmem:[#allocation2 + $0xd0] sm:$0xff]
    %v186 = vld [vmem:[#allocation2 + $0xd8] sm:$0xff]
    %v187 = vld [vmem:[#allocation2 + $0xe0] sm:$0xff]
    %v188 = vld [vmem:[#allocation2 + $0xe8] sm:$0xff]
    %v189 = vld [vmem:[#allocation2 + $0xf0] sm:$0xff]
    %v190 = vld [vmem:[#allocation2 + $0xf8] sm:$0xff]
    %v191 = vld [vmem:[#allocation2 + $0x100] sm:$0xff]
    %v192 = vld [vmem:[#allocation2 + $0x108] sm:$0xff]
    %v193 = vld [vmem:[#allocation2 + $0x110] sm:$0xff]
    %v194 = vld [vmem:[#allocation2 + $0x118] sm:$0xff]
    %v195 = vld [vmem:[#allocation2 + $0x120] sm:$0xff]
    %v196 = vld [vmem:[#allocation2 + $0x128] sm:$0xff]
    %v197 = vld [vmem:[#allocation2 + $0x130] sm:$0xff]
    %v198 = vld [vmem:[#allocation2 + $0x138] sm:$0xff]
    %v199 = vld [vmem:[#allocation2 + $0x140] sm:$0xff]
    %v200 = vld [vmem:[#allocation2 + $0x148] sm:$0xff]
    %v201 = vld [vmem:[#allocation2 + $0x150] sm:$0xff]
    %v202 = vld [vmem:[#allocation2 + $0x158] sm:$0xff]
    %v203 = vld [vmem:[#allocation2 + $0x160] sm:$0xff]
    %v204 = vld [vmem:[#allocation2 + $0x168] sm:$0xff]
    %v205 = vld [vmem:[#allocation2 + $0x170] sm:$0xff]
    %v206 = vld [vmem:[#allocation2 + $0x178] sm:$0xff]
    %v207 = vld [vmem:[#allocation2 + $0x180] sm:$0xff]
    %v208 = vld [vmem:[#allocation2 + $0x188] sm:$0xff]
    %v209 = vld [vmem:[#allocation2 + $0x190] sm:$0xff]
    %v210 = vld [vmem:[#allocation2 + $0x198] sm:$0xff]
    %v211 = vld [vmem:[#allocation2 + $0x1a0] sm:$0xff]
    %v212 = vld [vmem:[#allocation2 + $0x1a8] sm:$0xff]
    %v213 = vld [vmem:[#allocation2 + $0x1b0] sm:$0xff]
    %v214 = vld [vmem:[#allocation2 + $0x1b8] sm:$0xff]
    %v215 = vld [vmem:[#allocation2 + $0x1c0] sm:$0xff]
    %v216 = vld [vmem:[#allocation2 + $0x1c8] sm:$0xff]
    %v217 = vld [vmem:[#allocation2 + $0x1d0] sm:$0xff]
    %v218 = vld [vmem:[#allocation2 + $0x1d8] sm:$0xff]
    %v219 = vld [vmem:[#allocation2 + $0x1e0] sm:$0xff]
    %v220 = vld [vmem:[#allocation2 + $0x1e8] sm:$0xff]
    %v221 = vld [vmem:[#allocation2 + $0x1f0] sm:$0xff]
    %v222 = vld [vmem:[#allocation2 + $0x1f8] sm:$0xff]
    %v224 = vlaneseq
    %v225 = vshrl.u32 %v224, 7
    %v226 = vsub.s32 0, %v225
    %v227 = vrot.slane %v154, %v226
    %v228 = vlaneseq
    %v229 = vshrl.u32 %v228, 7
    %v230 = vsub.s32 1, %v229
    %v231 = vrot.slane %v154, %v230
    %v232 = vlaneseq
    %v233 = vshrl.u32 %v232, 7
    %v234 = vsub.s32 2, %v233
    %v235 = vrot.slane %v154, %v234
    %v236 = vlaneseq
    %v237 = vshrl.u32 %v236, 7
    %v238 = vsub.s32 3, %v237
    %v239 = vrot.slane %v154, %v238
    %244 = vmatprep.subr.mxu0 %v160
    %245 = vmatpush1.msra.mxu0 %v159
    %246 = vmatprep.subr.mxu0 %v164
    %247 = vmatpush1.msra.mxu0 %v163
    %248 = vmatprep.subr.mxu0 %v168
    %249 = vmatpush1.msra.mxu0 %v167
    %250 = vmatprep.subr.mxu0 %v172
    %251 = vmatpush1.msra.mxu0 %v171
    %252 = vmatprep.subr.mxu0 %v176
    %253 = vmatpush1.msra.mxu0 %v175
    %254 = vmatprep.subr.mxu0 %v180
    %255 = vmatpush1.msra.mxu0 %v179
    %256 = vmatprep.subr.mxu0 %v184
    %257 = vmatpush1.msra.mxu0 %v183
    %258 = vmatprep.subr.mxu0 %v188
    %259 = vmatpush1.msra.mxu0 %v187
    %260 = vmatprep.subr.mxu0 %v192
    %261 = vmatpush1.msra.mxu0 %v191
    %262 = vmatprep.subr.mxu0 %v196
    %263 = vmatpush1.msra.mxu0 %v195
    %264 = vmatprep.subr.mxu0 %v200
    %265 = vmatpush1.msra.mxu0 %v199
    %266 = vmatprep.subr.mxu0 %v204
    %267 = vmatpush1.msra.mxu0 %v203
    %268 = vmatprep.subr.mxu0 %v208
    %269 = vmatpush1.msra.mxu0 %v207
    %270 = vmatprep.subr.mxu0 %v212
    %271 = vmatpush1.msra.mxu0 %v211
    %272 = vmatprep.subr.mxu0 %v216
    %273 = vmatpush1.msra.mxu0 %v215
    %274 = vmatprep.subr.mxu0 %v220
    %275 = vmatpush1.msra.mxu0 %v219
    %276 = vmatprep.subr.mxu0 0.0
    %277 = vmatpush1.msra.mxu0 0.0
    %278 = vmatprep.subr.mxu0 0.0
    %279 = vmatpush1.msra.mxu0 0.0
    %280 = vmatprep.subr.mxu0 0.0
    %281 = vmatpush1.msra.mxu0 0.0
    %282 = vmatprep.subr.mxu0 0.0
    %283 = vmatpush1.msra.mxu0 0.0
    %284 = vmatprep.subr.mxu0 0.0
    %285 = vmatpush1.msra.mxu0 0.0
    %286 = vmatprep.subr.mxu0 0.0
    %287 = vmatpush1.msra.mxu0 0.0
    %288 = vmatprep.subr.mxu0 0.0
    %289 = vmatpush1.msra.mxu0 0.0
    %290 = vmatprep.subr.mxu0 0.0
    %291 = vmatpush1.msra.mxu0 0.0
    %292 = vmatprep.subr.mxu0 0.0
    %293 = vmatpush1.msra.mxu0 0.0
    %294 = vmatprep.subr.mxu0 0.0
    %295 = vmatpush1.msra.mxu0 0.0
    %296 = vmatprep.subr.mxu0 0.0
    %297 = vmatpush1.msra.mxu0 0.0
    %298 = vmatprep.subr.mxu0 0.0
    %299 = vmatpush1.msra.mxu0 0.0
    %300 = vmatprep.subr.mxu0 0.0
    %301 = vmatpush1.msra.mxu0 0.0
    %302 = vmatprep.subr.mxu0 0.0
    %303 = vmatpush1.msra.mxu0 0.0
    %304 = vmatprep.subr.mxu0 0.0
    %305 = vmatpush1.msra.mxu0 0.0
    %306 = vmatprep.subr.mxu0 0.0
    %307 = vmatpush1.msra.mxu0 0.0
    %308 = vmatprep.mubr.f32.mxu0 0.0
    %309 = vmatmul.mubr.f32.gmra.mrb[0].mxu0 %v158
    %v310 = vpop.f32.mrb[0].mxu0
    %v311 = vadd.f32 %v227, %v310
    %v312 = vpop.f32.mrb[0].mxu0
    %v313 = vadd.f32 %v231, %v312
    %314 = vdwg.mxu0
    %315 = vmatprep.subr.mxu0 %v162
    %316 = vmatpush1.msra.mxu0 %v161
    %317 = vmatprep.subr.mxu0 %v166
    %318 = vmatpush1.msra.mxu0 %v165
    %319 = vmatprep.subr.mxu0 %v170
    %320 = vmatpush1.msra.mxu0 %v169
    %321 = vmatprep.subr.mxu0 %v174
    %322 = vmatpush1.msra.mxu0 %v173
    %323 = vmatprep.subr.mxu0 %v178
    %324 = vmatpush1.msra.mxu0 %v177
    %325 = vmatprep.subr.mxu0 %v182
    %326 = vmatpush1.msra.mxu0 %v181
    %327 = vmatprep.subr.mxu0 %v186
    %328 = vmatpush1.msra.mxu0 %v185
    %329 = vmatprep.subr.mxu0 %v190
    %330 = vmatpush1.msra.mxu0 %v189
    %331 = vmatprep.subr.mxu0 %v194
    %332 = vmatpush1.msra.mxu0 %v193
    %333 = vmatprep.subr.mxu0 %v198
    %334 = vmatpush1.msra.mxu0 %v197
    %335 = vmatprep.subr.mxu0 %v202
    %336 = vmatpush1.msra.mxu0 %v201
    %337 = vmatprep.subr.mxu0 %v206
    %338 = vmatpush1.msra.mxu0 %v205
    %339 = vmatprep.subr.mxu0 %v210
    %340 = vmatpush1.msra.mxu0 %v209
    %341 = vmatprep.subr.mxu0 %v214
    %342 = vmatpush1.msra.mxu0 %v213
    %343 = vmatprep.subr.mxu0 %v218
    %344 = vmatpush1.msra.mxu0 %v217
    %345 = vmatprep.subr.mxu0 %v222
    %346 = vmatpush1.msra.mxu0 %v221
    %347 = vmatprep.subr.mxu0 0.0
    %348 = vmatpush1.msra.mxu0 0.0
    %349 = vmatprep.subr.mxu0 0.0
    %350 = vmatpush1.msra.mxu0 0.0
    %351 = vmatprep.subr.mxu0 0.0
    %352 = vmatpush1.msra.mxu0 0.0
    %353 = vmatprep.subr.mxu0 0.0
    %354 = vmatpush1.msra.mxu0 0.0
    %355 = vmatprep.subr.mxu0 0.0
    %356 = vmatpush1.msra.mxu0 0.0
    %357 = vmatprep.subr.mxu0 0.0
    %358 = vmatpush1.msra.mxu0 0.0
    %359 = vmatprep.subr.mxu0 0.0
    %360 = vmatpush1.msra.mxu0 0.0
    %361 = vmatprep.subr.mxu0 0.0
    %362 = vmatpush1.msra.mxu0 0.0
    %363 = vmatprep.subr.mxu0 0.0
    %364 = vmatpush1.msra.mxu0 0.0
    %365 = vmatprep.subr.mxu0 0.0
    %366 = vmatpush1.msra.mxu0 0.0
    %367 = vmatprep.subr.mxu0 0.0
    %368 = vmatpush1.msra.mxu0 0.0
    %369 = vmatprep.subr.mxu0 0.0
    %370 = vmatpush1.msra.mxu0 0.0
    %371 = vmatprep.subr.mxu0 0.0
    %372 = vmatpush1.msra.mxu0 0.0
    %373 = vmatprep.subr.mxu0 0.0
    %374 = vmatpush1.msra.mxu0 0.0
    %375 = vmatprep.subr.mxu0 0.0
    %376 = vmatpush1.msra.mxu0 0.0
    %377 = vmatprep.subr.mxu0 0.0
    %378 = vmatpush1.msra.mxu0 0.0
    %379 = vmatprep.mubr.f32.mxu0 0.0
    %380 = vmatmul.mubr.f32.gmra.mrb[0].mxu0 %v158
    %v381 = vpop.f32.mrb[0].mxu0
    %v382 = vadd.f32 %v235, %v381
    %v383 = vpop.f32.mrb[0].mxu0
    %v384 = vadd.f32 %v239, %v383
    %385 = vdwg.mxu0
    %v386 = vld [vmem:[#allocation5] sm:$0xff]
    %v387 = vld [vmem:[#allocation5 + $0x8] sm:$0xff]
    %v388 = vld [vmem:[#allocation5 + $0x10] sm:$0xff]
    %v389 = vld [vmem:[#allocation5 + $0x18] sm:$0xff]
    %v390 = vld [vmem:[#allocation5 + $0x20] sm:$0xff]
    %v391 = vld [vmem:[#allocation5 + $0x28] sm:$0xff]
    %v392 = vld [vmem:[#allocation5 + $0x30] sm:$0xff]
    %v393 = vld [vmem:[#allocation5 + $0x38] sm:$0xff]
    %v394 = vld [vmem:[#allocation5 + $0x40] sm:$0xff]
    %v395 = vld [vmem:[#allocation5 + $0x48] sm:$0xff]
    %v396 = vld [vmem:[#allocation5 + $0x50] sm:$0xff]
    %v397 = vld [vmem:[#allocation5 + $0x58] sm:$0xff]
    %v398 = vld [vmem:[#allocation5 + $0x60] sm:$0xff]
    %v399 = vld [vmem:[#allocation5 + $0x68] sm:$0xff]
    %v400 = vld [vmem:[#allocation5 + $0x70] sm:$0xff]
    %v401 = vld [vmem:[#allocation5 + $0x78] sm:$0xff]
    %v402 = vld [vmem:[#allocation5 + $0x80] sm:$0xff]
    %v403 = vld [vmem:[#allocation5 + $0x88] sm:$0xff]
    %v404 = vld [vmem:[#allocation5 + $0x90] sm:$0xff]
    %v405 = vld [vmem:[#allocation5 + $0x98] sm:$0xff]
    %v406 = vld [vmem:[#allocation5 + $0xa0] sm:$0xff]
    %v407 = vld [vmem:[#allocation5 + $0xa8] sm:$0xff]
    %v408 = vld [vmem:[#allocation5 + $0xb0] sm:$0xff]
    %v409 = vld [vmem:[#allocation5 + $0xb8] sm:$0xff]
    %v410 = vld [vmem:[#allocation5 + $0xc0] sm:$0xff]
    %v411 = vld [vmem:[#allocation5 + $0xc8] sm:$0xff]
    %v412 = vld [vmem:[#allocation5 + $0xd0] sm:$0xff]
    %v413 = vld [vmem:[#allocation5 + $0xd8] sm:$0xff]
    %v414 = vld [vmem:[#allocation5 + $0xe0] sm:$0xff]
    %v415 = vld [vmem:[#allocation5 + $0xe8] sm:$0xff]
    %v416 = vld [vmem:[#allocation5 + $0xf0] sm:$0xff]
    %v417 = vld [vmem:[#allocation5 + $0xf8] sm:$0xff]
    %v418 = vld [vmem:[#allocation5 + $0x100] sm:$0xff]
    %v419 = vld [vmem:[#allocation5 + $0x108] sm:$0xff]
    %v420 = vld [vmem:[#allocation5 + $0x110] sm:$0xff]
    %v421 = vld [vmem:[#allocation5 + $0x118] sm:$0xff]
    %v422 = vld [vmem:[#allocation5 + $0x120] sm:$0xff]
    %v423 = vld [vmem:[#allocation5 + $0x128] sm:$0xff]
    %v424 = vld [vmem:[#allocation5 + $0x130] sm:$0xff]
    %v425 = vld [vmem:[#allocation5 + $0x138] sm:$0xff]
    %v426 = vld [vmem:[#allocation5 + $0x140] sm:$0xff]
    %v427 = vld [vmem:[#allocation5 + $0x148] sm:$0xff]
    %v428 = vld [vmem:[#allocation5 + $0x150] sm:$0xff]
    %v429 = vld [vmem:[#allocation5 + $0x158] sm:$0xff]
    %v430 = vld [vmem:[#allocation5 + $0x160] sm:$0xff]
    %v431 = vld [vmem:[#allocation5 + $0x168] sm:$0xff]
    %v432 = vld [vmem:[#allocation5 + $0x170] sm:$0xff]
    %v433 = vld [vmem:[#allocation5 + $0x178] sm:$0xff]
    %v434 = vld [vmem:[#allocation5 + $0x180] sm:$0xff]
    %v435 = vld [vmem:[#allocation5 + $0x188] sm:$0xff]
    %v436 = vld [vmem:[#allocation5 + $0x190] sm:$0xff]
    %v437 = vld [vmem:[#allocation5 + $0x198] sm:$0xff]
    %v438 = vld [vmem:[#allocation5 + $0x1a0] sm:$0xff]
    %v439 = vld [vmem:[#allocation5 + $0x1a8] sm:$0xff]
    %v440 = vld [vmem:[#allocation5 + $0x1b0] sm:$0xff]
    %v441 = vld [vmem:[#allocation5 + $0x1b8] sm:$0xff]
    %v442 = vld [vmem:[#allocation5 + $0x1c0] sm:$0xff]
    %v443 = vld [vmem:[#allocation5 + $0x1c8] sm:$0xff]
    %v444 = vld [vmem:[#allocation5 + $0x1d0] sm:$0xff]
    %v445 = vld [vmem:[#allocation5 + $0x1d8] sm:$0xff]
    %v446 = vld [vmem:[#allocation5 + $0x1e0] sm:$0xff]
    %v447 = vld [vmem:[#allocation5 + $0x1e8] sm:$0xff]
    %v448 = vld [vmem:[#allocation5 + $0x1f0] sm:$0xff]
    %v449 = vld [vmem:[#allocation5 + $0x1f8] sm:$0xff]
    %450 = vmatprep.subr.mxu0 %v387
    %451 = vmatpush1.msra.mxu0 %v386
    %452 = vmatprep.subr.mxu0 %v391
    %453 = vmatpush1.msra.mxu0 %v390
    %454 = vmatprep.subr.mxu0 %v395
    %455 = vmatpush1.msra.mxu0 %v394
    %456 = vmatprep.subr.mxu0 %v399
    %457 = vmatpush1.msra.mxu0 %v398
    %458 = vmatprep.subr.mxu0 %v403
    %459 = vmatpush1.msra.mxu0 %v402
    %460 = vmatprep.subr.mxu0 %v407
    %461 = vmatpush1.msra.mxu0 %v406
    %462 = vmatprep.subr.mxu0 %v411
    %463 = vmatpush1.msra.mxu0 %v410
    %464 = vmatprep.subr.mxu0 %v415
    %465 = vmatpush1.msra.mxu0 %v414
    %466 = vmatprep.subr.mxu0 %v419
    %467 = vmatpush1.msra.mxu0 %v418
    %468 = vmatprep.subr.mxu0 %v423
    %469 = vmatpush1.msra.mxu0 %v422
    %470 = vmatprep.subr.mxu0 %v427
    %471 = vmatpush1.msra.mxu0 %v426
    %472 = vmatprep.subr.mxu0 %v431
    %473 = vmatpush1.msra.mxu0 %v430
    %474 = vmatprep.subr.mxu0 %v435
    %475 = vmatpush1.msra.mxu0 %v434
    %476 = vmatprep.subr.mxu0 %v439
    %477 = vmatpush1.msra.mxu0 %v438
    %478 = vmatprep.subr.mxu0 %v443
    %479 = vmatpush1.msra.mxu0 %v442
    %480 = vmatprep.subr.mxu0 %v447
    %481 = vmatpush1.msra.mxu0 %v446
    %482 = vmatprep.subr.mxu0 0.0
    %483 = vmatpush1.msra.mxu0 0.0
    %484 = vmatprep.subr.mxu0 0.0
    %485 = vmatpush1.msra.mxu0 0.0
    %486 = vmatprep.subr.mxu0 0.0
    %487 = vmatpush1.msra.mxu0 0.0
    %488 = vmatprep.subr.mxu0 0.0
    %489 = vmatpush1.msra.mxu0 0.0
    %490 = vmatprep.subr.mxu0 0.0
    %491 = vmatpush1.msra.mxu0 0.0
    %492 = vmatprep.subr.mxu0 0.0
    %493 = vmatpush1.msra.mxu0 0.0
    %494 = vmatprep.subr.mxu0 0.0
    %495 = vmatpush1.msra.mxu0 0.0
    %496 = vmatprep.subr.mxu0 0.0
    %497 = vmatpush1.msra.mxu0 0.0
    %498 = vmatprep.subr.mxu0 0.0
    %499 = vmatpush1.msra.mxu0 0.0
    %500 = vmatprep.subr.mxu0 0.0
    %501 = vmatpush1.msra.mxu0 0.0
    %502 = vmatprep.subr.mxu0 0.0
    %503 = vmatpush1.msra.mxu0 0.0
    %504 = vmatprep.subr.mxu0 0.0
    %505 = vmatpush1.msra.mxu0 0.0
    %506 = vmatprep.subr.mxu0 0.0
    %507 = vmatpush1.msra.mxu0 0.0
    %508 = vmatprep.subr.mxu0 0.0
    %509 = vmatpush1.msra.mxu0 0.0
    %510 = vmatprep.subr.mxu0 0.0
    %511 = vmatpush1.msra.mxu0 0.0
    %512 = vmatprep.subr.mxu0 0.0
    %513 = vmatpush1.msra.mxu0 0.0
    %514 = vmatprep.mubr.f32.mxu0 0.0
    %515 = vmatmul.mubr.f32.gmra.mrb[0].mxu0 0.0
    %v516 = vpop.f32.mrb[0].mxu0
    %v517 = vadd.f32 0.0, %v516
    %v518 = vpop.f32.mrb[0].mxu0
    %v519 = vadd.f32 0.0, %v518
    %520 = vdwg.mxu0
    %521 = vmatprep.subr.mxu0 %v389
    %522 = vmatpush1.msra.mxu0 %v388
    %523 = vmatprep.subr.mxu0 %v393
    %524 = vmatpush1.msra.mxu0 %v392
    %525 = vmatprep.subr.mxu0 %v397
    %526 = vmatpush1.msra.mxu0 %v396
    %527 = vmatprep.subr.mxu0 %v401
    %528 = vmatpush1.msra.mxu0 %v400
    %529 = vmatprep.subr.mxu0 %v405
    %530 = vmatpush1.msra.mxu0 %v404
    %531 = vmatprep.subr.mxu0 %v409
    %532 = vmatpush1.msra.mxu0 %v408
    %533 = vmatprep.subr.mxu0 %v413
    %534 = vmatpush1.msra.mxu0 %v412
    %535 = vmatprep.subr.mxu0 %v417
    %536 = vmatpush1.msra.mxu0 %v416
    %537 = vmatprep.subr.mxu0 %v421
    %538 = vmatpush1.msra.mxu0 %v420
    %539 = vmatprep.subr.mxu0 %v425
    %540 = vmatpush1.msra.mxu0 %v424
    %541 = vmatprep.subr.mxu0 %v429
    %542 = vmatpush1.msra.mxu0 %v428
    %543 = vmatprep.subr.mxu0 %v433
    %544 = vmatpush1.msra.mxu0 %v432
    %545 = vmatprep.subr.mxu0 %v437
    %546 = vmatpush1.msra.mxu0 %v436
    %547 = vmatprep.subr.mxu0 %v441
    %548 = vmatpush1.msra.mxu0 %v440
    %549 = vmatprep.subr.mxu0 %v445
    %550 = vmatpush1.msra.mxu0 %v444
    %551 = vmatprep.subr.mxu0 %v449
    %552 = vmatpush1.msra.mxu0 %v448
    %553 = vmatprep.subr.mxu0 0.0
    %554 = vmatpush1.msra.mxu0 0.0
    %555 = vmatprep.subr.mxu0 0.0
    %556 = vmatpush1.msra.mxu0 0.0
    %557 = vmatprep.subr.mxu0 0.0
    %558 = vmatpush1.msra.mxu0 0.0
    %559 = vmatprep.subr.mxu0 0.0
    %560 = vmatpush1.msra.mxu0 0.0
    %561 = vmatprep.subr.mxu0 0.0
    %562 = vmatpush1.msra.mxu0 0.0
    %563 = vmatprep.subr.mxu0 0.0
    %564 = vmatpush1.msra.mxu0 0.0
    %565 = vmatprep.subr.mxu0 0.0
    %566 = vmatpush1.msra.mxu0 0.0
    %567 = vmatprep.subr.mxu0 0.0
    %568 = vmatpush1.msra.mxu0 0.0
    %569 = vmatprep.subr.mxu0 0.0
    %570 = vmatpush1.msra.mxu0 0.0
    %571 = vmatprep.subr.mxu0 0.0
    %572 = vmatpush1.msra.mxu0 0.0
    %573 = vmatprep.subr.mxu0 0.0
    %574 = vmatpush1.msra.mxu0 0.0
    %575 = vmatprep.subr.mxu0 0.0
    %576 = vmatpush1.msra.mxu0 0.0
    %577 = vmatprep.subr.mxu0 0.0
    %578 = vmatpush1.msra.mxu0 0.0
    %579 = vmatprep.subr.mxu0 0.0
    %580 = vmatpush1.msra.mxu0 0.0
    %581 = vmatprep.subr.mxu0 0.0
    %582 = vmatpush1.msra.mxu0 0.0
    %583 = vmatprep.subr.mxu0 0.0
    %584 = vmatpush1.msra.mxu0 0.0
    %585 = vmatprep.mubr.f32.mxu0 0.0
    %586 = vmatmul.mubr.f32.gmra.mrb[0].mxu0 0.0
    %v587 = vpop.f32.mrb[0].mxu0
    %v588 = vadd.f32 0.0, %v587
    %v589 = vpop.f32.mrb[0].mxu0
    %v590 = vadd.f32 0.0, %v589
    %591 = vdwg.mxu0
    %v592 = vadd.f32 %v311, %v517
    %v593 = vadd.f32 %v313, %v519
    %v594 = vadd.f32 %v382, %v588
    %v595 = vadd.f32 %v384, %v590
    %v596 = vmul.f32 %v592, 0.5
    %v597 = vmul.f32 %v593, 0.5
    %v598 = vmul.f32 %v594, 0.5
    %v599 = vtanh.pop %v596
    %v600 = vtanh.pop %v597
    %v601 = vtanh.pop %v598
    %v602 = vadd.f32 %v599, 1.0
    %v603 = vadd.f32 %v600, 1.0
    %v604 = vadd.f32 %v601, 1.0
    %v605 = vmul.f32 %v602, 0.5
    %v606 = vmul.f32 %v603, 0.5
    %v607 = vmul.f32 %v604, 0.5
    %v608 = vtanh.pop %v595
    %v609 = vmul.f32 %v606, 0.0
    %v610 = vmul.f32 %v605, %v608
    %v611 = vadd.f32 %v609, %v610
    %v612 = vtanh.pop %v611
    %v613 = vmul.f32 %v607, %v612
    %v614 = vmul.f32 %v613, 0.5
    %v615 = vtanh.pop %v614
    %v616 = vadd.f32 %v615, 1.0
    %v617 = vmul.f32 %v616, 0.5
    %v618 = vld [vmem:[#allocation7] sm:$0xff]
    %v619 = vld [vmem:[#allocation7 + $0x8] sm:$0xff]
    %v620 = vld [vmem:[#allocation7 + $0x10] sm:$0xff]
    %v621 = vld [vmem:[#allocation7 + $0x18] sm:$0xff]
    %v622 = vld [vmem:[#allocation7 + $0x20] sm:$0xff]
    %v623 = vld [vmem:[#allocation7 + $0x28] sm:$0xff]
    %v624 = vld [vmem:[#allocation7 + $0x30] sm:$0xff]
    %v625 = vld [vmem:[#allocation7 + $0x38] sm:$0xff]
    %v626 = vld [vmem:[#allocation7 + $0x40] sm:$0xff]
    %v627 = vld [vmem:[#allocation7 + $0x48] sm:$0xff]
    %v628 = vld [vmem:[#allocation7 + $0x50] sm:$0xff]
    %v629 = vld [vmem:[#allocation7 + $0x58] sm:$0xff]
    %v630 = vld [vmem:[#allocation7 + $0x60] sm:$0xff]
    %v631 = vld [vmem:[#allocation7 + $0x68] sm:$0xff]
    %v632 = vld [vmem:[#allocation7 + $0x70] sm:$0xff]
    %v633 = vld [vmem:[#allocation7 + $0x78] sm:$0xff]
    %v634 = vld [vmem:[#allocation7 + $0x80] sm:$0xff]
    %v635 = vld [vmem:[#allocation7 + $0x88] sm:$0xff]
    %v636 = vld [vmem:[#allocation7 + $0x90] sm:$0xff]
    %v637 = vld [vmem:[#allocation7 + $0x98] sm:$0xff]
    %v638 = vld [vmem:[#allocation7 + $0xa0] sm:$0xff]
    %v639 = vld [vmem:[#allocation7 + $0xa8] sm:$0xff]
    %v640 = vld [vmem:[#allocation7 + $0xb0] sm:$0xff]
    %v641 = vld [vmem:[#allocation7 + $0xb8] sm:$0xff]
    %v642 = vld [vmem:[#allocation7 + $0xc0] sm:$0xff]
    %v643 = vld [vmem:[#allocation7 + $0xc8] sm:$0xff]
    %v644 = vld [vmem:[#allocation7 + $0xd0] sm:$0xff]
    %v645 = vld [vmem:[#allocation7 + $0xd8] sm:$0xff]
    %v646 = vld [vmem:[#allocation7 + $0xe0] sm:$0xff]
    %v647 = vld [vmem:[#allocation7 + $0xe8] sm:$0xff]
    %v648 = vld [vmem:[#allocation7 + $0xf0] sm:$0xff]
    %v649 = vld [vmem:[#allocation7 + $0xf8] sm:$0xff]
    %v650 = vld [vmem:[#allocation7 + $0x100] sm:$0xff]
    %v651 = vld [vmem:[#allocation7 + $0x108] sm:$0xff]
    %v652 = vld [vmem:[#allocation7 + $0x110] sm:$0xff]
    %v653 = vld [vmem:[#allocation7 + $0x118] sm:$0xff]
    %v654 = vld [vmem:[#allocation7 + $0x120] sm:$0xff]
    %v655 = vld [vmem:[#allocation7 + $0x128] sm:$0xff]
    %v656 = vld [vmem:[#allocation7 + $0x130] sm:$0xff]
    %v657 = vld [vmem:[#allocation7 + $0x138] sm:$0xff]
    %v658 = vld [vmem:[#allocation7 + $0x140] sm:$0xff]
    %v659 = vld [vmem:[#allocation7 + $0x148] sm:$0xff]
    %v660 = vld [vmem:[#allocation7 + $0x150] sm:$0xff]
    %v661 = vld [vmem:[#allocation7 + $0x158] sm:$0xff]
    %v662 = vld [vmem:[#allocation7 + $0x160] sm:$0xff]
    %v663 = vld [vmem:[#allocation7 + $0x168] sm:$0xff]
    %v664 = vld [vmem:[#allocation7 + $0x170] sm:$0xff]
    %v665 = vld [vmem:[#allocation7 + $0x178] sm:$0xff]
    %v666 = vld [vmem:[#allocation7 + $0x180] sm:$0xff]
    %v667 = vld [vmem:[#allocation7 + $0x188] sm:$0xff]
    %v668 = vld [vmem:[#allocation7 + $0x190] sm:$0xff]
    %v669 = vld [vmem:[#allocation7 + $0x198] sm:$0xff]
    %v670 = vld [vmem:[#allocation7 + $0x1a0] sm:$0xff]
    %v671 = vld [vmem:[#allocation7 + $0x1a8] sm:$0xff]
    %v672 = vld [vmem:[#allocation7 + $0x1b0] sm:$0xff]
    %v673 = vld [vmem:[#allocation7 + $0x1b8] sm:$0xff]
    %v674 = vld [vmem:[#allocation7 + $0x1c0] sm:$0xff]
    %v675 = vld [vmem:[#allocation7 + $0x1c8] sm:$0xff]
    %v676 = vld [vmem:[#allocation7 + $0x1d0] sm:$0xff]
    %v677 = vld [vmem:[#allocation7 + $0x1d8] sm:$0xff]
    %v678 = vld [vmem:[#allocation7 + $0x1e0] sm:$0xff]
    %v679 = vld [vmem:[#allocation7 + $0x1e8] sm:$0xff]
    %v680 = vld [vmem:[#allocation7 + $0x1f0] sm:$0xff]
    %v681 = vld [vmem:[#allocation7 + $0x1f8] sm:$0xff]
    %v683 = vlaneseq
    %v684 = vshrl.u32 %v683, 7
    %v685 = vsub.s32 0, %v684
    %v686 = vrot.slane %v155, %v685
    %v687 = vlaneseq
    %v688 = vshrl.u32 %v687, 7
    %v689 = vsub.s32 1, %v688
    %v690 = vrot.slane %v155, %v689
    %v691 = vlaneseq
    %v692 = vshrl.u32 %v691, 7
    %v693 = vsub.s32 2, %v692
    %v694 = vrot.slane %v155, %v693
    %v695 = vlaneseq
    %v696 = vshrl.u32 %v695, 7
    %v697 = vsub.s32 3, %v696
    %v698 = vrot.slane %v155, %v697
    %703 = vmatprep.subr.mxu0 %v619
    %704 = vmatpush1.msra.mxu0 %v618
    %705 = vmatprep.subr.mxu0 %v623
    %706 = vmatpush1.msra.mxu0 %v622
    %707 = vmatprep.subr.mxu0 %v627
    %708 = vmatpush1.msra.mxu0 %v626
    %709 = vmatprep.subr.mxu0 %v631
    %710 = vmatpush1.msra.mxu0 %v630
    %711 = vmatprep.subr.mxu0 %v635
    %712 = vmatpush1.msra.mxu0 %v634
    %713 = vmatprep.subr.mxu0 %v639
    %714 = vmatpush1.msra.mxu0 %v638
    %715 = vmatprep.subr.mxu0 %v643
    %716 = vmatpush1.msra.mxu0 %v642
    %717 = vmatprep.subr.mxu0 %v647
    %718 = vmatpush1.msra.mxu0 %v646
    %719 = vmatprep.subr.mxu0 %v651
    %720 = vmatpush1.msra.mxu0 %v650
    %721 = vmatprep.subr.mxu0 %v655
    %722 = vmatpush1.msra.mxu0 %v654
    %723 = vmatprep.subr.mxu0 %v659
    %724 = vmatpush1.msra.mxu0 %v658
    %725 = vmatprep.subr.mxu0 %v663
    %726 = vmatpush1.msra.mxu0 %v662
    %727 = vmatprep.subr.mxu0 %v667
    %728 = vmatpush1.msra.mxu0 %v666
    %729 = vmatprep.subr.mxu0 %v671
    %730 = vmatpush1.msra.mxu0 %v670
    %731 = vmatprep.subr.mxu0 %v675
    %732 = vmatpush1.msra.mxu0 %v674
    %733 = vmatprep.subr.mxu0 %v679
    %734 = vmatpush1.msra.mxu0 %v678
    %735 = vmatprep.subr.mxu0 0.0
    %736 = vmatpush1.msra.mxu0 0.0
    %737 = vmatprep.subr.mxu0 0.0
    %738 = vmatpush1.msra.mxu0 0.0
    %739 = vmatprep.subr.mxu0 0.0
    %740 = vmatpush1.msra.mxu0 0.0
    %741 = vmatprep.subr.mxu0 0.0
    %742 = vmatpush1.msra.mxu0 0.0
    %743 = vmatprep.subr.mxu0 0.0
    %744 = vmatpush1.msra.mxu0 0.0
    %745 = vmatprep.subr.mxu0 0.0
    %746 = vmatpush1.msra.mxu0 0.0
    %747 = vmatprep.subr.mxu0 0.0
    %748 = vmatpush1.msra.mxu0 0.0
    %749 = vmatprep.subr.mxu0 0.0
    %750 = vmatpush1.msra.mxu0 0.0
    %751 = vmatprep.subr.mxu0 0.0
    %752 = vmatpush1.msra.mxu0 0.0
    %753 = vmatprep.subr.mxu0 0.0
    %754 = vmatpush1.msra.mxu0 0.0
    %755 = vmatprep.subr.mxu0 0.0
    %756 = vmatpush1.msra.mxu0 0.0
    %757 = vmatprep.subr.mxu0 0.0
    %758 = vmatpush1.msra.mxu0 0.0
    %759 = vmatprep.subr.mxu0 0.0
    %760 = vmatpush1.msra.mxu0 0.0
    %761 = vmatprep.subr.mxu0 0.0
    %762 = vmatpush1.msra.mxu0 0.0
    %763 = vmatprep.subr.mxu0 0.0
    %764 = vmatpush1.msra.mxu0 0.0
    %765 = vmatprep.subr.mxu0 0.0
    %766 = vmatpush1.msra.mxu0 0.0
    %767 = vmatprep.mubr.f32.mxu0 0.0
    %768 = vmatmul.mubr.f32.gmra.mrb[0].mxu0 %v617
    %v769 = vpop.f32.mrb[0].mxu0
    %v770 = vadd.f32 %v686, %v769
    %v771 = vpop.f32.mrb[0].mxu0
    %v772 = vadd.f32 %v690, %v771
    %773 = vdwg.mxu0
    %774 = vmatprep.subr.mxu0 %v621
    %775 = vmatpush1.msra.mxu0 %v620
    %776 = vmatprep.subr.mxu0 %v625
    %777 = vmatpush1.msra.mxu0 %v624
    %778 = vmatprep.subr.mxu0 %v629
    %779 = vmatpush1.msra.mxu0 %v628
    %780 = vmatprep.subr.mxu0 %v633
    %781 = vmatpush1.msra.mxu0 %v632
    %782 = vmatprep.subr.mxu0 %v637
    %783 = vmatpush1.msra.mxu0 %v636
    %784 = vmatprep.subr.mxu0 %v641
    %785 = vmatpush1.msra.mxu0 %v640
    %786 = vmatprep.subr.mxu0 %v645
    %787 = vmatpush1.msra.mxu0 %v644
    %788 = vmatprep.subr.mxu0 %v649
    %789 = vmatpush1.msra.mxu0 %v648
    %790 = vmatprep.subr.mxu0 %v653
    %791 = vmatpush1.msra.mxu0 %v652
    %792 = vmatprep.subr.mxu0 %v657
    %793 = vmatpush1.msra.mxu0 %v656
    %794 = vmatprep.subr.mxu0 %v661
    %795 = vmatpush1.msra.mxu0 %v660
    %796 = vmatprep.subr.mxu0 %v665
    %797 = vmatpush1.msra.mxu0 %v664
    %798 = vmatprep.subr.mxu0 %v669
    %799 = vmatpush1.msra.mxu0 %v668
    %800 = vmatprep.subr.mxu0 %v673
    %801 = vmatpush1.msra.mxu0 %v672
    %802 = vmatprep.subr.mxu0 %v677
    %803 = vmatpush1.msra.mxu0 %v676
    %804 = vmatprep.subr.mxu0 %v681
    %805 = vmatpush1.msra.mxu0 %v680
    %806 = vmatprep.subr.mxu0 0.0
    %807 = vmatpush1.msra.mxu0 0.0
    %808 = vmatprep.subr.mxu0 0.0
    %809 = vmatpush1.msra.mxu0 0.0
    %810 = vmatprep.subr.mxu0 0.0
    %811 = vmatpush1.msra.mxu0 0.0
    %812 = vmatprep.subr.mxu0 0.0
    %813 = vmatpush1.msra.mxu0 0.0
    %814 = vmatprep.subr.mxu0 0.0
    %815 = vmatpush1.msra.mxu0 0.0
    %816 = vmatprep.subr.mxu0 0.0
    %817 = vmatpush1.msra.mxu0 0.0
    %818 = vmatprep.subr.mxu0 0.0
    %819 = vmatpush1.msra.mxu0 0.0
    %820 = vmatprep.subr.mxu0 0.0
    %821 = vmatpush1.msra.mxu0 0.0
    %822 = vmatprep.subr.mxu0 0.0
    %823 = vmatpush1.msra.mxu0 0.0
    %824 = vmatprep.subr.mxu0 0.0
    %825 = vmatpush1.msra.mxu0 0.0
    %826 = vmatprep.subr.mxu0 0.0
    %827 = vmatpush1.msra.mxu0 0.0
    %828 = vmatprep.subr.mxu0 0.0
    %829 = vmatpush1.msra.mxu0 0.0
    %830 = vmatprep.subr.mxu0 0.0
    %831 = vmatpush1.msra.mxu0 0.0
    %832 = vmatprep.subr.mxu0 0.0
    %833 = vmatpush1.msra.mxu0 0.0
    %834 = vmatprep.subr.mxu0 0.0
    %835 = vmatpush1.msra.mxu0 0.0
    %836 = vmatprep.subr.mxu0 0.0
    %837 = vmatpush1.msra.mxu0 0.0
    %838 = vmatprep.mubr.f32.mxu0 0.0
    %839 = vmatmul.mubr.f32.gmra.mrb[0].mxu0 %v617
    %v840 = vpop.f32.mrb[0].mxu0
    %v841 = vadd.f32 %v694, %v840
    %v842 = vpop.f32.mrb[0].mxu0
    %v843 = vadd.f32 %v698, %v842
    %844 = vdwg.mxu0
    %v845 = vld [vmem:[#allocation8] sm:$0xff]
    %v846 = vld [vmem:[#allocation8 + $0x8] sm:$0xff]
    %v847 = vld [vmem:[#allocation8 + $0x10] sm:$0xff]
    %v848 = vld [vmem:[#allocation8 + $0x18] sm:$0xff]
    %v849 = vld [vmem:[#allocation8 + $0x20] sm:$0xff]
    %v850 = vld [vmem:[#allocation8 + $0x28] sm:$0xff]
    %v851 = vld [vmem:[#allocation8 + $0x30] sm:$0xff]
    %v852 = vld [vmem:[#allocation8 + $0x38] sm:$0xff]
    %v853 = vld [vmem:[#allocation8 + $0x40] sm:$0xff]
    %v854 = vld [vmem:[#allocation8 + $0x48] sm:$0xff]
    %v855 = vld [vmem:[#allocation8 + $0x50] sm:$0xff]
    %v856 = vld [vmem:[#allocation8 + $0x58] sm:$0xff]
    %v857 = vld [vmem:[#allocation8 + $0x60] sm:$0xff]
    %v858 = vld [vmem:[#allocation8 + $0x68] sm:$0xff]
    %v859 = vld [vmem:[#allocation8 + $0x70] sm:$0xff]
    %v860 = vld [vmem:[#allocation8 + $0x78] sm:$0xff]
    %v861 = vld [vmem:[#allocation8 + $0x80] sm:$0xff]
    %v862 = vld [vmem:[#allocation8 + $0x88] sm:$0xff]
    %v863 = vld [vmem:[#allocation8 + $0x90] sm:$0xff]
    %v864 = vld [vmem:[#allocation8 + $0x98] sm:$0xff]
    %v865 = vld [vmem:[#allocation8 + $0xa0] sm:$0xff]
    %v866 = vld [vmem:[#allocation8 + $0xa8] sm:$0xff]
    %v867 = vld [vmem:[#allocation8 + $0xb0] sm:$0xff]
    %v868 = vld [vmem:[#allocation8 + $0xb8] sm:$0xff]
    %v869 = vld [vmem:[#allocation8 + $0xc0] sm:$0xff]
    %v870 = vld [vmem:[#allocation8 + $0xc8] sm:$0xff]
    %v871 = vld [vmem:[#allocation8 + $0xd0] sm:$0xff]
    %v872 = vld [vmem:[#allocation8 + $0xd8] sm:$0xff]
    %v873 = vld [vmem:[#allocation8 + $0xe0] sm:$0xff]
    %v874 = vld [vmem:[#allocation8 + $0xe8] sm:$0xff]
    %v875 = vld [vmem:[#allocation8 + $0xf0] sm:$0xff]
    %v876 = vld [vmem:[#allocation8 + $0xf8] sm:$0xff]
    %v877 = vld [vmem:[#allocation8 + $0x100] sm:$0xff]
    %v878 = vld [vmem:[#allocation8 + $0x108] sm:$0xff]
    %v879 = vld [vmem:[#allocation8 + $0x110] sm:$0xff]
    %v880 = vld [vmem:[#allocation8 + $0x118] sm:$0xff]
    %v881 = vld [vmem:[#allocation8 + $0x120] sm:$0xff]
    %v882 = vld [vmem:[#allocation8 + $0x128] sm:$0xff]
    %v883 = vld [vmem:[#allocation8 + $0x130] sm:$0xff]
    %v884 = vld [vmem:[#allocation8 + $0x138] sm:$0xff]
    %v885 = vld [vmem:[#allocation8 + $0x140] sm:$0xff]
    %v886 = vld [vmem:[#allocation8 + $0x148] sm:$0xff]
    %v887 = vld [vmem:[#allocation8 + $0x150] sm:$0xff]
    %v888 = vld [vmem:[#allocation8 + $0x158] sm:$0xff]
    %v889 = vld [vmem:[#allocation8 + $0x160] sm:$0xff]
    %v890 = vld [vmem:[#allocation8 + $0x168] sm:$0xff]
    %v891 = vld [vmem:[#allocation8 + $0x170] sm:$0xff]
    %v892 = vld [vmem:[#allocation8 + $0x178] sm:$0xff]
    %v893 = vld [vmem:[#allocation8 + $0x180] sm:$0xff]
    %v894 = vld [vmem:[#allocation8 + $0x188] sm:$0xff]
    %v895 = vld [vmem:[#allocation8 + $0x190] sm:$0xff]
    %v896 = vld [vmem:[#allocation8 + $0x198] sm:$0xff]
    %v897 = vld [vmem:[#allocation8 + $0x1a0] sm:$0xff]
    %v898 = vld [vmem:[#allocation8 + $0x1a8] sm:$0xff]
    %v899 = vld [vmem:[#allocation8 + $0x1b0] sm:$0xff]
    %v900 = vld [vmem:[#allocation8 + $0x1b8] sm:$0xff]
    %v901 = vld [vmem:[#allocation8 + $0x1c0] sm:$0xff]
    %v902 = vld [vmem:[#allocation8 + $0x1c8] sm:$0xff]
    %v903 = vld [vmem:[#allocation8 + $0x1d0] sm:$0xff]
    %v904 = vld [vmem:[#allocation8 + $0x1d8] sm:$0xff]
    %v905 = vld [vmem:[#allocation8 + $0x1e0] sm:$0xff]
    %v906 = vld [vmem:[#allocation8 + $0x1e8] sm:$0xff]
    %v907 = vld [vmem:[#allocation8 + $0x1f0] sm:$0xff]
    %v908 = vld [vmem:[#allocation8 + $0x1f8] sm:$0xff]
    %909 = vmatprep.subr.mxu0 %v846
    %910 = vmatpush1.msra.mxu0 %v845
    %911 = vmatprep.subr.mxu0 %v850
    %912 = vmatpush1.msra.mxu0 %v849
    %913 = vmatprep.subr.mxu0 %v854
    %914 = vmatpush1.msra.mxu0 %v853
    %915 = vmatprep.subr.mxu0 %v858
    %916 = vmatpush1.msra.mxu0 %v857
    %917 = vmatprep.subr.mxu0 %v862
    %918 = vmatpush1.msra.mxu0 %v861
    %919 = vmatprep.subr.mxu0 %v866
    %920 = vmatpush1.msra.mxu0 %v865
    %921 = vmatprep.subr.mxu0 %v870
    %922 = vmatpush1.msra.mxu0 %v869
    %923 = vmatprep.subr.mxu0 %v874
    %924 = vmatpush1.msra.mxu0 %v873
    %925 = vmatprep.subr.mxu0 %v878
    %926 = vmatpush1.msra.mxu0 %v877
    %927 = vmatprep.subr.mxu0 %v882
    %928 = vmatpush1.msra.mxu0 %v881
    %929 = vmatprep.subr.mxu0 %v886
    %930 = vmatpush1.msra.mxu0 %v885
    %931 = vmatprep.subr.mxu0 %v890
    %932 = vmatpush1.msra.mxu0 %v889
    %933 = vmatprep.subr.mxu0 %v894
    %934 = vmatpush1.msra.mxu0 %v893
    %935 = vmatprep.subr.mxu0 %v898
    %936 = vmatpush1.msra.mxu0 %v897
    %937 = vmatprep.subr.mxu0 %v902
    %938 = vmatpush1.msra.mxu0 %v901
    %939 = vmatprep.subr.mxu0 %v906
    %940 = vmatpush1.msra.mxu0 %v905
    %941 = vmatprep.subr.mxu0 0.0
    %942 = vmatpush1.msra.mxu0 0.0
    %943 = vmatprep.subr.mxu0 0.0
    %944 = vmatpush1.msra.mxu0 0.0
    %945 = vmatprep.subr.mxu0 0.0
    %946 = vmatpush1.msra.mxu0 0.0
    %947 = vmatprep.subr.mxu0 0.0
    %948 = vmatpush1.msra.mxu0 0.0
    %949 = vmatprep.subr.mxu0 0.0
    %950 = vmatpush1.msra.mxu0 0.0
    %951 = vmatprep.subr.mxu0 0.0
    %952 = vmatpush1.msra.mxu0 0.0
    %953 = vmatprep.subr.mxu0 0.0
    %954 = vmatpush1.msra.mxu0 0.0
    %955 = vmatprep.subr.mxu0 0.0
    %956 = vmatpush1.msra.mxu0 0.0
    %957 = vmatprep.subr.mxu0 0.0
    %958 = vmatpush1.msra.mxu0 0.0
    %959 = vmatprep.subr.mxu0 0.0
    %960 = vmatpush1.msra.mxu0 0.0
    %961 = vmatprep.subr.mxu0 0.0
    %962 = vmatpush1.msra.mxu0 0.0
    %963 = vmatprep.subr.mxu0 0.0
    %964 = vmatpush1.msra.mxu0 0.0
    %965 = vmatprep.subr.mxu0 0.0
    %966 = vmatpush1.msra.mxu0 0.0
    %967 = vmatprep.subr.mxu0 0.0
    %968 = vmatpush1.msra.mxu0 0.0
    %969 = vmatprep.subr.mxu0 0.0
    %970 = vmatpush1.msra.mxu0 0.0
    %971 = vmatprep.subr.mxu0 0.0
    %972 = vmatpush1.msra.mxu0 0.0
    %973 = vmatprep.mubr.f32.mxu0 0.0
    %974 = vmatmul.mubr.f32.gmra.mrb[0].mxu0 0.0
    %v975 = vpop.f32.mrb[0].mxu0
    %v976 = vadd.f32 0.0, %v975
    %v977 = vpop.f32.mrb[0].mxu0
    %v978 = vadd.f32 0.0, %v977
    %979 = vdwg.mxu0
    %980 = vmatprep.subr.mxu0 %v848
    %981 = vmatpush1.msra.mxu0 %v847
    %982 = vmatprep.subr.mxu0 %v852
    %983 = vmatpush1.msra.mxu0 %v851
    %984 = vmatprep.subr.mxu0 %v856
    %985 = vmatpush1.msra.mxu0 %v855
    %986 = vmatprep.subr.mxu0 %v860
    %987 = vmatpush1.msra.mxu0 %v859
    %988 = vmatprep.subr.mxu0 %v864
    %989 = vmatpush1.msra.mxu0 %v863
    %990 = vmatprep.subr.mxu0 %v868
    %991 = vmatpush1.msra.mxu0 %v867
    %992 = vmatprep.subr.mxu0 %v872
    %993 = vmatpush1.msra.mxu0 %v871
    %994 = vmatprep.subr.mxu0 %v876
    %995 = vmatpush1.msra.mxu0 %v875
    %996 = vmatprep.subr.mxu0 %v880
    %997 = vmatpush1.msra.mxu0 %v879
    %998 = vmatprep.subr.mxu0 %v884
    %999 = vmatpush1.msra.mxu0 %v883
    %1000 = vmatprep.subr.mxu0 %v888
    %1001 = vmatpush1.msra.mxu0 %v887
    %1002 = vmatprep.subr.mxu0 %v892
    %1003 = vmatpush1.msra.mxu0 %v891
    %1004 = vmatprep.subr.mxu0 %v896
    %1005 = vmatpush1.msra.mxu0 %v895
    %1006 = vmatprep.subr.mxu0 %v900
    %1007 = vmatpush1.msra.mxu0 %v899
    %1008 = vmatprep.subr.mxu0 %v904
    %1009 = vmatpush1.msra.mxu0 %v903
    %1010 = vmatprep.subr.mxu0 %v908
    %1011 = vmatpush1.msra.mxu0 %v907
    %1012 = vmatprep.subr.mxu0 0.0
    %1013 = vmatpush1.msra.mxu0 0.0
    %1014 = vmatprep.subr.mxu0 0.0
    %1015 = vmatpush1.msra.mxu0 0.0
    %1016 = vmatprep.subr.mxu0 0.0
    %1017 = vmatpush1.msra.mxu0 0.0
    %1018 = vmatprep.subr.mxu0 0.0
    %1019 = vmatpush1.msra.mxu0 0.0
    %1020 = vmatprep.subr.mxu0 0.0
    %1021 = vmatpush1.msra.mxu0 0.0
    %1022 = vmatprep.subr.mxu0 0.0
    %1023 = vmatpush1.msra.mxu0 0.0
    %1024 = vmatprep.subr.mxu0 0.0
    %1025 = vmatpush1.msra.mxu0 0.0
    %1026 = vmatprep.subr.mxu0 0.0
    %1027 = vmatpush1.msra.mxu0 0.0
    %1028 = vmatprep.subr.mxu0 0.0
    %1029 = vmatpush1.msra.mxu0 0.0
    %1030 = vmatprep.subr.mxu0 0.0
    %1031 = vmatpush1.msra.mxu0 0.0
    %1032 = vmatprep.subr.mxu0 0.0
    %1033 = vmatpush1.msra.mxu0 0.0
    %1034 = vmatprep.subr.mxu0 0.0
    %1035 = vmatpush1.msra.mxu0 0.0
    %1036 = vmatprep.subr.mxu0 0.0
    %1037 = vmatpush1.msra.mxu0 0.0
    %1038 = vmatprep.subr.mxu0 0.0
    %1039 = vmatpush1.msra.mxu0 0.0
    %1040 = vmatprep.subr.mxu0 0.0
    %1041 = vmatpush1.msra.mxu0 0.0
    %1042 = vmatprep.subr.mxu0 0.0
    %1043 = vmatpush1.msra.mxu0 0.0
    %1044 = vmatprep.mubr.f32.mxu0 0.0
    %1045 = vmatmul.mubr.f32.gmra.mrb[0].mxu0 0.0
    %v1046 = vpop.f32.mrb[0].mxu0
    %v1047 = vadd.f32 0.0, %v1046
    %v1048 = vpop.f32.mrb[0].mxu0
    %v1049 = vadd.f32 0.0, %v1048
    %1050 = vdwg.mxu0
    %v1051 = vadd.f32 %v770, %v976
    %v1052 = vadd.f32 %v772, %v978
    %v1053 = vadd.f32 %v841, %v1047
    %v1054 = vadd.f32 %v843, %v1049
    %v1055 = vmul.f32 %v1051, 0.5
    %v1056 = vmul.f32 %v1052, 0.5
    %v1057 = vmul.f32 %v1053, 0.5
    %v1058 = vtanh.pop %v1055
    %v1059 = vtanh.pop %v1056
    %v1060 = vtanh.pop %v1057
    %v1061 = vadd.f32 %v1058, 1.0
    %v1062 = vadd.f32 %v1059, 1.0
    %v1063 = vadd.f32 %v1060, 1.0
    %v1064 = vmul.f32 %v1061, 0.5
    %v1065 = vmul.f32 %v1062, 0.5
    %v1066 = vmul.f32 %v1063, 0.5
    %v1067 = vtanh.pop %v1054
    %v1068 = vmul.f32 %v1065, 0.0
    %v1069 = vmul.f32 %v1064, %v1067
    %v1070 = vadd.f32 %v1068, %v1069
    %v1071 = vtanh.pop %v1070
    %v1072 = vmul.f32 %v1066, %v1071
    %1073 = vmatprep.subr.mxu0 %v387
    %1074 = vmatpush1.msra.mxu0 %v386
    %1075 = vmatprep.subr.mxu0 %v391
    %1076 = vmatpush1.msra.mxu0 %v390
    %1077 = vmatprep.subr.mxu0 %v395
    %1078 = vmatpush1.msra.mxu0 %v394
    %1079 = vmatprep.subr.mxu0 %v399
    %1080 = vmatpush1.msra.mxu0 %v398
    %1081 = vmatprep.subr.mxu0 %v403
    %1082 = vmatpush1.msra.mxu0 %v402
    %1083 = vmatprep.subr.mxu0 %v407
    %1084 = vmatpush1.msra.mxu0 %v406
    %1085 = vmatprep.subr.mxu0 %v411
    %1086 = vmatpush1.msra.mxu0 %v410
    %1087 = vmatprep.subr.mxu0 %v415
    %1088 = vmatpush1.msra.mxu0 %v414
    %1089 = vmatprep.subr.mxu0 %v419
    %1090 = vmatpush1.msra.mxu0 %v418
    %1091 = vmatprep.subr.mxu0 %v423
    %1092 = vmatpush1.msra.mxu0 %v422
    %1093 = vmatprep.subr.mxu0 %v427
    %1094 = vmatpush1.msra.mxu0 %v426
    %1095 = vmatprep.subr.mxu0 %v431
    %1096 = vmatpush1.msra.mxu0 %v430
    %1097 = vmatprep.subr.mxu0 %v435
    %1098 = vmatpush1.msra.mxu0 %v434
    %1099 = vmatprep.subr.mxu0 %v439
    %1100 = vmatpush1.msra.mxu0 %v438
    %1101 = vmatprep.subr.mxu0 %v443
    %1102 = vmatpush1.msra.mxu0 %v442
    %1103 = vmatprep.subr.mxu0 %v447
    %1104 = vmatpush1.msra.mxu0 %v446
    %1105 = vmatprep.subr.mxu0 0.0
    %1106 = vmatpush1.msra.mxu0 0.0
    %1107 = vmatprep.subr.mxu0 0.0
    %1108 = vmatpush1.msra.mxu0 0.0
    %1109 = vmatprep.subr.mxu0 0.0
    %1110 = vmatpush1.msra.mxu0 0.0
    %1111 = vmatprep.subr.mxu0 0.0
    %1112 = vmatpush1.msra.mxu0 0.0
    %1113 = vmatprep.subr.mxu0 0.0
    %1114 = vmatpush1.msra.mxu0 0.0
    %1115 = vmatprep.subr.mxu0 0.0
    %1116 = vmatpush1.msra.mxu0 0.0
    %1117 = vmatprep.subr.mxu0 0.0
    %1118 = vmatpush1.msra.mxu0 0.0
    %1119 = vmatprep.subr.mxu0 0.0
    %1120 = vmatpush1.msra.mxu0 0.0
    %1121 = vmatprep.subr.mxu0 0.0
    %1122 = vmatpush1.msra.mxu0 0.0
    %1123 = vmatprep.subr.mxu0 0.0
    %1124 = vmatpush1.msra.mxu0 0.0
    %1125 = vmatprep.subr.mxu0 0.0
    %1126 = vmatpush1.msra.mxu0 0.0
    %1127 = vmatprep.subr.mxu0 0.0
    %1128 = vmatpush1.msra.mxu0 0.0
    %1129 = vmatprep.subr.mxu0 0.0
    %1130 = vmatpush1.msra.mxu0 0.0
    %1131 = vmatprep.subr.mxu0 0.0
    %1132 = vmatpush1.msra.mxu0 0.0
    %1133 = vmatprep.subr.mxu0 0.0
    %1134 = vmatpush1.msra.mxu0 0.0
    %1135 = vmatprep.subr.mxu0 0.0
    %1136 = vmatpush1.msra.mxu0 0.0
    %1137 = vmatprep.mubr.f32.mxu0 0.0
    %1138 = vmatmul.mubr.f32.gmra.mrb[0].mxu0 %v613
    %v1139 = vpop.f32.mrb[0].mxu0
    %v1140 = vadd.f32 0.0, %v1139
    %v1141 = vpop.f32.mrb[0].mxu0
    %v1142 = vadd.f32 0.0, %v1141
    %1143 = vdwg.mxu0
    %1144 = vmatprep.subr.mxu0 %v389
    %1145 = vmatpush1.msra.mxu0 %v388
    %1146 = vmatprep.subr.mxu0 %v393
    %1147 = vmatpush1.msra.mxu0 %v392
    %1148 = vmatprep.subr.mxu0 %v397
    %1149 = vmatpush1.msra.mxu0 %v396
    %1150 = vmatprep.subr.mxu0 %v401
    %1151 = vmatpush1.msra.mxu0 %v400
    %1152 = vmatprep.subr.mxu0 %v405
    %1153 = vmatpush1.msra.mxu0 %v404
    %1154 = vmatprep.subr.mxu0 %v409
    %1155 = vmatpush1.msra.mxu0 %v408
    %1156 = vmatprep.subr.mxu0 %v413
    %1157 = vmatpush1.msra.mxu0 %v412
    %1158 = vmatprep.subr.mxu0 %v417
    %1159 = vmatpush1.msra.mxu0 %v416
    %1160 = vmatprep.subr.mxu0 %v421
    %1161 = vmatpush1.msra.mxu0 %v420
    %1162 = vmatprep.subr.mxu0 %v425
    %1163 = vmatpush1.msra.mxu0 %v424
    %1164 = vmatprep.subr.mxu0 %v429
    %1165 = vmatpush1.msra.mxu0 %v428
    %1166 = vmatprep.subr.mxu0 %v433
    %1167 = vmatpush1.msra.mxu0 %v432
    %1168 = vmatprep.subr.mxu0 %v437
    %1169 = vmatpush1.msra.mxu0 %v436
    %1170 = vmatprep.subr.mxu0 %v441
    %1171 = vmatpush1.msra.mxu0 %v440
    %1172 = vmatprep.subr.mxu0 %v445
    %1173 = vmatpush1.msra.mxu0 %v444
    %1174 = vmatprep.subr.mxu0 %v449
    %1175 = vmatpush1.msra.mxu0 %v448
    %1176 = vmatprep.subr.mxu0 0.0
    %1177 = vmatpush1.msra.mxu0 0.0
    %1178 = vmatprep.subr.mxu0 0.0
    %1179 = vmatpush1.msra.mxu0 0.0
    %1180 = vmatprep.subr.mxu0 0.0
    %1181 = vmatpush1.msra.mxu0 0.0
    %1182 = vmatprep.subr.mxu0 0.0
    %1183 = vmatpush1.msra.mxu0 0.0
    %1184 = vmatprep.subr.mxu0 0.0
    %1185 = vmatpush1.msra.mxu0 0.0
    %1186 = vmatprep.subr.mxu0 0.0
    %1187 = vmatpush1.msra.mxu0 0.0
    %1188 = vmatprep.subr.mxu0 0.0
    %1189 = vmatpush1.msra.mxu0 0.0
    %1190 = vmatprep.subr.mxu0 0.0
    %1191 = vmatpush1.msra.mxu0 0.0
    %1192 = vmatprep.subr.mxu0 0.0
    %1193 = vmatpush1.msra.mxu0 0.0
    %1194 = vmatprep.subr.mxu0 0.0
    %1195 = vmatpush1.msra.mxu0 0.0
    %1196 = vmatprep.subr.mxu0 0.0
    %1197 = vmatpush1.msra.mxu0 0.0
    %1198 = vmatprep.subr.mxu0 0.0
    %1199 = vmatpush1.msra.mxu0 0.0
    %1200 = vmatprep.subr.mxu0 0.0
    %1201 = vmatpush1.msra.mxu0 0.0
    %1202 = vmatprep.subr.mxu0 0.0
    %1203 = vmatpush1.msra.mxu0 0.0
    %1204 = vmatprep.subr.mxu0 0.0
    %1205 = vmatpush1.msra.mxu0 0.0
    %1206 = vmatprep.subr.mxu0 0.0
    %1207 = vmatpush1.msra.mxu0 0.0
    %1208 = vmatprep.mubr.f32.mxu0 0.0
    %1209 = vmatmul.mubr.f32.gmra.mrb[0].mxu0 %v613
    %v1210 = vpop.f32.mrb[0].mxu0
    %v1211 = vadd.f32 0.0, %v1210
    %v1212 = vpop.f32.mrb[0].mxu0
    %v1213 = vadd.f32 0.0, %v1212
    %1214 = vdwg.mxu0
    %v1219 = vrot.slane %v1140, 7
    %v1220 = vrot.slane %v1142, 7
    %v1221 = vrot.slane %v1211, 7
    %v1222 = vrot.slane %v1213, 7
    %v1227 = vadd.f32 %v311, %v1219
    %v1228 = vadd.f32 %v313, %v1220
    %v1229 = vadd.f32 %v382, %v1221
    %v1230 = vadd.f32 %v384, %v1222
    %v1231 = vmul.f32 %v1227, 0.5
    %v1232 = vmul.f32 %v1228, 0.5
    %v1233 = vmul.f32 %v1229, 0.5
    %v1234 = vtanh.pop %v1231
    %v1235 = vtanh.pop %v1232
    %v1236 = vtanh.pop %v1233
    %v1237 = vadd.f32 %v1234, 1.0
    %v1238 = vadd.f32 %v1235, 1.0
    %v1239 = vadd.f32 %v1236, 1.0
    %v1240 = vmul.f32 %v1237, 0.5
    %v1241 = vmul.f32 %v1238, 0.5
    %v1242 = vmul.f32 %v1239, 0.5
    %v1243 = vtanh.pop %v1230
    %v1245 = vrot.slane %v611, 7
    %v1247 = vmul.f32 %v1241, %v1245
    %v1248 = vmul.f32 %v1240, %v1243
    %v1249 = vadd.f32 %v1247, %v1248
    %v1250 = vtanh.pop %v1249
    %v1251 = vmul.f32 %v1242, %v1250
    %v1252 = vmul.f32 %v1072, 0.5
    %v1253 = vtanh.pop %v1252
    %v1254 = vadd.f32 %v1253, 1.0
    %v1255 = vmul.f32 %v1254, 0.5
    %v1256 = vld [vmem:[#allocation10] sm:$0xff]
    %v1257 = vld [vmem:[#allocation10 + $0x8] sm:$0xff]
    %v1258 = vld [vmem:[#allocation10 + $0x10] sm:$0xff]
    %v1259 = vld [vmem:[#allocation10 + $0x18] sm:$0xff]
    %v1260 = vld [vmem:[#allocation10 + $0x20] sm:$0xff]
    %v1261 = vld [vmem:[#allocation10 + $0x28] sm:$0xff]
    %v1262 = vld [vmem:[#allocation10 + $0x30] sm:$0xff]
    %v1263 = vld [vmem:[#allocation10 + $0x38] sm:$0xff]
    %v1264 = vld [vmem:[#allocation10 + $0x40] sm:$0xff]
    %v1265 = vld [vmem:[#allocation10 + $0x48] sm:$0xff]
    %v1266 = vld [vmem:[#allocation10 + $0x50] sm:$0xff]
    %v1267 = vld [vmem:[#allocation10 + $0x58] sm:$0xff]
    %v1268 = vld [vmem:[#allocation10 + $0x60] sm:$0xff]
    %v1269 = vld [vmem:[#allocation10 + $0x68] sm:$0xff]
    %v1270 = vld [vmem:[#allocation10 + $0x70] sm:$0xff]
    %v1271 = vld [vmem:[#allocation10 + $0x78] sm:$0xff]
    %v1272 = vld [vmem:[#allocation10 + $0x80] sm:$0xff]
    %v1273 = vld [vmem:[#allocation10 + $0x88] sm:$0xff]
    %v1274 = vld [vmem:[#allocation10 + $0x90] sm:$0xff]
    %v1275 = vld [vmem:[#allocation10 + $0x98] sm:$0xff]
    %v1276 = vld [vmem:[#allocation10 + $0xa0] sm:$0xff]
    %v1277 = vld [vmem:[#allocation10 + $0xa8] sm:$0xff]
    %v1278 = vld [vmem:[#allocation10 + $0xb0] sm:$0xff]
    %v1279 = vld [vmem:[#allocation10 + $0xb8] sm:$0xff]
    %v1280 = vld [vmem:[#allocation10 + $0xc0] sm:$0xff]
    %v1281 = vld [vmem:[#allocation10 + $0xc8] sm:$0xff]
    %v1282 = vld [vmem:[#allocation10 + $0xd0] sm:$0xff]
    %v1283 = vld [vmem:[#allocation10 + $0xd8] sm:$0xff]
    %v1284 = vld [vmem:[#allocation10 + $0xe0] sm:$0xff]
    %v1285 = vld [vmem:[#allocation10 + $0xe8] sm:$0xff]
    %v1286 = vld [vmem:[#allocation10 + $0xf0] sm:$0xff]
    %v1287 = vld [vmem:[#allocation10 + $0xf8] sm:$0xff]
    %v1288 = vld [vmem:[#allocation10 + $0x100] sm:$0xff]
    %v1289 = vld [vmem:[#allocation10 + $0x108] sm:$0xff]
    %v1290 = vld [vmem:[#allocation10 + $0x110] sm:$0xff]
    %v1291 = vld [vmem:[#allocation10 + $0x118] sm:$0xff]
    %v1292 = vld [vmem:[#allocation10 + $0x120] sm:$0xff]
    %v1293 = vld [vmem:[#allocation10 + $0x128] sm:$0xff]
    %v1294 = vld [vmem:[#allocation10 + $0x130] sm:$0xff]
    %v1295 = vld [vmem:[#allocation10 + $0x138] sm:$0xff]
    %v1296 = vld [vmem:[#allocation10 + $0x140] sm:$0xff]
    %v1297 = vld [vmem:[#allocation10 + $0x148] sm:$0xff]
    %v1298 = vld [vmem:[#allocation10 + $0x150] sm:$0xff]
    %v1299 = vld [vmem:[#allocation10 + $0x158] sm:$0xff]
    %v1300 = vld [vmem:[#allocation10 + $0x160] sm:$0xff]
    %v1301 = vld [vmem:[#allocation10 + $0x168] sm:$0xff]
    %v1302 = vld [vmem:[#allocation10 + $0x170] sm:$0xff]
    %v1303 = vld [vmem:[#allocation10 + $0x178] sm:$0xff]
    %v1304 = vld [vmem:[#allocation10 + $0x180] sm:$0xff]
    %v1305 = vld [vmem:[#allocation10 + $0x188] sm:$0xff]
    %v1306 = vld [vmem:[#allocation10 + $0x190] sm:$0xff]
    %v1307 = vld [vmem:[#allocation10 + $0x198] sm:$0xff]
    %v1308 = vld [vmem:[#allocation10 + $0x1a0] sm:$0xff]
    %v1309 = vld [vmem:[#allocation10 + $0x1a8] sm:$0xff]
    %v1310 = vld [vmem:[#allocation10 + $0x1b0] sm:$0xff]
    %v1311 = vld [vmem:[#allocation10 + $0x1b8] sm:$0xff]
    %v1312 = vld [vmem:[#allocation10 + $0x1c0] sm:$0xff]
    %v1313 = vld [vmem:[#allocation10 + $0x1c8] sm:$0xff]
    %v1314 = vld [vmem:[#allocation10 + $0x1d0] sm:$0xff]
    %v1315 = vld [vmem:[#allocation10 + $0x1d8] sm:$0xff]
    %v1316 = vld [vmem:[#allocation10 + $0x1e0] sm:$0xff]
    %v1317 = vld [vmem:[#allocation10 + $0x1e8] sm:$0xff]
    %v1318 = vld [vmem:[#allocation10 + $0x1f0] sm:$0xff]
    %v1319 = vld [vmem:[#allocation10 + $0x1f8] sm:$0xff]
    %v1321 = vlaneseq
    %v1322 = vshrl.u32 %v1321, 7
    %v1323 = vsub.s32 0, %v1322
    %v1324 = vrot.slane %v156, %v1323
    %v1325 = vlaneseq
    %v1326 = vshrl.u32 %v1325, 7
    %v1327 = vsub.s32 1, %v1326
    %v1328 = vrot.slane %v156, %v1327
    %v1329 = vlaneseq
    %v1330 = vshrl.u32 %v1329, 7
    %v1331 = vsub.s32 2, %v1330
    %v1332 = vrot.slane %v156, %v1331
    %v1333 = vlaneseq
    %v1334 = vshrl.u32 %v1333, 7
    %v1335 = vsub.s32 3, %v1334
    %v1336 = vrot.slane %v156, %v1335
    %1341 = vmatprep.subr.mxu0 %v1257
    %1342 = vmatpush1.msra.mxu0 %v1256
    %1343 = vmatprep.subr.mxu0 %v1261
    %1344 = vmatpush1.msra.mxu0 %v1260
    %1345 = vmatprep.subr.mxu0 %v1265
    %1346 = vmatpush1.msra.mxu0 %v1264
    %1347 = vmatprep.subr.mxu0 %v1269
    %1348 = vmatpush1.msra.mxu0 %v1268
    %1349 = vmatprep.subr.mxu0 %v1273
    %1350 = vmatpush1.msra.mxu0 %v1272
    %1351 = vmatprep.subr.mxu0 %v1277
    %1352 = vmatpush1.msra.mxu0 %v1276
    %1353 = vmatprep.subr.mxu0 %v1281
    %1354 = vmatpush1.msra.mxu0 %v1280
    %1355 = vmatprep.subr.mxu0 %v1285
    %1356 = vmatpush1.msra.mxu0 %v1284
    %1357 = vmatprep.subr.mxu0 %v1289
    %1358 = vmatpush1.msra.mxu0 %v1288
    %1359 = vmatprep.subr.mxu0 %v1293
    %1360 = vmatpush1.msra.mxu0 %v1292
    %1361 = vmatprep.subr.mxu0 %v1297
    %1362 = vmatpush1.msra.mxu0 %v1296
    %1363 = vmatprep.subr.mxu0 %v1301
    %1364 = vmatpush1.msra.mxu0 %v1300
    %1365 = vmatprep.subr.mxu0 %v1305
    %1366 = vmatpush1.msra.mxu0 %v1304
    %1367 = vmatprep.subr.mxu0 %v1309
    %1368 = vmatpush1.msra.mxu0 %v1308
    %1369 = vmatprep.subr.mxu0 %v1313
    %1370 = vmatpush1.msra.mxu0 %v1312
    %1371 = vmatprep.subr.mxu0 %v1317
    %1372 = vmatpush1.msra.mxu0 %v1316
    %1373 = vmatprep.subr.mxu0 0.0
    %1374 = vmatpush1.msra.mxu0 0.0
    %1375 = vmatprep.subr.mxu0 0.0
    %1376 = vmatpush1.msra.mxu0 0.0
    %1377 = vmatprep.subr.mxu0 0.0
    %1378 = vmatpush1.msra.mxu0 0.0
    %1379 = vmatprep.subr.mxu0 0.0
    %1380 = vmatpush1.msra.mxu0 0.0
    %1381 = vmatprep.subr.mxu0 0.0
    %1382 = vmatpush1.msra.mxu0 0.0
    %1383 = vmatprep.subr.mxu0 0.0
    %1384 = vmatpush1.msra.mxu0 0.0
    %1385 = vmatprep.subr.mxu0 0.0
    %1386 = vmatpush1.msra.mxu0 0.0
    %1387 = vmatprep.subr.mxu0 0.0
    %1388 = vmatpush1.msra.mxu0 0.0
    %1389 = vmatprep.subr.mxu0 0.0
    %1390 = vmatpush1.msra.mxu0 0.0
    %1391 = vmatprep.subr.mxu0 0.0
    %1392 = vmatpush1.msra.mxu0 0.0
    %1393 = vmatprep.subr.mxu0 0.0
    %1394 = vmatpush1.msra.mxu0 0.0
    %1395 = vmatprep.subr.mxu0 0.0
    %1396 = vmatpush1.msra.mxu0 0.0
    %1397 = vmatprep.subr.mxu0 0.0
    %1398 = vmatpush1.msra.mxu0 0.0
    %1399 = vmatprep.subr.mxu0 0.0
    %1400 = vmatpush1.msra.mxu0 0.0
    %1401 = vmatprep.subr.mxu0 0.0
    %1402 = vmatpush1.msra.mxu0 0.0
    %1403 = vmatprep.subr.mxu0 0.0
    %1404 = vmatpush1.msra.mxu0 0.0
    %1405 = vmatprep.mubr.f32.mxu0 0.0
    %1406 = vmatmul.mubr.f32.gmra.mrb[0].mxu0 %v1255
    %v1407 = vpop.f32.mrb[0].mxu0
    %v1408 = vadd.f32 %v1324, %v1407
    %v1409 = vpop.f32.mrb[0].mxu0
    %v1410 = vadd.f32 %v1328, %v1409
    %1411 = vdwg.mxu0
    %1412 = vmatprep.subr.mxu0 %v1259
    %1413 = vmatpush1.msra.mxu0 %v1258
    %1414 = vmatprep.subr.mxu0 %v1263
    %1415 = vmatpush1.msra.mxu0 %v1262
    %1416 = vmatprep.subr.mxu0 %v1267
    %1417 = vmatpush1.msra.mxu0 %v1266
    %1418 = vmatprep.subr.mxu0 %v1271
    %1419 = vmatpush1.msra.mxu0 %v1270
    %1420 = vmatprep.subr.mxu0 %v1275
    %1421 = vmatpush1.msra.mxu0 %v1274
    %1422 = vmatprep.subr.mxu0 %v1279
    %1423 = vmatpush1.msra.mxu0 %v1278
    %1424 = vmatprep.subr.mxu0 %v1283
    %1425 = vmatpush1.msra.mxu0 %v1282
    %1426 = vmatprep.subr.mxu0 %v1287
    %1427 = vmatpush1.msra.mxu0 %v1286
    %1428 = vmatprep.subr.mxu0 %v1291
    %1429 = vmatpush1.msra.mxu0 %v1290
    %1430 = vmatprep.subr.mxu0 %v1295
    %1431 = vmatpush1.msra.mxu0 %v1294
    %1432 = vmatprep.subr.mxu0 %v1299
    %1433 = vmatpush1.msra.mxu0 %v1298
    %1434 = vmatprep.subr.mxu0 %v1303
    %1435 = vmatpush1.msra.mxu0 %v1302
    %1436 = vmatprep.subr.mxu0 %v1307
    %1437 = vmatpush1.msra.mxu0 %v1306
    %1438 = vmatprep.subr.mxu0 %v1311
    %1439 = vmatpush1.msra.mxu0 %v1310
    %1440 = vmatprep.subr.mxu0 %v1315
    %1441 = vmatpush1.msra.mxu0 %v1314
    %1442 = vmatprep.subr.mxu0 %v1319
    %1443 = vmatpush1.msra.mxu0 %v1318
    %1444 = vmatprep.subr.mxu0 0.0
    %1445 = vmatpush1.msra.mxu0 0.0
    %1446 = vmatprep.subr.mxu0 0.0
    %1447 = vmatpush1.msra.mxu0 0.0
    %1448 = vmatprep.subr.mxu0 0.0
    %1449 = vmatpush1.msra.mxu0 0.0
    %1450 = vmatprep.subr.mxu0 0.0
    %1451 = vmatpush1.msra.mxu0 0.0
    %1452 = vmatprep.subr.mxu0 0.0
    %1453 = vmatpush1.msra.mxu0 0.0
    %1454 = vmatprep.subr.mxu0 0.0
    %1455 = vmatpush1.msra.mxu0 0.0
    %1456 = vmatprep.subr.mxu0 0.0
    %1457 = vmatpush1.msra.mxu0 0.0
    %1458 = vmatprep.subr.mxu0 0.0
    %1459 = vmatpush1.msra.mxu0 0.0
    %1460 = vmatprep.subr.mxu0 0.0
    %1461 = vmatpush1.msra.mxu0 0.0
    %1462 = vmatprep.subr.mxu0 0.0
    %1463 = vmatpush1.msra.mxu0 0.0
    %1464 = vmatprep.subr.mxu0 0.0
    %1465 = vmatpush1.msra.mxu0 0.0
    %1466 = vmatprep.subr.mxu0 0.0
    %1467 = vmatpush1.msra.mxu0 0.0
    %1468 = vmatprep.subr.mxu0 0.0
    %1469 = vmatpush1.msra.mxu0 0.0
    %1470 = vmatprep.subr.mxu0 0.0
    %1471 = vmatpush1.msra.mxu0 0.0
    %1472 = vmatprep.subr.mxu0 0.0
    %1473 = vmatpush1.msra.mxu0 0.0
    %1474 = vmatprep.subr.mxu0 0.0
    %1475 = vmatpush1.msra.mxu0 0.0
    %1476 = vmatprep.mubr.f32.mxu0 0.0
    %1477 = vmatmul.mubr.f32.gmra.mrb[0].mxu0 %v1255
    %v1478 = vpop.f32.mrb[0].mxu0
    %v1479 = vadd.f32 %v1332, %v1478
    %v1480 = vpop.f32.mrb[0].mxu0
    %v1481 = vadd.f32 %v1336, %v1480
    %1482 = vdwg.mxu0
    %v1483 = vld [vmem:[#allocation11] sm:$0xff]
    %v1484 = vld [vmem:[#allocation11 + $0x8] sm:$0xff]
    %v1485 = vld [vmem:[#allocation11 + $0x10] sm:$0xff]
    %v1486 = vld [vmem:[#allocation11 + $0x18] sm:$0xff]
    %v1487 = vld [vmem:[#allocation11 + $0x20] sm:$0xff]
    %v1488 = vld [vmem:[#allocation11 + $0x28] sm:$0xff]
    %v1489 = vld [vmem:[#allocation11 + $0x30] sm:$0xff]
    %v1490 = vld [vmem:[#allocation11 + $0x38] sm:$0xff]
    %v1491 = vld [vmem:[#allocation11 + $0x40] sm:$0xff]
    %v1492 = vld [vmem:[#allocation11 + $0x48] sm:$0xff]
    %v1493 = vld [vmem:[#allocation11 + $0x50] sm:$0xff]
    %v1494 = vld [vmem:[#allocation11 + $0x58] sm:$0xff]
    %v1495 = vld [vmem:[#allocation11 + $0x60] sm:$0xff]
    %v1496 = vld [vmem:[#allocation11 + $0x68] sm:$0xff]
    %v1497 = vld [vmem:[#allocation11 + $0x70] sm:$0xff]
    %v1498 = vld [vmem:[#allocation11 + $0x78] sm:$0xff]
    %v1499 = vld [vmem:[#allocation11 + $0x80] sm:$0xff]
    %v1500 = vld [vmem:[#allocation11 + $0x88] sm:$0xff]
    %v1501 = vld [vmem:[#allocation11 + $0x90] sm:$0xff]
    %v1502 = vld [vmem:[#allocation11 + $0x98] sm:$0xff]
    %v1503 = vld [vmem:[#allocation11 + $0xa0] sm:$0xff]
    %v1504 = vld [vmem:[#allocation11 + $0xa8] sm:$0xff]
    %v1505 = vld [vmem:[#allocation11 + $0xb0] sm:$0xff]
    %v1506 = vld [vmem:[#allocation11 + $0xb8] sm:$0xff]
    %v1507 = vld [vmem:[#allocation11 + $0xc0] sm:$0xff]
    %v1508 = vld [vmem:[#allocation11 + $0xc8] sm:$0xff]
    %v1509 = vld [vmem:[#allocation11 + $0xd0] sm:$0xff]
    %v1510 = vld [vmem:[#allocation11 + $0xd8] sm:$0xff]
    %v1511 = vld [vmem:[#allocation11 + $0xe0] sm:$0xff]
    %v1512 = vld [vmem:[#allocation11 + $0xe8] sm:$0xff]
    %v1513 = vld [vmem:[#allocation11 + $0xf0] sm:$0xff]
    %v1514 = vld [vmem:[#allocation11 + $0xf8] sm:$0xff]
    %v1515 = vld [vmem:[#allocation11 + $0x100] sm:$0xff]
    %v1516 = vld [vmem:[#allocation11 + $0x108] sm:$0xff]
    %v1517 = vld [vmem:[#allocation11 + $0x110] sm:$0xff]
    %v1518 = vld [vmem:[#allocation11 + $0x118] sm:$0xff]
    %v1519 = vld [vmem:[#allocation11 + $0x120] sm:$0xff]
    %v1520 = vld [vmem:[#allocation11 + $0x128] sm:$0xff]
    %v1521 = vld [vmem:[#allocation11 + $0x130] sm:$0xff]
    %v1522 = vld [vmem:[#allocation11 + $0x138] sm:$0xff]
    %v1523 = vld [vmem:[#allocation11 + $0x140] sm:$0xff]
    %v1524 = vld [vmem:[#allocation11 + $0x148] sm:$0xff]
    %v1525 = vld [vmem:[#allocation11 + $0x150] sm:$0xff]
    %v1526 = vld [vmem:[#allocation11 + $0x158] sm:$0xff]
    %v1527 = vld [vmem:[#allocation11 + $0x160] sm:$0xff]
    %v1528 = vld [vmem:[#allocation11 + $0x168] sm:$0xff]
    %v1529 = vld [vmem:[#allocation11 + $0x170] sm:$0xff]
    %v1530 = vld [vmem:[#allocation11 + $0x178] sm:$0xff]
    %v1531 = vld [vmem:[#allocation11 + $0x180] sm:$0xff]
    %v1532 = vld [vmem:[#allocation11 + $0x188] sm:$0xff]
    %v1533 = vld [vmem:[#allocation11 + $0x190] sm:$0xff]
    %v1534 = vld [vmem:[#allocation11 + $0x198] sm:$0xff]
    %v1535 = vld [vmem:[#allocation11 + $0x1a0] sm:$0xff]
    %v1536 = vld [vmem:[#allocation11 + $0x1a8] sm:$0xff]
    %v1537 = vld [vmem:[#allocation11 + $0x1b0] sm:$0xff]
    %v1538 = vld [vmem:[#allocation11 + $0x1b8] sm:$0xff]
    %v1539 = vld [vmem:[#allocation11 + $0x1c0] sm:$0xff]
    %v1540 = vld [vmem:[#allocation11 + $0x1c8] sm:$0xff]
    %v1541 = vld [vmem:[#allocation11 + $0x1d0] sm:$0xff]
    %v1542 = vld [vmem:[#allocation11 + $0x1d8] sm:$0xff]
    %v1543 = vld [vmem:[#allocation11 + $0x1e0] sm:$0xff]
    %v1544 = vld [vmem:[#allocation11 + $0x1e8] sm:$0xff]
    %v1545 = vld [vmem:[#allocation11 + $0x1f0] sm:$0xff]
    %v1546 = vld [vmem:[#allocation11 + $0x1f8] sm:$0xff]
    %1547 = vmatprep.subr.mxu0 %v1484
    %1548 = vmatpush1.msra.mxu0 %v1483
    %1549 = vmatprep.subr.mxu0 %v1488
    %1550 = vmatpush1.msra.mxu0 %v1487
    %1551 = vmatprep.subr.mxu0 %v1492
    %1552 = vmatpush1.msra.mxu0 %v1491
    %1553 = vmatprep.subr.mxu0 %v1496
    %1554 = vmatpush1.msra.mxu0 %v1495
    %1555 = vmatprep.subr.mxu0 %v1500
    %1556 = vmatpush1.msra.mxu0 %v1499
    %1557 = vmatprep.subr.mxu0 %v1504
    %1558 = vmatpush1.msra.mxu0 %v1503
    %1559 = vmatprep.subr.mxu0 %v1508
    %1560 = vmatpush1.msra.mxu0 %v1507
    %1561 = vmatprep.subr.mxu0 %v1512
    %1562 = vmatpush1.msra.mxu0 %v1511
    %1563 = vmatprep.subr.mxu0 %v1516
    %1564 = vmatpush1.msra.mxu0 %v1515
    %1565 = vmatprep.subr.mxu0 %v1520
    %1566 = vmatpush1.msra.mxu0 %v1519
    %1567 = vmatprep.subr.mxu0 %v1524
    %1568 = vmatpush1.msra.mxu0 %v1523
    %1569 = vmatprep.subr.mxu0 %v1528
    %1570 = vmatpush1.msra.mxu0 %v1527
    %1571 = vmatprep.subr.mxu0 %v1532
    %1572 = vmatpush1.msra.mxu0 %v1531
    %1573 = vmatprep.subr.mxu0 %v1536
    %1574 = vmatpush1.msra.mxu0 %v1535
    %1575 = vmatprep.subr.mxu0 %v1540
    %1576 = vmatpush1.msra.mxu0 %v1539
    %1577 = vmatprep.subr.mxu0 %v1544
    %1578 = vmatpush1.msra.mxu0 %v1543
    %1579 = vmatprep.subr.mxu0 0.0
    %1580 = vmatpush1.msra.mxu0 0.0
    %1581 = vmatprep.subr.mxu0 0.0
    %1582 = vmatpush1.msra.mxu0 0.0
    %1583 = vmatprep.subr.mxu0 0.0
    %1584 = vmatpush1.msra.mxu0 0.0
    %1585 = vmatprep.subr.mxu0 0.0
    %1586 = vmatpush1.msra.mxu0 0.0
    %1587 = vmatprep.subr.mxu0 0.0
    %1588 = vmatpush1.msra.mxu0 0.0
    %1589 = vmatprep.subr.mxu0 0.0
    %1590 = vmatpush1.msra.mxu0 0.0
    %1591 = vmatprep.subr.mxu0 0.0
    %1592 = vmatpush1.msra.mxu0 0.0
    %1593 = vmatprep.subr.mxu0 0.0
    %1594 = vmatpush1.msra.mxu0 0.0
    %1595 = vmatprep.subr.mxu0 0.0
    %1596 = vmatpush1.msra.mxu0 0.0
    %1597 = vmatprep.subr.mxu0 0.0
    %1598 = vmatpush1.msra.mxu0 0.0
    %1599 = vmatprep.subr.mxu0 0.0
    %1600 = vmatpush1.msra.mxu0 0.0
    %1601 = vmatprep.subr.mxu0 0.0
    %1602 = vmatpush1.msra.mxu0 0.0
    %1603 = vmatprep.subr.mxu0 0.0
    %1604 = vmatpush1.msra.mxu0 0.0
    %1605 = vmatprep.subr.mxu0 0.0
    %1606 = vmatpush1.msra.mxu0 0.0
    %1607 = vmatprep.subr.mxu0 0.0
    %1608 = vmatpush1.msra.mxu0 0.0
    %1609 = vmatprep.subr.mxu0 0.0
    %1610 = vmatpush1.msra.mxu0 0.0
    %1611 = vmatprep.mubr.f32.mxu0 0.0
    %1612 = vmatmul.mubr.f32.gmra.mrb[0].mxu0 0.0
    %v1613 = vpop.f32.mrb[0].mxu0
    %v1614 = vadd.f32 0.0, %v1613
    %v1615 = vpop.f32.mrb[0].mxu0
    %v1616 = vadd.f32 0.0, %v1615
    %1617 = vdwg.mxu0
    %1618 = vmatprep.subr.mxu0 %v1486
    %1619 = vmatpush1.msra.mxu0 %v1485
    %1620 = vmatprep.subr.mxu0 %v1490
    %1621 = vmatpush1.msra.mxu0 %v1489
    %1622 = vmatprep.subr.mxu0 %v1494
    %1623 = vmatpush1.msra.mxu0 %v1493
    %1624 = vmatprep.subr.mxu0 %v1498
    %1625 = vmatpush1.msra.mxu0 %v1497
    %1626 = vmatprep.subr.mxu0 %v1502
    %1627 = vmatpush1.msra.mxu0 %v1501
    %1628 = vmatprep.subr.mxu0 %v1506
    %1629 = vmatpush1.msra.mxu0 %v1505
    %1630 = vmatprep.subr.mxu0 %v1510
    %1631 = vmatpush1.msra.mxu0 %v1509
    %1632 = vmatprep.subr.mxu0 %v1514
    %1633 = vmatpush1.msra.mxu0 %v1513
    %1634 = vmatprep.subr.mxu0 %v1518
    %1635 = vmatpush1.msra.mxu0 %v1517
    %1636 = vmatprep.subr.mxu0 %v1522
    %1637 = vmatpush1.msra.mxu0 %v1521
    %1638 = vmatprep.subr.mxu0 %v1526
    %1639 = vmatpush1.msra.mxu0 %v1525
    %1640 = vmatprep.subr.mxu0 %v1530
    %1641 = vmatpush1.msra.mxu0 %v1529
    %1642 = vmatprep.subr.mxu0 %v1534
    %1643 = vmatpush1.msra.mxu0 %v1533
    %1644 = vmatprep.subr.mxu0 %v1538
    %1645 = vmatpush1.msra.mxu0 %v1537
    %1646 = vmatprep.subr.mxu0 %v1542
    %1647 = vmatpush1.msra.mxu0 %v1541
    %1648 = vmatprep.subr.mxu0 %v1546
    %1649 = vmatpush1.msra.mxu0 %v1545
    %1650 = vmatprep.subr.mxu0 0.0
    %1651 = vmatpush1.msra.mxu0 0.0
    %1652 = vmatprep.subr.mxu0 0.0
    %1653 = vmatpush1.msra.mxu0 0.0
    %1654 = vmatprep.subr.mxu0 0.0
    %1655 = vmatpush1.msra.mxu0 0.0
    %1656 = vmatprep.subr.mxu0 0.0
    %1657 = vmatpush1.msra.mxu0 0.0
    %1658 = vmatprep.subr.mxu0 0.0
    %1659 = vmatpush1.msra.mxu0 0.0
    %1660 = vmatprep.subr.mxu0 0.0
    %1661 = vmatpush1.msra.mxu0 0.0
    %1662 = vmatprep.subr.mxu0 0.0
    %1663 = vmatpush1.msra.mxu0 0.0
    %1664 = vmatprep.subr.mxu0 0.0
    %1665 = vmatpush1.msra.mxu0 0.0
    %1666 = vmatprep.subr.mxu0 0.0
    %1667 = vmatpush1.msra.mxu0 0.0
    %1668 = vmatprep.subr.mxu0 0.0
    %1669 = vmatpush1.msra.mxu0 0.0
    %1670 = vmatprep.subr.mxu0 0.0
    %1671 = vmatpush1.msra.mxu0 0.0
    %1672 = vmatprep.subr.mxu0 0.0
    %1673 = vmatpush1.msra.mxu0 0.0
    %1674 = vmatprep.subr.mxu0 0.0
    %1675 = vmatpush1.msra.mxu0 0.0
    %1676 = vmatprep.subr.mxu0 0.0
    %1677 = vmatpush1.msra.mxu0 0.0
    %1678 = vmatprep.subr.mxu0 0.0
    %1679 = vmatpush1.msra.mxu0 0.0
    %1680 = vmatprep.subr.mxu0 0.0
    %1681 = vmatpush1.msra.mxu0 0.0
    %1682 = vmatprep.mubr.f32.mxu0 0.0
    %1683 = vmatmul.mubr.f32.gmra.mrb[0].mxu0 0.0
    %v1684 = vpop.f32.mrb[0].mxu0
    %v1685 = vadd.f32 0.0, %v1684
    %v1686 = vpop.f32.mrb[0].mxu0
    %v1687 = vadd.f32 0.0, %v1686
    %1688 = vdwg.mxu0
    %v1689 = vadd.f32 %v1408, %v1614
    %v1690 = vadd.f32 %v1410, %v1616
    %v1691 = vadd.f32 %v1479, %v1685
    %v1692 = vadd.f32 %v1481, %v1687
    %v1693 = vmul.f32 %v1689, 0.5
    %v1694 = vmul.f32 %v1690, 0.5
    %v1695 = vmul.f32 %v1691, 0.5
    %v1696 = vtanh.pop %v1693
    %v1697 = vtanh.pop %v1694
    %v1698 = vtanh.pop %v1695
    %v1699 = vadd.f32 %v1696, 1.0
    %v1700 = vadd.f32 %v1697, 1.0
    %v1701 = vadd.f32 %v1698, 1.0
    %v1702 = vmul.f32 %v1699, 0.5
    %v1703 = vmul.f32 %v1700, 0.5
    %v1704 = vmul.f32 %v1701, 0.5
    %v1705 = vtanh.pop %v1692
    %v1706 = vmul.f32 %v1703, 0.0
    %v1707 = vmul.f32 %v1702, %v1705
    %v1708 = vadd.f32 %v1706, %v1707
    %v1709 = vtanh.pop %v1708
    %v1710 = vmul.f32 %v1704, %v1709
    %v1711 = vmul.f32 %v1251, 0.5
    %v1712 = vtanh.pop %v1711
    %v1713 = vadd.f32 %v1712, 1.0
    %v1714 = vmul.f32 %v1713, 0.5
    %v1716 = vrot.slane %v1714, 1
    %1718 = vmatprep.subr.mxu0 %v619
    %1719 = vmatpush1.msra.mxu0 %v618
    %1720 = vmatprep.subr.mxu0 %v623
    %1721 = vmatpush1.msra.mxu0 %v622
    %1722 = vmatprep.subr.mxu0 %v627
    %1723 = vmatpush1.msra.mxu0 %v626
    %1724 = vmatprep.subr.mxu0 %v631
    %1725 = vmatpush1.msra.mxu0 %v630
    %1726 = vmatprep.subr.mxu0 %v635
    %1727 = vmatpush1.msra.mxu0 %v634
    %1728 = vmatprep.subr.mxu0 %v639
    %1729 = vmatpush1.msra.mxu0 %v638
    %1730 = vmatprep.subr.mxu0 %v643
    %1731 = vmatpush1.msra.mxu0 %v642
    %1732 = vmatprep.subr.mxu0 %v647
    %1733 = vmatpush1.msra.mxu0 %v646
    %1734 = vmatprep.subr.mxu0 %v651
    %1735 = vmatpush1.msra.mxu0 %v650
    %1736 = vmatprep.subr.mxu0 %v655
    %1737 = vmatpush1.msra.mxu0 %v654
    %1738 = vmatprep.subr.mxu0 %v659
    %1739 = vmatpush1.msra.mxu0 %v658
    %1740 = vmatprep.subr.mxu0 %v663
    %1741 = vmatpush1.msra.mxu0 %v662
    %1742 = vmatprep.subr.mxu0 %v667
    %1743 = vmatpush1.msra.mxu0 %v666
    %1744 = vmatprep.subr.mxu0 %v671
    %1745 = vmatpush1.msra.mxu0 %v670
    %1746 = vmatprep.subr.mxu0 %v675
    %1747 = vmatpush1.msra.mxu0 %v674
    %1748 = vmatprep.subr.mxu0 %v679
    %1749 = vmatpush1.msra.mxu0 %v678
    %1750 = vmatprep.subr.mxu0 0.0
    %1751 = vmatpush1.msra.mxu0 0.0
    %1752 = vmatprep.subr.mxu0 0.0
    %1753 = vmatpush1.msra.mxu0 0.0
    %1754 = vmatprep.subr.mxu0 0.0
    %1755 = vmatpush1.msra.mxu0 0.0
    %1756 = vmatprep.subr.mxu0 0.0
    %1757 = vmatpush1.msra.mxu0 0.0
    %1758 = vmatprep.subr.mxu0 0.0
    %1759 = vmatpush1.msra.mxu0 0.0
    %1760 = vmatprep.subr.mxu0 0.0
    %1761 = vmatpush1.msra.mxu0 0.0
    %1762 = vmatprep.subr.mxu0 0.0
    %1763 = vmatpush1.msra.mxu0 0.0
    %1764 = vmatprep.subr.mxu0 0.0
    %1765 = vmatpush1.msra.mxu0 0.0
    %1766 = vmatprep.subr.mxu0 0.0
    %1767 = vmatpush1.msra.mxu0 0.0
    %1768 = vmatprep.subr.mxu0 0.0
    %1769 = vmatpush1.msra.mxu0 0.0
    %1770 = vmatprep.subr.mxu0 0.0
    %1771 = vmatpush1.msra.mxu0 0.0
    %1772 = vmatprep.subr.mxu0 0.0
    %1773 = vmatpush1.msra.mxu0 0.0
    %1774 = vmatprep.subr.mxu0 0.0
    %1775 = vmatpush1.msra.mxu0 0.0
    %1776 = vmatprep.subr.mxu0 0.0
    %1777 = vmatpush1.msra.mxu0 0.0
    %1778 = vmatprep.subr.mxu0 0.0
    %1779 = vmatpush1.msra.mxu0 0.0
    %1780 = vmatprep.subr.mxu0 0.0
    %1781 = vmatpush1.msra.mxu0 0.0
    %1782 = vmatprep.mubr.f32.mxu0 0.0
    %1783 = vmatmul.mubr.f32.gmra.mrb[0].mxu0 %v1716
    %v1784 = vpop.f32.mrb[0].mxu0
    %v1785 = vadd.f32 %v686, %v1784
    %v1786 = vpop.f32.mrb[0].mxu0
    %v1787 = vadd.f32 %v690, %v1786
    %1788 = vdwg.mxu0
    %1789 = vmatprep.subr.mxu0 %v621
    %1790 = vmatpush1.msra.mxu0 %v620
    %1791 = vmatprep.subr.mxu0 %v625
    %1792 = vmatpush1.msra.mxu0 %v624
    %1793 = vmatprep.subr.mxu0 %v629
    %1794 = vmatpush1.msra.mxu0 %v628
    %1795 = vmatprep.subr.mxu0 %v633
    %1796 = vmatpush1.msra.mxu0 %v632
    %1797 = vmatprep.subr.mxu0 %v637
    %1798 = vmatpush1.msra.mxu0 %v636
    %1799 = vmatprep.subr.mxu0 %v641
    %1800 = vmatpush1.msra.mxu0 %v640
    %1801 = vmatprep.subr.mxu0 %v645
    %1802 = vmatpush1.msra.mxu0 %v644
    %1803 = vmatprep.subr.mxu0 %v649
    %1804 = vmatpush1.msra.mxu0 %v648
    %1805 = vmatprep.subr.mxu0 %v653
    %1806 = vmatpush1.msra.mxu0 %v652
    %1807 = vmatprep.subr.mxu0 %v657
    %1808 = vmatpush1.msra.mxu0 %v656
    %1809 = vmatprep.subr.mxu0 %v661
    %1810 = vmatpush1.msra.mxu0 %v660
    %1811 = vmatprep.subr.mxu0 %v665
    %1812 = vmatpush1.msra.mxu0 %v664
    %1813 = vmatprep.subr.mxu0 %v669
    %1814 = vmatpush1.msra.mxu0 %v668
    %1815 = vmatprep.subr.mxu0 %v673
    %1816 = vmatpush1.msra.mxu0 %v672
    %1817 = vmatprep.subr.mxu0 %v677
    %1818 = vmatpush1.msra.mxu0 %v676
    %1819 = vmatprep.subr.mxu0 %v681
    %1820 = vmatpush1.msra.mxu0 %v680
    %1821 = vmatprep.subr.mxu0 0.0
    %1822 = vmatpush1.msra.mxu0 0.0
    %1823 = vmatprep.subr.mxu0 0.0
    %1824 = vmatpush1.msra.mxu0 0.0
    %1825 = vmatprep.subr.mxu0 0.0
    %1826 = vmatpush1.msra.mxu0 0.0
    %1827 = vmatprep.subr.mxu0 0.0
    %1828 = vmatpush1.msra.mxu0 0.0
    %1829 = vmatprep.subr.mxu0 0.0
    %1830 = vmatpush1.msra.mxu0 0.0
    %1831 = vmatprep.subr.mxu0 0.0
    %1832 = vmatpush1.msra.mxu0 0.0
    %1833 = vmatprep.subr.mxu0 0.0
    %1834 = vmatpush1.msra.mxu0 0.0
    %1835 = vmatprep.subr.mxu0 0.0
    %1836 = vmatpush1.msra.mxu0 0.0
    %1837 = vmatprep.subr.mxu0 0.0
    %1838 = vmatpush1.msra.mxu0 0.0
    %1839 = vmatprep.subr.mxu0 0.0
    %1840 = vmatpush1.msra.mxu0 0.0
    %1841 = vmatprep.subr.mxu0 0.0
    %1842 = vmatpush1.msra.mxu0 0.0
    %1843 = vmatprep.subr.mxu0 0.0
    %1844 = vmatpush1.msra.mxu0 0.0
    %1845 = vmatprep.subr.mxu0 0.0
    %1846 = vmatpush1.msra.mxu0 0.0
    %1847 = vmatprep.subr.mxu0 0.0
    %1848 = vmatpush1.msra.mxu0 0.0
    %1849 = vmatprep.subr.mxu0 0.0
    %1850 = vmatpush1.msra.mxu0 0.0
    %1851 = vmatprep.subr.mxu0 0.0
    %1852 = vmatpush1.msra.mxu0 0.0
    %1853 = vmatprep.mubr.f32.mxu0 0.0
    %1854 = vmatmul.mubr.f32.gmra.mrb[0].mxu0 %v1716
    %v1855 = vpop.f32.mrb[0].mxu0
    %v1856 = vadd.f32 %v694, %v1855
    %v1857 = vpop.f32.mrb[0].mxu0
    %v1858 = vadd.f32 %v698, %v1857
    %1859 = vdwg.mxu0
    %1860 = vmatprep.subr.mxu0 %v846
    %1861 = vmatpush1.msra.mxu0 %v845
    %1862 = vmatprep.subr.mxu0 %v850
    %1863 = vmatpush1.msra.mxu0 %v849
    %1864 = vmatprep.subr.mxu0 %v854
    %1865 = vmatpush1.msra.mxu0 %v853
    %1866 = vmatprep.subr.mxu0 %v858
    %1867 = vmatpush1.msra.mxu0 %v857
    %1868 = vmatprep.subr.mxu0 %v862
    %1869 = vmatpush1.msra.mxu0 %v861
    %1870 = vmatprep.subr.mxu0 %v866
    %1871 = vmatpush1.msra.mxu0 %v865
    %1872 = vmatprep.subr.mxu0 %v870
    %1873 = vmatpush1.msra.mxu0 %v869
    %1874 = vmatprep.subr.mxu0 %v874
    %1875 = vmatpush1.msra.mxu0 %v873
    %1876 = vmatprep.subr.mxu0 %v878
    %1877 = vmatpush1.msra.mxu0 %v877
    %1878 = vmatprep.subr.mxu0 %v882
    %1879 = vmatpush1.msra.mxu0 %v881
    %1880 = vmatprep.subr.mxu0 %v886
    %1881 = vmatpush1.msra.mxu0 %v885
    %1882 = vmatprep.subr.mxu0 %v890
    %1883 = vmatpush1.msra.mxu0 %v889
    %1884 = vmatprep.subr.mxu0 %v894
    %1885 = vmatpush1.msra.mxu0 %v893
    %1886 = vmatprep.subr.mxu0 %v898
    %1887 = vmatpush1.msra.mxu0 %v897
    %1888 = vmatprep.subr.mxu0 %v902
    %1889 = vmatpush1.msra.mxu0 %v901
    %1890 = vmatprep.subr.mxu0 %v906
    %1891 = vmatpush1.msra.mxu0 %v905
    %1892 = vmatprep.subr.mxu0 0.0
    %1893 = vmatpush1.msra.mxu0 0.0
    %1894 = vmatprep.subr.mxu0 0.0
    %1895 = vmatpush1.msra.mxu0 0.0
    %1896 = vmatprep.subr.mxu0 0.0
    %1897 = vmatpush1.msra.mxu0 0.0
    %1898 = vmatprep.subr.mxu0 0.0
    %1899 = vmatpush1.msra.mxu0 0.0
    %1900 = vmatprep.subr.mxu0 0.0
    %1901 = vmatpush1.msra.mxu0 0.0
    %1902 = vmatprep.subr.mxu0 0.0
    %1903 = vmatpush1.msra.mxu0 0.0
    %1904 = vmatprep.subr.mxu0 0.0
    %1905 = vmatpush1.msra.mxu0 0.0
    %1906 = vmatprep.subr.mxu0 0.0
    %1907 = vmatpush1.msra.mxu0 0.0
    %1908 = vmatprep.subr.mxu0 0.0
    %1909 = vmatpush1.msra.mxu0 0.0
    %1910 = vmatprep.subr.mxu0 0.0
    %1911 = vmatpush1.msra.mxu0 0.0
    %1912 = vmatprep.subr.mxu0 0.0
    %1913 = vmatpush1.msra.mxu0 0.0
    %1914 = vmatprep.subr.mxu0 0.0
    %1915 = vmatpush1.msra.mxu0 0.0
    %1916 = vmatprep.subr.mxu0 0.0
    %1917 = vmatpush1.msra.mxu0 0.0
    %1918 = vmatprep.subr.mxu0 0.0
    %1919 = vmatpush1.msra.mxu0 0.0
    %1920 = vmatprep.subr.mxu0 0.0
    %1921 = vmatpush1.msra.mxu0 0.0
    %1922 = vmatprep.subr.mxu0 0.0
    %1923 = vmatpush1.msra.mxu0 0.0
    %1924 = vmatprep.mubr.f32.mxu0 0.0
    %1925 = vmatmul.mubr.f32.gmra.mrb[0].mxu0 %v1072
    %v1926 = vpop.f32.mrb[0].mxu0
    %v1927 = vadd.f32 0.0, %v1926
    %v1928 = vpop.f32.mrb[0].mxu0
    %v1929 = vadd.f32 0.0, %v1928
    %1930 = vdwg.mxu0
    %1931 = vmatprep.subr.mxu0 %v848
    %1932 = vmatpush1.msra.mxu0 %v847
    %1933 = vmatprep.subr.mxu0 %v852
    %1934 = vmatpush1.msra.mxu0 %v851
    %1935 = vmatprep.subr.mxu0 %v856
    %1936 = vmatpush1.msra.mxu0 %v855
    %1937 = vmatprep.subr.mxu0 %v860
    %1938 = vmatpush1.msra.mxu0 %v859
    %1939 = vmatprep.subr.mxu0 %v864
    %1940 = vmatpush1.msra.mxu0 %v863
    %1941 = vmatprep.subr.mxu0 %v868
    %1942 = vmatpush1.msra.mxu0 %v867
    %1943 = vmatprep.subr.mxu0 %v872
    %1944 = vmatpush1.msra.mxu0 %v871
    %1945 = vmatprep.subr.mxu0 %v876
    %1946 = vmatpush1.msra.mxu0 %v875
    %1947 = vmatprep.subr.mxu0 %v880
    %1948 = vmatpush1.msra.mxu0 %v879
    %1949 = vmatprep.subr.mxu0 %v884
    %1950 = vmatpush1.msra.mxu0 %v883
    %1951 = vmatprep.subr.mxu0 %v888
    %1952 = vmatpush1.msra.mxu0 %v887
    %1953 = vmatprep.subr.mxu0 %v892
    %1954 = vmatpush1.msra.mxu0 %v891
    %1955 = vmatprep.subr.mxu0 %v896
    %1956 = vmatpush1.msra.mxu0 %v895
    %1957 = vmatprep.subr.mxu0 %v900
    %1958 = vmatpush1.msra.mxu0 %v899
    %1959 = vmatprep.subr.mxu0 %v904
    %1960 = vmatpush1.msra.mxu0 %v903
    %1961 = vmatprep.subr.mxu0 %v908
    %1962 = vmatpush1.msra.mxu0 %v907
    %1963 = vmatprep.subr.mxu0 0.0
    %1964 = vmatpush1.msra.mxu0 0.0
    %1965 = vmatprep.subr.mxu0 0.0
    %1966 = vmatpush1.msra.mxu0 0.0
    %1967 = vmatprep.subr.mxu0 0.0
    %1968 = vmatpush1.msra.mxu0 0.0
    %1969 = vmatprep.subr.mxu0 0.0
    %1970 = vmatpush1.msra.mxu0 0.0
    %1971 = vmatprep.subr.mxu0 0.0
    %1972 = vmatpush1.msra.mxu0 0.0
    %1973 = vmatprep.subr.mxu0 0.0
    %1974 = vmatpush1.msra.mxu0 0.0
    %1975 = vmatprep.subr.mxu0 0.0
    %1976 = vmatpush1.msra.mxu0 0.0
    %1977 = vmatprep.subr.mxu0 0.0
    %1978 = vmatpush1.msra.mxu0 0.0
    %1979 = vmatprep.subr.mxu0 0.0
    %1980 = vmatpush1.msra.mxu0 0.0
    %1981 = vmatprep.subr.mxu0 0.0
    %1982 = vmatpush1.msra.mxu0 0.0
    %1983 = vmatprep.subr.mxu0 0.0
    %1984 = vmatpush1.msra.mxu0 0.0
    %1985 = vmatprep.subr.mxu0 0.0
    %1986 = vmatpush1.msra.mxu0 0.0
    %1987 = vmatprep.subr.mxu0 0.0
    %1988 = vmatpush1.msra.mxu0 0.0
    %1989 = vmatprep.subr.mxu0 0.0
    %1990 = vmatpush1.msra.mxu0 0.0
    %1991 = vmatprep.subr.mxu0 0.0
    %1992 = vmatpush1.msra.mxu0 0.0
    %1993 = vmatprep.subr.mxu0 0.0
    %1994 = vmatpush1.msra.mxu0 0.0
    %1995 = vmatprep.mubr.f32.mxu0 0.0
    %1996 = vmatmul.mubr.f32.gmra.mrb[0].mxu0 %v1072
    %v1997 = vpop.f32.mrb[0].mxu0
    %v1998 = vadd.f32 0.0, %v1997
    %v1999 = vpop.f32.mrb[0].mxu0
    %v2000 = vadd.f32 0.0, %v1999
    %2001 = vdwg.mxu0
    %v2002 = vadd.f32 %v1785, %v1927
    %v2003 = vadd.f32 %v1787, %v1929
    %v2004 = vadd.f32 %v1856, %v1998
    %v2005 = vadd.f32 %v1858, %v2000
    %v2006 = vmul.f32 %v2002, 0.5
    %v2007 = vmul.f32 %v2003, 0.5
    %v2008 = vmul.f32 %v2004, 0.5
    %v2009 = vtanh.pop %v2006
    %v2010 = vtanh.pop %v2007
    %v2011 = vtanh.pop %v2008
    %v2012 = vadd.f32 %v2009, 1.0
    %v2013 = vadd.f32 %v2010, 1.0
    %v2014 = vadd.f32 %v2011, 1.0
    %v2015 = vmul.f32 %v2012, 0.5
    %v2016 = vmul.f32 %v2013, 0.5
    %v2017 = vmul.f32 %v2014, 0.5
    %v2018 = vtanh.pop %v2005
    %v2019 = vmul.f32 %v2016, %v1070
    %v2020 = vmul.f32 %v2015, %v2018
    %v2021 = vadd.f32 %v2019, %v2020
    %v2022 = vtanh.pop %v2021
    %v2023 = vmul.f32 %v2017, %v2022
    %v2025 = vrot.slane %v1251, 1
    %2027 = vmatprep.subr.mxu0 %v387
    %2028 = vmatpush1.msra.mxu0 %v386
    %2029 = vmatprep.subr.mxu0 %v391
    %2030 = vmatpush1.msra.mxu0 %v390
    %2031 = vmatprep.subr.mxu0 %v395
    %2032 = vmatpush1.msra.mxu0 %v394
    %2033 = vmatprep.subr.mxu0 %v399
    %2034 = vmatpush1.msra.mxu0 %v398
    %2035 = vmatprep.subr.mxu0 %v403
    %2036 = vmatpush1.msra.mxu0 %v402
    %2037 = vmatprep.subr.mxu0 %v407
    %2038 = vmatpush1.msra.mxu0 %v406
    %2039 = vmatprep.subr.mxu0 %v411
    %2040 = vmatpush1.msra.mxu0 %v410
    %2041 = vmatprep.subr.mxu0 %v415
    %2042 = vmatpush1.msra.mxu0 %v414
    %2043 = vmatprep.subr.mxu0 %v419
    %2044 = vmatpush1.msra.mxu0 %v418
    %2045 = vmatprep.subr.mxu0 %v423
    %2046 = vmatpush1.msra.mxu0 %v422
    %2047 = vmatprep.subr.mxu0 %v427
    %2048 = vmatpush1.msra.mxu0 %v426
    %2049 = vmatprep.subr.mxu0 %v431
    %2050 = vmatpush1.msra.mxu0 %v430
    %2051 = vmatprep.subr.mxu0 %v435
    %2052 = vmatpush1.msra.mxu0 %v434
    %2053 = vmatprep.subr.mxu0 %v439
    %2054 = vmatpush1.msra.mxu0 %v438
    %2055 = vmatprep.subr.mxu0 %v443
    %2056 = vmatpush1.msra.mxu0 %v442
    %2057 = vmatprep.subr.mxu0 %v447
    %2058 = vmatpush1.msra.mxu0 %v446
    %2059 = vmatprep.subr.mxu0 0.0
    %2060 = vmatpush1.msra.mxu0 0.0
    %2061 = vmatprep.subr.mxu0 0.0
    %2062 = vmatpush1.msra.mxu0 0.0
    %2063 = vmatprep.subr.mxu0 0.0
    %2064 = vmatpush1.msra.mxu0 0.0
    %2065 = vmatprep.subr.mxu0 0.0
    %2066 = vmatpush1.msra.mxu0 0.0
    %2067 = vmatprep.subr.mxu0 0.0
    %2068 = vmatpush1.msra.mxu0 0.0
    %2069 = vmatprep.subr.mxu0 0.0
    %2070 = vmatpush1.msra.mxu0 0.0
    %2071 = vmatprep.subr.mxu0 0.0
    %2072 = vmatpush1.msra.mxu0 0.0
    %2073 = vmatprep.subr.mxu0 0.0
    %2074 = vmatpush1.msra.mxu0 0.0
    %2075 = vmatprep.subr.mxu0 0.0
    %2076 = vmatpush1.msra.mxu0 0.0
    %2077 = vmatprep.subr.mxu0 0.0
    %2078 = vmatpush1.msra.mxu0 0.0
    %2079 = vmatprep.subr.mxu0 0.0
    %2080 = vmatpush1.msra.mxu0 0.0
    %2081 = vmatprep.subr.mxu0 0.0
    %2082 = vmatpush1.msra.mxu0 0.0
    %2083 = vmatprep.subr.mxu0 0.0
    %2084 = vmatpush1.msra.mxu0 0.0
    %2085 = vmatprep.subr.mxu0 0.0
    %2086 = vmatpush1.msra.mxu0 0.0
    %2087 = vmatprep.subr.mxu0 0.0
    %2088 = vmatpush1.msra.mxu0 0.0
    %2089 = vmatprep.subr.mxu0 0.0
    %2090 = vmatpush1.msra.mxu0 0.0
    %2091 = vmatprep.mubr.f32.mxu0 0.0
    %2092 = vmatmul.mubr.f32.gmra.mrb[0].mxu0 %v2025
    %v2093 = vpop.f32.mrb[0].mxu0
    %v2094 = vadd.f32 0.0, %v2093
    %v2095 = vpop.f32.mrb[0].mxu0
    %v2096 = vadd.f32 0.0, %v2095
    %2097 = vdwg.mxu0
    %2098 = vmatprep.subr.mxu0 %v389
    %2099 = vmatpush1.msra.mxu0 %v388
    %2100 = vmatprep.subr.mxu0 %v393
    %2101 = vmatpush1.msra.mxu0 %v392
    %2102 = vmatprep.subr.mxu0 %v397
    %2103 = vmatpush1.msra.mxu0 %v396
    %2104 = vmatprep.subr.mxu0 %v401
    %2105 = vmatpush1.msra.mxu0 %v400
    %2106 = vmatprep.subr.mxu0 %v405
    %2107 = vmatpush1.msra.mxu0 %v404
    %2108 = vmatprep.subr.mxu0 %v409
    %2109 = vmatpush1.msra.mxu0 %v408
    %2110 = vmatprep.subr.mxu0 %v413
    %2111 = vmatpush1.msra.mxu0 %v412
    %2112 = vmatprep.subr.mxu0 %v417
    %2113 = vmatpush1.msra.mxu0 %v416
    %2114 = vmatprep.subr.mxu0 %v421
    %2115 = vmatpush1.msra.mxu0 %v420
    %2116 = vmatprep.subr.mxu0 %v425
    %2117 = vmatpush1.msra.mxu0 %v424
    %2118 = vmatprep.subr.mxu0 %v429
    %2119 = vmatpush1.msra.mxu0 %v428
    %2120 = vmatprep.subr.mxu0 %v433
    %2121 = vmatpush1.msra.mxu0 %v432
    %2122 = vmatprep.subr.mxu0 %v437
    %2123 = vmatpush1.msra.mxu0 %v436
    %2124 = vmatprep.subr.mxu0 %v441
    %2125 = vmatpush1.msra.mxu0 %v440
    %2126 = vmatprep.subr.mxu0 %v445
    %2127 = vmatpush1.msra.mxu0 %v444
    %2128 = vmatprep.subr.mxu0 %v449
    %2129 = vmatpush1.msra.mxu0 %v448
    %2130 = vmatprep.subr.mxu0 0.0
    %2131 = vmatpush1.msra.mxu0 0.0
    %2132 = vmatprep.subr.mxu0 0.0
    %2133 = vmatpush1.msra.mxu0 0.0
    %2134 = vmatprep.subr.mxu0 0.0
    %2135 = vmatpush1.msra.mxu0 0.0
    %2136 = vmatprep.subr.mxu0 0.0
    %2137 = vmatpush1.msra.mxu0 0.0
    %2138 = vmatprep.subr.mxu0 0.0
    %2139 = vmatpush1.msra.mxu0 0.0
    %2140 = vmatprep.subr.mxu0 0.0
    %2141 = vmatpush1.msra.mxu0 0.0
    %2142 = vmatprep.subr.mxu0 0.0
    %2143 = vmatpush1.msra.mxu0 0.0
    %2144 = vmatprep.subr.mxu0 0.0
    %2145 = vmatpush1.msra.mxu0 0.0
    %2146 = vmatprep.subr.mxu0 0.0
    %2147 = vmatpush1.msra.mxu0 0.0
    %2148 = vmatprep.subr.mxu0 0.0
    %2149 = vmatpush1.msra.mxu0 0.0
    %2150 = vmatprep.subr.mxu0 0.0
    %2151 = vmatpush1.msra.mxu0 0.0
    %2152 = vmatprep.subr.mxu0 0.0
    %2153 = vmatpush1.msra.mxu0 0.0
    %2154 = vmatprep.subr.mxu0 0.0
    %2155 = vmatpush1.msra.mxu0 0.0
    %2156 = vmatprep.subr.mxu0 0.0
    %2157 = vmatpush1.msra.mxu0 0.0
    %2158 = vmatprep.subr.mxu0 0.0
    %2159 = vmatpush1.msra.mxu0 0.0
    %2160 = vmatprep.subr.mxu0 0.0
    %2161 = vmatpush1.msra.mxu0 0.0
    %2162 = vmatprep.mubr.f32.mxu0 0.0
    %2163 = vmatmul.mubr.f32.gmra.mrb[0].mxu0 %v2025
    %v2164 = vpop.f32.mrb[0].mxu0
    %v2165 = vadd.f32 0.0, %v2164
    %v2166 = vpop.f32.mrb[0].mxu0
    %v2167 = vadd.f32 0.0, %v2166
    %2168 = vdwg.mxu0
    %v2173 = vrot.slane %v2094, 6
    %v2174 = vrot.slane %v2096, 6
    %v2175 = vrot.slane %v2165, 6
    %v2176 = vrot.slane %v2167, 6
    %v2181 = vadd.f32 %v311, %v2173
    %v2182 = vadd.f32 %v313, %v2174
    %v2183 = vadd.f32 %v382, %v2175
    %v2184 = vadd.f32 %v384, %v2176
    %v2185 = vmul.f32 %v2181, 0.5
    %v2186 = vmul.f32 %v2182, 0.5
    %v2187 = vmul.f32 %v2183, 0.5
    %v2188 = vtanh.pop %v2185
    %v2189 = vtanh.pop %v2186
    %v2190 = vtanh.pop %v2187
    %v2191 = vadd.f32 %v2188, 1.0
    %v2192 = vadd.f32 %v2189, 1.0
    %v2193 = vadd.f32 %v2190, 1.0
    %v2194 = vmul.f32 %v2191, 0.5
    %v2195 = vmul.f32 %v2192, 0.5
    %v2196 = vmul.f32 %v2193, 0.5
    %v2197 = vtanh.pop %v2184
    %v2199 = vrot.slane %v1249, 7
    %v2201 = vmul.f32 %v2195, %v2199
    %v2202 = vmul.f32 %v2194, %v2197
    %v2203 = vadd.f32 %v2201, %v2202
    %v2204 = vtanh.pop %v2203
    %v2205 = vmul.f32 %v2196, %v2204
    %v2206 = vmul.f32 %v1710, 0.5
    %v2207 = vtanh.pop %v2206
    %v2208 = vadd.f32 %v2207, 1.0
    %v2209 = vmul.f32 %v2208, 0.5
    %v2210 = vld [vmem:[#allocation13] sm:$0xff]
    %v2211 = vld [vmem:[#allocation13 + $0x8] sm:$0xff]
    %v2212 = vld [vmem:[#allocation13 + $0x10] sm:$0xff]
    %v2213 = vld [vmem:[#allocation13 + $0x18] sm:$0xff]
    %v2214 = vld [vmem:[#allocation13 + $0x20] sm:$0xff]
    %v2215 = vld [vmem:[#allocation13 + $0x28] sm:$0xff]
    %v2216 = vld [vmem:[#allocation13 + $0x30] sm:$0xff]
    %v2217 = vld [vmem:[#allocation13 + $0x38] sm:$0xff]
    %v2218 = vld [vmem:[#allocation13 + $0x40] sm:$0xff]
    %v2219 = vld [vmem:[#allocation13 + $0x48] sm:$0xff]
    %v2220 = vld [vmem:[#allocation13 + $0x50] sm:$0xff]
    %v2221 = vld [vmem:[#allocation13 + $0x58] sm:$0xff]
    %v2222 = vld [vmem:[#allocation13 + $0x60] sm:$0xff]
    %v2223 = vld [vmem:[#allocation13 + $0x68] sm:$0xff]
    %v2224 = vld [vmem:[#allocation13 + $0x70] sm:$0xff]
    %v2225 = vld [vmem:[#allocation13 + $0x78] sm:$0xff]
    %v2226 = vld [vmem:[#allocation13 + $0x80] sm:$0xff]
    %v2227 = vld [vmem:[#allocation13 + $0x88] sm:$0xff]
    %v2228 = vld [vmem:[#allocation13 + $0x90] sm:$0xff]
    %v2229 = vld [vmem:[#allocation13 + $0x98] sm:$0xff]
    %v2230 = vld [vmem:[#allocation13 + $0xa0] sm:$0xff]
    %v2231 = vld [vmem:[#allocation13 + $0xa8] sm:$0xff]
    %v2232 = vld [vmem:[#allocation13 + $0xb0] sm:$0xff]
    %v2233 = vld [vmem:[#allocation13 + $0xb8] sm:$0xff]
    %v2234 = vld [vmem:[#allocation13 + $0xc0] sm:$0xff]
    %v2235 = vld [vmem:[#allocation13 + $0xc8] sm:$0xff]
    %v2236 = vld [vmem:[#allocation13 + $0xd0] sm:$0xff]
    %v2237 = vld [vmem:[#allocation13 + $0xd8] sm:$0xff]
    %v2238 = vld [vmem:[#allocation13 + $0xe0] sm:$0xff]
    %v2239 = vld [vmem:[#allocation13 + $0xe8] sm:$0xff]
    %v2240 = vld [vmem:[#allocation13 + $0xf0] sm:$0xff]
    %v2241 = vld [vmem:[#allocation13 + $0xf8] sm:$0xff]
    %v2242 = vld [vmem:[#allocation13 + $0x100] sm:$0xff]
    %v2243 = vld [vmem:[#allocation13 + $0x108] sm:$0xff]
    %v2244 = vld [vmem:[#allocation13 + $0x110] sm:$0xff]
    %v2245 = vld [vmem:[#allocation13 + $0x118] sm:$0xff]
    %v2246 = vld [vmem:[#allocation13 + $0x120] sm:$0xff]
    %v2247 = vld [vmem:[#allocation13 + $0x128] sm:$0xff]
    %v2248 = vld [vmem:[#allocation13 + $0x130] sm:$0xff]
    %v2249 = vld [vmem:[#allocation13 + $0x138] sm:$0xff]
    %v2250 = vld [vmem:[#allocation13 + $0x140] sm:$0xff]
    %v2251 = vld [vmem:[#allocation13 + $0x148] sm:$0xff]
    %v2252 = vld [vmem:[#allocation13 + $0x150] sm:$0xff]
    %v2253 = vld [vmem:[#allocation13 + $0x158] sm:$0xff]
    %v2254 = vld [vmem:[#allocation13 + $0x160] sm:$0xff]
    %v2255 = vld [vmem:[#allocation13 + $0x168] sm:$0xff]
    %v2256 = vld [vmem:[#allocation13 + $0x170] sm:$0xff]
    %v2257 = vld [vmem:[#allocation13 + $0x178] sm:$0xff]
    %v2258 = vld [vmem:[#allocation13 + $0x180] sm:$0xff]
    %v2259 = vld [vmem:[#allocation13 + $0x188] sm:$0xff]
    %v2260 = vld [vmem:[#allocation13 + $0x190] sm:$0xff]
    %v2261 = vld [vmem:[#allocation13 + $0x198] sm:$0xff]
    %v2262 = vld [vmem:[#allocation13 + $0x1a0] sm:$0xff]
    %v2263 = vld [vmem:[#allocation13 + $0x1a8] sm:$0xff]
    %v2264 = vld [vmem:[#allocation13 + $0x1b0] sm:$0xff]
    %v2265 = vld [vmem:[#allocation13 + $0x1b8] sm:$0xff]
    %v2266 = vld [vmem:[#allocation13 + $0x1c0] sm:$0xff]
    %v2267 = vld [vmem:[#allocation13 + $0x1c8] sm:$0xff]
    %v2268 = vld [vmem:[#allocation13 + $0x1d0] sm:$0xff]
    %v2269 = vld [vmem:[#allocation13 + $0x1d8] sm:$0xff]
    %v2270 = vld [vmem:[#allocation13 + $0x1e0] sm:$0xff]
    %v2271 = vld [vmem:[#allocation13 + $0x1e8] sm:$0xff]
    %v2272 = vld [vmem:[#allocation13 + $0x1f0] sm:$0xff]
    %v2273 = vld [vmem:[#allocation13 + $0x1f8] sm:$0xff]
    %v2275 = vlaneseq
    %v2276 = vshrl.u32 %v2275, 7
    %v2277 = vsub.s32 0, %v2276
    %v2278 = vrot.slane %v157, %v2277
    %v2279 = vlaneseq
    %v2280 = vshrl.u32 %v2279, 7
    %v2281 = vsub.s32 1, %v2280
    %v2282 = vrot.slane %v157, %v2281
    %v2283 = vlaneseq
    %v2284 = vshrl.u32 %v2283, 7
    %v2285 = vsub.s32 2, %v2284
    %v2286 = vrot.slane %v157, %v2285
    %v2287 = vlaneseq
    %v2288 = vshrl.u32 %v2287, 7
    %v2289 = vsub.s32 3, %v2288
    %v2290 = vrot.slane %v157, %v2289
    %2295 = vmatprep.subr.mxu0 %v2211
    %2296 = vmatpush1.msra.mxu0 %v2210
    %2297 = vmatprep.subr.mxu0 %v2215
    %2298 = vmatpush1.msra.mxu0 %v2214
    %2299 = vmatprep.subr.mxu0 %v2219
    %2300 = vmatpush1.msra.mxu0 %v2218
    %2301 = vmatprep.subr.mxu0 %v2223
    %2302 = vmatpush1.msra.mxu0 %v2222
    %2303 = vmatprep.subr.mxu0 %v2227
    %2304 = vmatpush1.msra.mxu0 %v2226
    %2305 = vmatprep.subr.mxu0 %v2231
    %2306 = vmatpush1.msra.mxu0 %v2230
    %2307 = vmatprep.subr.mxu0 %v2235
    %2308 = vmatpush1.msra.mxu0 %v2234
    %2309 = vmatprep.subr.mxu0 %v2239
    %2310 = vmatpush1.msra.mxu0 %v2238
    %2311 = vmatprep.subr.mxu0 %v2243
    %2312 = vmatpush1.msra.mxu0 %v2242
    %2313 = vmatprep.subr.mxu0 %v2247
    %2314 = vmatpush1.msra.mxu0 %v2246
    %2315 = vmatprep.subr.mxu0 %v2251
    %2316 = vmatpush1.msra.mxu0 %v2250
    %2317 = vmatprep.subr.mxu0 %v2255
    %2318 = vmatpush1.msra.mxu0 %v2254
    %2319 = vmatprep.subr.mxu0 %v2259
    %2320 = vmatpush1.msra.mxu0 %v2258
    %2321 = vmatprep.subr.mxu0 %v2263
    %2322 = vmatpush1.msra.mxu0 %v2262
    %2323 = vmatprep.subr.mxu0 %v2267
    %2324 = vmatpush1.msra.mxu0 %v2266
    %2325 = vmatprep.subr.mxu0 %v2271
    %2326 = vmatpush1.msra.mxu0 %v2270
    %2327 = vmatprep.subr.mxu0 0.0
    %2328 = vmatpush1.msra.mxu0 0.0
    %2329 = vmatprep.subr.mxu0 0.0
    %2330 = vmatpush1.msra.mxu0 0.0
    %2331 = vmatprep.subr.mxu0 0.0
    %2332 = vmatpush1.msra.mxu0 0.0
    %2333 = vmatprep.subr.mxu0 0.0
    %2334 = vmatpush1.msra.mxu0 0.0
    %2335 = vmatprep.subr.mxu0 0.0
    %2336 = vmatpush1.msra.mxu0 0.0
    %2337 = vmatprep.subr.mxu0 0.0
    %2338 = vmatpush1.msra.mxu0 0.0
    %2339 = vmatprep.subr.mxu0 0.0
    %2340 = vmatpush1.msra.mxu0 0.0
    %2341 = vmatprep.subr.mxu0 0.0
    %2342 = vmatpush1.msra.mxu0 0.0
    %2343 = vmatprep.subr.mxu0 0.0
    %2344 = vmatpush1.msra.mxu0 0.0
    %2345 = vmatprep.subr.mxu0 0.0
    %2346 = vmatpush1.msra.mxu0 0.0
    %2347 = vmatprep.subr.mxu0 0.0
    %2348 = vmatpush1.msra.mxu0 0.0
    %2349 = vmatprep.subr.mxu0 0.0
    %2350 = vmatpush1.msra.mxu0 0.0
    %2351 = vmatprep.subr.mxu0 0.0
    %2352 = vmatpush1.msra.mxu0 0.0
    %2353 = vmatprep.subr.mxu0 0.0
    %2354 = vmatpush1.msra.mxu0 0.0
    %2355 = vmatprep.subr.mxu0 0.0
    %2356 = vmatpush1.msra.mxu0 0.0
    %2357 = vmatprep.subr.mxu0 0.0
    %2358 = vmatpush1.msra.mxu0 0.0
    %2359 = vmatprep.mubr.f32.mxu0 0.0
    %2360 = vmatmul.mubr.f32.gmra.mrb[0].mxu0 %v2209
    %v2361 = vpop.f32.mrb[0].mxu0
    %v2362 = vadd.f32 %v2278, %v2361
    %v2363 = vpop.f32.mrb[0].mxu0
    %v2364 = vadd.f32 %v2282, %v2363
    %2365 = vdwg.mxu0
    %2366 = vmatprep.subr.mxu0 %v2213
    %2367 = vmatpush1.msra.mxu0 %v2212
    %2368 = vmatprep.subr.mxu0 %v2217
    %2369 = vmatpush1.msra.mxu0 %v2216
    %2370 = vmatprep.subr.mxu0 %v2221
    %2371 = vmatpush1.msra.mxu0 %v2220
    %2372 = vmatprep.subr.mxu0 %v2225
    %2373 = vmatpush1.msra.mxu0 %v2224
    %2374 = vmatprep.subr.mxu0 %v2229
    %2375 = vmatpush1.msra.mxu0 %v2228
    %2376 = vmatprep.subr.mxu0 %v2233
    %2377 = vmatpush1.msra.mxu0 %v2232
    %2378 = vmatprep.subr.mxu0 %v2237
    %2379 = vmatpush1.msra.mxu0 %v2236
    %2380 = vmatprep.subr.mxu0 %v2241
    %2381 = vmatpush1.msra.mxu0 %v2240
    %2382 = vmatprep.subr.mxu0 %v2245
    %2383 = vmatpush1.msra.mxu0 %v2244
    %2384 = vmatprep.subr.mxu0 %v2249
    %2385 = vmatpush1.msra.mxu0 %v2248
    %2386 = vmatprep.subr.mxu0 %v2253
    %2387 = vmatpush1.msra.mxu0 %v2252
    %2388 = vmatprep.subr.mxu0 %v2257
    %2389 = vmatpush1.msra.mxu0 %v2256
    %2390 = vmatprep.subr.mxu0 %v2261
    %2391 = vmatpush1.msra.mxu0 %v2260
    %2392 = vmatprep.subr.mxu0 %v2265
    %2393 = vmatpush1.msra.mxu0 %v2264
    %2394 = vmatprep.subr.mxu0 %v2269
    %2395 = vmatpush1.msra.mxu0 %v2268
    %2396 = vmatprep.subr.mxu0 %v2273
    %2397 = vmatpush1.msra.mxu0 %v2272
    %2398 = vmatprep.subr.mxu0 0.0
    %2399 = vmatpush1.msra.mxu0 0.0
    %2400 = vmatprep.subr.mxu0 0.0
    %2401 = vmatpush1.msra.mxu0 0.0
    %2402 = vmatprep.subr.mxu0 0.0
    %2403 = vmatpush1.msra.mxu0 0.0
    %2404 = vmatprep.subr.mxu0 0.0
    %2405 = vmatpush1.msra.mxu0 0.0
    %2406 = vmatprep.subr.mxu0 0.0
    %2407 = vmatpush1.msra.mxu0 0.0
    %2408 = vmatprep.subr.mxu0 0.0
    %2409 = vmatpush1.msra.mxu0 0.0
    %2410 = vmatprep.subr.mxu0 0.0
    %2411 = vmatpush1.msra.mxu0 0.0
    %2412 = vmatprep.subr.mxu0 0.0
    %2413 = vmatpush1.msra.mxu0 0.0
    %2414 = vmatprep.subr.mxu0 0.0
    %2415 = vmatpush1.msra.mxu0 0.0
    %2416 = vmatprep.subr.mxu0 0.0
    %2417 = vmatpush1.msra.mxu0 0.0
    %2418 = vmatprep.subr.mxu0 0.0
    %2419 = vmatpush1.msra.mxu0 0.0
    %2420 = vmatprep.subr.mxu0 0.0
    %2421 = vmatpush1.msra.mxu0 0.0
    %2422 = vmatprep.subr.mxu0 0.0
    %2423 = vmatpush1.msra.mxu0 0.0
    %2424 = vmatprep.subr.mxu0 0.0
    %2425 = vmatpush1.msra.mxu0 0.0
    %2426 = vmatprep.subr.mxu0 0.0
    %2427 = vmatpush1.msra.mxu0 0.0
    %2428 = vmatprep.subr.mxu0 0.0
    %2429 = vmatpush1.msra.mxu0 0.0
    %2430 = vmatprep.mubr.f32.mxu0 0.0
    %2431 = vmatmul.mubr.f32.gmra.mrb[0].mxu0 %v2209
    %v2432 = vpop.f32.mrb[0].mxu0
    %v2433 = vadd.f32 %v2286, %v2432
    %v2434 = vpop.f32.mrb[0].mxu0
    %v2435 = vadd.f32 %v2290, %v2434
    %2436 = vdwg.mxu0
    %v2437 = vld [vmem:[#allocation14] sm:$0xff]
    %v2438 = vld [vmem:[#allocation14 + $0x8] sm:$0xff]
    %v2439 = vld [vmem:[#allocation14 + $0x10] sm:$0xff]
    %v2440 = vld [vmem:[#allocation14 + $0x18] sm:$0xff]
    %v2441 = vld [vmem:[#allocation14 + $0x20] sm:$0xff]
    %v2442 = vld [vmem:[#allocation14 + $0x28] sm:$0xff]
    %v2443 = vld [vmem:[#allocation14 + $0x30] sm:$0xff]
    %v2444 = vld [vmem:[#allocation14 + $0x38] sm:$0xff]
    %v2445 = vld [vmem:[#allocation14 + $0x40] sm:$0xff]
    %v2446 = vld [vmem:[#allocation14 + $0x48] sm:$0xff]
    %v2447 = vld [vmem:[#allocation14 + $0x50] sm:$0xff]
    %v2448 = vld [vmem:[#allocation14 + $0x58] sm:$0xff]
    %v2449 = vld [vmem:[#allocation14 + $0x60] sm:$0xff]
    %v2450 = vld [vmem:[#allocation14 + $0x68] sm:$0xff]
    %v2451 = vld [vmem:[#allocation14 + $0x70] sm:$0xff]
    %v2452 = vld [vmem:[#allocation14 + $0x78] sm:$0xff]
    %v2453 = vld [vmem:[#allocation14 + $0x80] sm:$0xff]
    %v2454 = vld [vmem:[#allocation14 + $0x88] sm:$0xff]
    %v2455 = vld [vmem:[#allocation14 + $0x90] sm:$0xff]
    %v2456 = vld [vmem:[#allocation14 + $0x98] sm:$0xff]
    %v2457 = vld [vmem:[#allocation14 + $0xa0] sm:$0xff]
    %v2458 = vld [vmem:[#allocation14 + $0xa8] sm:$0xff]
    %v2459 = vld [vmem:[#allocation14 + $0xb0] sm:$0xff]
    %v2460 = vld [vmem:[#allocation14 + $0xb8] sm:$0xff]
    %v2461 = vld [vmem:[#allocation14 + $0xc0] sm:$0xff]
    %v2462 = vld [vmem:[#allocation14 + $0xc8] sm:$0xff]
    %v2463 = vld [vmem:[#allocation14 + $0xd0] sm:$0xff]
    %v2464 = vld [vmem:[#allocation14 + $0xd8] sm:$0xff]
    %v2465 = vld [vmem:[#allocation14 + $0xe0] sm:$0xff]
    %v2466 = vld [vmem:[#allocation14 + $0xe8] sm:$0xff]
    %v2467 = vld [vmem:[#allocation14 + $0xf0] sm:$0xff]
    %v2468 = vld [vmem:[#allocation14 + $0xf8] sm:$0xff]
    %v2469 = vld [vmem:[#allocation14 + $0x100] sm:$0xff]
    %v2470 = vld [vmem:[#allocation14 + $0x108] sm:$0xff]
    %v2471 = vld [vmem:[#allocation14 + $0x110] sm:$0xff]
    %v2472 = vld [vmem:[#allocation14 + $0x118] sm:$0xff]
    %v2473 = vld [vmem:[#allocation14 + $0x120] sm:$0xff]
    %v2474 = vld [vmem:[#allocation14 + $0x128] sm:$0xff]
    %v2475 = vld [vmem:[#allocation14 + $0x130] sm:$0xff]
    %v2476 = vld [vmem:[#allocation14 + $0x138] sm:$0xff]
    %v2477 = vld [vmem:[#allocation14 + $0x140] sm:$0xff]
    %v2478 = vld [vmem:[#allocation14 + $0x148] sm:$0xff]
    %v2479 = vld [vmem:[#allocation14 + $0x150] sm:$0xff]
    %v2480 = vld [vmem:[#allocation14 + $0x158] sm:$0xff]
    %v2481 = vld [vmem:[#allocation14 + $0x160] sm:$0xff]
    %v2482 = vld [vmem:[#allocation14 + $0x168] sm:$0xff]
    %v2483 = vld [vmem:[#allocation14 + $0x170] sm:$0xff]
    %v2484 = vld [vmem:[#allocation14 + $0x178] sm:$0xff]
    %v2485 = vld [vmem:[#allocation14 + $0x180] sm:$0xff]
    %v2486 = vld [vmem:[#allocation14 + $0x188] sm:$0xff]
    %v2487 = vld [vmem:[#allocation14 + $0x190] sm:$0xff]
    %v2488 = vld [vmem:[#allocation14 + $0x198] sm:$0xff]
    %v2489 = vld [vmem:[#allocation14 + $0x1a0] sm:$0xff]
    %v2490 = vld [vmem:[#allocation14 + $0x1a8] sm:$0xff]
    %v2491 = vld [vmem:[#allocation14 + $0x1b0] sm:$0xff]
    %v2492 = vld [vmem:[#allocation14 + $0x1b8] sm:$0xff]
    %v2493 = vld [vmem:[#allocation14 + $0x1c0] sm:$0xff]
    %v2494 = vld [vmem:[#allocation14 + $0x1c8] sm:$0xff]
    %v2495 = vld [vmem:[#allocation14 + $0x1d0] sm:$0xff]
    %v2496 = vld [vmem:[#allocation14 + $0x1d8] sm:$0xff]
    %v2497 = vld [vmem:[#allocation14 + $0x1e0] sm:$0xff]
    %v2498 = vld [vmem:[#allocation14 + $0x1e8] sm:$0xff]
    %v2499 = vld [vmem:[#allocation14 + $0x1f0] sm:$0xff]
    %v2500 = vld [vmem:[#allocation14 + $0x1f8] sm:$0xff]
    %2501 = vmatprep.subr.mxu0 %v2438
    %2502 = vmatpush1.msra.mxu0 %v2437
    %2503 = vmatprep.subr.mxu0 %v2442
    %2504 = vmatpush1.msra.mxu0 %v2441
    %2505 = vmatprep.subr.mxu0 %v2446
    %2506 = vmatpush1.msra.mxu0 %v2445
    %2507 = vmatprep.subr.mxu0 %v2450
    %2508 = vmatpush1.msra.mxu0 %v2449
    %2509 = vmatprep.subr.mxu0 %v2454
    %2510 = vmatpush1.msra.mxu0 %v2453
    %2511 = vmatprep.subr.mxu0 %v2458
    %2512 = vmatpush1.msra.mxu0 %v2457
    %2513 = vmatprep.subr.mxu0 %v2462
    %2514 = vmatpush1.msra.mxu0 %v2461
    %2515 = vmatprep.subr.mxu0 %v2466
    %2516 = vmatpush1.msra.mxu0 %v2465
    %2517 = vmatprep.subr.mxu0 %v2470
    %2518 = vmatpush1.msra.mxu0 %v2469
    %2519 = vmatprep.subr.mxu0 %v2474
    %2520 = vmatpush1.msra.mxu0 %v2473
    %2521 = vmatprep.subr.mxu0 %v2478
    %2522 = vmatpush1.msra.mxu0 %v2477
    %2523 = vmatprep.subr.mxu0 %v2482
    %2524 = vmatpush1.msra.mxu0 %v2481
    %2525 = vmatprep.subr.mxu0 %v2486
    %2526 = vmatpush1.msra.mxu0 %v2485
    %2527 = vmatprep.subr.mxu0 %v2490
    %2528 = vmatpush1.msra.mxu0 %v2489
    %2529 = vmatprep.subr.mxu0 %v2494
    %2530 = vmatpush1.msra.mxu0 %v2493
    %2531 = vmatprep.subr.mxu0 %v2498
    %2532 = vmatpush1.msra.mxu0 %v2497
    %2533 = vmatprep.subr.mxu0 0.0
    %2534 = vmatpush1.msra.mxu0 0.0
    %2535 = vmatprep.subr.mxu0 0.0
    %2536 = vmatpush1.msra.mxu0 0.0
    %2537 = vmatprep.subr.mxu0 0.0
    %2538 = vmatpush1.msra.mxu0 0.0
    %2539 = vmatprep.subr.mxu0 0.0
    %2540 = vmatpush1.msra.mxu0 0.0
    %2541 = vmatprep.subr.mxu0 0.0
    %2542 = vmatpush1.msra.mxu0 0.0
    %2543 = vmatprep.subr.mxu0 0.0
    %2544 = vmatpush1.msra.mxu0 0.0
    %2545 = vmatprep.subr.mxu0 0.0
    %2546 = vmatpush1.msra.mxu0 0.0
    %2547 = vmatprep.subr.mxu0 0.0
    %2548 = vmatpush1.msra.mxu0 0.0
    %2549 = vmatprep.subr.mxu0 0.0
    %2550 = vmatpush1.msra.mxu0 0.0
    %2551 = vmatprep.subr.mxu0 0.0
    %2552 = vmatpush1.msra.mxu0 0.0
    %2553 = vmatprep.subr.mxu0 0.0
    %2554 = vmatpush1.msra.mxu0 0.0
    %2555 = vmatprep.subr.mxu0 0.0
    %2556 = vmatpush1.msra.mxu0 0.0
    %2557 = vmatprep.subr.mxu0 0.0
    %2558 = vmatpush1.msra.mxu0 0.0
    %2559 = vmatprep.subr.mxu0 0.0
    %2560 = vmatpush1.msra.mxu0 0.0
    %2561 = vmatprep.subr.mxu0 0.0
    %2562 = vmatpush1.msra.mxu0 0.0
    %2563 = vmatprep.subr.mxu0 0.0
    %2564 = vmatpush1.msra.mxu0 0.0
    %2565 = vmatprep.mubr.f32.mxu0 0.0
    %2566 = vmatmul.mubr.f32.gmra.mrb[0].mxu0 0.0
    %v2567 = vpop.f32.mrb[0].mxu0
    %v2568 = vadd.f32 0.0, %v2567
    %v2569 = vpop.f32.mrb[0].mxu0
    %v2570 = vadd.f32 0.0, %v2569
    %2571 = vdwg.mxu0
    %2572 = vmatprep.subr.mxu0 %v2440
    %2573 = vmatpush1.msra.mxu0 %v2439
    %2574 = vmatprep.subr.mxu0 %v2444
    %2575 = vmatpush1.msra.mxu0 %v2443
    %2576 = vmatprep.subr.mxu0 %v2448
    %2577 = vmatpush1.msra.mxu0 %v2447
    %2578 = vmatprep.subr.mxu0 %v2452
    %2579 = vmatpush1.msra.mxu0 %v2451
    %2580 = vmatprep.subr.mxu0 %v2456
    %2581 = vmatpush1.msra.mxu0 %v2455
    %2582 = vmatprep.subr.mxu0 %v2460
    %2583 = vmatpush1.msra.mxu0 %v2459
    %2584 = vmatprep.subr.mxu0 %v2464
    %2585 = vmatpush1.msra.mxu0 %v2463
    %2586 = vmatprep.subr.mxu0 %v2468
    %2587 = vmatpush1.msra.mxu0 %v2467
    %2588 = vmatprep.subr.mxu0 %v2472
    %2589 = vmatpush1.msra.mxu0 %v2471
    %2590 = vmatprep.subr.mxu0 %v2476
    %2591 = vmatpush1.msra.mxu0 %v2475
    %2592 = vmatprep.subr.mxu0 %v2480
    %2593 = vmatpush1.msra.mxu0 %v2479
    %2594 = vmatprep.subr.mxu0 %v2484
    %2595 = vmatpush1.msra.mxu0 %v2483
    %2596 = vmatprep.subr.mxu0 %v2488
    %2597 = vmatpush1.msra.mxu0 %v2487
    %2598 = vmatprep.subr.mxu0 %v2492
    %2599 = vmatpush1.msra.mxu0 %v2491
    %2600 = vmatprep.subr.mxu0 %v2496
    %2601 = vmatpush1.msra.mxu0 %v2495
    %2602 = vmatprep.subr.mxu0 %v2500
    %2603 = vmatpush1.msra.mxu0 %v2499
    %2604 = vmatprep.subr.mxu0 0.0
    %2605 = vmatpush1.msra.mxu0 0.0
    %2606 = vmatprep.subr.mxu0 0.0
    %2607 = vmatpush1.msra.mxu0 0.0
    %2608 = vmatprep.subr.mxu0 0.0
    %2609 = vmatpush1.msra.mxu0 0.0
    %2610 = vmatprep.subr.mxu0 0.0
    %2611 = vmatpush1.msra.mxu0 0.0
    %2612 = vmatprep.subr.mxu0 0.0
    %2613 = vmatpush1.msra.mxu0 0.0
    %2614 = vmatprep.subr.mxu0 0.0
    %2615 = vmatpush1.msra.mxu0 0.0
    %2616 = vmatprep.subr.mxu0 0.0
    %2617 = vmatpush1.msra.mxu0 0.0
    %2618 = vmatprep.subr.mxu0 0.0
    %2619 = vmatpush1.msra.mxu0 0.0
    %2620 = vmatprep.subr.mxu0 0.0
    %2621 = vmatpush1.msra.mxu0 0.0
    %2622 = vmatprep.subr.mxu0 0.0
    %2623 = vmatpush1.msra.mxu0 0.0
    %2624 = vmatprep.subr.mxu0 0.0
    %2625 = vmatpush1.msra.mxu0 0.0
    %2626 = vmatprep.subr.mxu0 0.0
    %2627 = vmatpush1.msra.mxu0 0.0
    %2628 = vmatprep.subr.mxu0 0.0
    %2629 = vmatpush1.msra.mxu0 0.0
    %2630 = vmatprep.subr.mxu0 0.0
    %2631 = vmatpush1.msra.mxu0 0.0
    %2632 = vmatprep.subr.mxu0 0.0
    %2633 = vmatpush1.msra.mxu0 0.0
    %2634 = vmatprep.subr.mxu0 0.0
    %2635 = vmatpush1.msra.mxu0 0.0
    %2636 = vmatprep.mubr.f32.mxu0 0.0
    %2637 = vmatmul.mubr.f32.gmra.mrb[0].mxu0 0.0
    %v2638 = vpop.f32.mrb[0].mxu0
    %v2639 = vadd.f32 0.0, %v2638
    %v2640 = vpop.f32.mrb[0].mxu0
    %v2641 = vadd.f32 0.0, %v2640
    %2642 = vdwg.mxu0
    %v2643 = vadd.f32 %v2362, %v2568
    %v2644 = vadd.f32 %v2364, %v2570
    %v2645 = vadd.f32 %v2433, %v2639
    %v2646 = vadd.f32 %v2435, %v2641
    %v2647 = vmul.f32 %v2643, 0.5
    %v2648 = vmul.f32 %v2644, 0.5
    %v2649 = vmul.f32 %v2645, 0.5
    %v2650 = vtanh.pop %v2647
    %v2651 = vtanh.pop %v2648
    %v2652 = vtanh.pop %v2649
    %v2653 = vadd.f32 %v2650, 1.0
    %v2654 = vadd.f32 %v2651, 1.0
    %v2655 = vadd.f32 %v2652, 1.0
    %v2656 = vmul.f32 %v2653, 0.5
    %v2657 = vmul.f32 %v2654, 0.5
    %v2658 = vmul.f32 %v2655, 0.5
    %v2659 = vtanh.pop %v2646
    %v2660 = vmul.f32 %v2657, 0.0
    %v2661 = vmul.f32 %v2656, %v2659
    %v2662 = vadd.f32 %v2660, %v2661
    %v2663 = vtanh.pop %v2662
    %v2664 = vmul.f32 %v2658, %v2663
    %v2665 = vmul.f32 %v2023, 0.5
    %v2666 = vtanh.pop %v2665
    %v2667 = vadd.f32 %v2666, 1.0
    %v2668 = vmul.f32 %v2667, 0.5
    %2669 = vmatprep.subr.mxu0 %v1257
    %2670 = vmatpush1.msra.mxu0 %v1256
    %2671 = vmatprep.subr.mxu0 %v1261
    %2672 = vmatpush1.msra.mxu0 %v1260
    %2673 = vmatprep.subr.mxu0 %v1265
    %2674 = vmatpush1.msra.mxu0 %v1264
    %2675 = vmatprep.subr.mxu0 %v1269
    %2676 = vmatpush1.msra.mxu0 %v1268
    %2677 = vmatprep.subr.mxu0 %v1273
    %2678 = vmatpush1.msra.mxu0 %v1272
    %2679 = vmatprep.subr.mxu0 %v1277
    %2680 = vmatpush1.msra.mxu0 %v1276
    %2681 = vmatprep.subr.mxu0 %v1281
    %2682 = vmatpush1.msra.mxu0 %v1280
    %2683 = vmatprep.subr.mxu0 %v1285
    %2684 = vmatpush1.msra.mxu0 %v1284
    %2685 = vmatprep.subr.mxu0 %v1289
    %2686 = vmatpush1.msra.mxu0 %v1288
    %2687 = vmatprep.subr.mxu0 %v1293
    %2688 = vmatpush1.msra.mxu0 %v1292
    %2689 = vmatprep.subr.mxu0 %v1297
    %2690 = vmatpush1.msra.mxu0 %v1296
    %2691 = vmatprep.subr.mxu0 %v1301
    %2692 = vmatpush1.msra.mxu0 %v1300
    %2693 = vmatprep.subr.mxu0 %v1305
    %2694 = vmatpush1.msra.mxu0 %v1304
    %2695 = vmatprep.subr.mxu0 %v1309
    %2696 = vmatpush1.msra.mxu0 %v1308
    %2697 = vmatprep.subr.mxu0 %v1313
    %2698 = vmatpush1.msra.mxu0 %v1312
    %2699 = vmatprep.subr.mxu0 %v1317
    %2700 = vmatpush1.msra.mxu0 %v1316
    %2701 = vmatprep.subr.mxu0 0.0
    %2702 = vmatpush1.msra.mxu0 0.0
    %2703 = vmatprep.subr.mxu0 0.0
    %2704 = vmatpush1.msra.mxu0 0.0
    %2705 = vmatprep.subr.mxu0 0.0
    %2706 = vmatpush1.msra.mxu0 0.0
    %2707 = vmatprep.subr.mxu0 0.0
    %2708 = vmatpush1.msra.mxu0 0.0
    %2709 = vmatprep.subr.mxu0 0.0
    %2710 = vmatpush1.msra.mxu0 0.0
    %2711 = vmatprep.subr.mxu0 0.0
    %2712 = vmatpush1.msra.mxu0 0.0
    %2713 = vmatprep.subr.mxu0 0.0
    %2714 = vmatpush1.msra.mxu0 0.0
    %2715 = vmatprep.subr.mxu0 0.0
    %2716 = vmatpush1.msra.mxu0 0.0
    %2717 = vmatprep.subr.mxu0 0.0
    %2718 = vmatpush1.msra.mxu0 0.0
    %2719 = vmatprep.subr.mxu0 0.0
    %2720 = vmatpush1.msra.mxu0 0.0
    %2721 = vmatprep.subr.mxu0 0.0
    %2722 = vmatpush1.msra.mxu0 0.0
    %2723 = vmatprep.subr.mxu0 0.0
    %2724 = vmatpush1.msra.mxu0 0.0
    %2725 = vmatprep.subr.mxu0 0.0
    %2726 = vmatpush1.msra.mxu0 0.0
    %2727 = vmatprep.subr.mxu0 0.0
    %2728 = vmatpush1.msra.mxu0 0.0
    %2729 = vmatprep.subr.mxu0 0.0
    %2730 = vmatpush1.msra.mxu0 0.0
    %2731 = vmatprep.subr.mxu0 0.0
    %2732 = vmatpush1.msra.mxu0 0.0
    %2733 = vmatprep.mubr.f32.mxu0 0.0
    %2734 = vmatmul.mubr.f32.gmra.mrb[0].mxu0 %v2668
    %v2735 = vpop.f32.mrb[0].mxu0
    %v2736 = vadd.f32 %v1324, %v2735
    %v2737 = vpop.f32.mrb[0].mxu0
    %v2738 = vadd.f32 %v1328, %v2737
    %2739 = vdwg.mxu0
    %2740 = vmatprep.subr.mxu0 %v1259
    %2741 = vmatpush1.msra.mxu0 %v1258
    %2742 = vmatprep.subr.mxu0 %v1263
    %2743 = vmatpush1.msra.mxu0 %v1262
    %2744 = vmatprep.subr.mxu0 %v1267
    %2745 = vmatpush1.msra.mxu0 %v1266
    %2746 = vmatprep.subr.mxu0 %v1271
    %2747 = vmatpush1.msra.mxu0 %v1270
    %2748 = vmatprep.subr.mxu0 %v1275
    %2749 = vmatpush1.msra.mxu0 %v1274
    %2750 = vmatprep.subr.mxu0 %v1279
    %2751 = vmatpush1.msra.mxu0 %v1278
    %2752 = vmatprep.subr.mxu0 %v1283
    %2753 = vmatpush1.msra.mxu0 %v1282
    %2754 = vmatprep.subr.mxu0 %v1287
    %2755 = vmatpush1.msra.mxu0 %v1286
    %2756 = vmatprep.subr.mxu0 %v1291
    %2757 = vmatpush1.msra.mxu0 %v1290
    %2758 = vmatprep.subr.mxu0 %v1295
    %2759 = vmatpush1.msra.mxu0 %v1294
    %2760 = vmatprep.subr.mxu0 %v1299
    %2761 = vmatpush1.msra.mxu0 %v1298
    %2762 = vmatprep.subr.mxu0 %v1303
    %2763 = vmatpush1.msra.mxu0 %v1302
    %2764 = vmatprep.subr.mxu0 %v1307
    %2765 = vmatpush1.msra.mxu0 %v1306
    %2766 = vmatprep.subr.mxu0 %v1311
    %2767 = vmatpush1.msra.mxu0 %v1310
    %2768 = vmatprep.subr.mxu0 %v1315
    %2769 = vmatpush1.msra.mxu0 %v1314
    %2770 = vmatprep.subr.mxu0 %v1319
    %2771 = vmatpush1.msra.mxu0 %v1318
    %2772 = vmatprep.subr.mxu0 0.0
    %2773 = vmatpush1.msra.mxu0 0.0
    %2774 = vmatprep.subr.mxu0 0.0
    %2775 = vmatpush1.msra.mxu0 0.0
    %2776 = vmatprep.subr.mxu0 0.0
    %2777 = vmatpush1.msra.mxu0 0.0
    %2778 = vmatprep.subr.mxu0 0.0
    %2779 = vmatpush1.msra.mxu0 0.0
    %2780 = vmatprep.subr.mxu0 0.0
    %2781 = vmatpush1.msra.mxu0 0.0
    %2782 = vmatprep.subr.mxu0 0.0
    %2783 = vmatpush1.msra.mxu0 0.0
    %2784 = vmatprep.subr.mxu0 0.0
    %2785 = vmatpush1.msra.mxu0 0.0
    %2786 = vmatprep.subr.mxu0 0.0
    %2787 = vmatpush1.msra.mxu0 0.0
    %2788 = vmatprep.subr.mxu0 0.0
    %2789 = vmatpush1.msra.mxu0 0.0
    %2790 = vmatprep.subr.mxu0 0.0
    %2791 = vmatpush1.msra.mxu0 0.0
    %2792 = vmatprep.subr.mxu0 0.0
    %2793 = vmatpush1.msra.mxu0 0.0
    %2794 = vmatprep.subr.mxu0 0.0
    %2795 = vmatpush1.msra.mxu0 0.0
    %2796 = vmatprep.subr.mxu0 0.0
    %2797 = vmatpush1.msra.mxu0 0.0
    %2798 = vmatprep.subr.mxu0 0.0
    %2799 = vmatpush1.msra.mxu0 0.0
    %2800 = vmatprep.subr.mxu0 0.0
    %2801 = vmatpush1.msra.mxu0 0.0
    %2802 = vmatprep.subr.mxu0 0.0
    %2803 = vmatpush1.msra.mxu0 0.0
    %2804 = vmatprep.mubr.f32.mxu0 0.0
    %2805 = vmatmul.mubr.f32.gmra.mrb[0].mxu0 %v2668
    %v2806 = vpop.f32.mrb[0].mxu0
    %v2807 = vadd.f32 %v1332, %v2806
    %v2808 = vpop.f32.mrb[0].mxu0
    %v2809 = vadd.f32 %v1336, %v2808
    %2810 = vdwg.mxu0
    %2811 = vmatprep.subr.mxu0 %v1484
    %2812 = vmatpush1.msra.mxu0 %v1483
    %2813 = vmatprep.subr.mxu0 %v1488
    %2814 = vmatpush1.msra.mxu0 %v1487
    %2815 = vmatprep.subr.mxu0 %v1492
    %2816 = vmatpush1.msra.mxu0 %v1491
    %2817 = vmatprep.subr.mxu0 %v1496
    %2818 = vmatpush1.msra.mxu0 %v1495
    %2819 = vmatprep.subr.mxu0 %v1500
    %2820 = vmatpush1.msra.mxu0 %v1499
    %2821 = vmatprep.subr.mxu0 %v1504
    %2822 = vmatpush1.msra.mxu0 %v1503
    %2823 = vmatprep.subr.mxu0 %v1508
    %2824 = vmatpush1.msra.mxu0 %v1507
    %2825 = vmatprep.subr.mxu0 %v1512
    %2826 = vmatpush1.msra.mxu0 %v1511
    %2827 = vmatprep.subr.mxu0 %v1516
    %2828 = vmatpush1.msra.mxu0 %v1515
    %2829 = vmatprep.subr.mxu0 %v1520
    %2830 = vmatpush1.msra.mxu0 %v1519
    %2831 = vmatprep.subr.mxu0 %v1524
    %2832 = vmatpush1.msra.mxu0 %v1523
    %2833 = vmatprep.subr.mxu0 %v1528
    %2834 = vmatpush1.msra.mxu0 %v1527
    %2835 = vmatprep.subr.mxu0 %v1532
    %2836 = vmatpush1.msra.mxu0 %v1531
    %2837 = vmatprep.subr.mxu0 %v1536
    %2838 = vmatpush1.msra.mxu0 %v1535
    %2839 = vmatprep.subr.mxu0 %v1540
    %2840 = vmatpush1.msra.mxu0 %v1539
    %2841 = vmatprep.subr.mxu0 %v1544
    %2842 = vmatpush1.msra.mxu0 %v1543
    %2843 = vmatprep.subr.mxu0 0.0
    %2844 = vmatpush1.msra.mxu0 0.0
    %2845 = vmatprep.subr.mxu0 0.0
    %2846 = vmatpush1.msra.mxu0 0.0
    %2847 = vmatprep.subr.mxu0 0.0
    %2848 = vmatpush1.msra.mxu0 0.0
    %2849 = vmatprep.subr.mxu0 0.0
    %2850 = vmatpush1.msra.mxu0 0.0
    %2851 = vmatprep.subr.mxu0 0.0
    %2852 = vmatpush1.msra.mxu0 0.0
    %2853 = vmatprep.subr.mxu0 0.0
    %2854 = vmatpush1.msra.mxu0 0.0
    %2855 = vmatprep.subr.mxu0 0.0
    %2856 = vmatpush1.msra.mxu0 0.0
    %2857 = vmatprep.subr.mxu0 0.0
    %2858 = vmatpush1.msra.mxu0 0.0
    %2859 = vmatprep.subr.mxu0 0.0
    %2860 = vmatpush1.msra.mxu0 0.0
    %2861 = vmatprep.subr.mxu0 0.0
    %2862 = vmatpush1.msra.mxu0 0.0
    %2863 = vmatprep.subr.mxu0 0.0
    %2864 = vmatpush1.msra.mxu0 0.0
    %2865 = vmatprep.subr.mxu0 0.0
    %2866 = vmatpush1.msra.mxu0 0.0
    %2867 = vmatprep.subr.mxu0 0.0
    %2868 = vmatpush1.msra.mxu0 0.0
    %2869 = vmatprep.subr.mxu0 0.0
    %2870 = vmatpush1.msra.mxu0 0.0
    %2871 = vmatprep.subr.mxu0 0.0
    %2872 = vmatpush1.msra.mxu0 0.0
    %2873 = vmatprep.subr.mxu0 0.0
    %2874 = vmatpush1.msra.mxu0 0.0
    %2875 = vmatprep.mubr.f32.mxu0 0.0
    %2876 = vmatmul.mubr.f32.gmra.mrb[0].mxu0 %v1710
    %v2877 = vpop.f32.mrb[0].mxu0
    %v2878 = vadd.f32 0.0, %v2877
    %v2879 = vpop.f32.mrb[0].mxu0
    %v2880 = vadd.f32 0.0, %v2879
    %2881 = vdwg.mxu0
    %2882 = vmatprep.subr.mxu0 %v1486
    %2883 = vmatpush1.msra.mxu0 %v1485
    %2884 = vmatprep.subr.mxu0 %v1490
    %2885 = vmatpush1.msra.mxu0 %v1489
    %2886 = vmatprep.subr.mxu0 %v1494
    %2887 = vmatpush1.msra.mxu0 %v1493
    %2888 = vmatprep.subr.mxu0 %v1498
    %2889 = vmatpush1.msra.mxu0 %v1497
    %2890 = vmatprep.subr.mxu0 %v1502
    %2891 = vmatpush1.msra.mxu0 %v1501
    %2892 = vmatprep.subr.mxu0 %v1506
    %2893 = vmatpush1.msra.mxu0 %v1505
    %2894 = vmatprep.subr.mxu0 %v1510
    %2895 = vmatpush1.msra.mxu0 %v1509
    %2896 = vmatprep.subr.mxu0 %v1514
    %2897 = vmatpush1.msra.mxu0 %v1513
    %2898 = vmatprep.subr.mxu0 %v1518
    %2899 = vmatpush1.msra.mxu0 %v1517
    %2900 = vmatprep.subr.mxu0 %v1522
    %2901 = vmatpush1.msra.mxu0 %v1521
    %2902 = vmatprep.subr.mxu0 %v1526
    %2903 = vmatpush1.msra.mxu0 %v1525
    %2904 = vmatprep.subr.mxu0 %v1530
    %2905 = vmatpush1.msra.mxu0 %v1529
    %2906 = vmatprep.subr.mxu0 %v1534
    %2907 = vmatpush1.msra.mxu0 %v1533
    %2908 = vmatprep.subr.mxu0 %v1538
    %2909 = vmatpush1.msra.mxu0 %v1537
    %2910 = vmatprep.subr.mxu0 %v1542
    %2911 = vmatpush1.msra.mxu0 %v1541
    %2912 = vmatprep.subr.mxu0 %v1546
    %2913 = vmatpush1.msra.mxu0 %v1545
    %2914 = vmatprep.subr.mxu0 0.0
    %2915 = vmatpush1.msra.mxu0 0.0
    %2916 = vmatprep.subr.mxu0 0.0
    %2917 = vmatpush1.msra.mxu0 0.0
    %2918 = vmatprep.subr.mxu0 0.0
    %2919 = vmatpush1.msra.mxu0 0.0
    %2920 = vmatprep.subr.mxu0 0.0
    %2921 = vmatpush1.msra.mxu0 0.0
    %2922 = vmatprep.subr.mxu0 0.0
    %2923 = vmatpush1.msra.mxu0 0.0
    %2924 = vmatprep.subr.mxu0 0.0
    %2925 = vmatpush1.msra.mxu0 0.0
    %2926 = vmatprep.subr.mxu0 0.0
    %2927 = vmatpush1.msra.mxu0 0.0
    %2928 = vmatprep.subr.mxu0 0.0
    %2929 = vmatpush1.msra.mxu0 0.0
    %2930 = vmatprep.subr.mxu0 0.0
    %2931 = vmatpush1.msra.mxu0 0.0
    %2932 = vmatprep.subr.mxu0 0.0
    %2933 = vmatpush1.msra.mxu0 0.0
    %2934 = vmatprep.subr.mxu0 0.0
    %2935 = vmatpush1.msra.mxu0 0.0
    %2936 = vmatprep.subr.mxu0 0.0
    %2937 = vmatpush1.msra.mxu0 0.0
    %2938 = vmatprep.subr.mxu0 0.0
    %2939 = vmatpush1.msra.mxu0 0.0
    %2940 = vmatprep.subr.mxu0 0.0
    %2941 = vmatpush1.msra.mxu0 0.0
    %2942 = vmatprep.subr.mxu0 0.0
    %2943 = vmatpush1.msra.mxu0 0.0
    %2944 = vmatprep.subr.mxu0 0.0
    %2945 = vmatpush1.msra.mxu0 0.0
    %2946 = vmatprep.mubr.f32.mxu0 0.0
    %2947 = vmatmul.mubr.f32.gmra.mrb[0].mxu0 %v1710
    %v2948 = vpop.f32.mrb[0].mxu0
    %v2949 = vadd.f32 0.0, %v2948
    %v2950 = vpop.f32.mrb[0].mxu0
    %v2951 = vadd.f32 0.0, %v2950
    %2952 = vdwg.mxu0
    %v2953 = vadd.f32 %v2736, %v2878
    %v2954 = vadd.f32 %v2738, %v2880
    %v2955 = vadd.f32 %v2807, %v2949
    %v2956 = vadd.f32 %v2809, %v2951
    %v2957 = vmul.f32 %v2953, 0.5
    %v2958 = vmul.f32 %v2954, 0.5
    %v2959 = vmul.f32 %v2955, 0.5
    %v2960 = vtanh.pop %v2957
    %v2961 = vtanh.pop %v2958
    %v2962 = vtanh.pop %v2959
    %v2963 = vadd.f32 %v2960, 1.0
    %v2964 = vadd.f32 %v2961, 1.0
    %v2965 = vadd.f32 %v2962, 1.0
    %v2966 = vmul.f32 %v2963, 0.5
    %v2967 = vmul.f32 %v2964, 0.5
    %v2968 = vmul.f32 %v2965, 0.5
    %v2969 = vtanh.pop %v2956
    %v2970 = vmul.f32 %v2967, %v1708
    %v2971 = vmul.f32 %v2966, %v2969
    %v2972 = vadd.f32 %v2970, %v2971
    %v2973 = vtanh.pop %v2972
    %v2974 = vmul.f32 %v2968, %v2973
    %v2975 = vmul.f32 %v2205, 0.5
    %v2976 = vtanh.pop %v2975
    %v2977 = vadd.f32 %v2976, 1.0
    %v2978 = vmul.f32 %v2977, 0.5
    %v2980 = vrot.slane %v2978, 2
    %2982 = vmatprep.subr.mxu0 %v619
    %2983 = vmatpush1.msra.mxu0 %v618
    %2984 = vmatprep.subr.mxu0 %v623
    %2985 = vmatpush1.msra.mxu0 %v622
    %2986 = vmatprep.subr.mxu0 %v627
    %2987 = vmatpush1.msra.mxu0 %v626
    %2988 = vmatprep.subr.mxu0 %v631
    %2989 = vmatpush1.msra.mxu0 %v630
    %2990 = vmatprep.subr.mxu0 %v635
    %2991 = vmatpush1.msra.mxu0 %v634
    %2992 = vmatprep.subr.mxu0 %v639
    %2993 = vmatpush1.msra.mxu0 %v638
    %2994 = vmatprep.subr.mxu0 %v643
    %2995 = vmatpush1.msra.mxu0 %v642
    %2996 = vmatprep.subr.mxu0 %v647
    %2997 = vmatpush1.msra.mxu0 %v646
    %2998 = vmatprep.subr.mxu0 %v651
    %2999 = vmatpush1.msra.mxu0 %v650
    %3000 = vmatprep.subr.mxu0 %v655
    %3001 = vmatpush1.msra.mxu0 %v654
    %3002 = vmatprep.subr.mxu0 %v659
    %3003 = vmatpush1.msra.mxu0 %v658
    %3004 = vmatprep.subr.mxu0 %v663
    %3005 = vmatpush1.msra.mxu0 %v662
    %3006 = vmatprep.subr.mxu0 %v667
    %3007 = vmatpush1.msra.mxu0 %v666
    %3008 = vmatprep.subr.mxu0 %v671
    %3009 = vmatpush1.msra.mxu0 %v670
    %3010 = vmatprep.subr.mxu0 %v675
    %3011 = vmatpush1.msra.mxu0 %v674
    %3012 = vmatprep.subr.mxu0 %v679
    %3013 = vmatpush1.msra.mxu0 %v678
    %3014 = vmatprep.subr.mxu0 0.0
    %3015 = vmatpush1.msra.mxu0 0.0
    %3016 = vmatprep.subr.mxu0 0.0
    %3017 = vmatpush1.msra.mxu0 0.0
    %3018 = vmatprep.subr.mxu0 0.0
    %3019 = vmatpush1.msra.mxu0 0.0
    %3020 = vmatprep.subr.mxu0 0.0
    %3021 = vmatpush1.msra.mxu0 0.0
    %3022 = vmatprep.subr.mxu0 0.0
    %3023 = vmatpush1.msra.mxu0 0.0
    %3024 = vmatprep.subr.mxu0 0.0
    %3025 = vmatpush1.msra.mxu0 0.0
    %3026 = vmatprep.subr.mxu0 0.0
    %3027 = vmatpush1.msra.mxu0 0.0
    %3028 = vmatprep.subr.mxu0 0.0
    %3029 = vmatpush1.msra.mxu0 0.0
    %3030 = vmatprep.subr.mxu0 0.0
    %3031 = vmatpush1.msra.mxu0 0.0
    %3032 = vmatprep.subr.mxu0 0.0
    %3033 = vmatpush1.msra.mxu0 0.0
    %3034 = vmatprep.subr.mxu0 0.0
    %3035 = vmatpush1.msra.mxu0 0.0
    %3036 = vmatprep.subr.mxu0 0.0
    %3037 = vmatpush1.msra.mxu0 0.0
    %3038 = vmatprep.subr.mxu0 0.0
    %3039 = vmatpush1.msra.mxu0 0.0
    %3040 = vmatprep.subr.mxu0 0.0
    %3041 = vmatpush1.msra.mxu0 0.0
    %3042 = vmatprep.subr.mxu0 0.0
    %3043 = vmatpush1.msra.mxu0 0.0
    %3044 = vmatprep.subr.mxu0 0.0
    %3045 = vmatpush1.msra.mxu0 0.0
    %3046 = vmatprep.mubr.f32.mxu0 0.0
    %3047 = vmatmul.mubr.f32.gmra.mrb[0].mxu0 %v2980
    %v3048 = vpop.f32.mrb[0].mxu0
    %v3049 = vadd.f32 %v686, %v3048
    %v3050 = vpop.f32.mrb[0].mxu0
    %v3051 = vadd.f32 %v690, %v3050
    %3052 = vdwg.mxu0
    %3053 = vmatprep.subr.mxu0 %v621
    %3054 = vmatpush1.msra.mxu0 %v620
    %3055 = vmatprep.subr.mxu0 %v625
    %3056 = vmatpush1.msra.mxu0 %v624
    %3057 = vmatprep.subr.mxu0 %v629
    %3058 = vmatpush1.msra.mxu0 %v628
    %3059 = vmatprep.subr.mxu0 %v633
    %3060 = vmatpush1.msra.mxu0 %v632
    %3061 = vmatprep.subr.mxu0 %v637
    %3062 = vmatpush1.msra.mxu0 %v636
    %3063 = vmatprep.subr.mxu0 %v641
    %3064 = vmatpush1.msra.mxu0 %v640
    %3065 = vmatprep.subr.mxu0 %v645
    %3066 = vmatpush1.msra.mxu0 %v644
    %3067 = vmatprep.subr.mxu0 %v649
    %3068 = vmatpush1.msra.mxu0 %v648
    %3069 = vmatprep.subr.mxu0 %v653
    %3070 = vmatpush1.msra.mxu0 %v652
    %3071 = vmatprep.subr.mxu0 %v657
    %3072 = vmatpush1.msra.mxu0 %v656
    %3073 = vmatprep.subr.mxu0 %v661
    %3074 = vmatpush1.msra.mxu0 %v660
    %3075 = vmatprep.subr.mxu0 %v665
    %3076 = vmatpush1.msra.mxu0 %v664
    %3077 = vmatprep.subr.mxu0 %v669
    %3078 = vmatpush1.msra.mxu0 %v668
    %3079 = vmatprep.subr.mxu0 %v673
    %3080 = vmatpush1.msra.mxu0 %v672
    %3081 = vmatprep.subr.mxu0 %v677
    %3082 = vmatpush1.msra.mxu0 %v676
    %3083 = vmatprep.subr.mxu0 %v681
    %3084 = vmatpush1.msra.mxu0 %v680
    %3085 = vmatprep.subr.mxu0 0.0
    %3086 = vmatpush1.msra.mxu0 0.0
    %3087 = vmatprep.subr.mxu0 0.0
    %3088 = vmatpush1.msra.mxu0 0.0
    %3089 = vmatprep.subr.mxu0 0.0
    %3090 = vmatpush1.msra.mxu0 0.0
    %3091 = vmatprep.subr.mxu0 0.0
    %3092 = vmatpush1.msra.mxu0 0.0
    %3093 = vmatprep.subr.mxu0 0.0
    %3094 = vmatpush1.msra.mxu0 0.0
    %3095 = vmatprep.subr.mxu0 0.0
    %3096 = vmatpush1.msra.mxu0 0.0
    %3097 = vmatprep.subr.mxu0 0.0
    %3098 = vmatpush1.msra.mxu0 0.0
    %3099 = vmatprep.subr.mxu0 0.0
    %3100 = vmatpush1.msra.mxu0 0.0
    %3101 = vmatprep.subr.mxu0 0.0
    %3102 = vmatpush1.msra.mxu0 0.0
    %3103 = vmatprep.subr.mxu0 0.0
    %3104 = vmatpush1.msra.mxu0 0.0
    %3105 = vmatprep.subr.mxu0 0.0
    %3106 = vmatpush1.msra.mxu0 0.0
    %3107 = vmatprep.subr.mxu0 0.0
    %3108 = vmatpush1.msra.mxu0 0.0
    %3109 = vmatprep.subr.mxu0 0.0
    %3110 = vmatpush1.msra.mxu0 0.0
    %3111 = vmatprep.subr.mxu0 0.0
    %3112 = vmatpush1.msra.mxu0 0.0
    %3113 = vmatprep.subr.mxu0 0.0
    %3114 = vmatpush1.msra.mxu0 0.0
    %3115 = vmatprep.subr.mxu0 0.0
    %3116 = vmatpush1.msra.mxu0 0.0
    %3117 = vmatprep.mubr.f32.mxu0 0.0
    %3118 = vmatmul.mubr.f32.gmra.mrb[0].mxu0 %v2980
    %v3119 = vpop.f32.mrb[0].mxu0
    %v3120 = vadd.f32 %v694, %v3119
    %v3121 = vpop.f32.mrb[0].mxu0
    %v3122 = vadd.f32 %v698, %v3121
    %3123 = vdwg.mxu0
    %3124 = vmatprep.subr.mxu0 %v846
    %3125 = vmatpush1.msra.mxu0 %v845
    %3126 = vmatprep.subr.mxu0 %v850
    %3127 = vmatpush1.msra.mxu0 %v849
    %3128 = vmatprep.subr.mxu0 %v854
    %3129 = vmatpush1.msra.mxu0 %v853
    %3130 = vmatprep.subr.mxu0 %v858
    %3131 = vmatpush1.msra.mxu0 %v857
    %3132 = vmatprep.subr.mxu0 %v862
    %3133 = vmatpush1.msra.mxu0 %v861
    %3134 = vmatprep.subr.mxu0 %v866
    %3135 = vmatpush1.msra.mxu0 %v865
    %3136 = vmatprep.subr.mxu0 %v870
    %3137 = vmatpush1.msra.mxu0 %v869
    %3138 = vmatprep.subr.mxu0 %v874
    %3139 = vmatpush1.msra.mxu0 %v873
    %3140 = vmatprep.subr.mxu0 %v878
    %3141 = vmatpush1.msra.mxu0 %v877
    %3142 = vmatprep.subr.mxu0 %v882
    %3143 = vmatpush1.msra.mxu0 %v881
    %3144 = vmatprep.subr.mxu0 %v886
    %3145 = vmatpush1.msra.mxu0 %v885
    %3146 = vmatprep.subr.mxu0 %v890
    %3147 = vmatpush1.msra.mxu0 %v889
    %3148 = vmatprep.subr.mxu0 %v894
    %3149 = vmatpush1.msra.mxu0 %v893
    %3150 = vmatprep.subr.mxu0 %v898
    %3151 = vmatpush1.msra.mxu0 %v897
    %3152 = vmatprep.subr.mxu0 %v902
    %3153 = vmatpush1.msra.mxu0 %v901
    %3154 = vmatprep.subr.mxu0 %v906
    %3155 = vmatpush1.msra.mxu0 %v905
    %3156 = vmatprep.subr.mxu0 0.0
    %3157 = vmatpush1.msra.mxu0 0.0
    %3158 = vmatprep.subr.mxu0 0.0
    %3159 = vmatpush1.msra.mxu0 0.0
    %3160 = vmatprep.subr.mxu0 0.0
    %3161 = vmatpush1.msra.mxu0 0.0
    %3162 = vmatprep.subr.mxu0 0.0
    %3163 = vmatpush1.msra.mxu0 0.0
    %3164 = vmatprep.subr.mxu0 0.0
    %3165 = vmatpush1.msra.mxu0 0.0
    %3166 = vmatprep.subr.mxu0 0.0
    %3167 = vmatpush1.msra.mxu0 0.0
    %3168 = vmatprep.subr.mxu0 0.0
    %3169 = vmatpush1.msra.mxu0 0.0
    %3170 = vmatprep.subr.mxu0 0.0
    %3171 = vmatpush1.msra.mxu0 0.0
    %3172 = vmatprep.subr.mxu0 0.0
    %3173 = vmatpush1.msra.mxu0 0.0
    %3174 = vmatprep.subr.mxu0 0.0
    %3175 = vmatpush1.msra.mxu0 0.0
    %3176 = vmatprep.subr.mxu0 0.0
    %3177 = vmatpush1.msra.mxu0 0.0
    %3178 = vmatprep.subr.mxu0 0.0
    %3179 = vmatpush1.msra.mxu0 0.0
    %3180 = vmatprep.subr.mxu0 0.0
    %3181 = vmatpush1.msra.mxu0 0.0
    %3182 = vmatprep.subr.mxu0 0.0
    %3183 = vmatpush1.msra.mxu0 0.0
    %3184 = vmatprep.subr.mxu0 0.0
    %3185 = vmatpush1.msra.mxu0 0.0
    %3186 = vmatprep.subr.mxu0 0.0
    %3187 = vmatpush1.msra.mxu0 0.0
    %3188 = vmatprep.mubr.f32.mxu0 0.0
    %3189 = vmatmul.mubr.f32.gmra.mrb[0].mxu0 %v2023
    %v3190 = vpop.f32.mrb[0].mxu0
    %v3191 = vadd.f32 0.0, %v3190
    %v3192 = vpop.f32.mrb[0].mxu0
    %v3193 = vadd.f32 0.0, %v3192
    %3194 = vdwg.mxu0
    %3195 = vmatprep.subr.mxu0 %v848
    %3196 = vmatpush1.msra.mxu0 %v847
    %3197 = vmatprep.subr.mxu0 %v852
    %3198 = vmatpush1.msra.mxu0 %v851
    %3199 = vmatprep.subr.mxu0 %v856
    %3200 = vmatpush1.msra.mxu0 %v855
    %3201 = vmatprep.subr.mxu0 %v860
    %3202 = vmatpush1.msra.mxu0 %v859
    %3203 = vmatprep.subr.mxu0 %v864
    %3204 = vmatpush1.msra.mxu0 %v863
    %3205 = vmatprep.subr.mxu0 %v868
    %3206 = vmatpush1.msra.mxu0 %v867
    %3207 = vmatprep.subr.mxu0 %v872
    %3208 = vmatpush1.msra.mxu0 %v871
    %3209 = vmatprep.subr.mxu0 %v876
    %3210 = vmatpush1.msra.mxu0 %v875
    %3211 = vmatprep.subr.mxu0 %v880
    %3212 = vmatpush1.msra.mxu0 %v879
    %3213 = vmatprep.subr.mxu0 %v884
    %3214 = vmatpush1.msra.mxu0 %v883
    %3215 = vmatprep.subr.mxu0 %v888
    %3216 = vmatpush1.msra.mxu0 %v887
    %3217 = vmatprep.subr.mxu0 %v892
    %3218 = vmatpush1.msra.mxu0 %v891
    %3219 = vmatprep.subr.mxu0 %v896
    %3220 = vmatpush1.msra.mxu0 %v895
    %3221 = vmatprep.subr.mxu0 %v900
    %3222 = vmatpush1.msra.mxu0 %v899
    %3223 = vmatprep.subr.mxu0 %v904
    %3224 = vmatpush1.msra.mxu0 %v903
    %3225 = vmatprep.subr.mxu0 %v908
    %3226 = vmatpush1.msra.mxu0 %v907
    %3227 = vmatprep.subr.mxu0 0.0
    %3228 = vmatpush1.msra.mxu0 0.0
    %3229 = vmatprep.subr.mxu0 0.0
    %3230 = vmatpush1.msra.mxu0 0.0
    %3231 = vmatprep.subr.mxu0 0.0
    %3232 = vmatpush1.msra.mxu0 0.0
    %3233 = vmatprep.subr.mxu0 0.0
    %3234 = vmatpush1.msra.mxu0 0.0
    %3235 = vmatprep.subr.mxu0 0.0
    %3236 = vmatpush1.msra.mxu0 0.0
    %3237 = vmatprep.subr.mxu0 0.0
    %3238 = vmatpush1.msra.mxu0 0.0
    %3239 = vmatprep.subr.mxu0 0.0
    %3240 = vmatpush1.msra.mxu0 0.0
    %3241 = vmatprep.subr.mxu0 0.0
    %3242 = vmatpush1.msra.mxu0 0.0
    %3243 = vmatprep.subr.mxu0 0.0
    %3244 = vmatpush1.msra.mxu0 0.0
    %3245 = vmatprep.subr.mxu0 0.0
    %3246 = vmatpush1.msra.mxu0 0.0
    %3247 = vmatprep.subr.mxu0 0.0
    %3248 = vmatpush1.msra.mxu0 0.0
    %3249 = vmatprep.subr.mxu0 0.0
    %3250 = vmatpush1.msra.mxu0 0.0
    %3251 = vmatprep.subr.mxu0 0.0
    %3252 = vmatpush1.msra.mxu0 0.0
    %3253 = vmatprep.subr.mxu0 0.0
    %3254 = vmatpush1.msra.mxu0 0.0
    %3255 = vmatprep.subr.mxu0 0.0
    %3256 = vmatpush1.msra.mxu0 0.0
    %3257 = vmatprep.subr.mxu0 0.0
    %3258 = vmatpush1.msra.mxu0 0.0
    %3259 = vmatprep.mubr.f32.mxu0 0.0
    %3260 = vmatmul.mubr.f32.gmra.mrb[0].mxu0 %v2023
    %v3261 = vpop.f32.mrb[0].mxu0
    %v3262 = vadd.f32 0.0, %v3261
    %v3263 = vpop.f32.mrb[0].mxu0
    %v3264 = vadd.f32 0.0, %v3263
    %3265 = vdwg.mxu0
    %v3266 = vadd.f32 %v3049, %v3191
    %v3267 = vadd.f32 %v3051, %v3193
    %v3268 = vadd.f32 %v3120, %v3262
    %v3269 = vadd.f32 %v3122, %v3264
    %v3270 = vmul.f32 %v3266, 0.5
    %v3271 = vmul.f32 %v3267, 0.5
    %v3272 = vmul.f32 %v3268, 0.5
    %v3273 = vtanh.pop %v3270
    %v3274 = vtanh.pop %v3271
    %v3275 = vtanh.pop %v3272
    %v3276 = vadd.f32 %v3273, 1.0
    %v3277 = vadd.f32 %v3274, 1.0
    %v3278 = vadd.f32 %v3275, 1.0
    %v3279 = vmul.f32 %v3276, 0.5
    %v3280 = vmul.f32 %v3277, 0.5
    %v3281 = vmul.f32 %v3278, 0.5
    %v3282 = vtanh.pop %v3269
    %v3283 = vmul.f32 %v3280, %v2021
    %v3284 = vmul.f32 %v3279, %v3282
    %v3285 = vadd.f32 %v3283, %v3284
    %v3286 = vtanh.pop %v3285
    %v3287 = vmul.f32 %v3281, %v3286
    %v3289 = vrot.slane %v2205, 2
    %3291 = vmatprep.subr.mxu0 %v387
    %3292 = vmatpush1.msra.mxu0 %v386
    %3293 = vmatprep.subr.mxu0 %v391
    %3294 = vmatpush1.msra.mxu0 %v390
    %3295 = vmatprep.subr.mxu0 %v395
    %3296 = vmatpush1.msra.mxu0 %v394
    %3297 = vmatprep.subr.mxu0 %v399
    %3298 = vmatpush1.msra.mxu0 %v398
    %3299 = vmatprep.subr.mxu0 %v403
    %3300 = vmatpush1.msra.mxu0 %v402
    %3301 = vmatprep.subr.mxu0 %v407
    %3302 = vmatpush1.msra.mxu0 %v406
    %3303 = vmatprep.subr.mxu0 %v411
    %3304 = vmatpush1.msra.mxu0 %v410
    %3305 = vmatprep.subr.mxu0 %v415
    %3306 = vmatpush1.msra.mxu0 %v414
    %3307 = vmatprep.subr.mxu0 %v419
    %3308 = vmatpush1.msra.mxu0 %v418
    %3309 = vmatprep.subr.mxu0 %v423
    %3310 = vmatpush1.msra.mxu0 %v422
    %3311 = vmatprep.subr.mxu0 %v427
    %3312 = vmatpush1.msra.mxu0 %v426
    %3313 = vmatprep.subr.mxu0 %v431
    %3314 = vmatpush1.msra.mxu0 %v430
    %3315 = vmatprep.subr.mxu0 %v435
    %3316 = vmatpush1.msra.mxu0 %v434
    %3317 = vmatprep.subr.mxu0 %v439
    %3318 = vmatpush1.msra.mxu0 %v438
    %3319 = vmatprep.subr.mxu0 %v443
    %3320 = vmatpush1.msra.mxu0 %v442
    %3321 = vmatprep.subr.mxu0 %v447
    %3322 = vmatpush1.msra.mxu0 %v446
    %3323 = vmatprep.subr.mxu0 0.0
    %3324 = vmatpush1.msra.mxu0 0.0
    %3325 = vmatprep.subr.mxu0 0.0
    %3326 = vmatpush1.msra.mxu0 0.0
    %3327 = vmatprep.subr.mxu0 0.0
    %3328 = vmatpush1.msra.mxu0 0.0
    %3329 = vmatprep.subr.mxu0 0.0
    %3330 = vmatpush1.msra.mxu0 0.0
    %3331 = vmatprep.subr.mxu0 0.0
    %3332 = vmatpush1.msra.mxu0 0.0
    %3333 = vmatprep.subr.mxu0 0.0
    %3334 = vmatpush1.msra.mxu0 0.0
    %3335 = vmatprep.subr.mxu0 0.0
    %3336 = vmatpush1.msra.mxu0 0.0
    %3337 = vmatprep.subr.mxu0 0.0
    %3338 = vmatpush1.msra.mxu0 0.0
    %3339 = vmatprep.subr.mxu0 0.0
    %3340 = vmatpush1.msra.mxu0 0.0
    %3341 = vmatprep.subr.mxu0 0.0
    %3342 = vmatpush1.msra.mxu0 0.0
    %3343 = vmatprep.subr.mxu0 0.0
    %3344 = vmatpush1.msra.mxu0 0.0
    %3345 = vmatprep.subr.mxu0 0.0
    %3346 = vmatpush1.msra.mxu0 0.0
    %3347 = vmatprep.subr.mxu0 0.0
    %3348 = vmatpush1.msra.mxu0 0.0
    %3349 = vmatprep.subr.mxu0 0.0
    %3350 = vmatpush1.msra.mxu0 0.0
    %3351 = vmatprep.subr.mxu0 0.0
    %3352 = vmatpush1.msra.mxu0 0.0
    %3353 = vmatprep.subr.mxu0 0.0
    %3354 = vmatpush1.msra.mxu0 0.0
    %3355 = vmatprep.mubr.f32.mxu0 0.0
    %3356 = vmatmul.mubr.f32.gmra.mrb[0].mxu0 %v3289
    %v3357 = vpop.f32.mrb[0].mxu0
    %v3358 = vadd.f32 0.0, %v3357
    %v3359 = vpop.f32.mrb[0].mxu0
    %v3360 = vadd.f32 0.0, %v3359
    %3361 = vdwg.mxu0
    %3362 = vmatprep.subr.mxu0 %v389
    %3363 = vmatpush1.msra.mxu0 %v388
    %3364 = vmatprep.subr.mxu0 %v393
    %3365 = vmatpush1.msra.mxu0 %v392
    %3366 = vmatprep.subr.mxu0 %v397
    %3367 = vmatpush1.msra.mxu0 %v396
    %3368 = vmatprep.subr.mxu0 %v401
    %3369 = vmatpush1.msra.mxu0 %v400
    %3370 = vmatprep.subr.mxu0 %v405
    %3371 = vmatpush1.msra.mxu0 %v404
    %3372 = vmatprep.subr.mxu0 %v409
    %3373 = vmatpush1.msra.mxu0 %v408
    %3374 = vmatprep.subr.mxu0 %v413
    %3375 = vmatpush1.msra.mxu0 %v412
    %3376 = vmatprep.subr.mxu0 %v417
    %3377 = vmatpush1.msra.mxu0 %v416
    %3378 = vmatprep.subr.mxu0 %v421
    %3379 = vmatpush1.msra.mxu0 %v420
    %3380 = vmatprep.subr.mxu0 %v425
    %3381 = vmatpush1.msra.mxu0 %v424
    %3382 = vmatprep.subr.mxu0 %v429
    %3383 = vmatpush1.msra.mxu0 %v428
    %3384 = vmatprep.subr.mxu0 %v433
    %3385 = vmatpush1.msra.mxu0 %v432
    %3386 = vmatprep.subr.mxu0 %v437
    %3387 = vmatpush1.msra.mxu0 %v436
    %3388 = vmatprep.subr.mxu0 %v441
    %3389 = vmatpush1.msra.mxu0 %v440
    %3390 = vmatprep.subr.mxu0 %v445
    %3391 = vmatpush1.msra.mxu0 %v444
    %3392 = vmatprep.subr.mxu0 %v449
    %3393 = vmatpush1.msra.mxu0 %v448
    %3394 = vmatprep.subr.mxu0 0.0
    %3395 = vmatpush1.msra.mxu0 0.0
    %3396 = vmatprep.subr.mxu0 0.0
    %3397 = vmatpush1.msra.mxu0 0.0
    %3398 = vmatprep.subr.mxu0 0.0
    %3399 = vmatpush1.msra.mxu0 0.0
    %3400 = vmatprep.subr.mxu0 0.0
    %3401 = vmatpush1.msra.mxu0 0.0
    %3402 = vmatprep.subr.mxu0 0.0
    %3403 = vmatpush1.msra.mxu0 0.0
    %3404 = vmatprep.subr.mxu0 0.0
    %3405 = vmatpush1.msra.mxu0 0.0
    %3406 = vmatprep.subr.mxu0 0.0
    %3407 = vmatpush1.msra.mxu0 0.0
    %3408 = vmatprep.subr.mxu0 0.0
    %3409 = vmatpush1.msra.mxu0 0.0
    %3410 = vmatprep.subr.mxu0 0.0
    %3411 = vmatpush1.msra.mxu0 0.0
    %3412 = vmatprep.subr.mxu0 0.0
    %3413 = vmatpush1.msra.mxu0 0.0
    %3414 = vmatprep.subr.mxu0 0.0
    %3415 = vmatpush1.msra.mxu0 0.0
    %3416 = vmatprep.subr.mxu0 0.0
    %3417 = vmatpush1.msra.mxu0 0.0
    %3418 = vmatprep.subr.mxu0 0.0
    %3419 = vmatpush1.msra.mxu0 0.0
    %3420 = vmatprep.subr.mxu0 0.0
    %3421 = vmatpush1.msra.mxu0 0.0
    %3422 = vmatprep.subr.mxu0 0.0
    %3423 = vmatpush1.msra.mxu0 0.0
    %3424 = vmatprep.subr.mxu0 0.0
    %3425 = vmatpush1.msra.mxu0 0.0
    %3426 = vmatprep.mubr.f32.mxu0 0.0
    %3427 = vmatmul.mubr.f32.gmra.mrb[0].mxu0 %v3289
    %v3428 = vpop.f32.mrb[0].mxu0
    %v3429 = vadd.f32 0.0, %v3428
    %v3430 = vpop.f32.mrb[0].mxu0
    %v3431 = vadd.f32 0.0, %v3430
    %3432 = vdwg.mxu0
    %v3437 = vrot.slane %v3358, 5
    %v3438 = vrot.slane %v3360, 5
    %v3439 = vrot.slane %v3429, 5
    %v3440 = vrot.slane %v3431, 5
    %v3445 = vadd.f32 %v311, %v3437
    %v3446 = vadd.f32 %v313, %v3438
    %v3447 = vadd.f32 %v382, %v3439
    %v3448 = vadd.f32 %v384, %v3440
    %v3449 = vmul.f32 %v3445, 0.5
    %v3450 = vmul.f32 %v3446, 0.5
    %v3451 = vmul.f32 %v3447, 0.5
    %v3452 = vtanh.pop %v3449
    %v3453 = vtanh.pop %v3450
    %v3454 = vtanh.pop %v3451
    %v3455 = vadd.f32 %v3452, 1.0
    %v3456 = vadd.f32 %v3453, 1.0
    %v3457 = vadd.f32 %v3454, 1.0
    %v3458 = vmul.f32 %v3455, 0.5
    %v3459 = vmul.f32 %v3456, 0.5
    %v3460 = vmul.f32 %v3457, 0.5
    %v3461 = vtanh.pop %v3448
    %v3463 = vrot.slane %v2203, 7
    %v3465 = vmul.f32 %v3459, %v3463
    %v3466 = vmul.f32 %v3458, %v3461
    %v3467 = vadd.f32 %v3465, %v3466
    %v3468 = vtanh.pop %v3467
    %v3469 = vmul.f32 %v3460, %v3468
    %v3470 = vmul.f32 %v2974, 0.5
    %v3471 = vtanh.pop %v3470
    %v3472 = vadd.f32 %v3471, 1.0
    %v3473 = vmul.f32 %v3472, 0.5
    %3474 = vmatprep.subr.mxu0 %v2211
    %3475 = vmatpush1.msra.mxu0 %v2210
    %3476 = vmatprep.subr.mxu0 %v2215
    %3477 = vmatpush1.msra.mxu0 %v2214
    %3478 = vmatprep.subr.mxu0 %v2219
    %3479 = vmatpush1.msra.mxu0 %v2218
    %3480 = vmatprep.subr.mxu0 %v2223
    %3481 = vmatpush1.msra.mxu0 %v2222
    %3482 = vmatprep.subr.mxu0 %v2227
    %3483 = vmatpush1.msra.mxu0 %v2226
    %3484 = vmatprep.subr.mxu0 %v2231
    %3485 = vmatpush1.msra.mxu0 %v2230
    %3486 = vmatprep.subr.mxu0 %v2235
    %3487 = vmatpush1.msra.mxu0 %v2234
    %3488 = vmatprep.subr.mxu0 %v2239
    %3489 = vmatpush1.msra.mxu0 %v2238
    %3490 = vmatprep.subr.mxu0 %v2243
    %3491 = vmatpush1.msra.mxu0 %v2242
    %3492 = vmatprep.subr.mxu0 %v2247
    %3493 = vmatpush1.msra.mxu0 %v2246
    %3494 = vmatprep.subr.mxu0 %v2251
    %3495 = vmatpush1.msra.mxu0 %v2250
    %3496 = vmatprep.subr.mxu0 %v2255
    %3497 = vmatpush1.msra.mxu0 %v2254
    %3498 = vmatprep.subr.mxu0 %v2259
    %3499 = vmatpush1.msra.mxu0 %v2258
    %3500 = vmatprep.subr.mxu0 %v2263
    %3501 = vmatpush1.msra.mxu0 %v2262
    %3502 = vmatprep.subr.mxu0 %v2267
    %3503 = vmatpush1.msra.mxu0 %v2266
    %3504 = vmatprep.subr.mxu0 %v2271
    %3505 = vmatpush1.msra.mxu0 %v2270
    %3506 = vmatprep.subr.mxu0 0.0
    %3507 = vmatpush1.msra.mxu0 0.0
    %3508 = vmatprep.subr.mxu0 0.0
    %3509 = vmatpush1.msra.mxu0 0.0
    %3510 = vmatprep.subr.mxu0 0.0
    %3511 = vmatpush1.msra.mxu0 0.0
    %3512 = vmatprep.subr.mxu0 0.0
    %3513 = vmatpush1.msra.mxu0 0.0
    %3514 = vmatprep.subr.mxu0 0.0
    %3515 = vmatpush1.msra.mxu0 0.0
    %3516 = vmatprep.subr.mxu0 0.0
    %3517 = vmatpush1.msra.mxu0 0.0
    %3518 = vmatprep.subr.mxu0 0.0
    %3519 = vmatpush1.msra.mxu0 0.0
    %3520 = vmatprep.subr.mxu0 0.0
    %3521 = vmatpush1.msra.mxu0 0.0
    %3522 = vmatprep.subr.mxu0 0.0
    %3523 = vmatpush1.msra.mxu0 0.0
    %3524 = vmatprep.subr.mxu0 0.0
    %3525 = vmatpush1.msra.mxu0 0.0
    %3526 = vmatprep.subr.mxu0 0.0
    %3527 = vmatpush1.msra.mxu0 0.0
    %3528 = vmatprep.subr.mxu0 0.0
    %3529 = vmatpush1.msra.mxu0 0.0
    %3530 = vmatprep.subr.mxu0 0.0
    %3531 = vmatpush1.msra.mxu0 0.0
    %3532 = vmatprep.subr.mxu0 0.0
    %3533 = vmatpush1.msra.mxu0 0.0
    %3534 = vmatprep.subr.mxu0 0.0
    %3535 = vmatpush1.msra.mxu0 0.0
    %3536 = vmatprep.subr.mxu0 0.0
    %3537 = vmatpush1.msra.mxu0 0.0
    %3538 = vmatprep.mubr.f32.mxu0 0.0
    %3539 = vmatmul.mubr.f32.gmra.mrb[0].mxu0 %v3473
    %v3540 = vpop.f32.mrb[0].mxu0
    %v3541 = vadd.f32 %v2278, %v3540
    %v3542 = vpop.f32.mrb[0].mxu0
    %v3543 = vadd.f32 %v2282, %v3542
    %3544 = vdwg.mxu0
    %3545 = vmatprep.subr.mxu0 %v2213
    %3546 = vmatpush1.msra.mxu0 %v2212
    %3547 = vmatprep.subr.mxu0 %v2217
    %3548 = vmatpush1.msra.mxu0 %v2216
    %3549 = vmatprep.subr.mxu0 %v2221
    %3550 = vmatpush1.msra.mxu0 %v2220
    %3551 = vmatprep.subr.mxu0 %v2225
    %3552 = vmatpush1.msra.mxu0 %v2224
    %3553 = vmatprep.subr.mxu0 %v2229
    %3554 = vmatpush1.msra.mxu0 %v2228
    %3555 = vmatprep.subr.mxu0 %v2233
    %3556 = vmatpush1.msra.mxu0 %v2232
    %3557 = vmatprep.subr.mxu0 %v2237
    %3558 = vmatpush1.msra.mxu0 %v2236
    %3559 = vmatprep.subr.mxu0 %v2241
    %3560 = vmatpush1.msra.mxu0 %v2240
    %3561 = vmatprep.subr.mxu0 %v2245
    %3562 = vmatpush1.msra.mxu0 %v2244
    %3563 = vmatprep.subr.mxu0 %v2249
    %3564 = vmatpush1.msra.mxu0 %v2248
    %3565 = vmatprep.subr.mxu0 %v2253
    %3566 = vmatpush1.msra.mxu0 %v2252
    %3567 = vmatprep.subr.mxu0 %v2257
    %3568 = vmatpush1.msra.mxu0 %v2256
    %3569 = vmatprep.subr.mxu0 %v2261
    %3570 = vmatpush1.msra.mxu0 %v2260
    %3571 = vmatprep.subr.mxu0 %v2265
    %3572 = vmatpush1.msra.mxu0 %v2264
    %3573 = vmatprep.subr.mxu0 %v2269
    %3574 = vmatpush1.msra.mxu0 %v2268
    %3575 = vmatprep.subr.mxu0 %v2273
    %3576 = vmatpush1.msra.mxu0 %v2272
    %3577 = vmatprep.subr.mxu0 0.0
    %3578 = vmatpush1.msra.mxu0 0.0
    %3579 = vmatprep.subr.mxu0 0.0
    %3580 = vmatpush1.msra.mxu0 0.0
    %3581 = vmatprep.subr.mxu0 0.0
    %3582 = vmatpush1.msra.mxu0 0.0
    %3583 = vmatprep.subr.mxu0 0.0
    %3584 = vmatpush1.msra.mxu0 0.0
    %3585 = vmatprep.subr.mxu0 0.0
    %3586 = vmatpush1.msra.mxu0 0.0
    %3587 = vmatprep.subr.mxu0 0.0
    %3588 = vmatpush1.msra.mxu0 0.0
    %3589 = vmatprep.subr.mxu0 0.0
    %3590 = vmatpush1.msra.mxu0 0.0
    %3591 = vmatprep.subr.mxu0 0.0
    %3592 = vmatpush1.msra.mxu0 0.0
    %3593 = vmatprep.subr.mxu0 0.0
    %3594 = vmatpush1.msra.mxu0 0.0
    %3595 = vmatprep.subr.mxu0 0.0
    %3596 = vmatpush1.msra.mxu0 0.0
    %3597 = vmatprep.subr.mxu0 0.0
    %3598 = vmatpush1.msra.mxu0 0.0
    %3599 = vmatprep.subr.mxu0 0.0
    %3600 = vmatpush1.msra.mxu0 0.0
    %3601 = vmatprep.subr.mxu0 0.0
    %3602 = vmatpush1.msra.mxu0 0.0
    %3603 = vmatprep.subr.mxu0 0.0
    %3604 = vmatpush1.msra.mxu0 0.0
    %3605 = vmatprep.subr.mxu0 0.0
    %3606 = vmatpush1.msra.mxu0 0.0
    %3607 = vmatprep.subr.mxu0 0.0
    %3608 = vmatpush1.msra.mxu0 0.0
    %3609 = vmatprep.mubr.f32.mxu0 0.0
    %3610 = vmatmul.mubr.f32.gmra.mrb[0].mxu0 %v3473
    %v3611 = vpop.f32.mrb[0].mxu0
    %v3612 = vadd.f32 %v2286, %v3611
    %v3613 = vpop.f32.mrb[0].mxu0
    %v3614 = vadd.f32 %v2290, %v3613
    %3615 = vdwg.mxu0
    %3616 = vmatprep.subr.mxu0 %v2438
    %3617 = vmatpush1.msra.mxu0 %v2437
    %3618 = vmatprep.subr.mxu0 %v2442
    %3619 = vmatpush1.msra.mxu0 %v2441
    %3620 = vmatprep.subr.mxu0 %v2446
    %3621 = vmatpush1.msra.mxu0 %v2445
    %3622 = vmatprep.subr.mxu0 %v2450
    %3623 = vmatpush1.msra.mxu0 %v2449
    %3624 = vmatprep.subr.mxu0 %v2454
    %3625 = vmatpush1.msra.mxu0 %v2453
    %3626 = vmatprep.subr.mxu0 %v2458
    %3627 = vmatpush1.msra.mxu0 %v2457
    %3628 = vmatprep.subr.mxu0 %v2462
    %3629 = vmatpush1.msra.mxu0 %v2461
    %3630 = vmatprep.subr.mxu0 %v2466
    %3631 = vmatpush1.msra.mxu0 %v2465
    %3632 = vmatprep.subr.mxu0 %v2470
    %3633 = vmatpush1.msra.mxu0 %v2469
    %3634 = vmatprep.subr.mxu0 %v2474
    %3635 = vmatpush1.msra.mxu0 %v2473
    %3636 = vmatprep.subr.mxu0 %v2478
    %3637 = vmatpush1.msra.mxu0 %v2477
    %3638 = vmatprep.subr.mxu0 %v2482
    %3639 = vmatpush1.msra.mxu0 %v2481
    %3640 = vmatprep.subr.mxu0 %v2486
    %3641 = vmatpush1.msra.mxu0 %v2485
    %3642 = vmatprep.subr.mxu0 %v2490
    %3643 = vmatpush1.msra.mxu0 %v2489
    %3644 = vmatprep.subr.mxu0 %v2494
    %3645 = vmatpush1.msra.mxu0 %v2493
    %3646 = vmatprep.subr.mxu0 %v2498
    %3647 = vmatpush1.msra.mxu0 %v2497
    %3648 = vmatprep.subr.mxu0 0.0
    %3649 = vmatpush1.msra.mxu0 0.0
    %3650 = vmatprep.subr.mxu0 0.0
    %3651 = vmatpush1.msra.mxu0 0.0
    %3652 = vmatprep.subr.mxu0 0.0
    %3653 = vmatpush1.msra.mxu0 0.0
    %3654 = vmatprep.subr.mxu0 0.0
    %3655 = vmatpush1.msra.mxu0 0.0
    %3656 = vmatprep.subr.mxu0 0.0
    %3657 = vmatpush1.msra.mxu0 0.0
    %3658 = vmatprep.subr.mxu0 0.0
    %3659 = vmatpush1.msra.mxu0 0.0
    %3660 = vmatprep.subr.mxu0 0.0
    %3661 = vmatpush1.msra.mxu0 0.0
    %3662 = vmatprep.subr.mxu0 0.0
    %3663 = vmatpush1.msra.mxu0 0.0
    %3664 = vmatprep.subr.mxu0 0.0
    %3665 = vmatpush1.msra.mxu0 0.0
    %3666 = vmatprep.subr.mxu0 0.0
    %3667 = vmatpush1.msra.mxu0 0.0
    %3668 = vmatprep.subr.mxu0 0.0
    %3669 = vmatpush1.msra.mxu0 0.0
    %3670 = vmatprep.subr.mxu0 0.0
    %3671 = vmatpush1.msra.mxu0 0.0
    %3672 = vmatprep.subr.mxu0 0.0
    %3673 = vmatpush1.msra.mxu0 0.0
    %3674 = vmatprep.subr.mxu0 0.0
    %3675 = vmatpush1.msra.mxu0 0.0
    %3676 = vmatprep.subr.mxu0 0.0
    %3677 = vmatpush1.msra.mxu0 0.0
    %3678 = vmatprep.subr.mxu0 0.0
    %3679 = vmatpush1.msra.mxu0 0.0
    %3680 = vmatprep.mubr.f32.mxu0 0.0
    %3681 = vmatmul.mubr.f32.gmra.mrb[0].mxu0 %v2664
    %v3682 = vpop.f32.mrb[0].mxu0
    %v3683 = vadd.f32 0.0, %v3682
    %v3684 = vpop.f32.mrb[0].mxu0
    %v3685 = vadd.f32 0.0, %v3684
    %3686 = vdwg.mxu0
    %3687 = vmatprep.subr.mxu0 %v2440
    %3688 = vmatpush1.msra.mxu0 %v2439
    %3689 = vmatprep.subr.mxu0 %v2444
    %3690 = vmatpush1.msra.mxu0 %v2443
    %3691 = vmatprep.subr.mxu0 %v2448
    %3692 = vmatpush1.msra.mxu0 %v2447
    %3693 = vmatprep.subr.mxu0 %v2452
    %3694 = vmatpush1.msra.mxu0 %v2451
    %3695 = vmatprep.subr.mxu0 %v2456
    %3696 = vmatpush1.msra.mxu0 %v2455
    %3697 = vmatprep.subr.mxu0 %v2460
    %3698 = vmatpush1.msra.mxu0 %v2459
    %3699 = vmatprep.subr.mxu0 %v2464
    %3700 = vmatpush1.msra.mxu0 %v2463
    %3701 = vmatprep.subr.mxu0 %v2468
    %3702 = vmatpush1.msra.mxu0 %v2467
    %3703 = vmatprep.subr.mxu0 %v2472
    %3704 = vmatpush1.msra.mxu0 %v2471
    %3705 = vmatprep.subr.mxu0 %v2476
    %3706 = vmatpush1.msra.mxu0 %v2475
    %3707 = vmatprep.subr.mxu0 %v2480
    %3708 = vmatpush1.msra.mxu0 %v2479
    %3709 = vmatprep.subr.mxu0 %v2484
    %3710 = vmatpush1.msra.mxu0 %v2483
    %3711 = vmatprep.subr.mxu0 %v2488
    %3712 = vmatpush1.msra.mxu0 %v2487
    %3713 = vmatprep.subr.mxu0 %v2492
    %3714 = vmatpush1.msra.mxu0 %v2491
    %3715 = vmatprep.subr.mxu0 %v2496
    %3716 = vmatpush1.msra.mxu0 %v2495
    %3717 = vmatprep.subr.mxu0 %v2500
    %3718 = vmatpush1.msra.mxu0 %v2499
    %3719 = vmatprep.subr.mxu0 0.0
    %3720 = vmatpush1.msra.mxu0 0.0
    %3721 = vmatprep.subr.mxu0 0.0
    %3722 = vmatpush1.msra.mxu0 0.0
    %3723 = vmatprep.subr.mxu0 0.0
    %3724 = vmatpush1.msra.mxu0 0.0
    %3725 = vmatprep.subr.mxu0 0.0
    %3726 = vmatpush1.msra.mxu0 0.0
    %3727 = vmatprep.subr.mxu0 0.0
    %3728 = vmatpush1.msra.mxu0 0.0
    %3729 = vmatprep.subr.mxu0 0.0
    %3730 = vmatpush1.msra.mxu0 0.0
    %3731 = vmatprep.subr.mxu0 0.0
    %3732 = vmatpush1.msra.mxu0 0.0
    %3733 = vmatprep.subr.mxu0 0.0
    %3734 = vmatpush1.msra.mxu0 0.0
    %3735 = vmatprep.subr.mxu0 0.0
    %3736 = vmatpush1.msra.mxu0 0.0
    %3737 = vmatprep.subr.mxu0 0.0
    %3738 = vmatpush1.msra.mxu0 0.0
    %3739 = vmatprep.subr.mxu0 0.0
    %3740 = vmatpush1.msra.mxu0 0.0
    %3741 = vmatprep.subr.mxu0 0.0
    %3742 = vmatpush1.msra.mxu0 0.0
    %3743 = vmatprep.subr.mxu0 0.0
    %3744 = vmatpush1.msra.mxu0 0.0
    %3745 = vmatprep.subr.mxu0 0.0
    %3746 = vmatpush1.msra.mxu0 0.0
    %3747 = vmatprep.subr.mxu0 0.0
    %3748 = vmatpush1.msra.mxu0 0.0
    %3749 = vmatprep.subr.mxu0 0.0
    %3750 = vmatpush1.msra.mxu0 0.0
    %3751 = vmatprep.mubr.f32.mxu0 0.0
    %3752 = vmatmul.mubr.f32.gmra.mrb[0].mxu0 %v2664
    %v3753 = vpop.f32.mrb[0].mxu0
    %v3754 = vadd.f32 0.0, %v3753
    %v3755 = vpop.f32.mrb[0].mxu0
    %v3756 = vadd.f32 0.0, %v3755
    %3757 = vdwg.mxu0
    %v3758 = vadd.f32 %v3541, %v3683
    %v3759 = vadd.f32 %v3543, %v3685
    %v3760 = vadd.f32 %v3612, %v3754
    %v3761 = vadd.f32 %v3614, %v3756
    %v3762 = vmul.f32 %v3758, 0.5
    %v3763 = vmul.f32 %v3759, 0.5
    %v3764 = vmul.f32 %v3760, 0.5
    %v3765 = vtanh.pop %v3762
    %v3766 = vtanh.pop %v3763
    %v3767 = vtanh.pop %v3764
    %v3768 = vadd.f32 %v3765, 1.0
    %v3769 = vadd.f32 %v3766, 1.0
    %v3770 = vadd.f32 %v3767, 1.0
    %v3771 = vmul.f32 %v3768, 0.5
    %v3772 = vmul.f32 %v3769, 0.5
    %v3773 = vmul.f32 %v3770, 0.5
    %v3774 = vtanh.pop %v3761
    %v3775 = vmul.f32 %v3772, %v2662
    %v3776 = vmul.f32 %v3771, %v3774
    %v3777 = vadd.f32 %v3775, %v3776
    %v3778 = vtanh.pop %v3777
    %v3779 = vmul.f32 %v3773, %v3778
    %v3780 = vmul.f32 %v3287, 0.5
    %v3781 = vtanh.pop %v3780
    %v3782 = vadd.f32 %v3781, 1.0
    %v3783 = vmul.f32 %v3782, 0.5
    %3784 = vmatprep.subr.mxu0 %v1257
    %3785 = vmatpush1.msra.mxu0 %v1256
    %3786 = vmatprep.subr.mxu0 %v1261
    %3787 = vmatpush1.msra.mxu0 %v1260
    %3788 = vmatprep.subr.mxu0 %v1265
    %3789 = vmatpush1.msra.mxu0 %v1264
    %3790 = vmatprep.subr.mxu0 %v1269
    %3791 = vmatpush1.msra.mxu0 %v1268
    %3792 = vmatprep.subr.mxu0 %v1273
    %3793 = vmatpush1.msra.mxu0 %v1272
    %3794 = vmatprep.subr.mxu0 %v1277
    %3795 = vmatpush1.msra.mxu0 %v1276
    %3796 = vmatprep.subr.mxu0 %v1281
    %3797 = vmatpush1.msra.mxu0 %v1280
    %3798 = vmatprep.subr.mxu0 %v1285
    %3799 = vmatpush1.msra.mxu0 %v1284
    %3800 = vmatprep.subr.mxu0 %v1289
    %3801 = vmatpush1.msra.mxu0 %v1288
    %3802 = vmatprep.subr.mxu0 %v1293
    %3803 = vmatpush1.msra.mxu0 %v1292
    %3804 = vmatprep.subr.mxu0 %v1297
    %3805 = vmatpush1.msra.mxu0 %v1296
    %3806 = vmatprep.subr.mxu0 %v1301
    %3807 = vmatpush1.msra.mxu0 %v1300
    %3808 = vmatprep.subr.mxu0 %v1305
    %3809 = vmatpush1.msra.mxu0 %v1304
    %3810 = vmatprep.subr.mxu0 %v1309
    %3811 = vmatpush1.msra.mxu0 %v1308
    %3812 = vmatprep.subr.mxu0 %v1313
    %3813 = vmatpush1.msra.mxu0 %v1312
    %3814 = vmatprep.subr.mxu0 %v1317
    %3815 = vmatpush1.msra.mxu0 %v1316
    %3816 = vmatprep.subr.mxu0 0.0
    %3817 = vmatpush1.msra.mxu0 0.0
    %3818 = vmatprep.subr.mxu0 0.0
    %3819 = vmatpush1.msra.mxu0 0.0
    %3820 = vmatprep.subr.mxu0 0.0
    %3821 = vmatpush1.msra.mxu0 0.0
    %3822 = vmatprep.subr.mxu0 0.0
    %3823 = vmatpush1.msra.mxu0 0.0
    %3824 = vmatprep.subr.mxu0 0.0
    %3825 = vmatpush1.msra.mxu0 0.0
    %3826 = vmatprep.subr.mxu0 0.0
    %3827 = vmatpush1.msra.mxu0 0.0
    %3828 = vmatprep.subr.mxu0 0.0
    %3829 = vmatpush1.msra.mxu0 0.0
    %3830 = vmatprep.subr.mxu0 0.0
    %3831 = vmatpush1.msra.mxu0 0.0
    %3832 = vmatprep.subr.mxu0 0.0
    %3833 = vmatpush1.msra.mxu0 0.0
    %3834 = vmatprep.subr.mxu0 0.0
    %3835 = vmatpush1.msra.mxu0 0.0
    %3836 = vmatprep.subr.mxu0 0.0
    %3837 = vmatpush1.msra.mxu0 0.0
    %3838 = vmatprep.subr.mxu0 0.0
    %3839 = vmatpush1.msra.mxu0 0.0
    %3840 = vmatprep.subr.mxu0 0.0
    %3841 = vmatpush1.msra.mxu0 0.0
    %3842 = vmatprep.subr.mxu0 0.0
    %3843 = vmatpush1.msra.mxu0 0.0
    %3844 = vmatprep.subr.mxu0 0.0
    %3845 = vmatpush1.msra.mxu0 0.0
    %3846 = vmatprep.subr.mxu0 0.0
    %3847 = vmatpush1.msra.mxu0 0.0
    %3848 = vmatprep.mubr.f32.mxu0 0.0
    %3849 = vmatmul.mubr.f32.gmra.mrb[0].mxu0 %v3783
    %v3850 = vpop.f32.mrb[0].mxu0
    %v3851 = vadd.f32 %v1324, %v3850
    %v3852 = vpop.f32.mrb[0].mxu0
    %v3853 = vadd.f32 %v1328, %v3852
    %3854 = vdwg.mxu0
    %3855 = vmatprep.subr.mxu0 %v1259
    %3856 = vmatpush1.msra.mxu0 %v1258
    %3857 = vmatprep.subr.mxu0 %v1263
    %3858 = vmatpush1.msra.mxu0 %v1262
    %3859 = vmatprep.subr.mxu0 %v1267
    %3860 = vmatpush1.msra.mxu0 %v1266
    %3861 = vmatprep.subr.mxu0 %v1271
    %3862 = vmatpush1.msra.mxu0 %v1270
    %3863 = vmatprep.subr.mxu0 %v1275
    %3864 = vmatpush1.msra.mxu0 %v1274
    %3865 = vmatprep.subr.mxu0 %v1279
    %3866 = vmatpush1.msra.mxu0 %v1278
    %3867 = vmatprep.subr.mxu0 %v1283
    %3868 = vmatpush1.msra.mxu0 %v1282
    %3869 = vmatprep.subr.mxu0 %v1287
    %3870 = vmatpush1.msra.mxu0 %v1286
    %3871 = vmatprep.subr.mxu0 %v1291
    %3872 = vmatpush1.msra.mxu0 %v1290
    %3873 = vmatprep.subr.mxu0 %v1295
    %3874 = vmatpush1.msra.mxu0 %v1294
    %3875 = vmatprep.subr.mxu0 %v1299
    %3876 = vmatpush1.msra.mxu0 %v1298
    %3877 = vmatprep.subr.mxu0 %v1303
    %3878 = vmatpush1.msra.mxu0 %v1302
    %3879 = vmatprep.subr.mxu0 %v1307
    %3880 = vmatpush1.msra.mxu0 %v1306
    %3881 = vmatprep.subr.mxu0 %v1311
    %3882 = vmatpush1.msra.mxu0 %v1310
    %3883 = vmatprep.subr.mxu0 %v1315
    %3884 = vmatpush1.msra.mxu0 %v1314
    %3885 = vmatprep.subr.mxu0 %v1319
    %3886 = vmatpush1.msra.mxu0 %v1318
    %3887 = vmatprep.subr.mxu0 0.0
    %3888 = vmatpush1.msra.mxu0 0.0
    %3889 = vmatprep.subr.mxu0 0.0
    %3890 = vmatpush1.msra.mxu0 0.0
    %3891 = vmatprep.subr.mxu0 0.0
    %3892 = vmatpush1.msra.mxu0 0.0
    %3893 = vmatprep.subr.mxu0 0.0
    %3894 = vmatpush1.msra.mxu0 0.0
    %3895 = vmatprep.subr.mxu0 0.0
    %3896 = vmatpush1.msra.mxu0 0.0
    %3897 = vmatprep.subr.mxu0 0.0
    %3898 = vmatpush1.msra.mxu0 0.0
    %3899 = vmatprep.subr.mxu0 0.0
    %3900 = vmatpush1.msra.mxu0 0.0
    %3901 = vmatprep.subr.mxu0 0.0
    %3902 = vmatpush1.msra.mxu0 0.0
    %3903 = vmatprep.subr.mxu0 0.0
    %3904 = vmatpush1.msra.mxu0 0.0
    %3905 = vmatprep.subr.mxu0 0.0
    %3906 = vmatpush1.msra.mxu0 0.0
    %3907 = vmatprep.subr.mxu0 0.0
    %3908 = vmatpush1.msra.mxu0 0.0
    %3909 = vmatprep.subr.mxu0 0.0
    %3910 = vmatpush1.msra.mxu0 0.0
    %3911 = vmatprep.subr.mxu0 0.0
    %3912 = vmatpush1.msra.mxu0 0.0
    %3913 = vmatprep.subr.mxu0 0.0
    %3914 = vmatpush1.msra.mxu0 0.0
    %3915 = vmatprep.subr.mxu0 0.0
    %3916 = vmatpush1.msra.mxu0 0.0
    %3917 = vmatprep.subr.mxu0 0.0
    %3918 = vmatpush1.msra.mxu0 0.0
    %3919 = vmatprep.mubr.f32.mxu0 0.0
    %3920 = vmatmul.mubr.f32.gmra.mrb[0].mxu0 %v3783
    %v3921 = vpop.f32.mrb[0].mxu0
    %v3922 = vadd.f32 %v1332, %v3921
    %v3923 = vpop.f32.mrb[0].mxu0
    %v3924 = vadd.f32 %v1336, %v3923
    %3925 = vdwg.mxu0
    %3926 = vmatprep.subr.mxu0 %v1484
    %3927 = vmatpush1.msra.mxu0 %v1483
    %3928 = vmatprep.subr.mxu0 %v1488
    %3929 = vmatpush1.msra.mxu0 %v1487
    %3930 = vmatprep.subr.mxu0 %v1492
    %3931 = vmatpush1.msra.mxu0 %v1491
    %3932 = vmatprep.subr.mxu0 %v1496
    %3933 = vmatpush1.msra.mxu0 %v1495
    %3934 = vmatprep.subr.mxu0 %v1500
    %3935 = vmatpush1.msra.mxu0 %v1499
    %3936 = vmatprep.subr.mxu0 %v1504
    %3937 = vmatpush1.msra.mxu0 %v1503
    %3938 = vmatprep.subr.mxu0 %v1508
    %3939 = vmatpush1.msra.mxu0 %v1507
    %3940 = vmatprep.subr.mxu0 %v1512
    %3941 = vmatpush1.msra.mxu0 %v1511
    %3942 = vmatprep.subr.mxu0 %v1516
    %3943 = vmatpush1.msra.mxu0 %v1515
    %3944 = vmatprep.subr.mxu0 %v1520
    %3945 = vmatpush1.msra.mxu0 %v1519
    %3946 = vmatprep.subr.mxu0 %v1524
    %3947 = vmatpush1.msra.mxu0 %v1523
    %3948 = vmatprep.subr.mxu0 %v1528
    %3949 = vmatpush1.msra.mxu0 %v1527
    %3950 = vmatprep.subr.mxu0 %v1532
    %3951 = vmatpush1.msra.mxu0 %v1531
    %3952 = vmatprep.subr.mxu0 %v1536
    %3953 = vmatpush1.msra.mxu0 %v1535
    %3954 = vmatprep.subr.mxu0 %v1540
    %3955 = vmatpush1.msra.mxu0 %v1539
    %3956 = vmatprep.subr.mxu0 %v1544
    %3957 = vmatpush1.msra.mxu0 %v1543
    %3958 = vmatprep.subr.mxu0 0.0
    %3959 = vmatpush1.msra.mxu0 0.0
    %3960 = vmatprep.subr.mxu0 0.0
    %3961 = vmatpush1.msra.mxu0 0.0
    %3962 = vmatprep.subr.mxu0 0.0
    %3963 = vmatpush1.msra.mxu0 0.0
    %3964 = vmatprep.subr.mxu0 0.0
    %3965 = vmatpush1.msra.mxu0 0.0
    %3966 = vmatprep.subr.mxu0 0.0
    %3967 = vmatpush1.msra.mxu0 0.0
    %3968 = vmatprep.subr.mxu0 0.0
    %3969 = vmatpush1.msra.mxu0 0.0
    %3970 = vmatprep.subr.mxu0 0.0
    %3971 = vmatpush1.msra.mxu0 0.0
    %3972 = vmatprep.subr.mxu0 0.0
    %3973 = vmatpush1.msra.mxu0 0.0
    %3974 = vmatprep.subr.mxu0 0.0
    %3975 = vmatpush1.msra.mxu0 0.0
    %3976 = vmatprep.subr.mxu0 0.0
    %3977 = vmatpush1.msra.mxu0 0.0
    %3978 = vmatprep.subr.mxu0 0.0
    %3979 = vmatpush1.msra.mxu0 0.0
    %3980 = vmatprep.subr.mxu0 0.0
    %3981 = vmatpush1.msra.mxu0 0.0
    %3982 = vmatprep.subr.mxu0 0.0
    %3983 = vmatpush1.msra.mxu0 0.0
    %3984 = vmatprep.subr.mxu0 0.0
    %3985 = vmatpush1.msra.mxu0 0.0
    %3986 = vmatprep.subr.mxu0 0.0
    %3987 = vmatpush1.msra.mxu0 0.0
    %3988 = vmatprep.subr.mxu0 0.0
    %3989 = vmatpush1.msra.mxu0 0.0
    %3990 = vmatprep.mubr.f32.mxu0 0.0
    %3991 = vmatmul.mubr.f32.gmra.mrb[0].mxu0 %v2974
    %v3992 = vpop.f32.mrb[0].mxu0
    %v3993 = vadd.f32 0.0, %v3992
    %v3994 = vpop.f32.mrb[0].mxu0
    %v3995 = vadd.f32 0.0, %v3994
    %3996 = vdwg.mxu0
    %3997 = vmatprep.subr.mxu0 %v1486
    %3998 = vmatpush1.msra.mxu0 %v1485
    %3999 = vmatprep.subr.mxu0 %v1490
    %4000 = vmatpush1.msra.mxu0 %v1489
    %4001 = vmatprep.subr.mxu0 %v1494
    %4002 = vmatpush1.msra.mxu0 %v1493
    %4003 = vmatprep.subr.mxu0 %v1498
    %4004 = vmatpush1.msra.mxu0 %v1497
    %4005 = vmatprep.subr.mxu0 %v1502
    %4006 = vmatpush1.msra.mxu0 %v1501
    %4007 = vmatprep.subr.mxu0 %v1506
    %4008 = vmatpush1.msra.mxu0 %v1505
    %4009 = vmatprep.subr.mxu0 %v1510
    %4010 = vmatpush1.msra.mxu0 %v1509
    %4011 = vmatprep.subr.mxu0 %v1514
    %4012 = vmatpush1.msra.mxu0 %v1513
    %4013 = vmatprep.subr.mxu0 %v1518
    %4014 = vmatpush1.msra.mxu0 %v1517
    %4015 = vmatprep.subr.mxu0 %v1522
    %4016 = vmatpush1.msra.mxu0 %v1521
    %4017 = vmatprep.subr.mxu0 %v1526
    %4018 = vmatpush1.msra.mxu0 %v1525
    %4019 = vmatprep.subr.mxu0 %v1530
    %4020 = vmatpush1.msra.mxu0 %v1529
    %4021 = vmatprep.subr.mxu0 %v1534
    %4022 = vmatpush1.msra.mxu0 %v1533
    %4023 = vmatprep.subr.mxu0 %v1538
    %4024 = vmatpush1.msra.mxu0 %v1537
    %4025 = vmatprep.subr.mxu0 %v1542
    %4026 = vmatpush1.msra.mxu0 %v1541
    %4027 = vmatprep.subr.mxu0 %v1546
    %4028 = vmatpush1.msra.mxu0 %v1545
    %4029 = vmatprep.subr.mxu0 0.0
    %4030 = vmatpush1.msra.mxu0 0.0
    %4031 = vmatprep.subr.mxu0 0.0
    %4032 = vmatpush1.msra.mxu0 0.0
    %4033 = vmatprep.subr.mxu0 0.0
    %4034 = vmatpush1.msra.mxu0 0.0
    %4035 = vmatprep.subr.mxu0 0.0
    %4036 = vmatpush1.msra.mxu0 0.0
    %4037 = vmatprep.subr.mxu0 0.0
    %4038 = vmatpush1.msra.mxu0 0.0
    %4039 = vmatprep.subr.mxu0 0.0
    %4040 = vmatpush1.msra.mxu0 0.0
    %4041 = vmatprep.subr.mxu0 0.0
    %4042 = vmatpush1.msra.mxu0 0.0
    %4043 = vmatprep.subr.mxu0 0.0
    %4044 = vmatpush1.msra.mxu0 0.0
    %4045 = vmatprep.subr.mxu0 0.0
    %4046 = vmatpush1.msra.mxu0 0.0
    %4047 = vmatprep.subr.mxu0 0.0
    %4048 = vmatpush1.msra.mxu0 0.0
    %4049 = vmatprep.subr.mxu0 0.0
    %4050 = vmatpush1.msra.mxu0 0.0
    %4051 = vmatprep.subr.mxu0 0.0
    %4052 = vmatpush1.msra.mxu0 0.0
    %4053 = vmatprep.subr.mxu0 0.0
    %4054 = vmatpush1.msra.mxu0 0.0
    %4055 = vmatprep.subr.mxu0 0.0
    %4056 = vmatpush1.msra.mxu0 0.0
    %4057 = vmatprep.subr.mxu0 0.0
    %4058 = vmatpush1.msra.mxu0 0.0
    %4059 = vmatprep.subr.mxu0 0.0
    %4060 = vmatpush1.msra.mxu0 0.0
    %4061 = vmatprep.mubr.f32.mxu0 0.0
    %4062 = vmatmul.mubr.f32.gmra.mrb[0].mxu0 %v2974
    %v4063 = vpop.f32.mrb[0].mxu0
    %v4064 = vadd.f32 0.0, %v4063
    %v4065 = vpop.f32.mrb[0].mxu0
    %v4066 = vadd.f32 0.0, %v4065
    %4067 = vdwg.mxu0
    %v4068 = vadd.f32 %v3851, %v3993
    %v4069 = vadd.f32 %v3853, %v3995
    %v4070 = vadd.f32 %v3922, %v4064
    %v4071 = vadd.f32 %v3924, %v4066
    %v4072 = vmul.f32 %v4068, 0.5
    %v4073 = vmul.f32 %v4069, 0.5
    %v4074 = vmul.f32 %v4070, 0.5
    %v4075 = vtanh.pop %v4072
    %v4076 = vtanh.pop %v4073
    %v4077 = vtanh.pop %v4074
    %v4078 = vadd.f32 %v4075, 1.0
    %v4079 = vadd.f32 %v4076, 1.0
    %v4080 = vadd.f32 %v4077, 1.0
    %v4081 = vmul.f32 %v4078, 0.5
    %v4082 = vmul.f32 %v4079, 0.5
    %v4083 = vmul.f32 %v4080, 0.5
    %v4084 = vtanh.pop %v4071
    %v4085 = vmul.f32 %v4082, %v2972
    %v4086 = vmul.f32 %v4081, %v4084
    %v4087 = vadd.f32 %v4085, %v4086
    %v4088 = vtanh.pop %v4087
    %v4089 = vmul.f32 %v4083, %v4088
    %v4090 = vmul.f32 %v3469, 0.5
    %v4091 = vtanh.pop %v4090
    %v4092 = vadd.f32 %v4091, 1.0
    %v4093 = vmul.f32 %v4092, 0.5
    %v4095 = vrot.slane %v4093, 3
    %4097 = vmatprep.subr.mxu0 %v619
    %4098 = vmatpush1.msra.mxu0 %v618
    %4099 = vmatprep.subr.mxu0 %v623
    %4100 = vmatpush1.msra.mxu0 %v622
    %4101 = vmatprep.subr.mxu0 %v627
    %4102 = vmatpush1.msra.mxu0 %v626
    %4103 = vmatprep.subr.mxu0 %v631
    %4104 = vmatpush1.msra.mxu0 %v630
    %4105 = vmatprep.subr.mxu0 %v635
    %4106 = vmatpush1.msra.mxu0 %v634
    %4107 = vmatprep.subr.mxu0 %v639
    %4108 = vmatpush1.msra.mxu0 %v638
    %4109 = vmatprep.subr.mxu0 %v643
    %4110 = vmatpush1.msra.mxu0 %v642
    %4111 = vmatprep.subr.mxu0 %v647
    %4112 = vmatpush1.msra.mxu0 %v646
    %4113 = vmatprep.subr.mxu0 %v651
    %4114 = vmatpush1.msra.mxu0 %v650
    %4115 = vmatprep.subr.mxu0 %v655
    %4116 = vmatpush1.msra.mxu0 %v654
    %4117 = vmatprep.subr.mxu0 %v659
    %4118 = vmatpush1.msra.mxu0 %v658
    %4119 = vmatprep.subr.mxu0 %v663
    %4120 = vmatpush1.msra.mxu0 %v662
    %4121 = vmatprep.subr.mxu0 %v667
    %4122 = vmatpush1.msra.mxu0 %v666
    %4123 = vmatprep.subr.mxu0 %v671
    %4124 = vmatpush1.msra.mxu0 %v670
    %4125 = vmatprep.subr.mxu0 %v675
    %4126 = vmatpush1.msra.mxu0 %v674
    %4127 = vmatprep.subr.mxu0 %v679
    %4128 = vmatpush1.msra.mxu0 %v678
    %4129 = vmatprep.subr.mxu0 0.0
    %4130 = vmatpush1.msra.mxu0 0.0
    %4131 = vmatprep.subr.mxu0 0.0
    %4132 = vmatpush1.msra.mxu0 0.0
    %4133 = vmatprep.subr.mxu0 0.0
    %4134 = vmatpush1.msra.mxu0 0.0
    %4135 = vmatprep.subr.mxu0 0.0
    %4136 = vmatpush1.msra.mxu0 0.0
    %4137 = vmatprep.subr.mxu0 0.0
    %4138 = vmatpush1.msra.mxu0 0.0
    %4139 = vmatprep.subr.mxu0 0.0
    %4140 = vmatpush1.msra.mxu0 0.0
    %4141 = vmatprep.subr.mxu0 0.0
    %4142 = vmatpush1.msra.mxu0 0.0
    %4143 = vmatprep.subr.mxu0 0.0
    %4144 = vmatpush1.msra.mxu0 0.0
    %4145 = vmatprep.subr.mxu0 0.0
    %4146 = vmatpush1.msra.mxu0 0.0
    %4147 = vmatprep.subr.mxu0 0.0
    %4148 = vmatpush1.msra.mxu0 0.0
    %4149 = vmatprep.subr.mxu0 0.0
    %4150 = vmatpush1.msra.mxu0 0.0
    %4151 = vmatprep.subr.mxu0 0.0
    %4152 = vmatpush1.msra.mxu0 0.0
    %4153 = vmatprep.subr.mxu0 0.0
    %4154 = vmatpush1.msra.mxu0 0.0
    %4155 = vmatprep.subr.mxu0 0.0
    %4156 = vmatpush1.msra.mxu0 0.0
    %4157 = vmatprep.subr.mxu0 0.0
    %4158 = vmatpush1.msra.mxu0 0.0
    %4159 = vmatprep.subr.mxu0 0.0
    %4160 = vmatpush1.msra.mxu0 0.0
    %4161 = vmatprep.mubr.f32.mxu0 0.0
    %4162 = vmatmul.mubr.f32.gmra.mrb[0].mxu0 %v4095
    %v4163 = vpop.f32.mrb[0].mxu0
    %v4164 = vadd.f32 %v686, %v4163
    %v4165 = vpop.f32.mrb[0].mxu0
    %v4166 = vadd.f32 %v690, %v4165
    %4167 = vdwg.mxu0
    %4168 = vmatprep.subr.mxu0 %v621
    %4169 = vmatpush1.msra.mxu0 %v620
    %4170 = vmatprep.subr.mxu0 %v625
    %4171 = vmatpush1.msra.mxu0 %v624
    %4172 = vmatprep.subr.mxu0 %v629
    %4173 = vmatpush1.msra.mxu0 %v628
    %4174 = vmatprep.subr.mxu0 %v633
    %4175 = vmatpush1.msra.mxu0 %v632
    %4176 = vmatprep.subr.mxu0 %v637
    %4177 = vmatpush1.msra.mxu0 %v636
    %4178 = vmatprep.subr.mxu0 %v641
    %4179 = vmatpush1.msra.mxu0 %v640
    %4180 = vmatprep.subr.mxu0 %v645
    %4181 = vmatpush1.msra.mxu0 %v644
    %4182 = vmatprep.subr.mxu0 %v649
    %4183 = vmatpush1.msra.mxu0 %v648
    %4184 = vmatprep.subr.mxu0 %v653
    %4185 = vmatpush1.msra.mxu0 %v652
    %4186 = vmatprep.subr.mxu0 %v657
    %4187 = vmatpush1.msra.mxu0 %v656
    %4188 = vmatprep.subr.mxu0 %v661
    %4189 = vmatpush1.msra.mxu0 %v660
    %4190 = vmatprep.subr.mxu0 %v665
    %4191 = vmatpush1.msra.mxu0 %v664
    %4192 = vmatprep.subr.mxu0 %v669
    %4193 = vmatpush1.msra.mxu0 %v668
    %4194 = vmatprep.subr.mxu0 %v673
    %4195 = vmatpush1.msra.mxu0 %v672
    %4196 = vmatprep.subr.mxu0 %v677
    %4197 = vmatpush1.msra.mxu0 %v676
    %4198 = vmatprep.subr.mxu0 %v681
    %4199 = vmatpush1.msra.mxu0 %v680
    %4200 = vmatprep.subr.mxu0 0.0
    %4201 = vmatpush1.msra.mxu0 0.0
    %4202 = vmatprep.subr.mxu0 0.0
    %4203 = vmatpush1.msra.mxu0 0.0
    %4204 = vmatprep.subr.mxu0 0.0
    %4205 = vmatpush1.msra.mxu0 0.0
    %4206 = vmatprep.subr.mxu0 0.0
    %4207 = vmatpush1.msra.mxu0 0.0
    %4208 = vmatprep.subr.mxu0 0.0
    %4209 = vmatpush1.msra.mxu0 0.0
    %4210 = vmatprep.subr.mxu0 0.0
    %4211 = vmatpush1.msra.mxu0 0.0
    %4212 = vmatprep.subr.mxu0 0.0
    %4213 = vmatpush1.msra.mxu0 0.0
    %4214 = vmatprep.subr.mxu0 0.0
    %4215 = vmatpush1.msra.mxu0 0.0
    %4216 = vmatprep.subr.mxu0 0.0
    %4217 = vmatpush1.msra.mxu0 0.0
    %4218 = vmatprep.subr.mxu0 0.0
    %4219 = vmatpush1.msra.mxu0 0.0
    %4220 = vmatprep.subr.mxu0 0.0
    %4221 = vmatpush1.msra.mxu0 0.0
    %4222 = vmatprep.subr.mxu0 0.0
    %4223 = vmatpush1.msra.mxu0 0.0
    %4224 = vmatprep.subr.mxu0 0.0
    %4225 = vmatpush1.msra.mxu0 0.0
    %4226 = vmatprep.subr.mxu0 0.0
    %4227 = vmatpush1.msra.mxu0 0.0
    %4228 = vmatprep.subr.mxu0 0.0
    %4229 = vmatpush1.msra.mxu0 0.0
    %4230 = vmatprep.subr.mxu0 0.0
    %4231 = vmatpush1.msra.mxu0 0.0
    %4232 = vmatprep.mubr.f32.mxu0 0.0
    %4233 = vmatmul.mubr.f32.gmra.mrb[0].mxu0 %v4095
    %v4234 = vpop.f32.mrb[0].mxu0
    %v4235 = vadd.f32 %v694, %v4234
    %v4236 = vpop.f32.mrb[0].mxu0
    %v4237 = vadd.f32 %v698, %v4236
    %4238 = vdwg.mxu0
    %4239 = vmatprep.subr.mxu0 %v846
    %4240 = vmatpush1.msra.mxu0 %v845
    %4241 = vmatprep.subr.mxu0 %v850
    %4242 = vmatpush1.msra.mxu0 %v849
    %4243 = vmatprep.subr.mxu0 %v854
    %4244 = vmatpush1.msra.mxu0 %v853
    %4245 = vmatprep.subr.mxu0 %v858
    %4246 = vmatpush1.msra.mxu0 %v857
    %4247 = vmatprep.subr.mxu0 %v862
    %4248 = vmatpush1.msra.mxu0 %v861
    %4249 = vmatprep.subr.mxu0 %v866
    %4250 = vmatpush1.msra.mxu0 %v865
    %4251 = vmatprep.subr.mxu0 %v870
    %4252 = vmatpush1.msra.mxu0 %v869
    %4253 = vmatprep.subr.mxu0 %v874
    %4254 = vmatpush1.msra.mxu0 %v873
    %4255 = vmatprep.subr.mxu0 %v878
    %4256 = vmatpush1.msra.mxu0 %v877
    %4257 = vmatprep.subr.mxu0 %v882
    %4258 = vmatpush1.msra.mxu0 %v881
    %4259 = vmatprep.subr.mxu0 %v886
    %4260 = vmatpush1.msra.mxu0 %v885
    %4261 = vmatprep.subr.mxu0 %v890
    %4262 = vmatpush1.msra.mxu0 %v889
    %4263 = vmatprep.subr.mxu0 %v894
    %4264 = vmatpush1.msra.mxu0 %v893
    %4265 = vmatprep.subr.mxu0 %v898
    %4266 = vmatpush1.msra.mxu0 %v897
    %4267 = vmatprep.subr.mxu0 %v902
    %4268 = vmatpush1.msra.mxu0 %v901
    %4269 = vmatprep.subr.mxu0 %v906
    %4270 = vmatpush1.msra.mxu0 %v905
    %4271 = vmatprep.subr.mxu0 0.0
    %4272 = vmatpush1.msra.mxu0 0.0
    %4273 = vmatprep.subr.mxu0 0.0
    %4274 = vmatpush1.msra.mxu0 0.0
    %4275 = vmatprep.subr.mxu0 0.0
    %4276 = vmatpush1.msra.mxu0 0.0
    %4277 = vmatprep.subr.mxu0 0.0
    %4278 = vmatpush1.msra.mxu0 0.0
    %4279 = vmatprep.subr.mxu0 0.0
    %4280 = vmatpush1.msra.mxu0 0.0
    %4281 = vmatprep.subr.mxu0 0.0
    %4282 = vmatpush1.msra.mxu0 0.0
    %4283 = vmatprep.subr.mxu0 0.0
    %4284 = vmatpush1.msra.mxu0 0.0
    %4285 = vmatprep.subr.mxu0 0.0
    %4286 = vmatpush1.msra.mxu0 0.0
    %4287 = vmatprep.subr.mxu0 0.0
    %4288 = vmatpush1.msra.mxu0 0.0
    %4289 = vmatprep.subr.mxu0 0.0
    %4290 = vmatpush1.msra.mxu0 0.0
    %4291 = vmatprep.subr.mxu0 0.0
    %4292 = vmatpush1.msra.mxu0 0.0
    %4293 = vmatprep.subr.mxu0 0.0
    %4294 = vmatpush1.msra.mxu0 0.0
    %4295 = vmatprep.subr.mxu0 0.0
    %4296 = vmatpush1.msra.mxu0 0.0
    %4297 = vmatprep.subr.mxu0 0.0
    %4298 = vmatpush1.msra.mxu0 0.0
    %4299 = vmatprep.subr.mxu0 0.0
    %4300 = vmatpush1.msra.mxu0 0.0
    %4301 = vmatprep.subr.mxu0 0.0
    %4302 = vmatpush1.msra.mxu0 0.0
    %4303 = vmatprep.mubr.f32.mxu0 0.0
    %4304 = vmatmul.mubr.f32.gmra.mrb[0].mxu0 %v3287
    %v4305 = vpop.f32.mrb[0].mxu0
    %v4306 = vadd.f32 0.0, %v4305
    %v4307 = vpop.f32.mrb[0].mxu0
    %v4308 = vadd.f32 0.0, %v4307
    %4309 = vdwg.mxu0
    %4310 = vmatprep.subr.mxu0 %v848
    %4311 = vmatpush1.msra.mxu0 %v847
    %4312 = vmatprep.subr.mxu0 %v852
    %4313 = vmatpush1.msra.mxu0 %v851
    %4314 = vmatprep.subr.mxu0 %v856
    %4315 = vmatpush1.msra.mxu0 %v855
    %4316 = vmatprep.subr.mxu0 %v860
    %4317 = vmatpush1.msra.mxu0 %v859
    %4318 = vmatprep.subr.mxu0 %v864
    %4319 = vmatpush1.msra.mxu0 %v863
    %4320 = vmatprep.subr.mxu0 %v868
    %4321 = vmatpush1.msra.mxu0 %v867
    %4322 = vmatprep.subr.mxu0 %v872
    %4323 = vmatpush1.msra.mxu0 %v871
    %4324 = vmatprep.subr.mxu0 %v876
    %4325 = vmatpush1.msra.mxu0 %v875
    %4326 = vmatprep.subr.mxu0 %v880
    %4327 = vmatpush1.msra.mxu0 %v879
    %4328 = vmatprep.subr.mxu0 %v884
    %4329 = vmatpush1.msra.mxu0 %v883
    %4330 = vmatprep.subr.mxu0 %v888
    %4331 = vmatpush1.msra.mxu0 %v887
    %4332 = vmatprep.subr.mxu0 %v892
    %4333 = vmatpush1.msra.mxu0 %v891
    %4334 = vmatprep.subr.mxu0 %v896
    %4335 = vmatpush1.msra.mxu0 %v895
    %4336 = vmatprep.subr.mxu0 %v900
    %4337 = vmatpush1.msra.mxu0 %v899
    %4338 = vmatprep.subr.mxu0 %v904
    %4339 = vmatpush1.msra.mxu0 %v903
    %4340 = vmatprep.subr.mxu0 %v908
    %4341 = vmatpush1.msra.mxu0 %v907
    %4342 = vmatprep.subr.mxu0 0.0
    %4343 = vmatpush1.msra.mxu0 0.0
    %4344 = vmatprep.subr.mxu0 0.0
    %4345 = vmatpush1.msra.mxu0 0.0
    %4346 = vmatprep.subr.mxu0 0.0
    %4347 = vmatpush1.msra.mxu0 0.0
    %4348 = vmatprep.subr.mxu0 0.0
    %4349 = vmatpush1.msra.mxu0 0.0
    %4350 = vmatprep.subr.mxu0 0.0
    %4351 = vmatpush1.msra.mxu0 0.0
    %4352 = vmatprep.subr.mxu0 0.0
    %4353 = vmatpush1.msra.mxu0 0.0
    %4354 = vmatprep.subr.mxu0 0.0
    %4355 = vmatpush1.msra.mxu0 0.0
    %4356 = vmatprep.subr.mxu0 0.0
    %4357 = vmatpush1.msra.mxu0 0.0
    %4358 = vmatprep.subr.mxu0 0.0
    %4359 = vmatpush1.msra.mxu0 0.0
    %4360 = vmatprep.subr.mxu0 0.0
    %4361 = vmatpush1.msra.mxu0 0.0
    %4362 = vmatprep.subr.mxu0 0.0
    %4363 = vmatpush1.msra.mxu0 0.0
    %4364 = vmatprep.subr.mxu0 0.0
    %4365 = vmatpush1.msra.mxu0 0.0
    %4366 = vmatprep.subr.mxu0 0.0
    %4367 = vmatpush1.msra.mxu0 0.0
    %4368 = vmatprep.subr.mxu0 0.0
    %4369 = vmatpush1.msra.mxu0 0.0
    %4370 = vmatprep.subr.mxu0 0.0
    %4371 = vmatpush1.msra.mxu0 0.0
    %4372 = vmatprep.subr.mxu0 0.0
    %4373 = vmatpush1.msra.mxu0 0.0
    %4374 = vmatprep.mubr.f32.mxu0 0.0
    %4375 = vmatmul.mubr.f32.gmra.mrb[0].mxu0 %v3287
    %v4376 = vpop.f32.mrb[0].mxu0
    %v4377 = vadd.f32 0.0, %v4376
    %v4378 = vpop.f32.mrb[0].mxu0
    %v4379 = vadd.f32 0.0, %v4378
    %4380 = vdwg.mxu0
    %v4381 = vadd.f32 %v4164, %v4306
    %v4382 = vadd.f32 %v4166, %v4308
    %v4383 = vadd.f32 %v4235, %v4377
    %v4384 = vadd.f32 %v4237, %v4379
    %v4385 = vmul.f32 %v4381, 0.5
    %v4386 = vmul.f32 %v4382, 0.5
    %v4387 = vmul.f32 %v4383, 0.5
    %v4388 = vtanh.pop %v4385
    %v4389 = vtanh.pop %v4386
    %v4390 = vtanh.pop %v4387
    %v4391 = vadd.f32 %v4388, 1.0
    %v4392 = vadd.f32 %v4389, 1.0
    %v4393 = vadd.f32 %v4390, 1.0
    %v4394 = vmul.f32 %v4391, 0.5
    %v4395 = vmul.f32 %v4392, 0.5
    %v4396 = vmul.f32 %v4393, 0.5
    %v4397 = vtanh.pop %v4384
    %v4398 = vmul.f32 %v4395, %v3285
    %v4399 = vmul.f32 %v4394, %v4397
    %v4400 = vadd.f32 %v4398, %v4399
    %v4401 = vtanh.pop %v4400
    %v4402 = vmul.f32 %v4396, %v4401
    %v4404 = vrot.slane %v3469, 3
    %4406 = vmatprep.subr.mxu0 %v387
    %4407 = vmatpush1.msra.mxu0 %v386
    %4408 = vmatprep.subr.mxu0 %v391
    %4409 = vmatpush1.msra.mxu0 %v390
    %4410 = vmatprep.subr.mxu0 %v395
    %4411 = vmatpush1.msra.mxu0 %v394
    %4412 = vmatprep.subr.mxu0 %v399
    %4413 = vmatpush1.msra.mxu0 %v398
    %4414 = vmatprep.subr.mxu0 %v403
    %4415 = vmatpush1.msra.mxu0 %v402
    %4416 = vmatprep.subr.mxu0 %v407
    %4417 = vmatpush1.msra.mxu0 %v406
    %4418 = vmatprep.subr.mxu0 %v411
    %4419 = vmatpush1.msra.mxu0 %v410
    %4420 = vmatprep.subr.mxu0 %v415
    %4421 = vmatpush1.msra.mxu0 %v414
    %4422 = vmatprep.subr.mxu0 %v419
    %4423 = vmatpush1.msra.mxu0 %v418
    %4424 = vmatprep.subr.mxu0 %v423
    %4425 = vmatpush1.msra.mxu0 %v422
    %4426 = vmatprep.subr.mxu0 %v427
    %4427 = vmatpush1.msra.mxu0 %v426
    %4428 = vmatprep.subr.mxu0 %v431
    %4429 = vmatpush1.msra.mxu0 %v430
    %4430 = vmatprep.subr.mxu0 %v435
    %4431 = vmatpush1.msra.mxu0 %v434
    %4432 = vmatprep.subr.mxu0 %v439
    %4433 = vmatpush1.msra.mxu0 %v438
    %4434 = vmatprep.subr.mxu0 %v443
    %4435 = vmatpush1.msra.mxu0 %v442
    %4436 = vmatprep.subr.mxu0 %v447
    %4437 = vmatpush1.msra.mxu0 %v446
    %4438 = vmatprep.subr.mxu0 0.0
    %4439 = vmatpush1.msra.mxu0 0.0
    %4440 = vmatprep.subr.mxu0 0.0
    %4441 = vmatpush1.msra.mxu0 0.0
    %4442 = vmatprep.subr.mxu0 0.0
    %4443 = vmatpush1.msra.mxu0 0.0
    %4444 = vmatprep.subr.mxu0 0.0
    %4445 = vmatpush1.msra.mxu0 0.0
    %4446 = vmatprep.subr.mxu0 0.0
    %4447 = vmatpush1.msra.mxu0 0.0
    %4448 = vmatprep.subr.mxu0 0.0
    %4449 = vmatpush1.msra.mxu0 0.0
    %4450 = vmatprep.subr.mxu0 0.0
    %4451 = vmatpush1.msra.mxu0 0.0
    %4452 = vmatprep.subr.mxu0 0.0
    %4453 = vmatpush1.msra.mxu0 0.0
    %4454 = vmatprep.subr.mxu0 0.0
    %4455 = vmatpush1.msra.mxu0 0.0
    %4456 = vmatprep.subr.mxu0 0.0
    %4457 = vmatpush1.msra.mxu0 0.0
    %4458 = vmatprep.subr.mxu0 0.0
    %4459 = vmatpush1.msra.mxu0 0.0
    %4460 = vmatprep.subr.mxu0 0.0
    %4461 = vmatpush1.msra.mxu0 0.0
    %4462 = vmatprep.subr.mxu0 0.0
    %4463 = vmatpush1.msra.mxu0 0.0
    %4464 = vmatprep.subr.mxu0 0.0
    %4465 = vmatpush1.msra.mxu0 0.0
    %4466 = vmatprep.subr.mxu0 0.0
    %4467 = vmatpush1.msra.mxu0 0.0
    %4468 = vmatprep.subr.mxu0 0.0
    %4469 = vmatpush1.msra.mxu0 0.0
    %4470 = vmatprep.mubr.f32.mxu0 0.0
    %4471 = vmatmul.mubr.f32.gmra.mrb[0].mxu0 %v4404
    %v4472 = vpop.f32.mrb[0].mxu0
    %v4473 = vadd.f32 0.0, %v4472
    %v4474 = vpop.f32.mrb[0].mxu0
    %v4475 = vadd.f32 0.0, %v4474
    %4476 = vdwg.mxu0
    %4477 = vmatprep.subr.mxu0 %v389
    %4478 = vmatpush1.msra.mxu0 %v388
    %4479 = vmatprep.subr.mxu0 %v393
    %4480 = vmatpush1.msra.mxu0 %v392
    %4481 = vmatprep.subr.mxu0 %v397
    %4482 = vmatpush1.msra.mxu0 %v396
    %4483 = vmatprep.subr.mxu0 %v401
    %4484 = vmatpush1.msra.mxu0 %v400
    %4485 = vmatprep.subr.mxu0 %v405
    %4486 = vmatpush1.msra.mxu0 %v404
    %4487 = vmatprep.subr.mxu0 %v409
    %4488 = vmatpush1.msra.mxu0 %v408
    %4489 = vmatprep.subr.mxu0 %v413
    %4490 = vmatpush1.msra.mxu0 %v412
    %4491 = vmatprep.subr.mxu0 %v417
    %4492 = vmatpush1.msra.mxu0 %v416
    %4493 = vmatprep.subr.mxu0 %v421
    %4494 = vmatpush1.msra.mxu0 %v420
    %4495 = vmatprep.subr.mxu0 %v425
    %4496 = vmatpush1.msra.mxu0 %v424
    %4497 = vmatprep.subr.mxu0 %v429
    %4498 = vmatpush1.msra.mxu0 %v428
    %4499 = vmatprep.subr.mxu0 %v433
    %4500 = vmatpush1.msra.mxu0 %v432
    %4501 = vmatprep.subr.mxu0 %v437
    %4502 = vmatpush1.msra.mxu0 %v436
    %4503 = vmatprep.subr.mxu0 %v441
    %4504 = vmatpush1.msra.mxu0 %v440
    %4505 = vmatprep.subr.mxu0 %v445
    %4506 = vmatpush1.msra.mxu0 %v444
    %4507 = vmatprep.subr.mxu0 %v449
    %4508 = vmatpush1.msra.mxu0 %v448
    %4509 = vmatprep.subr.mxu0 0.0
    %4510 = vmatpush1.msra.mxu0 0.0
    %4511 = vmatprep.subr.mxu0 0.0
    %4512 = vmatpush1.msra.mxu0 0.0
    %4513 = vmatprep.subr.mxu0 0.0
    %4514 = vmatpush1.msra.mxu0 0.0
    %4515 = vmatprep.subr.mxu0 0.0
    %4516 = vmatpush1.msra.mxu0 0.0
    %4517 = vmatprep.subr.mxu0 0.0
    %4518 = vmatpush1.msra.mxu0 0.0
    %4519 = vmatprep.subr.mxu0 0.0
    %4520 = vmatpush1.msra.mxu0 0.0
    %4521 = vmatprep.subr.mxu0 0.0
    %4522 = vmatpush1.msra.mxu0 0.0
    %4523 = vmatprep.subr.mxu0 0.0
    %4524 = vmatpush1.msra.mxu0 0.0
    %4525 = vmatprep.subr.mxu0 0.0
    %4526 = vmatpush1.msra.mxu0 0.0
    %4527 = vmatprep.subr.mxu0 0.0
    %4528 = vmatpush1.msra.mxu0 0.0
    %4529 = vmatprep.subr.mxu0 0.0
    %4530 = vmatpush1.msra.mxu0 0.0
    %4531 = vmatprep.subr.mxu0 0.0
    %4532 = vmatpush1.msra.mxu0 0.0
    %4533 = vmatprep.subr.mxu0 0.0
    %4534 = vmatpush1.msra.mxu0 0.0
    %4535 = vmatprep.subr.mxu0 0.0
    %4536 = vmatpush1.msra.mxu0 0.0
    %4537 = vmatprep.subr.mxu0 0.0
    %4538 = vmatpush1.msra.mxu0 0.0
    %4539 = vmatprep.subr.mxu0 0.0
    %4540 = vmatpush1.msra.mxu0 0.0
    %4541 = vmatprep.mubr.f32.mxu0 0.0
    %4542 = vmatmul.mubr.f32.gmra.mrb[0].mxu0 %v4404
    %v4543 = vpop.f32.mrb[0].mxu0
    %v4544 = vadd.f32 0.0, %v4543
    %v4545 = vpop.f32.mrb[0].mxu0
    %v4546 = vadd.f32 0.0, %v4545
    %4547 = vdwg.mxu0
    %v4552 = vrot.slane %v4473, 4
    %v4553 = vrot.slane %v4475, 4
    %v4554 = vrot.slane %v4544, 4
    %v4555 = vrot.slane %v4546, 4
    %v4560 = vadd.f32 %v311, %v4552
    %v4561 = vadd.f32 %v313, %v4553
    %v4562 = vadd.f32 %v382, %v4554
    %v4563 = vadd.f32 %v384, %v4555
    %v4564 = vmul.f32 %v4560, 0.5
    %v4565 = vmul.f32 %v4561, 0.5
    %v4566 = vmul.f32 %v4562, 0.5
    %v4567 = vtanh.pop %v4564
    %v4568 = vtanh.pop %v4565
    %v4569 = vtanh.pop %v4566
    %v4570 = vadd.f32 %v4567, 1.0
    %v4571 = vadd.f32 %v4568, 1.0
    %v4572 = vadd.f32 %v4569, 1.0
    %v4573 = vmul.f32 %v4570, 0.5
    %v4574 = vmul.f32 %v4571, 0.5
    %v4575 = vmul.f32 %v4572, 0.5
    %v4576 = vtanh.pop %v4563
    %v4578 = vrot.slane %v3467, 7
    %v4580 = vmul.f32 %v4574, %v4578
    %v4581 = vmul.f32 %v4573, %v4576
    %v4582 = vadd.f32 %v4580, %v4581
    %v4583 = vtanh.pop %v4582
    %v4584 = vmul.f32 %v4575, %v4583
    %v4585 = vmul.f32 %v4089, 0.5
    %v4586 = vtanh.pop %v4585
    %v4587 = vadd.f32 %v4586, 1.0
    %v4588 = vmul.f32 %v4587, 0.5
    %4589 = vmatprep.subr.mxu0 %v2211
    %4590 = vmatpush1.msra.mxu0 %v2210
    %4591 = vmatprep.subr.mxu0 %v2215
    %4592 = vmatpush1.msra.mxu0 %v2214
    %4593 = vmatprep.subr.mxu0 %v2219
    %4594 = vmatpush1.msra.mxu0 %v2218
    %4595 = vmatprep.subr.mxu0 %v2223
    %4596 = vmatpush1.msra.mxu0 %v2222
    %4597 = vmatprep.subr.mxu0 %v2227
    %4598 = vmatpush1.msra.mxu0 %v2226
    %4599 = vmatprep.subr.mxu0 %v2231
    %4600 = vmatpush1.msra.mxu0 %v2230
    %4601 = vmatprep.subr.mxu0 %v2235
    %4602 = vmatpush1.msra.mxu0 %v2234
    %4603 = vmatprep.subr.mxu0 %v2239
    %4604 = vmatpush1.msra.mxu0 %v2238
    %4605 = vmatprep.subr.mxu0 %v2243
    %4606 = vmatpush1.msra.mxu0 %v2242
    %4607 = vmatprep.subr.mxu0 %v2247
    %4608 = vmatpush1.msra.mxu0 %v2246
    %4609 = vmatprep.subr.mxu0 %v2251
    %4610 = vmatpush1.msra.mxu0 %v2250
    %4611 = vmatprep.subr.mxu0 %v2255
    %4612 = vmatpush1.msra.mxu0 %v2254
    %4613 = vmatprep.subr.mxu0 %v2259
    %4614 = vmatpush1.msra.mxu0 %v2258
    %4615 = vmatprep.subr.mxu0 %v2263
    %4616 = vmatpush1.msra.mxu0 %v2262
    %4617 = vmatprep.subr.mxu0 %v2267
    %4618 = vmatpush1.msra.mxu0 %v2266
    %4619 = vmatprep.subr.mxu0 %v2271
    %4620 = vmatpush1.msra.mxu0 %v2270
    %4621 = vmatprep.subr.mxu0 0.0
    %4622 = vmatpush1.msra.mxu0 0.0
    %4623 = vmatprep.subr.mxu0 0.0
    %4624 = vmatpush1.msra.mxu0 0.0
    %4625 = vmatprep.subr.mxu0 0.0
    %4626 = vmatpush1.msra.mxu0 0.0
    %4627 = vmatprep.subr.mxu0 0.0
    %4628 = vmatpush1.msra.mxu0 0.0
    %4629 = vmatprep.subr.mxu0 0.0
    %4630 = vmatpush1.msra.mxu0 0.0
    %4631 = vmatprep.subr.mxu0 0.0
    %4632 = vmatpush1.msra.mxu0 0.0
    %4633 = vmatprep.subr.mxu0 0.0
    %4634 = vmatpush1.msra.mxu0 0.0
    %4635 = vmatprep.subr.mxu0 0.0
    %4636 = vmatpush1.msra.mxu0 0.0
    %4637 = vmatprep.subr.mxu0 0.0
    %4638 = vmatpush1.msra.mxu0 0.0
    %4639 = vmatprep.subr.mxu0 0.0
    %4640 = vmatpush1.msra.mxu0 0.0
    %4641 = vmatprep.subr.mxu0 0.0
    %4642 = vmatpush1.msra.mxu0 0.0
    %4643 = vmatprep.subr.mxu0 0.0
    %4644 = vmatpush1.msra.mxu0 0.0
    %4645 = vmatprep.subr.mxu0 0.0
    %4646 = vmatpush1.msra.mxu0 0.0
    %4647 = vmatprep.subr.mxu0 0.0
    %4648 = vmatpush1.msra.mxu0 0.0
    %4649 = vmatprep.subr.mxu0 0.0
    %4650 = vmatpush1.msra.mxu0 0.0
    %4651 = vmatprep.subr.mxu0 0.0
    %4652 = vmatpush1.msra.mxu0 0.0
    %4653 = vmatprep.mubr.f32.mxu0 0.0
    %4654 = vmatmul.mubr.f32.gmra.mrb[0].mxu0 %v4588
    %v4655 = vpop.f32.mrb[0].mxu0
    %v4656 = vadd.f32 %v2278, %v4655
    %v4657 = vpop.f32.mrb[0].mxu0
    %v4658 = vadd.f32 %v2282, %v4657
    %4659 = vdwg.mxu0
    %4660 = vmatprep.subr.mxu0 %v2213
    %4661 = vmatpush1.msra.mxu0 %v2212
    %4662 = vmatprep.subr.mxu0 %v2217
    %4663 = vmatpush1.msra.mxu0 %v2216
    %4664 = vmatprep.subr.mxu0 %v2221
    %4665 = vmatpush1.msra.mxu0 %v2220
    %4666 = vmatprep.subr.mxu0 %v2225
    %4667 = vmatpush1.msra.mxu0 %v2224
    %4668 = vmatprep.subr.mxu0 %v2229
    %4669 = vmatpush1.msra.mxu0 %v2228
    %4670 = vmatprep.subr.mxu0 %v2233
    %4671 = vmatpush1.msra.mxu0 %v2232
    %4672 = vmatprep.subr.mxu0 %v2237
    %4673 = vmatpush1.msra.mxu0 %v2236
    %4674 = vmatprep.subr.mxu0 %v2241
    %4675 = vmatpush1.msra.mxu0 %v2240
    %4676 = vmatprep.subr.mxu0 %v2245
    %4677 = vmatpush1.msra.mxu0 %v2244
    %4678 = vmatprep.subr.mxu0 %v2249
    %4679 = vmatpush1.msra.mxu0 %v2248
    %4680 = vmatprep.subr.mxu0 %v2253
    %4681 = vmatpush1.msra.mxu0 %v2252
    %4682 = vmatprep.subr.mxu0 %v2257
    %4683 = vmatpush1.msra.mxu0 %v2256
    %4684 = vmatprep.subr.mxu0 %v2261
    %4685 = vmatpush1.msra.mxu0 %v2260
    %4686 = vmatprep.subr.mxu0 %v2265
    %4687 = vmatpush1.msra.mxu0 %v2264
    %4688 = vmatprep.subr.mxu0 %v2269
    %4689 = vmatpush1.msra.mxu0 %v2268
    %4690 = vmatprep.subr.mxu0 %v2273
    %4691 = vmatpush1.msra.mxu0 %v2272
    %4692 = vmatprep.subr.mxu0 0.0
    %4693 = vmatpush1.msra.mxu0 0.0
    %4694 = vmatprep.subr.mxu0 0.0
    %4695 = vmatpush1.msra.mxu0 0.0
    %4696 = vmatprep.subr.mxu0 0.0
    %4697 = vmatpush1.msra.mxu0 0.0
    %4698 = vmatprep.subr.mxu0 0.0
    %4699 = vmatpush1.msra.mxu0 0.0
    %4700 = vmatprep.subr.mxu0 0.0
    %4701 = vmatpush1.msra.mxu0 0.0
    %4702 = vmatprep.subr.mxu0 0.0
    %4703 = vmatpush1.msra.mxu0 0.0
    %4704 = vmatprep.subr.mxu0 0.0
    %4705 = vmatpush1.msra.mxu0 0.0
    %4706 = vmatprep.subr.mxu0 0.0
    %4707 = vmatpush1.msra.mxu0 0.0
    %4708 = vmatprep.subr.mxu0 0.0
    %4709 = vmatpush1.msra.mxu0 0.0
    %4710 = vmatprep.subr.mxu0 0.0
    %4711 = vmatpush1.msra.mxu0 0.0
    %4712 = vmatprep.subr.mxu0 0.0
    %4713 = vmatpush1.msra.mxu0 0.0
    %4714 = vmatprep.subr.mxu0 0.0
    %4715 = vmatpush1.msra.mxu0 0.0
    %4716 = vmatprep.subr.mxu0 0.0
    %4717 = vmatpush1.msra.mxu0 0.0
    %4718 = vmatprep.subr.mxu0 0.0
    %4719 = vmatpush1.msra.mxu0 0.0
    %4720 = vmatprep.subr.mxu0 0.0
    %4721 = vmatpush1.msra.mxu0 0.0
    %4722 = vmatprep.subr.mxu0 0.0
    %4723 = vmatpush1.msra.mxu0 0.0
    %4724 = vmatprep.mubr.f32.mxu0 0.0
    %4725 = vmatmul.mubr.f32.gmra.mrb[0].mxu0 %v4588
    %v4726 = vpop.f32.mrb[0].mxu0
    %v4727 = vadd.f32 %v2286, %v4726
    %v4728 = vpop.f32.mrb[0].mxu0
    %v4729 = vadd.f32 %v2290, %v4728
    %4730 = vdwg.mxu0
    %4731 = vmatprep.subr.mxu0 %v2438
    %4732 = vmatpush1.msra.mxu0 %v2437
    %4733 = vmatprep.subr.mxu0 %v2442
    %4734 = vmatpush1.msra.mxu0 %v2441
    %4735 = vmatprep.subr.mxu0 %v2446
    %4736 = vmatpush1.msra.mxu0 %v2445
    %4737 = vmatprep.subr.mxu0 %v2450
    %4738 = vmatpush1.msra.mxu0 %v2449
    %4739 = vmatprep.subr.mxu0 %v2454
    %4740 = vmatpush1.msra.mxu0 %v2453
    %4741 = vmatprep.subr.mxu0 %v2458
    %4742 = vmatpush1.msra.mxu0 %v2457
    %4743 = vmatprep.subr.mxu0 %v2462
    %4744 = vmatpush1.msra.mxu0 %v2461
    %4745 = vmatprep.subr.mxu0 %v2466
    %4746 = vmatpush1.msra.mxu0 %v2465
    %4747 = vmatprep.subr.mxu0 %v2470
    %4748 = vmatpush1.msra.mxu0 %v2469
    %4749 = vmatprep.subr.mxu0 %v2474
    %4750 = vmatpush1.msra.mxu0 %v2473
    %4751 = vmatprep.subr.mxu0 %v2478
    %4752 = vmatpush1.msra.mxu0 %v2477
    %4753 = vmatprep.subr.mxu0 %v2482
    %4754 = vmatpush1.msra.mxu0 %v2481
    %4755 = vmatprep.subr.mxu0 %v2486
    %4756 = vmatpush1.msra.mxu0 %v2485
    %4757 = vmatprep.subr.mxu0 %v2490
    %4758 = vmatpush1.msra.mxu0 %v2489
    %4759 = vmatprep.subr.mxu0 %v2494
    %4760 = vmatpush1.msra.mxu0 %v2493
    %4761 = vmatprep.subr.mxu0 %v2498
    %4762 = vmatpush1.msra.mxu0 %v2497
    %4763 = vmatprep.subr.mxu0 0.0
    %4764 = vmatpush1.msra.mxu0 0.0
    %4765 = vmatprep.subr.mxu0 0.0
    %4766 = vmatpush1.msra.mxu0 0.0
    %4767 = vmatprep.subr.mxu0 0.0
    %4768 = vmatpush1.msra.mxu0 0.0
    %4769 = vmatprep.subr.mxu0 0.0
    %4770 = vmatpush1.msra.mxu0 0.0
    %4771 = vmatprep.subr.mxu0 0.0
    %4772 = vmatpush1.msra.mxu0 0.0
    %4773 = vmatprep.subr.mxu0 0.0
    %4774 = vmatpush1.msra.mxu0 0.0
    %4775 = vmatprep.subr.mxu0 0.0
    %4776 = vmatpush1.msra.mxu0 0.0
    %4777 = vmatprep.subr.mxu0 0.0
    %4778 = vmatpush1.msra.mxu0 0.0
    %4779 = vmatprep.subr.mxu0 0.0
    %4780 = vmatpush1.msra.mxu0 0.0
    %4781 = vmatprep.subr.mxu0 0.0
    %4782 = vmatpush1.msra.mxu0 0.0
    %4783 = vmatprep.subr.mxu0 0.0
    %4784 = vmatpush1.msra.mxu0 0.0
    %4785 = vmatprep.subr.mxu0 0.0
    %4786 = vmatpush1.msra.mxu0 0.0
    %4787 = vmatprep.subr.mxu0 0.0
    %4788 = vmatpush1.msra.mxu0 0.0
    %4789 = vmatprep.subr.mxu0 0.0
    %4790 = vmatpush1.msra.mxu0 0.0
    %4791 = vmatprep.subr.mxu0 0.0
    %4792 = vmatpush1.msra.mxu0 0.0
    %4793 = vmatprep.subr.mxu0 0.0
    %4794 = vmatpush1.msra.mxu0 0.0
    %4795 = vmatprep.mubr.f32.mxu0 0.0
    %4796 = vmatmul.mubr.f32.gmra.mrb[0].mxu0 %v3779
    %v4797 = vpop.f32.mrb[0].mxu0
    %v4798 = vadd.f32 0.0, %v4797
    %v4799 = vpop.f32.mrb[0].mxu0
    %v4800 = vadd.f32 0.0, %v4799
    %4801 = vdwg.mxu0
    %4802 = vmatprep.subr.mxu0 %v2440
    %4803 = vmatpush1.msra.mxu0 %v2439
    %4804 = vmatprep.subr.mxu0 %v2444
    %4805 = vmatpush1.msra.mxu0 %v2443
    %4806 = vmatprep.subr.mxu0 %v2448
    %4807 = vmatpush1.msra.mxu0 %v2447
    %4808 = vmatprep.subr.mxu0 %v2452
    %4809 = vmatpush1.msra.mxu0 %v2451
    %4810 = vmatprep.subr.mxu0 %v2456
    %4811 = vmatpush1.msra.mxu0 %v2455
    %4812 = vmatprep.subr.mxu0 %v2460
    %4813 = vmatpush1.msra.mxu0 %v2459
    %4814 = vmatprep.subr.mxu0 %v2464
    %4815 = vmatpush1.msra.mxu0 %v2463
    %4816 = vmatprep.subr.mxu0 %v2468
    %4817 = vmatpush1.msra.mxu0 %v2467
    %4818 = vmatprep.subr.mxu0 %v2472
    %4819 = vmatpush1.msra.mxu0 %v2471
    %4820 = vmatprep.subr.mxu0 %v2476
    %4821 = vmatpush1.msra.mxu0 %v2475
    %4822 = vmatprep.subr.mxu0 %v2480
    %4823 = vmatpush1.msra.mxu0 %v2479
    %4824 = vmatprep.subr.mxu0 %v2484
    %4825 = vmatpush1.msra.mxu0 %v2483
    %4826 = vmatprep.subr.mxu0 %v2488
    %4827 = vmatpush1.msra.mxu0 %v2487
    %4828 = vmatprep.subr.mxu0 %v2492
    %4829 = vmatpush1.msra.mxu0 %v2491
    %4830 = vmatprep.subr.mxu0 %v2496
    %4831 = vmatpush1.msra.mxu0 %v2495
    %4832 = vmatprep.subr.mxu0 %v2500
    %4833 = vmatpush1.msra.mxu0 %v2499
    %4834 = vmatprep.subr.mxu0 0.0
    %4835 = vmatpush1.msra.mxu0 0.0
    %4836 = vmatprep.subr.mxu0 0.0
    %4837 = vmatpush1.msra.mxu0 0.0
    %4838 = vmatprep.subr.mxu0 0.0
    %4839 = vmatpush1.msra.mxu0 0.0
    %4840 = vmatprep.subr.mxu0 0.0
    %4841 = vmatpush1.msra.mxu0 0.0
    %4842 = vmatprep.subr.mxu0 0.0
    %4843 = vmatpush1.msra.mxu0 0.0
    %4844 = vmatprep.subr.mxu0 0.0
    %4845 = vmatpush1.msra.mxu0 0.0
    %4846 = vmatprep.subr.mxu0 0.0
    %4847 = vmatpush1.msra.mxu0 0.0
    %4848 = vmatprep.subr.mxu0 0.0
    %4849 = vmatpush1.msra.mxu0 0.0
    %4850 = vmatprep.subr.mxu0 0.0
    %4851 = vmatpush1.msra.mxu0 0.0
    %4852 = vmatprep.subr.mxu0 0.0
    %4853 = vmatpush1.msra.mxu0 0.0
    %4854 = vmatprep.subr.mxu0 0.0
    %4855 = vmatpush1.msra.mxu0 0.0
    %4856 = vmatprep.subr.mxu0 0.0
    %4857 = vmatpush1.msra.mxu0 0.0
    %4858 = vmatprep.subr.mxu0 0.0
    %4859 = vmatpush1.msra.mxu0 0.0
    %4860 = vmatprep.subr.mxu0 0.0
    %4861 = vmatpush1.msra.mxu0 0.0
    %4862 = vmatprep.subr.mxu0 0.0
    %4863 = vmatpush1.msra.mxu0 0.0
    %4864 = vmatprep.subr.mxu0 0.0
    %4865 = vmatpush1.msra.mxu0 0.0
    %4866 = vmatprep.mubr.f32.mxu0 0.0
    %4867 = vmatmul.mubr.f32.gmra.mrb[0].mxu0 %v3779
    %v4868 = vpop.f32.mrb[0].mxu0
    %v4869 = vadd.f32 0.0, %v4868
    %v4870 = vpop.f32.mrb[0].mxu0
    %v4871 = vadd.f32 0.0, %v4870
    %4872 = vdwg.mxu0
    %v4873 = vadd.f32 %v4656, %v4798
    %v4874 = vadd.f32 %v4658, %v4800
    %v4875 = vadd.f32 %v4727, %v4869
    %v4876 = vadd.f32 %v4729, %v4871
    %v4877 = vmul.f32 %v4873, 0.5
    %v4878 = vmul.f32 %v4874, 0.5
    %v4879 = vmul.f32 %v4875, 0.5
    %v4880 = vtanh.pop %v4877
    %v4881 = vtanh.pop %v4878
    %v4882 = vtanh.pop %v4879
    %v4883 = vadd.f32 %v4880, 1.0
    %v4884 = vadd.f32 %v4881, 1.0
    %v4885 = vadd.f32 %v4882, 1.0
    %v4886 = vmul.f32 %v4883, 0.5
    %v4887 = vmul.f32 %v4884, 0.5
    %v4888 = vmul.f32 %v4885, 0.5
    %v4889 = vtanh.pop %v4876
    %v4890 = vmul.f32 %v4887, %v3777
    %v4891 = vmul.f32 %v4886, %v4889
    %v4892 = vadd.f32 %v4890, %v4891
    %v4893 = vtanh.pop %v4892
    %v4894 = vmul.f32 %v4888, %v4893
    %v4895 = vmul.f32 %v4402, 0.5
    %v4896 = vtanh.pop %v4895
    %v4897 = vadd.f32 %v4896, 1.0
    %v4898 = vmul.f32 %v4897, 0.5
    %4899 = vmatprep.subr.mxu0 %v1257
    %4900 = vmatpush1.msra.mxu0 %v1256
    %4901 = vmatprep.subr.mxu0 %v1261
    %4902 = vmatpush1.msra.mxu0 %v1260
    %4903 = vmatprep.subr.mxu0 %v1265
    %4904 = vmatpush1.msra.mxu0 %v1264
    %4905 = vmatprep.subr.mxu0 %v1269
    %4906 = vmatpush1.msra.mxu0 %v1268
    %4907 = vmatprep.subr.mxu0 %v1273
    %4908 = vmatpush1.msra.mxu0 %v1272
    %4909 = vmatprep.subr.mxu0 %v1277
    %4910 = vmatpush1.msra.mxu0 %v1276
    %4911 = vmatprep.subr.mxu0 %v1281
    %4912 = vmatpush1.msra.mxu0 %v1280
    %4913 = vmatprep.subr.mxu0 %v1285
    %4914 = vmatpush1.msra.mxu0 %v1284
    %4915 = vmatprep.subr.mxu0 %v1289
    %4916 = vmatpush1.msra.mxu0 %v1288
    %4917 = vmatprep.subr.mxu0 %v1293
    %4918 = vmatpush1.msra.mxu0 %v1292
    %4919 = vmatprep.subr.mxu0 %v1297
    %4920 = vmatpush1.msra.mxu0 %v1296
    %4921 = vmatprep.subr.mxu0 %v1301
    %4922 = vmatpush1.msra.mxu0 %v1300
    %4923 = vmatprep.subr.mxu0 %v1305
    %4924 = vmatpush1.msra.mxu0 %v1304
    %4925 = vmatprep.subr.mxu0 %v1309
    %4926 = vmatpush1.msra.mxu0 %v1308
    %4927 = vmatprep.subr.mxu0 %v1313
    %4928 = vmatpush1.msra.mxu0 %v1312
    %4929 = vmatprep.subr.mxu0 %v1317
    %4930 = vmatpush1.msra.mxu0 %v1316
    %4931 = vmatprep.subr.mxu0 0.0
    %4932 = vmatpush1.msra.mxu0 0.0
    %4933 = vmatprep.subr.mxu0 0.0
    %4934 = vmatpush1.msra.mxu0 0.0
    %4935 = vmatprep.subr.mxu0 0.0
    %4936 = vmatpush1.msra.mxu0 0.0
    %4937 = vmatprep.subr.mxu0 0.0
    %4938 = vmatpush1.msra.mxu0 0.0
    %4939 = vmatprep.subr.mxu0 0.0
    %4940 = vmatpush1.msra.mxu0 0.0
    %4941 = vmatprep.subr.mxu0 0.0
    %4942 = vmatpush1.msra.mxu0 0.0
    %4943 = vmatprep.subr.mxu0 0.0
    %4944 = vmatpush1.msra.mxu0 0.0
    %4945 = vmatprep.subr.mxu0 0.0
    %4946 = vmatpush1.msra.mxu0 0.0
    %4947 = vmatprep.subr.mxu0 0.0
    %4948 = vmatpush1.msra.mxu0 0.0
    %4949 = vmatprep.subr.mxu0 0.0
    %4950 = vmatpush1.msra.mxu0 0.0
    %4951 = vmatprep.subr.mxu0 0.0
    %4952 = vmatpush1.msra.mxu0 0.0
    %4953 = vmatprep.subr.mxu0 0.0
    %4954 = vmatpush1.msra.mxu0 0.0
    %4955 = vmatprep.subr.mxu0 0.0
    %4956 = vmatpush1.msra.mxu0 0.0
    %4957 = vmatprep.subr.mxu0 0.0
    %4958 = vmatpush1.msra.mxu0 0.0
    %4959 = vmatprep.subr.mxu0 0.0
    %4960 = vmatpush1.msra.mxu0 0.0
    %4961 = vmatprep.subr.mxu0 0.0
    %4962 = vmatpush1.msra.mxu0 0.0
    %4963 = vmatprep.mubr.f32.mxu0 0.0
    %4964 = vmatmul.mubr.f32.gmra.mrb[0].mxu0 %v4898
    %v4965 = vpop.f32.mrb[0].mxu0
    %v4966 = vadd.f32 %v1324, %v4965
    %v4967 = vpop.f32.mrb[0].mxu0
    %v4968 = vadd.f32 %v1328, %v4967
    %4969 = vdwg.mxu0
    %4970 = vmatprep.subr.mxu0 %v1259
    %4971 = vmatpush1.msra.mxu0 %v1258
    %4972 = vmatprep.subr.mxu0 %v1263
    %4973 = vmatpush1.msra.mxu0 %v1262
    %4974 = vmatprep.subr.mxu0 %v1267
    %4975 = vmatpush1.msra.mxu0 %v1266
    %4976 = vmatprep.subr.mxu0 %v1271
    %4977 = vmatpush1.msra.mxu0 %v1270
    %4978 = vmatprep.subr.mxu0 %v1275
    %4979 = vmatpush1.msra.mxu0 %v1274
    %4980 = vmatprep.subr.mxu0 %v1279
    %4981 = vmatpush1.msra.mxu0 %v1278
    %4982 = vmatprep.subr.mxu0 %v1283
    %4983 = vmatpush1.msra.mxu0 %v1282
    %4984 = vmatprep.subr.mxu0 %v1287
    %4985 = vmatpush1.msra.mxu0 %v1286
    %4986 = vmatprep.subr.mxu0 %v1291
    %4987 = vmatpush1.msra.mxu0 %v1290
    %4988 = vmatprep.subr.mxu0 %v1295
    %4989 = vmatpush1.msra.mxu0 %v1294
    %4990 = vmatprep.subr.mxu0 %v1299
    %4991 = vmatpush1.msra.mxu0 %v1298
    %4992 = vmatprep.subr.mxu0 %v1303
    %4993 = vmatpush1.msra.mxu0 %v1302
    %4994 = vmatprep.subr.mxu0 %v1307
    %4995 = vmatpush1.msra.mxu0 %v1306
    %4996 = vmatprep.subr.mxu0 %v1311
    %4997 = vmatpush1.msra.mxu0 %v1310
    %4998 = vmatprep.subr.mxu0 %v1315
    %4999 = vmatpush1.msra.mxu0 %v1314
    %5000 = vmatprep.subr.mxu0 %v1319
    %5001 = vmatpush1.msra.mxu0 %v1318
    %5002 = vmatprep.subr.mxu0 0.0
    %5003 = vmatpush1.msra.mxu0 0.0
    %5004 = vmatprep.subr.mxu0 0.0
    %5005 = vmatpush1.msra.mxu0 0.0
    %5006 = vmatprep.subr.mxu0 0.0
    %5007 = vmatpush1.msra.mxu0 0.0
    %5008 = vmatprep.subr.mxu0 0.0
    %5009 = vmatpush1.msra.mxu0 0.0
    %5010 = vmatprep.subr.mxu0 0.0
    %5011 = vmatpush1.msra.mxu0 0.0
    %5012 = vmatprep.subr.mxu0 0.0
    %5013 = vmatpush1.msra.mxu0 0.0
    %5014 = vmatprep.subr.mxu0 0.0
    %5015 = vmatpush1.msra.mxu0 0.0
    %5016 = vmatprep.subr.mxu0 0.0
    %5017 = vmatpush1.msra.mxu0 0.0
    %5018 = vmatprep.subr.mxu0 0.0
    %5019 = vmatpush1.msra.mxu0 0.0
    %5020 = vmatprep.subr.mxu0 0.0
    %5021 = vmatpush1.msra.mxu0 0.0
    %5022 = vmatprep.subr.mxu0 0.0
    %5023 = vmatpush1.msra.mxu0 0.0
    %5024 = vmatprep.subr.mxu0 0.0
    %5025 = vmatpush1.msra.mxu0 0.0
    %5026 = vmatprep.subr.mxu0 0.0
    %5027 = vmatpush1.msra.mxu0 0.0
    %5028 = vmatprep.subr.mxu0 0.0
    %5029 = vmatpush1.msra.mxu0 0.0
    %5030 = vmatprep.subr.mxu0 0.0
    %5031 = vmatpush1.msra.mxu0 0.0
    %5032 = vmatprep.subr.mxu0 0.0
    %5033 = vmatpush1.msra.mxu0 0.0
    %5034 = vmatprep.mubr.f32.mxu0 0.0
    %5035 = vmatmul.mubr.f32.gmra.mrb[0].mxu0 %v4898
    %v5036 = vpop.f32.mrb[0].mxu0
    %v5037 = vadd.f32 %v1332, %v5036
    %v5038 = vpop.f32.mrb[0].mxu0
    %v5039 = vadd.f32 %v1336, %v5038
    %5040 = vdwg.mxu0
    %5041 = vmatprep.subr.mxu0 %v1484
    %5042 = vmatpush1.msra.mxu0 %v1483
    %5043 = vmatprep.subr.mxu0 %v1488
    %5044 = vmatpush1.msra.mxu0 %v1487
    %5045 = vmatprep.subr.mxu0 %v1492
    %5046 = vmatpush1.msra.mxu0 %v1491
    %5047 = vmatprep.subr.mxu0 %v1496
    %5048 = vmatpush1.msra.mxu0 %v1495
    %5049 = vmatprep.subr.mxu0 %v1500
    %5050 = vmatpush1.msra.mxu0 %v1499
    %5051 = vmatprep.subr.mxu0 %v1504
    %5052 = vmatpush1.msra.mxu0 %v1503
    %5053 = vmatprep.subr.mxu0 %v1508
    %5054 = vmatpush1.msra.mxu0 %v1507
    %5055 = vmatprep.subr.mxu0 %v1512
    %5056 = vmatpush1.msra.mxu0 %v1511
    %5057 = vmatprep.subr.mxu0 %v1516
    %5058 = vmatpush1.msra.mxu0 %v1515
    %5059 = vmatprep.subr.mxu0 %v1520
    %5060 = vmatpush1.msra.mxu0 %v1519
    %5061 = vmatprep.subr.mxu0 %v1524
    %5062 = vmatpush1.msra.mxu0 %v1523
    %5063 = vmatprep.subr.mxu0 %v1528
    %5064 = vmatpush1.msra.mxu0 %v1527
    %5065 = vmatprep.subr.mxu0 %v1532
    %5066 = vmatpush1.msra.mxu0 %v1531
    %5067 = vmatprep.subr.mxu0 %v1536
    %5068 = vmatpush1.msra.mxu0 %v1535
    %5069 = vmatprep.subr.mxu0 %v1540
    %5070 = vmatpush1.msra.mxu0 %v1539
    %5071 = vmatprep.subr.mxu0 %v1544
    %5072 = vmatpush1.msra.mxu0 %v1543
    %5073 = vmatprep.subr.mxu0 0.0
    %5074 = vmatpush1.msra.mxu0 0.0
    %5075 = vmatprep.subr.mxu0 0.0
    %5076 = vmatpush1.msra.mxu0 0.0
    %5077 = vmatprep.subr.mxu0 0.0
    %5078 = vmatpush1.msra.mxu0 0.0
    %5079 = vmatprep.subr.mxu0 0.0
    %5080 = vmatpush1.msra.mxu0 0.0
    %5081 = vmatprep.subr.mxu0 0.0
    %5082 = vmatpush1.msra.mxu0 0.0
    %5083 = vmatprep.subr.mxu0 0.0
    %5084 = vmatpush1.msra.mxu0 0.0
    %5085 = vmatprep.subr.mxu0 0.0
    %5086 = vmatpush1.msra.mxu0 0.0
    %5087 = vmatprep.subr.mxu0 0.0
    %5088 = vmatpush1.msra.mxu0 0.0
    %5089 = vmatprep.subr.mxu0 0.0
    %5090 = vmatpush1.msra.mxu0 0.0
    %5091 = vmatprep.subr.mxu0 0.0
    %5092 = vmatpush1.msra.mxu0 0.0
    %5093 = vmatprep.subr.mxu0 0.0
    %5094 = vmatpush1.msra.mxu0 0.0
    %5095 = vmatprep.subr.mxu0 0.0
    %5096 = vmatpush1.msra.mxu0 0.0
    %5097 = vmatprep.subr.mxu0 0.0
    %5098 = vmatpush1.msra.mxu0 0.0
    %5099 = vmatprep.subr.mxu0 0.0
    %5100 = vmatpush1.msra.mxu0 0.0
    %5101 = vmatprep.subr.mxu0 0.0
    %5102 = vmatpush1.msra.mxu0 0.0
    %5103 = vmatprep.subr.mxu0 0.0
    %5104 = vmatpush1.msra.mxu0 0.0
    %5105 = vmatprep.mubr.f32.mxu0 0.0
    %5106 = vmatmul.mubr.f32.gmra.mrb[0].mxu0 %v4089
    %v5107 = vpop.f32.mrb[0].mxu0
    %v5108 = vadd.f32 0.0, %v5107
    %v5109 = vpop.f32.mrb[0].mxu0
    %v5110 = vadd.f32 0.0, %v5109
    %5111 = vdwg.mxu0
    %5112 = vmatprep.subr.mxu0 %v1486
    %5113 = vmatpush1.msra.mxu0 %v1485
    %5114 = vmatprep.subr.mxu0 %v1490
    %5115 = vmatpush1.msra.mxu0 %v1489
    %5116 = vmatprep.subr.mxu0 %v1494
    %5117 = vmatpush1.msra.mxu0 %v1493
    %5118 = vmatprep.subr.mxu0 %v1498
    %5119 = vmatpush1.msra.mxu0 %v1497
    %5120 = vmatprep.subr.mxu0 %v1502
    %5121 = vmatpush1.msra.mxu0 %v1501
    %5122 = vmatprep.subr.mxu0 %v1506
    %5123 = vmatpush1.msra.mxu0 %v1505
    %5124 = vmatprep.subr.mxu0 %v1510
    %5125 = vmatpush1.msra.mxu0 %v1509
    %5126 = vmatprep.subr.mxu0 %v1514
    %5127 = vmatpush1.msra.mxu0 %v1513
    %5128 = vmatprep.subr.mxu0 %v1518
    %5129 = vmatpush1.msra.mxu0 %v1517
    %5130 = vmatprep.subr.mxu0 %v1522
    %5131 = vmatpush1.msra.mxu0 %v1521
    %5132 = vmatprep.subr.mxu0 %v1526
    %5133 = vmatpush1.msra.mxu0 %v1525
    %5134 = vmatprep.subr.mxu0 %v1530
    %5135 = vmatpush1.msra.mxu0 %v1529
    %5136 = vmatprep.subr.mxu0 %v1534
    %5137 = vmatpush1.msra.mxu0 %v1533
    %5138 = vmatprep.subr.mxu0 %v1538
    %5139 = vmatpush1.msra.mxu0 %v1537
    %5140 = vmatprep.subr.mxu0 %v1542
    %5141 = vmatpush1.msra.mxu0 %v1541
    %5142 = vmatprep.subr.mxu0 %v1546
    %5143 = vmatpush1.msra.mxu0 %v1545
    %5144 = vmatprep.subr.mxu0 0.0
    %5145 = vmatpush1.msra.mxu0 0.0
    %5146 = vmatprep.subr.mxu0 0.0
    %5147 = vmatpush1.msra.mxu0 0.0
    %5148 = vmatprep.subr.mxu0 0.0
    %5149 = vmatpush1.msra.mxu0 0.0
    %5150 = vmatprep.subr.mxu0 0.0
    %5151 = vmatpush1.msra.mxu0 0.0
    %5152 = vmatprep.subr.mxu0 0.0
    %5153 = vmatpush1.msra.mxu0 0.0
    %5154 = vmatprep.subr.mxu0 0.0
    %5155 = vmatpush1.msra.mxu0 0.0
    %5156 = vmatprep.subr.mxu0 0.0
    %5157 = vmatpush1.msra.mxu0 0.0
    %5158 = vmatprep.subr.mxu0 0.0
    %5159 = vmatpush1.msra.mxu0 0.0
    %5160 = vmatprep.subr.mxu0 0.0
    %5161 = vmatpush1.msra.mxu0 0.0
    %5162 = vmatprep.subr.mxu0 0.0
    %5163 = vmatpush1.msra.mxu0 0.0
    %5164 = vmatprep.subr.mxu0 0.0
    %5165 = vmatpush1.msra.mxu0 0.0
    %5166 = vmatprep.subr.mxu0 0.0
    %5167 = vmatpush1.msra.mxu0 0.0
    %5168 = vmatprep.subr.mxu0 0.0
    %5169 = vmatpush1.msra.mxu0 0.0
    %5170 = vmatprep.subr.mxu0 0.0
    %5171 = vmatpush1.msra.mxu0 0.0
    %5172 = vmatprep.subr.mxu0 0.0
    %5173 = vmatpush1.msra.mxu0 0.0
    %5174 = vmatprep.subr.mxu0 0.0
    %5175 = vmatpush1.msra.mxu0 0.0
    %5176 = vmatprep.mubr.f32.mxu0 0.0
    %5177 = vmatmul.mubr.f32.gmra.mrb[0].mxu0 %v4089
    %v5178 = vpop.f32.mrb[0].mxu0
    %v5179 = vadd.f32 0.0, %v5178
    %v5180 = vpop.f32.mrb[0].mxu0
    %v5181 = vadd.f32 0.0, %v5180
    %5182 = vdwg.mxu0
    %v5183 = vadd.f32 %v4966, %v5108
    %v5184 = vadd.f32 %v4968, %v5110
    %v5185 = vadd.f32 %v5037, %v5179
    %v5186 = vadd.f32 %v5039, %v5181
    %v5187 = vmul.f32 %v5183, 0.5
    %v5188 = vmul.f32 %v5184, 0.5
    %v5189 = vmul.f32 %v5185, 0.5
    %v5190 = vtanh.pop %v5187
    %v5191 = vtanh.pop %v5188
    %v5192 = vtanh.pop %v5189
    %v5193 = vadd.f32 %v5190, 1.0
    %v5194 = vadd.f32 %v5191, 1.0
    %v5195 = vadd.f32 %v5192, 1.0
    %v5196 = vmul.f32 %v5193, 0.5
    %v5197 = vmul.f32 %v5194, 0.5
    %v5198 = vmul.f32 %v5195, 0.5
    %v5199 = vtanh.pop %v5186
    %v5200 = vmul.f32 %v5197, %v4087
    %v5201 = vmul.f32 %v5196, %v5199
    %v5202 = vadd.f32 %v5200, %v5201
    %v5203 = vtanh.pop %v5202
    %v5204 = vmul.f32 %v5198, %v5203
    %v5205 = vmul.f32 %v4584, 0.5
    %v5206 = vtanh.pop %v5205
    %v5207 = vadd.f32 %v5206, 1.0
    %v5208 = vmul.f32 %v5207, 0.5
    %v5210 = vrot.slane %v5208, 4
    %5212 = vmatprep.subr.mxu0 %v619
    %5213 = vmatpush1.msra.mxu0 %v618
    %5214 = vmatprep.subr.mxu0 %v623
    %5215 = vmatpush1.msra.mxu0 %v622
    %5216 = vmatprep.subr.mxu0 %v627
    %5217 = vmatpush1.msra.mxu0 %v626
    %5218 = vmatprep.subr.mxu0 %v631
    %5219 = vmatpush1.msra.mxu0 %v630
    %5220 = vmatprep.subr.mxu0 %v635
    %5221 = vmatpush1.msra.mxu0 %v634
    %5222 = vmatprep.subr.mxu0 %v639
    %5223 = vmatpush1.msra.mxu0 %v638
    %5224 = vmatprep.subr.mxu0 %v643
    %5225 = vmatpush1.msra.mxu0 %v642
    %5226 = vmatprep.subr.mxu0 %v647
    %5227 = vmatpush1.msra.mxu0 %v646
    %5228 = vmatprep.subr.mxu0 %v651
    %5229 = vmatpush1.msra.mxu0 %v650
    %5230 = vmatprep.subr.mxu0 %v655
    %5231 = vmatpush1.msra.mxu0 %v654
    %5232 = vmatprep.subr.mxu0 %v659
    %5233 = vmatpush1.msra.mxu0 %v658
    %5234 = vmatprep.subr.mxu0 %v663
    %5235 = vmatpush1.msra.mxu0 %v662
    %5236 = vmatprep.subr.mxu0 %v667
    %5237 = vmatpush1.msra.mxu0 %v666
    %5238 = vmatprep.subr.mxu0 %v671
    %5239 = vmatpush1.msra.mxu0 %v670
    %5240 = vmatprep.subr.mxu0 %v675
    %5241 = vmatpush1.msra.mxu0 %v674
    %5242 = vmatprep.subr.mxu0 %v679
    %5243 = vmatpush1.msra.mxu0 %v678
    %5244 = vmatprep.subr.mxu0 0.0
    %5245 = vmatpush1.msra.mxu0 0.0
    %5246 = vmatprep.subr.mxu0 0.0
    %5247 = vmatpush1.msra.mxu0 0.0
    %5248 = vmatprep.subr.mxu0 0.0
    %5249 = vmatpush1.msra.mxu0 0.0
    %5250 = vmatprep.subr.mxu0 0.0
    %5251 = vmatpush1.msra.mxu0 0.0
    %5252 = vmatprep.subr.mxu0 0.0
    %5253 = vmatpush1.msra.mxu0 0.0
    %5254 = vmatprep.subr.mxu0 0.0
    %5255 = vmatpush1.msra.mxu0 0.0
    %5256 = vmatprep.subr.mxu0 0.0
    %5257 = vmatpush1.msra.mxu0 0.0
    %5258 = vmatprep.subr.mxu0 0.0
    %5259 = vmatpush1.msra.mxu0 0.0
    %5260 = vmatprep.subr.mxu0 0.0
    %5261 = vmatpush1.msra.mxu0 0.0
    %5262 = vmatprep.subr.mxu0 0.0
    %5263 = vmatpush1.msra.mxu0 0.0
    %5264 = vmatprep.subr.mxu0 0.0
    %5265 = vmatpush1.msra.mxu0 0.0
    %5266 = vmatprep.subr.mxu0 0.0
    %5267 = vmatpush1.msra.mxu0 0.0
    %5268 = vmatprep.subr.mxu0 0.0
    %5269 = vmatpush1.msra.mxu0 0.0
    %5270 = vmatprep.subr.mxu0 0.0
    %5271 = vmatpush1.msra.mxu0 0.0
    %5272 = vmatprep.subr.mxu0 0.0
    %5273 = vmatpush1.msra.mxu0 0.0
    %5274 = vmatprep.subr.mxu0 0.0
    %5275 = vmatpush1.msra.mxu0 0.0
    %5276 = vmatprep.mubr.f32.mxu0 0.0
    %5277 = vmatmul.mubr.f32.gmra.mrb[0].mxu0 %v5210
    %v5278 = vpop.f32.mrb[0].mxu0
    %v5279 = vadd.f32 %v686, %v5278
    %v5280 = vpop.f32.mrb[0].mxu0
    %v5281 = vadd.f32 %v690, %v5280
    %5282 = vdwg.mxu0
    %5283 = vmatprep.subr.mxu0 %v621
    %5284 = vmatpush1.msra.mxu0 %v620
    %5285 = vmatprep.subr.mxu0 %v625
    %5286 = vmatpush1.msra.mxu0 %v624
    %5287 = vmatprep.subr.mxu0 %v629
    %5288 = vmatpush1.msra.mxu0 %v628
    %5289 = vmatprep.subr.mxu0 %v633
    %5290 = vmatpush1.msra.mxu0 %v632
    %5291 = vmatprep.subr.mxu0 %v637
    %5292 = vmatpush1.msra.mxu0 %v636
    %5293 = vmatprep.subr.mxu0 %v641
    %5294 = vmatpush1.msra.mxu0 %v640
    %5295 = vmatprep.subr.mxu0 %v645
    %5296 = vmatpush1.msra.mxu0 %v644
    %5297 = vmatprep.subr.mxu0 %v649
    %5298 = vmatpush1.msra.mxu0 %v648
    %5299 = vmatprep.subr.mxu0 %v653
    %5300 = vmatpush1.msra.mxu0 %v652
    %5301 = vmatprep.subr.mxu0 %v657
    %5302 = vmatpush1.msra.mxu0 %v656
    %5303 = vmatprep.subr.mxu0 %v661
    %5304 = vmatpush1.msra.mxu0 %v660
    %5305 = vmatprep.subr.mxu0 %v665
    %5306 = vmatpush1.msra.mxu0 %v664
    %5307 = vmatprep.subr.mxu0 %v669
    %5308 = vmatpush1.msra.mxu0 %v668
    %5309 = vmatprep.subr.mxu0 %v673
    %5310 = vmatpush1.msra.mxu0 %v672
    %5311 = vmatprep.subr.mxu0 %v677
    %5312 = vmatpush1.msra.mxu0 %v676
    %5313 = vmatprep.subr.mxu0 %v681
    %5314 = vmatpush1.msra.mxu0 %v680
    %5315 = vmatprep.subr.mxu0 0.0
    %5316 = vmatpush1.msra.mxu0 0.0
    %5317 = vmatprep.subr.mxu0 0.0
    %5318 = vmatpush1.msra.mxu0 0.0
    %5319 = vmatprep.subr.mxu0 0.0
    %5320 = vmatpush1.msra.mxu0 0.0
    %5321 = vmatprep.subr.mxu0 0.0
    %5322 = vmatpush1.msra.mxu0 0.0
    %5323 = vmatprep.subr.mxu0 0.0
    %5324 = vmatpush1.msra.mxu0 0.0
    %5325 = vmatprep.subr.mxu0 0.0
    %5326 = vmatpush1.msra.mxu0 0.0
    %5327 = vmatprep.subr.mxu0 0.0
    %5328 = vmatpush1.msra.mxu0 0.0
    %5329 = vmatprep.subr.mxu0 0.0
    %5330 = vmatpush1.msra.mxu0 0.0
    %5331 = vmatprep.subr.mxu0 0.0
    %5332 = vmatpush1.msra.mxu0 0.0
    %5333 = vmatprep.subr.mxu0 0.0
    %5334 = vmatpush1.msra.mxu0 0.0
    %5335 = vmatprep.subr.mxu0 0.0
    %5336 = vmatpush1.msra.mxu0 0.0
    %5337 = vmatprep.subr.mxu0 0.0
    %5338 = vmatpush1.msra.mxu0 0.0
    %5339 = vmatprep.subr.mxu0 0.0
    %5340 = vmatpush1.msra.mxu0 0.0
    %5341 = vmatprep.subr.mxu0 0.0
    %5342 = vmatpush1.msra.mxu0 0.0
    %5343 = vmatprep.subr.mxu0 0.0
    %5344 = vmatpush1.msra.mxu0 0.0
    %5345 = vmatprep.subr.mxu0 0.0
    %5346 = vmatpush1.msra.mxu0 0.0
    %5347 = vmatprep.mubr.f32.mxu0 0.0
    %5348 = vmatmul.mubr.f32.gmra.mrb[0].mxu0 %v5210
    %v5349 = vpop.f32.mrb[0].mxu0
    %v5350 = vadd.f32 %v694, %v5349
    %v5351 = vpop.f32.mrb[0].mxu0
    %v5352 = vadd.f32 %v698, %v5351
    %5353 = vdwg.mxu0
    %5354 = vmatprep.subr.mxu0 %v846
    %5355 = vmatpush1.msra.mxu0 %v845
    %5356 = vmatprep.subr.mxu0 %v850
    %5357 = vmatpush1.msra.mxu0 %v849
    %5358 = vmatprep.subr.mxu0 %v854
    %5359 = vmatpush1.msra.mxu0 %v853
    %5360 = vmatprep.subr.mxu0 %v858
    %5361 = vmatpush1.msra.mxu0 %v857
    %5362 = vmatprep.subr.mxu0 %v862
    %5363 = vmatpush1.msra.mxu0 %v861
    %5364 = vmatprep.subr.mxu0 %v866
    %5365 = vmatpush1.msra.mxu0 %v865
    %5366 = vmatprep.subr.mxu0 %v870
    %5367 = vmatpush1.msra.mxu0 %v869
    %5368 = vmatprep.subr.mxu0 %v874
    %5369 = vmatpush1.msra.mxu0 %v873
    %5370 = vmatprep.subr.mxu0 %v878
    %5371 = vmatpush1.msra.mxu0 %v877
    %5372 = vmatprep.subr.mxu0 %v882
    %5373 = vmatpush1.msra.mxu0 %v881
    %5374 = vmatprep.subr.mxu0 %v886
    %5375 = vmatpush1.msra.mxu0 %v885
    %5376 = vmatprep.subr.mxu0 %v890
    %5377 = vmatpush1.msra.mxu0 %v889
    %5378 = vmatprep.subr.mxu0 %v894
    %5379 = vmatpush1.msra.mxu0 %v893
    %5380 = vmatprep.subr.mxu0 %v898
    %5381 = vmatpush1.msra.mxu0 %v897
    %5382 = vmatprep.subr.mxu0 %v902
    %5383 = vmatpush1.msra.mxu0 %v901
    %5384 = vmatprep.subr.mxu0 %v906
    %5385 = vmatpush1.msra.mxu0 %v905
    %5386 = vmatprep.subr.mxu0 0.0
    %5387 = vmatpush1.msra.mxu0 0.0
    %5388 = vmatprep.subr.mxu0 0.0
    %5389 = vmatpush1.msra.mxu0 0.0
    %5390 = vmatprep.subr.mxu0 0.0
    %5391 = vmatpush1.msra.mxu0 0.0
    %5392 = vmatprep.subr.mxu0 0.0
    %5393 = vmatpush1.msra.mxu0 0.0
    %5394 = vmatprep.subr.mxu0 0.0
    %5395 = vmatpush1.msra.mxu0 0.0
    %5396 = vmatprep.subr.mxu0 0.0
    %5397 = vmatpush1.msra.mxu0 0.0
    %5398 = vmatprep.subr.mxu0 0.0
    %5399 = vmatpush1.msra.mxu0 0.0
    %5400 = vmatprep.subr.mxu0 0.0
    %5401 = vmatpush1.msra.mxu0 0.0
    %5402 = vmatprep.subr.mxu0 0.0
    %5403 = vmatpush1.msra.mxu0 0.0
    %5404 = vmatprep.subr.mxu0 0.0
    %5405 = vmatpush1.msra.mxu0 0.0
    %5406 = vmatprep.subr.mxu0 0.0
    %5407 = vmatpush1.msra.mxu0 0.0
    %5408 = vmatprep.subr.mxu0 0.0
    %5409 = vmatpush1.msra.mxu0 0.0
    %5410 = vmatprep.subr.mxu0 0.0
    %5411 = vmatpush1.msra.mxu0 0.0
    %5412 = vmatprep.subr.mxu0 0.0
    %5413 = vmatpush1.msra.mxu0 0.0
    %5414 = vmatprep.subr.mxu0 0.0
    %5415 = vmatpush1.msra.mxu0 0.0
    %5416 = vmatprep.subr.mxu0 0.0
    %5417 = vmatpush1.msra.mxu0 0.0
    %5418 = vmatprep.mubr.f32.mxu0 0.0
    %5419 = vmatmul.mubr.f32.gmra.mrb[0].mxu0 %v4402
    %v5420 = vpop.f32.mrb[0].mxu0
    %v5421 = vadd.f32 0.0, %v5420
    %v5422 = vpop.f32.mrb[0].mxu0
    %v5423 = vadd.f32 0.0, %v5422
    %5424 = vdwg.mxu0
    %5425 = vmatprep.subr.mxu0 %v848
    %5426 = vmatpush1.msra.mxu0 %v847
    %5427 = vmatprep.subr.mxu0 %v852
    %5428 = vmatpush1.msra.mxu0 %v851
    %5429 = vmatprep.subr.mxu0 %v856
    %5430 = vmatpush1.msra.mxu0 %v855
    %5431 = vmatprep.subr.mxu0 %v860
    %5432 = vmatpush1.msra.mxu0 %v859
    %5433 = vmatprep.subr.mxu0 %v864
    %5434 = vmatpush1.msra.mxu0 %v863
    %5435 = vmatprep.subr.mxu0 %v868
    %5436 = vmatpush1.msra.mxu0 %v867
    %5437 = vmatprep.subr.mxu0 %v872
    %5438 = vmatpush1.msra.mxu0 %v871
    %5439 = vmatprep.subr.mxu0 %v876
    %5440 = vmatpush1.msra.mxu0 %v875
    %5441 = vmatprep.subr.mxu0 %v880
    %5442 = vmatpush1.msra.mxu0 %v879
    %5443 = vmatprep.subr.mxu0 %v884
    %5444 = vmatpush1.msra.mxu0 %v883
    %5445 = vmatprep.subr.mxu0 %v888
    %5446 = vmatpush1.msra.mxu0 %v887
    %5447 = vmatprep.subr.mxu0 %v892
    %5448 = vmatpush1.msra.mxu0 %v891
    %5449 = vmatprep.subr.mxu0 %v896
    %5450 = vmatpush1.msra.mxu0 %v895
    %5451 = vmatprep.subr.mxu0 %v900
    %5452 = vmatpush1.msra.mxu0 %v899
    %5453 = vmatprep.subr.mxu0 %v904
    %5454 = vmatpush1.msra.mxu0 %v903
    %5455 = vmatprep.subr.mxu0 %v908
    %5456 = vmatpush1.msra.mxu0 %v907
    %5457 = vmatprep.subr.mxu0 0.0
    %5458 = vmatpush1.msra.mxu0 0.0
    %5459 = vmatprep.subr.mxu0 0.0
    %5460 = vmatpush1.msra.mxu0 0.0
    %5461 = vmatprep.subr.mxu0 0.0
    %5462 = vmatpush1.msra.mxu0 0.0
    %5463 = vmatprep.subr.mxu0 0.0
    %5464 = vmatpush1.msra.mxu0 0.0
    %5465 = vmatprep.subr.mxu0 0.0
    %5466 = vmatpush1.msra.mxu0 0.0
    %5467 = vmatprep.subr.mxu0 0.0
    %5468 = vmatpush1.msra.mxu0 0.0
    %5469 = vmatprep.subr.mxu0 0.0
    %5470 = vmatpush1.msra.mxu0 0.0
    %5471 = vmatprep.subr.mxu0 0.0
    %5472 = vmatpush1.msra.mxu0 0.0
    %5473 = vmatprep.subr.mxu0 0.0
    %5474 = vmatpush1.msra.mxu0 0.0
    %5475 = vmatprep.subr.mxu0 0.0
    %5476 = vmatpush1.msra.mxu0 0.0
    %5477 = vmatprep.subr.mxu0 0.0
    %5478 = vmatpush1.msra.mxu0 0.0
    %5479 = vmatprep.subr.mxu0 0.0
    %5480 = vmatpush1.msra.mxu0 0.0
    %5481 = vmatprep.subr.mxu0 0.0
    %5482 = vmatpush1.msra.mxu0 0.0
    %5483 = vmatprep.subr.mxu0 0.0
    %5484 = vmatpush1.msra.mxu0 0.0
    %5485 = vmatprep.subr.mxu0 0.0
    %5486 = vmatpush1.msra.mxu0 0.0
    %5487 = vmatprep.subr.mxu0 0.0
    %5488 = vmatpush1.msra.mxu0 0.0
    %5489 = vmatprep.mubr.f32.mxu0 0.0
    %5490 = vmatmul.mubr.f32.gmra.mrb[0].mxu0 %v4402
    %v5491 = vpop.f32.mrb[0].mxu0
    %v5492 = vadd.f32 0.0, %v5491
    %v5493 = vpop.f32.mrb[0].mxu0
    %v5494 = vadd.f32 0.0, %v5493
    %5495 = vdwg.mxu0
    %v5496 = vadd.f32 %v5279, %v5421
    %v5497 = vadd.f32 %v5281, %v5423
    %v5498 = vadd.f32 %v5350, %v5492
    %v5499 = vadd.f32 %v5352, %v5494
    %v5500 = vmul.f32 %v5496, 0.5
    %v5501 = vmul.f32 %v5497, 0.5
    %v5502 = vmul.f32 %v5498, 0.5
    %v5503 = vtanh.pop %v5500
    %v5504 = vtanh.pop %v5501
    %v5505 = vtanh.pop %v5502
    %v5506 = vadd.f32 %v5503, 1.0
    %v5507 = vadd.f32 %v5504, 1.0
    %v5508 = vadd.f32 %v5505, 1.0
    %v5509 = vmul.f32 %v5506, 0.5
    %v5510 = vmul.f32 %v5507, 0.5
    %v5511 = vmul.f32 %v5508, 0.5
    %v5512 = vtanh.pop %v5499
    %v5513 = vmul.f32 %v5510, %v4400
    %v5514 = vmul.f32 %v5509, %v5512
    %v5515 = vadd.f32 %v5513, %v5514
    %v5516 = vtanh.pop %v5515
    %v5517 = vmul.f32 %v5511, %v5516
    %v5519 = vrot.slane %v4584, 4
    %5521 = vmatprep.subr.mxu0 %v387
    %5522 = vmatpush1.msra.mxu0 %v386
    %5523 = vmatprep.subr.mxu0 %v391
    %5524 = vmatpush1.msra.mxu0 %v390
    %5525 = vmatprep.subr.mxu0 %v395
    %5526 = vmatpush1.msra.mxu0 %v394
    %5527 = vmatprep.subr.mxu0 %v399
    %5528 = vmatpush1.msra.mxu0 %v398
    %5529 = vmatprep.subr.mxu0 %v403
    %5530 = vmatpush1.msra.mxu0 %v402
    %5531 = vmatprep.subr.mxu0 %v407
    %5532 = vmatpush1.msra.mxu0 %v406
    %5533 = vmatprep.subr.mxu0 %v411
    %5534 = vmatpush1.msra.mxu0 %v410
    %5535 = vmatprep.subr.mxu0 %v415
    %5536 = vmatpush1.msra.mxu0 %v414
    %5537 = vmatprep.subr.mxu0 %v419
    %5538 = vmatpush1.msra.mxu0 %v418
    %5539 = vmatprep.subr.mxu0 %v423
    %5540 = vmatpush1.msra.mxu0 %v422
    %5541 = vmatprep.subr.mxu0 %v427
    %5542 = vmatpush1.msra.mxu0 %v426
    %5543 = vmatprep.subr.mxu0 %v431
    %5544 = vmatpush1.msra.mxu0 %v430
    %5545 = vmatprep.subr.mxu0 %v435
    %5546 = vmatpush1.msra.mxu0 %v434
    %5547 = vmatprep.subr.mxu0 %v439
    %5548 = vmatpush1.msra.mxu0 %v438
    %5549 = vmatprep.subr.mxu0 %v443
    %5550 = vmatpush1.msra.mxu0 %v442
    %5551 = vmatprep.subr.mxu0 %v447
    %5552 = vmatpush1.msra.mxu0 %v446
    %5553 = vmatprep.subr.mxu0 0.0
    %5554 = vmatpush1.msra.mxu0 0.0
    %5555 = vmatprep.subr.mxu0 0.0
    %5556 = vmatpush1.msra.mxu0 0.0
    %5557 = vmatprep.subr.mxu0 0.0
    %5558 = vmatpush1.msra.mxu0 0.0
    %5559 = vmatprep.subr.mxu0 0.0
    %5560 = vmatpush1.msra.mxu0 0.0
    %5561 = vmatprep.subr.mxu0 0.0
    %5562 = vmatpush1.msra.mxu0 0.0
    %5563 = vmatprep.subr.mxu0 0.0
    %5564 = vmatpush1.msra.mxu0 0.0
    %5565 = vmatprep.subr.mxu0 0.0
    %5566 = vmatpush1.msra.mxu0 0.0
    %5567 = vmatprep.subr.mxu0 0.0
    %5568 = vmatpush1.msra.mxu0 0.0
    %5569 = vmatprep.subr.mxu0 0.0
    %5570 = vmatpush1.msra.mxu0 0.0
    %5571 = vmatprep.subr.mxu0 0.0
    %5572 = vmatpush1.msra.mxu0 0.0
    %5573 = vmatprep.subr.mxu0 0.0
    %5574 = vmatpush1.msra.mxu0 0.0
    %5575 = vmatprep.subr.mxu0 0.0
    %5576 = vmatpush1.msra.mxu0 0.0
    %5577 = vmatprep.subr.mxu0 0.0
    %5578 = vmatpush1.msra.mxu0 0.0
    %5579 = vmatprep.subr.mxu0 0.0
    %5580 = vmatpush1.msra.mxu0 0.0
    %5581 = vmatprep.subr.mxu0 0.0
    %5582 = vmatpush1.msra.mxu0 0.0
    %5583 = vmatprep.subr.mxu0 0.0
    %5584 = vmatpush1.msra.mxu0 0.0
    %5585 = vmatprep.mubr.f32.mxu0 0.0
    %5586 = vmatmul.mubr.f32.gmra.mrb[0].mxu0 %v5519
    %v5587 = vpop.f32.mrb[0].mxu0
    %v5588 = vadd.f32 0.0, %v5587
    %v5589 = vpop.f32.mrb[0].mxu0
    %v5590 = vadd.f32 0.0, %v5589
    %5591 = vdwg.mxu0
    %5592 = vmatprep.subr.mxu0 %v389
    %5593 = vmatpush1.msra.mxu0 %v388
    %5594 = vmatprep.subr.mxu0 %v393
    %5595 = vmatpush1.msra.mxu0 %v392
    %5596 = vmatprep.subr.mxu0 %v397
    %5597 = vmatpush1.msra.mxu0 %v396
    %5598 = vmatprep.subr.mxu0 %v401
    %5599 = vmatpush1.msra.mxu0 %v400
    %5600 = vmatprep.subr.mxu0 %v405
    %5601 = vmatpush1.msra.mxu0 %v404
    %5602 = vmatprep.subr.mxu0 %v409
    %5603 = vmatpush1.msra.mxu0 %v408
    %5604 = vmatprep.subr.mxu0 %v413
    %5605 = vmatpush1.msra.mxu0 %v412
    %5606 = vmatprep.subr.mxu0 %v417
    %5607 = vmatpush1.msra.mxu0 %v416
    %5608 = vmatprep.subr.mxu0 %v421
    %5609 = vmatpush1.msra.mxu0 %v420
    %5610 = vmatprep.subr.mxu0 %v425
    %5611 = vmatpush1.msra.mxu0 %v424
    %5612 = vmatprep.subr.mxu0 %v429
    %5613 = vmatpush1.msra.mxu0 %v428
    %5614 = vmatprep.subr.mxu0 %v433
    %5615 = vmatpush1.msra.mxu0 %v432
    %5616 = vmatprep.subr.mxu0 %v437
    %5617 = vmatpush1.msra.mxu0 %v436
    %5618 = vmatprep.subr.mxu0 %v441
    %5619 = vmatpush1.msra.mxu0 %v440
    %5620 = vmatprep.subr.mxu0 %v445
    %5621 = vmatpush1.msra.mxu0 %v444
    %5622 = vmatprep.subr.mxu0 %v449
    %5623 = vmatpush1.msra.mxu0 %v448
    %5624 = vmatprep.subr.mxu0 0.0
    %5625 = vmatpush1.msra.mxu0 0.0
    %5626 = vmatprep.subr.mxu0 0.0
    %5627 = vmatpush1.msra.mxu0 0.0
    %5628 = vmatprep.subr.mxu0 0.0
    %5629 = vmatpush1.msra.mxu0 0.0
    %5630 = vmatprep.subr.mxu0 0.0
    %5631 = vmatpush1.msra.mxu0 0.0
    %5632 = vmatprep.subr.mxu0 0.0
    %5633 = vmatpush1.msra.mxu0 0.0
    %5634 = vmatprep.subr.mxu0 0.0
    %5635 = vmatpush1.msra.mxu0 0.0
    %5636 = vmatprep.subr.mxu0 0.0
    %5637 = vmatpush1.msra.mxu0 0.0
    %5638 = vmatprep.subr.mxu0 0.0
    %5639 = vmatpush1.msra.mxu0 0.0
    %5640 = vmatprep.subr.mxu0 0.0
    %5641 = vmatpush1.msra.mxu0 0.0
    %5642 = vmatprep.subr.mxu0 0.0
    %5643 = vmatpush1.msra.mxu0 0.0
    %5644 = vmatprep.subr.mxu0 0.0
    %5645 = vmatpush1.msra.mxu0 0.0
    %5646 = vmatprep.subr.mxu0 0.0
    %5647 = vmatpush1.msra.mxu0 0.0
    %5648 = vmatprep.subr.mxu0 0.0
    %5649 = vmatpush1.msra.mxu0 0.0
    %5650 = vmatprep.subr.mxu0 0.0
    %5651 = vmatpush1.msra.mxu0 0.0
    %5652 = vmatprep.subr.mxu0 0.0
    %5653 = vmatpush1.msra.mxu0 0.0
    %5654 = vmatprep.subr.mxu0 0.0
    %5655 = vmatpush1.msra.mxu0 0.0
    %5656 = vmatprep.mubr.f32.mxu0 0.0
    %5657 = vmatmul.mubr.f32.gmra.mrb[0].mxu0 %v5519
    %v5658 = vpop.f32.mrb[0].mxu0
    %v5659 = vadd.f32 0.0, %v5658
    %v5660 = vpop.f32.mrb[0].mxu0
    %v5661 = vadd.f32 0.0, %v5660
    %5662 = vdwg.mxu0
    %v5667 = vrot.slane %v5588, 3
    %v5668 = vrot.slane %v5590, 3
    %v5669 = vrot.slane %v5659, 3
    %v5670 = vrot.slane %v5661, 3
    %v5675 = vadd.f32 %v311, %v5667
    %v5676 = vadd.f32 %v313, %v5668
    %v5677 = vadd.f32 %v382, %v5669
    %v5678 = vadd.f32 %v384, %v5670
    %v5679 = vmul.f32 %v5675, 0.5
    %v5680 = vmul.f32 %v5676, 0.5
    %v5681 = vmul.f32 %v5677, 0.5
    %v5682 = vtanh.pop %v5679
    %v5683 = vtanh.pop %v5680
    %v5684 = vtanh.pop %v5681
    %v5685 = vadd.f32 %v5682, 1.0
    %v5686 = vadd.f32 %v5683, 1.0
    %v5687 = vadd.f32 %v5684, 1.0
    %v5688 = vmul.f32 %v5685, 0.5
    %v5689 = vmul.f32 %v5686, 0.5
    %v5690 = vmul.f32 %v5687, 0.5
    %v5691 = vtanh.pop %v5678
    %v5693 = vrot.slane %v4582, 7
    %v5695 = vmul.f32 %v5689, %v5693
    %v5696 = vmul.f32 %v5688, %v5691
    %v5697 = vadd.f32 %v5695, %v5696
    %v5698 = vtanh.pop %v5697
    %v5699 = vmul.f32 %v5690, %v5698
    %v5700 = vmul.f32 %v5204, 0.5
    %v5701 = vtanh.pop %v5700
    %v5702 = vadd.f32 %v5701, 1.0
    %v5703 = vmul.f32 %v5702, 0.5
    %5704 = vmatprep.subr.mxu0 %v2211
    %5705 = vmatpush1.msra.mxu0 %v2210
    %5706 = vmatprep.subr.mxu0 %v2215
    %5707 = vmatpush1.msra.mxu0 %v2214
    %5708 = vmatprep.subr.mxu0 %v2219
    %5709 = vmatpush1.msra.mxu0 %v2218
    %5710 = vmatprep.subr.mxu0 %v2223
    %5711 = vmatpush1.msra.mxu0 %v2222
    %5712 = vmatprep.subr.mxu0 %v2227
    %5713 = vmatpush1.msra.mxu0 %v2226
    %5714 = vmatprep.subr.mxu0 %v2231
    %5715 = vmatpush1.msra.mxu0 %v2230
    %5716 = vmatprep.subr.mxu0 %v2235
    %5717 = vmatpush1.msra.mxu0 %v2234
    %5718 = vmatprep.subr.mxu0 %v2239
    %5719 = vmatpush1.msra.mxu0 %v2238
    %5720 = vmatprep.subr.mxu0 %v2243
    %5721 = vmatpush1.msra.mxu0 %v2242
    %5722 = vmatprep.subr.mxu0 %v2247
    %5723 = vmatpush1.msra.mxu0 %v2246
    %5724 = vmatprep.subr.mxu0 %v2251
    %5725 = vmatpush1.msra.mxu0 %v2250
    %5726 = vmatprep.subr.mxu0 %v2255
    %5727 = vmatpush1.msra.mxu0 %v2254
    %5728 = vmatprep.subr.mxu0 %v2259
    %5729 = vmatpush1.msra.mxu0 %v2258
    %5730 = vmatprep.subr.mxu0 %v2263
    %5731 = vmatpush1.msra.mxu0 %v2262
    %5732 = vmatprep.subr.mxu0 %v2267
    %5733 = vmatpush1.msra.mxu0 %v2266
    %5734 = vmatprep.subr.mxu0 %v2271
    %5735 = vmatpush1.msra.mxu0 %v2270
    %5736 = vmatprep.subr.mxu0 0.0
    %5737 = vmatpush1.msra.mxu0 0.0
    %5738 = vmatprep.subr.mxu0 0.0
    %5739 = vmatpush1.msra.mxu0 0.0
    %5740 = vmatprep.subr.mxu0 0.0
    %5741 = vmatpush1.msra.mxu0 0.0
    %5742 = vmatprep.subr.mxu0 0.0
    %5743 = vmatpush1.msra.mxu0 0.0
    %5744 = vmatprep.subr.mxu0 0.0
    %5745 = vmatpush1.msra.mxu0 0.0
    %5746 = vmatprep.subr.mxu0 0.0
    %5747 = vmatpush1.msra.mxu0 0.0
    %5748 = vmatprep.subr.mxu0 0.0
    %5749 = vmatpush1.msra.mxu0 0.0
    %5750 = vmatprep.subr.mxu0 0.0
    %5751 = vmatpush1.msra.mxu0 0.0
    %5752 = vmatprep.subr.mxu0 0.0
    %5753 = vmatpush1.msra.mxu0 0.0
    %5754 = vmatprep.subr.mxu0 0.0
    %5755 = vmatpush1.msra.mxu0 0.0
    %5756 = vmatprep.subr.mxu0 0.0
    %5757 = vmatpush1.msra.mxu0 0.0
    %5758 = vmatprep.subr.mxu0 0.0
    %5759 = vmatpush1.msra.mxu0 0.0
    %5760 = vmatprep.subr.mxu0 0.0
    %5761 = vmatpush1.msra.mxu0 0.0
    %5762 = vmatprep.subr.mxu0 0.0
    %5763 = vmatpush1.msra.mxu0 0.0
    %5764 = vmatprep.subr.mxu0 0.0
    %5765 = vmatpush1.msra.mxu0 0.0
    %5766 = vmatprep.subr.mxu0 0.0
    %5767 = vmatpush1.msra.mxu0 0.0
    %5768 = vmatprep.mubr.f32.mxu0 0.0
    %5769 = vmatmul.mubr.f32.gmra.mrb[0].mxu0 %v5703
    %v5770 = vpop.f32.mrb[0].mxu0
    %v5771 = vadd.f32 %v2278, %v5770
    %v5772 = vpop.f32.mrb[0].mxu0
    %v5773 = vadd.f32 %v2282, %v5772
    %5774 = vdwg.mxu0
    %5775 = vmatprep.subr.mxu0 %v2213
    %5776 = vmatpush1.msra.mxu0 %v2212
    %5777 = vmatprep.subr.mxu0 %v2217
    %5778 = vmatpush1.msra.mxu0 %v2216
    %5779 = vmatprep.subr.mxu0 %v2221
    %5780 = vmatpush1.msra.mxu0 %v2220
    %5781 = vmatprep.subr.mxu0 %v2225
    %5782 = vmatpush1.msra.mxu0 %v2224
    %5783 = vmatprep.subr.mxu0 %v2229
    %5784 = vmatpush1.msra.mxu0 %v2228
    %5785 = vmatprep.subr.mxu0 %v2233
    %5786 = vmatpush1.msra.mxu0 %v2232
    %5787 = vmatprep.subr.mxu0 %v2237
    %5788 = vmatpush1.msra.mxu0 %v2236
    %5789 = vmatprep.subr.mxu0 %v2241
    %5790 = vmatpush1.msra.mxu0 %v2240
    %5791 = vmatprep.subr.mxu0 %v2245
    %5792 = vmatpush1.msra.mxu0 %v2244
    %5793 = vmatprep.subr.mxu0 %v2249
    %5794 = vmatpush1.msra.mxu0 %v2248
    %5795 = vmatprep.subr.mxu0 %v2253
    %5796 = vmatpush1.msra.mxu0 %v2252
    %5797 = vmatprep.subr.mxu0 %v2257
    %5798 = vmatpush1.msra.mxu0 %v2256
    %5799 = vmatprep.subr.mxu0 %v2261
    %5800 = vmatpush1.msra.mxu0 %v2260
    %5801 = vmatprep.subr.mxu0 %v2265
    %5802 = vmatpush1.msra.mxu0 %v2264
    %5803 = vmatprep.subr.mxu0 %v2269
    %5804 = vmatpush1.msra.mxu0 %v2268
    %5805 = vmatprep.subr.mxu0 %v2273
    %5806 = vmatpush1.msra.mxu0 %v2272
    %5807 = vmatprep.subr.mxu0 0.0
    %5808 = vmatpush1.msra.mxu0 0.0
    %5809 = vmatprep.subr.mxu0 0.0
    %5810 = vmatpush1.msra.mxu0 0.0
    %5811 = vmatprep.subr.mxu0 0.0
    %5812 = vmatpush1.msra.mxu0 0.0
    %5813 = vmatprep.subr.mxu0 0.0
    %5814 = vmatpush1.msra.mxu0 0.0
    %5815 = vmatprep.subr.mxu0 0.0
    %5816 = vmatpush1.msra.mxu0 0.0
    %5817 = vmatprep.subr.mxu0 0.0
    %5818 = vmatpush1.msra.mxu0 0.0
    %5819 = vmatprep.subr.mxu0 0.0
    %5820 = vmatpush1.msra.mxu0 0.0
    %5821 = vmatprep.subr.mxu0 0.0
    %5822 = vmatpush1.msra.mxu0 0.0
    %5823 = vmatprep.subr.mxu0 0.0
    %5824 = vmatpush1.msra.mxu0 0.0
    %5825 = vmatprep.subr.mxu0 0.0
    %5826 = vmatpush1.msra.mxu0 0.0
    %5827 = vmatprep.subr.mxu0 0.0
    %5828 = vmatpush1.msra.mxu0 0.0
    %5829 = vmatprep.subr.mxu0 0.0
    %5830 = vmatpush1.msra.mxu0 0.0
    %5831 = vmatprep.subr.mxu0 0.0
    %5832 = vmatpush1.msra.mxu0 0.0
    %5833 = vmatprep.subr.mxu0 0.0
    %5834 = vmatpush1.msra.mxu0 0.0
    %5835 = vmatprep.subr.mxu0 0.0
    %5836 = vmatpush1.msra.mxu0 0.0
    %5837 = vmatprep.subr.mxu0 0.0
    %5838 = vmatpush1.msra.mxu0 0.0
    %5839 = vmatprep.mubr.f32.mxu0 0.0
    %5840 = vmatmul.mubr.f32.gmra.mrb[0].mxu0 %v5703
    %v5841 = vpop.f32.mrb[0].mxu0
    %v5842 = vadd.f32 %v2286, %v5841
    %v5843 = vpop.f32.mrb[0].mxu0
    %v5844 = vadd.f32 %v2290, %v5843
    %5845 = vdwg.mxu0
    %5846 = vmatprep.subr.mxu0 %v2438
    %5847 = vmatpush1.msra.mxu0 %v2437
    %5848 = vmatprep.subr.mxu0 %v2442
    %5849 = vmatpush1.msra.mxu0 %v2441
    %5850 = vmatprep.subr.mxu0 %v2446
    %5851 = vmatpush1.msra.mxu0 %v2445
    %5852 = vmatprep.subr.mxu0 %v2450
    %5853 = vmatpush1.msra.mxu0 %v2449
    %5854 = vmatprep.subr.mxu0 %v2454
    %5855 = vmatpush1.msra.mxu0 %v2453
    %5856 = vmatprep.subr.mxu0 %v2458
    %5857 = vmatpush1.msra.mxu0 %v2457
    %5858 = vmatprep.subr.mxu0 %v2462
    %5859 = vmatpush1.msra.mxu0 %v2461
    %5860 = vmatprep.subr.mxu0 %v2466
    %5861 = vmatpush1.msra.mxu0 %v2465
    %5862 = vmatprep.subr.mxu0 %v2470
    %5863 = vmatpush1.msra.mxu0 %v2469
    %5864 = vmatprep.subr.mxu0 %v2474
    %5865 = vmatpush1.msra.mxu0 %v2473
    %5866 = vmatprep.subr.mxu0 %v2478
    %5867 = vmatpush1.msra.mxu0 %v2477
    %5868 = vmatprep.subr.mxu0 %v2482
    %5869 = vmatpush1.msra.mxu0 %v2481
    %5870 = vmatprep.subr.mxu0 %v2486
    %5871 = vmatpush1.msra.mxu0 %v2485
    %5872 = vmatprep.subr.mxu0 %v2490
    %5873 = vmatpush1.msra.mxu0 %v2489
    %5874 = vmatprep.subr.mxu0 %v2494
    %5875 = vmatpush1.msra.mxu0 %v2493
    %5876 = vmatprep.subr.mxu0 %v2498
    %5877 = vmatpush1.msra.mxu0 %v2497
    %5878 = vmatprep.subr.mxu0 0.0
    %5879 = vmatpush1.msra.mxu0 0.0
    %5880 = vmatprep.subr.mxu0 0.0
    %5881 = vmatpush1.msra.mxu0 0.0
    %5882 = vmatprep.subr.mxu0 0.0
    %5883 = vmatpush1.msra.mxu0 0.0
    %5884 = vmatprep.subr.mxu0 0.0
    %5885 = vmatpush1.msra.mxu0 0.0
    %5886 = vmatprep.subr.mxu0 0.0
    %5887 = vmatpush1.msra.mxu0 0.0
    %5888 = vmatprep.subr.mxu0 0.0
    %5889 = vmatpush1.msra.mxu0 0.0
    %5890 = vmatprep.subr.mxu0 0.0
    %5891 = vmatpush1.msra.mxu0 0.0
    %5892 = vmatprep.subr.mxu0 0.0
    %5893 = vmatpush1.msra.mxu0 0.0
    %5894 = vmatprep.subr.mxu0 0.0
    %5895 = vmatpush1.msra.mxu0 0.0
    %5896 = vmatprep.subr.mxu0 0.0
    %5897 = vmatpush1.msra.mxu0 0.0
    %5898 = vmatprep.subr.mxu0 0.0
    %5899 = vmatpush1.msra.mxu0 0.0
    %5900 = vmatprep.subr.mxu0 0.0
    %5901 = vmatpush1.msra.mxu0 0.0
    %5902 = vmatprep.subr.mxu0 0.0
    %5903 = vmatpush1.msra.mxu0 0.0
    %5904 = vmatprep.subr.mxu0 0.0
    %5905 = vmatpush1.msra.mxu0 0.0
    %5906 = vmatprep.subr.mxu0 0.0
    %5907 = vmatpush1.msra.mxu0 0.0
    %5908 = vmatprep.subr.mxu0 0.0
    %5909 = vmatpush1.msra.mxu0 0.0
    %5910 = vmatprep.mubr.f32.mxu0 0.0
    %5911 = vmatmul.mubr.f32.gmra.mrb[0].mxu0 %v4894
    %v5912 = vpop.f32.mrb[0].mxu0
    %v5913 = vadd.f32 0.0, %v5912
    %v5914 = vpop.f32.mrb[0].mxu0
    %v5915 = vadd.f32 0.0, %v5914
    %5916 = vdwg.mxu0
    %5917 = vmatprep.subr.mxu0 %v2440
    %5918 = vmatpush1.msra.mxu0 %v2439
    %5919 = vmatprep.subr.mxu0 %v2444
    %5920 = vmatpush1.msra.mxu0 %v2443
    %5921 = vmatprep.subr.mxu0 %v2448
    %5922 = vmatpush1.msra.mxu0 %v2447
    %5923 = vmatprep.subr.mxu0 %v2452
    %5924 = vmatpush1.msra.mxu0 %v2451
    %5925 = vmatprep.subr.mxu0 %v2456
    %5926 = vmatpush1.msra.mxu0 %v2455
    %5927 = vmatprep.subr.mxu0 %v2460
    %5928 = vmatpush1.msra.mxu0 %v2459
    %5929 = vmatprep.subr.mxu0 %v2464
    %5930 = vmatpush1.msra.mxu0 %v2463
    %5931 = vmatprep.subr.mxu0 %v2468
    %5932 = vmatpush1.msra.mxu0 %v2467
    %5933 = vmatprep.subr.mxu0 %v2472
    %5934 = vmatpush1.msra.mxu0 %v2471
    %5935 = vmatprep.subr.mxu0 %v2476
    %5936 = vmatpush1.msra.mxu0 %v2475
    %5937 = vmatprep.subr.mxu0 %v2480
    %5938 = vmatpush1.msra.mxu0 %v2479
    %5939 = vmatprep.subr.mxu0 %v2484
    %5940 = vmatpush1.msra.mxu0 %v2483
    %5941 = vmatprep.subr.mxu0 %v2488
    %5942 = vmatpush1.msra.mxu0 %v2487
    %5943 = vmatprep.subr.mxu0 %v2492
    %5944 = vmatpush1.msra.mxu0 %v2491
    %5945 = vmatprep.subr.mxu0 %v2496
    %5946 = vmatpush1.msra.mxu0 %v2495
    %5947 = vmatprep.subr.mxu0 %v2500
    %5948 = vmatpush1.msra.mxu0 %v2499
    %5949 = vmatprep.subr.mxu0 0.0
    %5950 = vmatpush1.msra.mxu0 0.0
    %5951 = vmatprep.subr.mxu0 0.0
    %5952 = vmatpush1.msra.mxu0 0.0
    %5953 = vmatprep.subr.mxu0 0.0
    %5954 = vmatpush1.msra.mxu0 0.0
    %5955 = vmatprep.subr.mxu0 0.0
    %5956 = vmatpush1.msra.mxu0 0.0
    %5957 = vmatprep.subr.mxu0 0.0
    %5958 = vmatpush1.msra.mxu0 0.0
    %5959 = vmatprep.subr.mxu0 0.0
    %5960 = vmatpush1.msra.mxu0 0.0
    %5961 = vmatprep.subr.mxu0 0.0
    %5962 = vmatpush1.msra.mxu0 0.0
    %5963 = vmatprep.subr.mxu0 0.0
    %5964 = vmatpush1.msra.mxu0 0.0
    %5965 = vmatprep.subr.mxu0 0.0
    %5966 = vmatpush1.msra.mxu0 0.0
    %5967 = vmatprep.subr.mxu0 0.0
    %5968 = vmatpush1.msra.mxu0 0.0
    %5969 = vmatprep.subr.mxu0 0.0
    %5970 = vmatpush1.msra.mxu0 0.0
    %5971 = vmatprep.subr.mxu0 0.0
    %5972 = vmatpush1.msra.mxu0 0.0
    %5973 = vmatprep.subr.mxu0 0.0
    %5974 = vmatpush1.msra.mxu0 0.0
    %5975 = vmatprep.subr.mxu0 0.0
    %5976 = vmatpush1.msra.mxu0 0.0
    %5977 = vmatprep.subr.mxu0 0.0
    %5978 = vmatpush1.msra.mxu0 0.0
    %5979 = vmatprep.subr.mxu0 0.0
    %5980 = vmatpush1.msra.mxu0 0.0
    %5981 = vmatprep.mubr.f32.mxu0 0.0
    %5982 = vmatmul.mubr.f32.gmra.mrb[0].mxu0 %v4894
    %v5983 = vpop.f32.mrb[0].mxu0
    %v5984 = vadd.f32 0.0, %v5983
    %v5985 = vpop.f32.mrb[0].mxu0
    %v5986 = vadd.f32 0.0, %v5985
    %5987 = vdwg.mxu0
    %v5988 = vadd.f32 %v5771, %v5913
    %v5989 = vadd.f32 %v5773, %v5915
    %v5990 = vadd.f32 %v5842, %v5984
    %v5991 = vadd.f32 %v5844, %v5986
    %v5992 = vmul.f32 %v5988, 0.5
    %v5993 = vmul.f32 %v5989, 0.5
    %v5994 = vmul.f32 %v5990, 0.5
    %v5995 = vtanh.pop %v5992
    %v5996 = vtanh.pop %v5993
    %v5997 = vtanh.pop %v5994
    %v5998 = vadd.f32 %v5995, 1.0
    %v5999 = vadd.f32 %v5996, 1.0
    %v6000 = vadd.f32 %v5997, 1.0
    %v6001 = vmul.f32 %v5998, 0.5
    %v6002 = vmul.f32 %v5999, 0.5
    %v6003 = vmul.f32 %v6000, 0.5
    %v6004 = vtanh.pop %v5991
    %v6005 = vmul.f32 %v6002, %v4892
    %v6006 = vmul.f32 %v6001, %v6004
    %v6007 = vadd.f32 %v6005, %v6006
    %v6008 = vtanh.pop %v6007
    %v6009 = vmul.f32 %v6003, %v6008
    %v6010 = vmul.f32 %v5517, 0.5
    %v6011 = vtanh.pop %v6010
    %v6012 = vadd.f32 %v6011, 1.0
    %v6013 = vmul.f32 %v6012, 0.5
    %6014 = vmatprep.subr.mxu0 %v1257
    %6015 = vmatpush1.msra.mxu0 %v1256
    %6016 = vmatprep.subr.mxu0 %v1261
    %6017 = vmatpush1.msra.mxu0 %v1260
    %6018 = vmatprep.subr.mxu0 %v1265
    %6019 = vmatpush1.msra.mxu0 %v1264
    %6020 = vmatprep.subr.mxu0 %v1269
    %6021 = vmatpush1.msra.mxu0 %v1268
    %6022 = vmatprep.subr.mxu0 %v1273
    %6023 = vmatpush1.msra.mxu0 %v1272
    %6024 = vmatprep.subr.mxu0 %v1277
    %6025 = vmatpush1.msra.mxu0 %v1276
    %6026 = vmatprep.subr.mxu0 %v1281
    %6027 = vmatpush1.msra.mxu0 %v1280
    %6028 = vmatprep.subr.mxu0 %v1285
    %6029 = vmatpush1.msra.mxu0 %v1284
    %6030 = vmatprep.subr.mxu0 %v1289
    %6031 = vmatpush1.msra.mxu0 %v1288
    %6032 = vmatprep.subr.mxu0 %v1293
    %6033 = vmatpush1.msra.mxu0 %v1292
    %6034 = vmatprep.subr.mxu0 %v1297
    %6035 = vmatpush1.msra.mxu0 %v1296
    %6036 = vmatprep.subr.mxu0 %v1301
    %6037 = vmatpush1.msra.mxu0 %v1300
    %6038 = vmatprep.subr.mxu0 %v1305
    %6039 = vmatpush1.msra.mxu0 %v1304
    %6040 = vmatprep.subr.mxu0 %v1309
    %6041 = vmatpush1.msra.mxu0 %v1308
    %6042 = vmatprep.subr.mxu0 %v1313
    %6043 = vmatpush1.msra.mxu0 %v1312
    %6044 = vmatprep.subr.mxu0 %v1317
    %6045 = vmatpush1.msra.mxu0 %v1316
    %6046 = vmatprep.subr.mxu0 0.0
    %6047 = vmatpush1.msra.mxu0 0.0
    %6048 = vmatprep.subr.mxu0 0.0
    %6049 = vmatpush1.msra.mxu0 0.0
    %6050 = vmatprep.subr.mxu0 0.0
    %6051 = vmatpush1.msra.mxu0 0.0
    %6052 = vmatprep.subr.mxu0 0.0
    %6053 = vmatpush1.msra.mxu0 0.0
    %6054 = vmatprep.subr.mxu0 0.0
    %6055 = vmatpush1.msra.mxu0 0.0
    %6056 = vmatprep.subr.mxu0 0.0
    %6057 = vmatpush1.msra.mxu0 0.0
    %6058 = vmatprep.subr.mxu0 0.0
    %6059 = vmatpush1.msra.mxu0 0.0
    %6060 = vmatprep.subr.mxu0 0.0
    %6061 = vmatpush1.msra.mxu0 0.0
    %6062 = vmatprep.subr.mxu0 0.0
    %6063 = vmatpush1.msra.mxu0 0.0
    %6064 = vmatprep.subr.mxu0 0.0
    %6065 = vmatpush1.msra.mxu0 0.0
    %6066 = vmatprep.subr.mxu0 0.0
    %6067 = vmatpush1.msra.mxu0 0.0
    %6068 = vmatprep.subr.mxu0 0.0
    %6069 = vmatpush1.msra.mxu0 0.0
    %6070 = vmatprep.subr.mxu0 0.0
    %6071 = vmatpush1.msra.mxu0 0.0
    %6072 = vmatprep.subr.mxu0 0.0
    %6073 = vmatpush1.msra.mxu0 0.0
    %6074 = vmatprep.subr.mxu0 0.0
    %6075 = vmatpush1.msra.mxu0 0.0
    %6076 = vmatprep.subr.mxu0 0.0
    %6077 = vmatpush1.msra.mxu0 0.0
    %6078 = vmatprep.mubr.f32.mxu0 0.0
    %6079 = vmatmul.mubr.f32.gmra.mrb[0].mxu0 %v6013
    %v6080 = vpop.f32.mrb[0].mxu0
    %v6081 = vadd.f32 %v1324, %v6080
    %v6082 = vpop.f32.mrb[0].mxu0
    %v6083 = vadd.f32 %v1328, %v6082
    %6084 = vdwg.mxu0
    %6085 = vmatprep.subr.mxu0 %v1259
    %6086 = vmatpush1.msra.mxu0 %v1258
    %6087 = vmatprep.subr.mxu0 %v1263
    %6088 = vmatpush1.msra.mxu0 %v1262
    %6089 = vmatprep.subr.mxu0 %v1267
    %6090 = vmatpush1.msra.mxu0 %v1266
    %6091 = vmatprep.subr.mxu0 %v1271
    %6092 = vmatpush1.msra.mxu0 %v1270
    %6093 = vmatprep.subr.mxu0 %v1275
    %6094 = vmatpush1.msra.mxu0 %v1274
    %6095 = vmatprep.subr.mxu0 %v1279
    %6096 = vmatpush1.msra.mxu0 %v1278
    %6097 = vmatprep.subr.mxu0 %v1283
    %6098 = vmatpush1.msra.mxu0 %v1282
    %6099 = vmatprep.subr.mxu0 %v1287
    %6100 = vmatpush1.msra.mxu0 %v1286
    %6101 = vmatprep.subr.mxu0 %v1291
    %6102 = vmatpush1.msra.mxu0 %v1290
    %6103 = vmatprep.subr.mxu0 %v1295
    %6104 = vmatpush1.msra.mxu0 %v1294
    %6105 = vmatprep.subr.mxu0 %v1299
    %6106 = vmatpush1.msra.mxu0 %v1298
    %6107 = vmatprep.subr.mxu0 %v1303
    %6108 = vmatpush1.msra.mxu0 %v1302
    %6109 = vmatprep.subr.mxu0 %v1307
    %6110 = vmatpush1.msra.mxu0 %v1306
    %6111 = vmatprep.subr.mxu0 %v1311
    %6112 = vmatpush1.msra.mxu0 %v1310
    %6113 = vmatprep.subr.mxu0 %v1315
    %6114 = vmatpush1.msra.mxu0 %v1314
    %6115 = vmatprep.subr.mxu0 %v1319
    %6116 = vmatpush1.msra.mxu0 %v1318
    %6117 = vmatprep.subr.mxu0 0.0
    %6118 = vmatpush1.msra.mxu0 0.0
    %6119 = vmatprep.subr.mxu0 0.0
    %6120 = vmatpush1.msra.mxu0 0.0
    %6121 = vmatprep.subr.mxu0 0.0
    %6122 = vmatpush1.msra.mxu0 0.0
    %6123 = vmatprep.subr.mxu0 0.0
    %6124 = vmatpush1.msra.mxu0 0.0
    %6125 = vmatprep.subr.mxu0 0.0
    %6126 = vmatpush1.msra.mxu0 0.0
    %6127 = vmatprep.subr.mxu0 0.0
    %6128 = vmatpush1.msra.mxu0 0.0
    %6129 = vmatprep.subr.mxu0 0.0
    %6130 = vmatpush1.msra.mxu0 0.0
    %6131 = vmatprep.subr.mxu0 0.0
    %6132 = vmatpush1.msra.mxu0 0.0
    %6133 = vmatprep.subr.mxu0 0.0
    %6134 = vmatpush1.msra.mxu0 0.0
    %6135 = vmatprep.subr.mxu0 0.0
    %6136 = vmatpush1.msra.mxu0 0.0
    %6137 = vmatprep.subr.mxu0 0.0
    %6138 = vmatpush1.msra.mxu0 0.0
    %6139 = vmatprep.subr.mxu0 0.0
    %6140 = vmatpush1.msra.mxu0 0.0
    %6141 = vmatprep.subr.mxu0 0.0
    %6142 = vmatpush1.msra.mxu0 0.0
    %6143 = vmatprep.subr.mxu0 0.0
    %6144 = vmatpush1.msra.mxu0 0.0
    %6145 = vmatprep.subr.mxu0 0.0
    %6146 = vmatpush1.msra.mxu0 0.0
    %6147 = vmatprep.subr.mxu0 0.0
    %6148 = vmatpush1.msra.mxu0 0.0
    %6149 = vmatprep.mubr.f32.mxu0 0.0
    %6150 = vmatmul.mubr.f32.gmra.mrb[0].mxu0 %v6013
    %v6151 = vpop.f32.mrb[0].mxu0
    %v6152 = vadd.f32 %v1332, %v6151
    %v6153 = vpop.f32.mrb[0].mxu0
    %v6154 = vadd.f32 %v1336, %v6153
    %6155 = vdwg.mxu0
    %6156 = vmatprep.subr.mxu0 %v1484
    %6157 = vmatpush1.msra.mxu0 %v1483
    %6158 = vmatprep.subr.mxu0 %v1488
    %6159 = vmatpush1.msra.mxu0 %v1487
    %6160 = vmatprep.subr.mxu0 %v1492
    %6161 = vmatpush1.msra.mxu0 %v1491
    %6162 = vmatprep.subr.mxu0 %v1496
    %6163 = vmatpush1.msra.mxu0 %v1495
    %6164 = vmatprep.subr.mxu0 %v1500
    %6165 = vmatpush1.msra.mxu0 %v1499
    %6166 = vmatprep.subr.mxu0 %v1504
    %6167 = vmatpush1.msra.mxu0 %v1503
    %6168 = vmatprep.subr.mxu0 %v1508
    %6169 = vmatpush1.msra.mxu0 %v1507
    %6170 = vmatprep.subr.mxu0 %v1512
    %6171 = vmatpush1.msra.mxu0 %v1511
    %6172 = vmatprep.subr.mxu0 %v1516
    %6173 = vmatpush1.msra.mxu0 %v1515
    %6174 = vmatprep.subr.mxu0 %v1520
    %6175 = vmatpush1.msra.mxu0 %v1519
    %6176 = vmatprep.subr.mxu0 %v1524
    %6177 = vmatpush1.msra.mxu0 %v1523
    %6178 = vmatprep.subr.mxu0 %v1528
    %6179 = vmatpush1.msra.mxu0 %v1527
    %6180 = vmatprep.subr.mxu0 %v1532
    %6181 = vmatpush1.msra.mxu0 %v1531
    %6182 = vmatprep.subr.mxu0 %v1536
    %6183 = vmatpush1.msra.mxu0 %v1535
    %6184 = vmatprep.subr.mxu0 %v1540
    %6185 = vmatpush1.msra.mxu0 %v1539
    %6186 = vmatprep.subr.mxu0 %v1544
    %6187 = vmatpush1.msra.mxu0 %v1543
    %6188 = vmatprep.subr.mxu0 0.0
    %6189 = vmatpush1.msra.mxu0 0.0
    %6190 = vmatprep.subr.mxu0 0.0
    %6191 = vmatpush1.msra.mxu0 0.0
    %6192 = vmatprep.subr.mxu0 0.0
    %6193 = vmatpush1.msra.mxu0 0.0
    %6194 = vmatprep.subr.mxu0 0.0
    %6195 = vmatpush1.msra.mxu0 0.0
    %6196 = vmatprep.subr.mxu0 0.0
    %6197 = vmatpush1.msra.mxu0 0.0
    %6198 = vmatprep.subr.mxu0 0.0
    %6199 = vmatpush1.msra.mxu0 0.0
    %6200 = vmatprep.subr.mxu0 0.0
    %6201 = vmatpush1.msra.mxu0 0.0
    %6202 = vmatprep.subr.mxu0 0.0
    %6203 = vmatpush1.msra.mxu0 0.0
    %6204 = vmatprep.subr.mxu0 0.0
    %6205 = vmatpush1.msra.mxu0 0.0
    %6206 = vmatprep.subr.mxu0 0.0
    %6207 = vmatpush1.msra.mxu0 0.0
    %6208 = vmatprep.subr.mxu0 0.0
    %6209 = vmatpush1.msra.mxu0 0.0
    %6210 = vmatprep.subr.mxu0 0.0
    %6211 = vmatpush1.msra.mxu0 0.0
    %6212 = vmatprep.subr.mxu0 0.0
    %6213 = vmatpush1.msra.mxu0 0.0
    %6214 = vmatprep.subr.mxu0 0.0
    %6215 = vmatpush1.msra.mxu0 0.0
    %6216 = vmatprep.subr.mxu0 0.0
    %6217 = vmatpush1.msra.mxu0 0.0
    %6218 = vmatprep.subr.mxu0 0.0
    %6219 = vmatpush1.msra.mxu0 0.0
    %6220 = vmatprep.mubr.f32.mxu0 0.0
    %6221 = vmatmul.mubr.f32.gmra.mrb[0].mxu0 %v5204
    %v6222 = vpop.f32.mrb[0].mxu0
    %v6223 = vadd.f32 0.0, %v6222
    %v6224 = vpop.f32.mrb[0].mxu0
    %v6225 = vadd.f32 0.0, %v6224
    %6226 = vdwg.mxu0
    %6227 = vmatprep.subr.mxu0 %v1486
    %6228 = vmatpush1.msra.mxu0 %v1485
    %6229 = vmatprep.subr.mxu0 %v1490
    %6230 = vmatpush1.msra.mxu0 %v1489
    %6231 = vmatprep.subr.mxu0 %v1494
    %6232 = vmatpush1.msra.mxu0 %v1493
    %6233 = vmatprep.subr.mxu0 %v1498
    %6234 = vmatpush1.msra.mxu0 %v1497
    %6235 = vmatprep.subr.mxu0 %v1502
    %6236 = vmatpush1.msra.mxu0 %v1501
    %6237 = vmatprep.subr.mxu0 %v1506
    %6238 = vmatpush1.msra.mxu0 %v1505
    %6239 = vmatprep.subr.mxu0 %v1510
    %6240 = vmatpush1.msra.mxu0 %v1509
    %6241 = vmatprep.subr.mxu0 %v1514
    %6242 = vmatpush1.msra.mxu0 %v1513
    %6243 = vmatprep.subr.mxu0 %v1518
    %6244 = vmatpush1.msra.mxu0 %v1517
    %6245 = vmatprep.subr.mxu0 %v1522
    %6246 = vmatpush1.msra.mxu0 %v1521
    %6247 = vmatprep.subr.mxu0 %v1526
    %6248 = vmatpush1.msra.mxu0 %v1525
    %6249 = vmatprep.subr.mxu0 %v1530
    %6250 = vmatpush1.msra.mxu0 %v1529
    %6251 = vmatprep.subr.mxu0 %v1534
    %6252 = vmatpush1.msra.mxu0 %v1533
    %6253 = vmatprep.subr.mxu0 %v1538
    %6254 = vmatpush1.msra.mxu0 %v1537
    %6255 = vmatprep.subr.mxu0 %v1542
    %6256 = vmatpush1.msra.mxu0 %v1541
    %6257 = vmatprep.subr.mxu0 %v1546
    %6258 = vmatpush1.msra.mxu0 %v1545
    %6259 = vmatprep.subr.mxu0 0.0
    %6260 = vmatpush1.msra.mxu0 0.0
    %6261 = vmatprep.subr.mxu0 0.0
    %6262 = vmatpush1.msra.mxu0 0.0
    %6263 = vmatprep.subr.mxu0 0.0
    %6264 = vmatpush1.msra.mxu0 0.0
    %6265 = vmatprep.subr.mxu0 0.0
    %6266 = vmatpush1.msra.mxu0 0.0
    %6267 = vmatprep.subr.mxu0 0.0
    %6268 = vmatpush1.msra.mxu0 0.0
    %6269 = vmatprep.subr.mxu0 0.0
    %6270 = vmatpush1.msra.mxu0 0.0
    %6271 = vmatprep.subr.mxu0 0.0
    %6272 = vmatpush1.msra.mxu0 0.0
    %6273 = vmatprep.subr.mxu0 0.0
    %6274 = vmatpush1.msra.mxu0 0.0
    %6275 = vmatprep.subr.mxu0 0.0
    %6276 = vmatpush1.msra.mxu0 0.0
    %6277 = vmatprep.subr.mxu0 0.0
    %6278 = vmatpush1.msra.mxu0 0.0
    %6279 = vmatprep.subr.mxu0 0.0
    %6280 = vmatpush1.msra.mxu0 0.0
    %6281 = vmatprep.subr.mxu0 0.0
    %6282 = vmatpush1.msra.mxu0 0.0
    %6283 = vmatprep.subr.mxu0 0.0
    %6284 = vmatpush1.msra.mxu0 0.0
    %6285 = vmatprep.subr.mxu0 0.0
    %6286 = vmatpush1.msra.mxu0 0.0
    %6287 = vmatprep.subr.mxu0 0.0
    %6288 = vmatpush1.msra.mxu0 0.0
    %6289 = vmatprep.subr.mxu0 0.0
    %6290 = vmatpush1.msra.mxu0 0.0
    %6291 = vmatprep.mubr.f32.mxu0 0.0
    %6292 = vmatmul.mubr.f32.gmra.mrb[0].mxu0 %v5204
    %v6293 = vpop.f32.mrb[0].mxu0
    %v6294 = vadd.f32 0.0, %v6293
    %v6295 = vpop.f32.mrb[0].mxu0
    %v6296 = vadd.f32 0.0, %v6295
    %6297 = vdwg.mxu0
    %v6298 = vadd.f32 %v6081, %v6223
    %v6299 = vadd.f32 %v6083, %v6225
    %v6300 = vadd.f32 %v6152, %v6294
    %v6301 = vadd.f32 %v6154, %v6296
    %v6302 = vmul.f32 %v6298, 0.5
    %v6303 = vmul.f32 %v6299, 0.5
    %v6304 = vmul.f32 %v6300, 0.5
    %v6305 = vtanh.pop %v6302
    %v6306 = vtanh.pop %v6303
    %v6307 = vtanh.pop %v6304
    %v6308 = vadd.f32 %v6305, 1.0
    %v6309 = vadd.f32 %v6306, 1.0
    %v6310 = vadd.f32 %v6307, 1.0
    %v6311 = vmul.f32 %v6308, 0.5
    %v6312 = vmul.f32 %v6309, 0.5
    %v6313 = vmul.f32 %v6310, 0.5
    %v6314 = vtanh.pop %v6301
    %v6315 = vmul.f32 %v6312, %v5202
    %v6316 = vmul.f32 %v6311, %v6314
    %v6317 = vadd.f32 %v6315, %v6316
    %v6318 = vtanh.pop %v6317
    %v6319 = vmul.f32 %v6313, %v6318
    %v6320 = vmul.f32 %v5699, 0.5
    %v6321 = vtanh.pop %v6320
    %v6322 = vadd.f32 %v6321, 1.0
    %v6323 = vmul.f32 %v6322, 0.5
    %v6325 = vrot.slane %v6323, 5
    %6327 = vmatprep.subr.mxu0 %v619
    %6328 = vmatpush1.msra.mxu0 %v618
    %6329 = vmatprep.subr.mxu0 %v623
    %6330 = vmatpush1.msra.mxu0 %v622
    %6331 = vmatprep.subr.mxu0 %v627
    %6332 = vmatpush1.msra.mxu0 %v626
    %6333 = vmatprep.subr.mxu0 %v631
    %6334 = vmatpush1.msra.mxu0 %v630
    %6335 = vmatprep.subr.mxu0 %v635
    %6336 = vmatpush1.msra.mxu0 %v634
    %6337 = vmatprep.subr.mxu0 %v639
    %6338 = vmatpush1.msra.mxu0 %v638
    %6339 = vmatprep.subr.mxu0 %v643
    %6340 = vmatpush1.msra.mxu0 %v642
    %6341 = vmatprep.subr.mxu0 %v647
    %6342 = vmatpush1.msra.mxu0 %v646
    %6343 = vmatprep.subr.mxu0 %v651
    %6344 = vmatpush1.msra.mxu0 %v650
    %6345 = vmatprep.subr.mxu0 %v655
    %6346 = vmatpush1.msra.mxu0 %v654
    %6347 = vmatprep.subr.mxu0 %v659
    %6348 = vmatpush1.msra.mxu0 %v658
    %6349 = vmatprep.subr.mxu0 %v663
    %6350 = vmatpush1.msra.mxu0 %v662
    %6351 = vmatprep.subr.mxu0 %v667
    %6352 = vmatpush1.msra.mxu0 %v666
    %6353 = vmatprep.subr.mxu0 %v671
    %6354 = vmatpush1.msra.mxu0 %v670
    %6355 = vmatprep.subr.mxu0 %v675
    %6356 = vmatpush1.msra.mxu0 %v674
    %6357 = vmatprep.subr.mxu0 %v679
    %6358 = vmatpush1.msra.mxu0 %v678
    %6359 = vmatprep.subr.mxu0 0.0
    %6360 = vmatpush1.msra.mxu0 0.0
    %6361 = vmatprep.subr.mxu0 0.0
    %6362 = vmatpush1.msra.mxu0 0.0
    %6363 = vmatprep.subr.mxu0 0.0
    %6364 = vmatpush1.msra.mxu0 0.0
    %6365 = vmatprep.subr.mxu0 0.0
    %6366 = vmatpush1.msra.mxu0 0.0
    %6367 = vmatprep.subr.mxu0 0.0
    %6368 = vmatpush1.msra.mxu0 0.0
    %6369 = vmatprep.subr.mxu0 0.0
    %6370 = vmatpush1.msra.mxu0 0.0
    %6371 = vmatprep.subr.mxu0 0.0
    %6372 = vmatpush1.msra.mxu0 0.0
    %6373 = vmatprep.subr.mxu0 0.0
    %6374 = vmatpush1.msra.mxu0 0.0
    %6375 = vmatprep.subr.mxu0 0.0
    %6376 = vmatpush1.msra.mxu0 0.0
    %6377 = vmatprep.subr.mxu0 0.0
    %6378 = vmatpush1.msra.mxu0 0.0
    %6379 = vmatprep.subr.mxu0 0.0
    %6380 = vmatpush1.msra.mxu0 0.0
    %6381 = vmatprep.subr.mxu0 0.0
    %6382 = vmatpush1.msra.mxu0 0.0
    %6383 = vmatprep.subr.mxu0 0.0
    %6384 = vmatpush1.msra.mxu0 0.0
    %6385 = vmatprep.subr.mxu0 0.0
    %6386 = vmatpush1.msra.mxu0 0.0
    %6387 = vmatprep.subr.mxu0 0.0
    %6388 = vmatpush1.msra.mxu0 0.0
    %6389 = vmatprep.subr.mxu0 0.0
    %6390 = vmatpush1.msra.mxu0 0.0
    %6391 = vmatprep.mubr.f32.mxu0 0.0
    %6392 = vmatmul.mubr.f32.gmra.mrb[0].mxu0 %v6325
    %v6393 = vpop.f32.mrb[0].mxu0
    %v6394 = vadd.f32 %v686, %v6393
    %v6395 = vpop.f32.mrb[0].mxu0
    %v6396 = vadd.f32 %v690, %v6395
    %6397 = vdwg.mxu0
    %6398 = vmatprep.subr.mxu0 %v621
    %6399 = vmatpush1.msra.mxu0 %v620
    %6400 = vmatprep.subr.mxu0 %v625
    %6401 = vmatpush1.msra.mxu0 %v624
    %6402 = vmatprep.subr.mxu0 %v629
    %6403 = vmatpush1.msra.mxu0 %v628
    %6404 = vmatprep.subr.mxu0 %v633
    %6405 = vmatpush1.msra.mxu0 %v632
    %6406 = vmatprep.subr.mxu0 %v637
    %6407 = vmatpush1.msra.mxu0 %v636
    %6408 = vmatprep.subr.mxu0 %v641
    %6409 = vmatpush1.msra.mxu0 %v640
    %6410 = vmatprep.subr.mxu0 %v645
    %6411 = vmatpush1.msra.mxu0 %v644
    %6412 = vmatprep.subr.mxu0 %v649
    %6413 = vmatpush1.msra.mxu0 %v648
    %6414 = vmatprep.subr.mxu0 %v653
    %6415 = vmatpush1.msra.mxu0 %v652
    %6416 = vmatprep.subr.mxu0 %v657
    %6417 = vmatpush1.msra.mxu0 %v656
    %6418 = vmatprep.subr.mxu0 %v661
    %6419 = vmatpush1.msra.mxu0 %v660
    %6420 = vmatprep.subr.mxu0 %v665
    %6421 = vmatpush1.msra.mxu0 %v664
    %6422 = vmatprep.subr.mxu0 %v669
    %6423 = vmatpush1.msra.mxu0 %v668
    %6424 = vmatprep.subr.mxu0 %v673
    %6425 = vmatpush1.msra.mxu0 %v672
    %6426 = vmatprep.subr.mxu0 %v677
    %6427 = vmatpush1.msra.mxu0 %v676
    %6428 = vmatprep.subr.mxu0 %v681
    %6429 = vmatpush1.msra.mxu0 %v680
    %6430 = vmatprep.subr.mxu0 0.0
    %6431 = vmatpush1.msra.mxu0 0.0
    %6432 = vmatprep.subr.mxu0 0.0
    %6433 = vmatpush1.msra.mxu0 0.0
    %6434 = vmatprep.subr.mxu0 0.0
    %6435 = vmatpush1.msra.mxu0 0.0
    %6436 = vmatprep.subr.mxu0 0.0
    %6437 = vmatpush1.msra.mxu0 0.0
    %6438 = vmatprep.subr.mxu0 0.0
    %6439 = vmatpush1.msra.mxu0 0.0
    %6440 = vmatprep.subr.mxu0 0.0
    %6441 = vmatpush1.msra.mxu0 0.0
    %6442 = vmatprep.subr.mxu0 0.0
    %6443 = vmatpush1.msra.mxu0 0.0
    %6444 = vmatprep.subr.mxu0 0.0
    %6445 = vmatpush1.msra.mxu0 0.0
    %6446 = vmatprep.subr.mxu0 0.0
    %6447 = vmatpush1.msra.mxu0 0.0
    %6448 = vmatprep.subr.mxu0 0.0
    %6449 = vmatpush1.msra.mxu0 0.0
    %6450 = vmatprep.subr.mxu0 0.0
    %6451 = vmatpush1.msra.mxu0 0.0
    %6452 = vmatprep.subr.mxu0 0.0
    %6453 = vmatpush1.msra.mxu0 0.0
    %6454 = vmatprep.subr.mxu0 0.0
    %6455 = vmatpush1.msra.mxu0 0.0
    %6456 = vmatprep.subr.mxu0 0.0
    %6457 = vmatpush1.msra.mxu0 0.0
    %6458 = vmatprep.subr.mxu0 0.0
    %6459 = vmatpush1.msra.mxu0 0.0
    %6460 = vmatprep.subr.mxu0 0.0
    %6461 = vmatpush1.msra.mxu0 0.0
    %6462 = vmatprep.mubr.f32.mxu0 0.0
    %6463 = vmatmul.mubr.f32.gmra.mrb[0].mxu0 %v6325
    %v6464 = vpop.f32.mrb[0].mxu0
    %v6465 = vadd.f32 %v694, %v6464
    %v6466 = vpop.f32.mrb[0].mxu0
    %v6467 = vadd.f32 %v698, %v6466
    %6468 = vdwg.mxu0
    %6469 = vmatprep.subr.mxu0 %v846
    %6470 = vmatpush1.msra.mxu0 %v845
    %6471 = vmatprep.subr.mxu0 %v850
    %6472 = vmatpush1.msra.mxu0 %v849
    %6473 = vmatprep.subr.mxu0 %v854
    %6474 = vmatpush1.msra.mxu0 %v853
    %6475 = vmatprep.subr.mxu0 %v858
    %6476 = vmatpush1.msra.mxu0 %v857
    %6477 = vmatprep.subr.mxu0 %v862
    %6478 = vmatpush1.msra.mxu0 %v861
    %6479 = vmatprep.subr.mxu0 %v866
    %6480 = vmatpush1.msra.mxu0 %v865
    %6481 = vmatprep.subr.mxu0 %v870
    %6482 = vmatpush1.msra.mxu0 %v869
    %6483 = vmatprep.subr.mxu0 %v874
    %6484 = vmatpush1.msra.mxu0 %v873
    %6485 = vmatprep.subr.mxu0 %v878
    %6486 = vmatpush1.msra.mxu0 %v877
    %6487 = vmatprep.subr.mxu0 %v882
    %6488 = vmatpush1.msra.mxu0 %v881
    %6489 = vmatprep.subr.mxu0 %v886
    %6490 = vmatpush1.msra.mxu0 %v885
    %6491 = vmatprep.subr.mxu0 %v890
    %6492 = vmatpush1.msra.mxu0 %v889
    %6493 = vmatprep.subr.mxu0 %v894
    %6494 = vmatpush1.msra.mxu0 %v893
    %6495 = vmatprep.subr.mxu0 %v898
    %6496 = vmatpush1.msra.mxu0 %v897
    %6497 = vmatprep.subr.mxu0 %v902
    %6498 = vmatpush1.msra.mxu0 %v901
    %6499 = vmatprep.subr.mxu0 %v906
    %6500 = vmatpush1.msra.mxu0 %v905
    %6501 = vmatprep.subr.mxu0 0.0
    %6502 = vmatpush1.msra.mxu0 0.0
    %6503 = vmatprep.subr.mxu0 0.0
    %6504 = vmatpush1.msra.mxu0 0.0
    %6505 = vmatprep.subr.mxu0 0.0
    %6506 = vmatpush1.msra.mxu0 0.0
    %6507 = vmatprep.subr.mxu0 0.0
    %6508 = vmatpush1.msra.mxu0 0.0
    %6509 = vmatprep.subr.mxu0 0.0
    %6510 = vmatpush1.msra.mxu0 0.0
    %6511 = vmatprep.subr.mxu0 0.0
    %6512 = vmatpush1.msra.mxu0 0.0
    %6513 = vmatprep.subr.mxu0 0.0
    %6514 = vmatpush1.msra.mxu0 0.0
    %6515 = vmatprep.subr.mxu0 0.0
    %6516 = vmatpush1.msra.mxu0 0.0
    %6517 = vmatprep.subr.mxu0 0.0
    %6518 = vmatpush1.msra.mxu0 0.0
    %6519 = vmatprep.subr.mxu0 0.0
    %6520 = vmatpush1.msra.mxu0 0.0
    %6521 = vmatprep.subr.mxu0 0.0
    %6522 = vmatpush1.msra.mxu0 0.0
    %6523 = vmatprep.subr.mxu0 0.0
    %6524 = vmatpush1.msra.mxu0 0.0
    %6525 = vmatprep.subr.mxu0 0.0
    %6526 = vmatpush1.msra.mxu0 0.0
    %6527 = vmatprep.subr.mxu0 0.0
    %6528 = vmatpush1.msra.mxu0 0.0
    %6529 = vmatprep.subr.mxu0 0.0
    %6530 = vmatpush1.msra.mxu0 0.0
    %6531 = vmatprep.subr.mxu0 0.0
    %6532 = vmatpush1.msra.mxu0 0.0
    %6533 = vmatprep.mubr.f32.mxu0 0.0
    %6534 = vmatmul.mubr.f32.gmra.mrb[0].mxu0 %v5517
    %v6535 = vpop.f32.mrb[0].mxu0
    %v6536 = vadd.f32 0.0, %v6535
    %v6537 = vpop.f32.mrb[0].mxu0
    %v6538 = vadd.f32 0.0, %v6537
    %6539 = vdwg.mxu0
    %6540 = vmatprep.subr.mxu0 %v848
    %6541 = vmatpush1.msra.mxu0 %v847
    %6542 = vmatprep.subr.mxu0 %v852
    %6543 = vmatpush1.msra.mxu0 %v851
    %6544 = vmatprep.subr.mxu0 %v856
    %6545 = vmatpush1.msra.mxu0 %v855
    %6546 = vmatprep.subr.mxu0 %v860
    %6547 = vmatpush1.msra.mxu0 %v859
    %6548 = vmatprep.subr.mxu0 %v864
    %6549 = vmatpush1.msra.mxu0 %v863
    %6550 = vmatprep.subr.mxu0 %v868
    %6551 = vmatpush1.msra.mxu0 %v867
    %6552 = vmatprep.subr.mxu0 %v872
    %6553 = vmatpush1.msra.mxu0 %v871
    %6554 = vmatprep.subr.mxu0 %v876
    %6555 = vmatpush1.msra.mxu0 %v875
    %6556 = vmatprep.subr.mxu0 %v880
    %6557 = vmatpush1.msra.mxu0 %v879
    %6558 = vmatprep.subr.mxu0 %v884
    %6559 = vmatpush1.msra.mxu0 %v883
    %6560 = vmatprep.subr.mxu0 %v888
    %6561 = vmatpush1.msra.mxu0 %v887
    %6562 = vmatprep.subr.mxu0 %v892
    %6563 = vmatpush1.msra.mxu0 %v891
    %6564 = vmatprep.subr.mxu0 %v896
    %6565 = vmatpush1.msra.mxu0 %v895
    %6566 = vmatprep.subr.mxu0 %v900
    %6567 = vmatpush1.msra.mxu0 %v899
    %6568 = vmatprep.subr.mxu0 %v904
    %6569 = vmatpush1.msra.mxu0 %v903
    %6570 = vmatprep.subr.mxu0 %v908
    %6571 = vmatpush1.msra.mxu0 %v907
    %6572 = vmatprep.subr.mxu0 0.0
    %6573 = vmatpush1.msra.mxu0 0.0
    %6574 = vmatprep.subr.mxu0 0.0
    %6575 = vmatpush1.msra.mxu0 0.0
    %6576 = vmatprep.subr.mxu0 0.0
    %6577 = vmatpush1.msra.mxu0 0.0
    %6578 = vmatprep.subr.mxu0 0.0
    %6579 = vmatpush1.msra.mxu0 0.0
    %6580 = vmatprep.subr.mxu0 0.0
    %6581 = vmatpush1.msra.mxu0 0.0
    %6582 = vmatprep.subr.mxu0 0.0
    %6583 = vmatpush1.msra.mxu0 0.0
    %6584 = vmatprep.subr.mxu0 0.0
    %6585 = vmatpush1.msra.mxu0 0.0
    %6586 = vmatprep.subr.mxu0 0.0
    %6587 = vmatpush1.msra.mxu0 0.0
    %6588 = vmatprep.subr.mxu0 0.0
    %6589 = vmatpush1.msra.mxu0 0.0
    %6590 = vmatprep.subr.mxu0 0.0
    %6591 = vmatpush1.msra.mxu0 0.0
    %6592 = vmatprep.subr.mxu0 0.0
    %6593 = vmatpush1.msra.mxu0 0.0
    %6594 = vmatprep.subr.mxu0 0.0
    %6595 = vmatpush1.msra.mxu0 0.0
    %6596 = vmatprep.subr.mxu0 0.0
    %6597 = vmatpush1.msra.mxu0 0.0
    %6598 = vmatprep.subr.mxu0 0.0
    %6599 = vmatpush1.msra.mxu0 0.0
    %6600 = vmatprep.subr.mxu0 0.0
    %6601 = vmatpush1.msra.mxu0 0.0
    %6602 = vmatprep.subr.mxu0 0.0
    %6603 = vmatpush1.msra.mxu0 0.0
    %6604 = vmatprep.mubr.f32.mxu0 0.0
    %6605 = vmatmul.mubr.f32.gmra.mrb[0].mxu0 %v5517
    %v6606 = vpop.f32.mrb[0].mxu0
    %v6607 = vadd.f32 0.0, %v6606
    %v6608 = vpop.f32.mrb[0].mxu0
    %v6609 = vadd.f32 0.0, %v6608
    %6610 = vdwg.mxu0
    %v6611 = vadd.f32 %v6394, %v6536
    %v6612 = vadd.f32 %v6396, %v6538
    %v6613 = vadd.f32 %v6465, %v6607
    %v6614 = vadd.f32 %v6467, %v6609
    %v6615 = vmul.f32 %v6611, 0.5
    %v6616 = vmul.f32 %v6612, 0.5
    %v6617 = vmul.f32 %v6613, 0.5
    %v6618 = vtanh.pop %v6615
    %v6619 = vtanh.pop %v6616
    %v6620 = vtanh.pop %v6617
    %v6621 = vadd.f32 %v6618, 1.0
    %v6622 = vadd.f32 %v6619, 1.0
    %v6623 = vadd.f32 %v6620, 1.0
    %v6624 = vmul.f32 %v6621, 0.5
    %v6625 = vmul.f32 %v6622, 0.5
    %v6626 = vmul.f32 %v6623, 0.5
    %v6627 = vtanh.pop %v6614
    %v6628 = vmul.f32 %v6625, %v5515
    %v6629 = vmul.f32 %v6624, %v6627
    %v6630 = vadd.f32 %v6628, %v6629
    %v6631 = vtanh.pop %v6630
    %v6632 = vmul.f32 %v6626, %v6631
    %v6634 = vrot.slane %v5699, 5
    %6636 = vmatprep.subr.mxu0 %v387
    %6637 = vmatpush1.msra.mxu0 %v386
    %6638 = vmatprep.subr.mxu0 %v391
    %6639 = vmatpush1.msra.mxu0 %v390
    %6640 = vmatprep.subr.mxu0 %v395
    %6641 = vmatpush1.msra.mxu0 %v394
    %6642 = vmatprep.subr.mxu0 %v399
    %6643 = vmatpush1.msra.mxu0 %v398
    %6644 = vmatprep.subr.mxu0 %v403
    %6645 = vmatpush1.msra.mxu0 %v402
    %6646 = vmatprep.subr.mxu0 %v407
    %6647 = vmatpush1.msra.mxu0 %v406
    %6648 = vmatprep.subr.mxu0 %v411
    %6649 = vmatpush1.msra.mxu0 %v410
    %6650 = vmatprep.subr.mxu0 %v415
    %6651 = vmatpush1.msra.mxu0 %v414
    %6652 = vmatprep.subr.mxu0 %v419
    %6653 = vmatpush1.msra.mxu0 %v418
    %6654 = vmatprep.subr.mxu0 %v423
    %6655 = vmatpush1.msra.mxu0 %v422
    %6656 = vmatprep.subr.mxu0 %v427
    %6657 = vmatpush1.msra.mxu0 %v426
    %6658 = vmatprep.subr.mxu0 %v431
    %6659 = vmatpush1.msra.mxu0 %v430
    %6660 = vmatprep.subr.mxu0 %v435
    %6661 = vmatpush1.msra.mxu0 %v434
    %6662 = vmatprep.subr.mxu0 %v439
    %6663 = vmatpush1.msra.mxu0 %v438
    %6664 = vmatprep.subr.mxu0 %v443
    %6665 = vmatpush1.msra.mxu0 %v442
    %6666 = vmatprep.subr.mxu0 %v447
    %6667 = vmatpush1.msra.mxu0 %v446
    %6668 = vmatprep.subr.mxu0 0.0
    %6669 = vmatpush1.msra.mxu0 0.0
    %6670 = vmatprep.subr.mxu0 0.0
    %6671 = vmatpush1.msra.mxu0 0.0
    %6672 = vmatprep.subr.mxu0 0.0
    %6673 = vmatpush1.msra.mxu0 0.0
    %6674 = vmatprep.subr.mxu0 0.0
    %6675 = vmatpush1.msra.mxu0 0.0
    %6676 = vmatprep.subr.mxu0 0.0
    %6677 = vmatpush1.msra.mxu0 0.0
    %6678 = vmatprep.subr.mxu0 0.0
    %6679 = vmatpush1.msra.mxu0 0.0
    %6680 = vmatprep.subr.mxu0 0.0
    %6681 = vmatpush1.msra.mxu0 0.0
    %6682 = vmatprep.subr.mxu0 0.0
    %6683 = vmatpush1.msra.mxu0 0.0
    %6684 = vmatprep.subr.mxu0 0.0
    %6685 = vmatpush1.msra.mxu0 0.0
    %6686 = vmatprep.subr.mxu0 0.0
    %6687 = vmatpush1.msra.mxu0 0.0
    %6688 = vmatprep.subr.mxu0 0.0
    %6689 = vmatpush1.msra.mxu0 0.0
    %6690 = vmatprep.subr.mxu0 0.0
    %6691 = vmatpush1.msra.mxu0 0.0
    %6692 = vmatprep.subr.mxu0 0.0
    %6693 = vmatpush1.msra.mxu0 0.0
    %6694 = vmatprep.subr.mxu0 0.0
    %6695 = vmatpush1.msra.mxu0 0.0
    %6696 = vmatprep.subr.mxu0 0.0
    %6697 = vmatpush1.msra.mxu0 0.0
    %6698 = vmatprep.subr.mxu0 0.0
    %6699 = vmatpush1.msra.mxu0 0.0
    %6700 = vmatprep.mubr.f32.mxu0 0.0
    %6701 = vmatmul.mubr.f32.gmra.mrb[0].mxu0 %v6634
    %v6702 = vpop.f32.mrb[0].mxu0
    %v6703 = vadd.f32 0.0, %v6702
    %v6704 = vpop.f32.mrb[0].mxu0
    %v6705 = vadd.f32 0.0, %v6704
    %6706 = vdwg.mxu0
    %6707 = vmatprep.subr.mxu0 %v389
    %6708 = vmatpush1.msra.mxu0 %v388
    %6709 = vmatprep.subr.mxu0 %v393
    %6710 = vmatpush1.msra.mxu0 %v392
    %6711 = vmatprep.subr.mxu0 %v397
    %6712 = vmatpush1.msra.mxu0 %v396
    %6713 = vmatprep.subr.mxu0 %v401
    %6714 = vmatpush1.msra.mxu0 %v400
    %6715 = vmatprep.subr.mxu0 %v405
    %6716 = vmatpush1.msra.mxu0 %v404
    %6717 = vmatprep.subr.mxu0 %v409
    %6718 = vmatpush1.msra.mxu0 %v408
    %6719 = vmatprep.subr.mxu0 %v413
    %6720 = vmatpush1.msra.mxu0 %v412
    %6721 = vmatprep.subr.mxu0 %v417
    %6722 = vmatpush1.msra.mxu0 %v416
    %6723 = vmatprep.subr.mxu0 %v421
    %6724 = vmatpush1.msra.mxu0 %v420
    %6725 = vmatprep.subr.mxu0 %v425
    %6726 = vmatpush1.msra.mxu0 %v424
    %6727 = vmatprep.subr.mxu0 %v429
    %6728 = vmatpush1.msra.mxu0 %v428
    %6729 = vmatprep.subr.mxu0 %v433
    %6730 = vmatpush1.msra.mxu0 %v432
    %6731 = vmatprep.subr.mxu0 %v437
    %6732 = vmatpush1.msra.mxu0 %v436
    %6733 = vmatprep.subr.mxu0 %v441
    %6734 = vmatpush1.msra.mxu0 %v440
    %6735 = vmatprep.subr.mxu0 %v445
    %6736 = vmatpush1.msra.mxu0 %v444
    %6737 = vmatprep.subr.mxu0 %v449
    %6738 = vmatpush1.msra.mxu0 %v448
    %6739 = vmatprep.subr.mxu0 0.0
    %6740 = vmatpush1.msra.mxu0 0.0
    %6741 = vmatprep.subr.mxu0 0.0
    %6742 = vmatpush1.msra.mxu0 0.0
    %6743 = vmatprep.subr.mxu0 0.0
    %6744 = vmatpush1.msra.mxu0 0.0
    %6745 = vmatprep.subr.mxu0 0.0
    %6746 = vmatpush1.msra.mxu0 0.0
    %6747 = vmatprep.subr.mxu0 0.0
    %6748 = vmatpush1.msra.mxu0 0.0
    %6749 = vmatprep.subr.mxu0 0.0
    %6750 = vmatpush1.msra.mxu0 0.0
    %6751 = vmatprep.subr.mxu0 0.0
    %6752 = vmatpush1.msra.mxu0 0.0
    %6753 = vmatprep.subr.mxu0 0.0
    %6754 = vmatpush1.msra.mxu0 0.0
    %6755 = vmatprep.subr.mxu0 0.0
    %6756 = vmatpush1.msra.mxu0 0.0
    %6757 = vmatprep.subr.mxu0 0.0
    %6758 = vmatpush1.msra.mxu0 0.0
    %6759 = vmatprep.subr.mxu0 0.0
    %6760 = vmatpush1.msra.mxu0 0.0
    %6761 = vmatprep.subr.mxu0 0.0
    %6762 = vmatpush1.msra.mxu0 0.0
    %6763 = vmatprep.subr.mxu0 0.0
    %6764 = vmatpush1.msra.mxu0 0.0
    %6765 = vmatprep.subr.mxu0 0.0
    %6766 = vmatpush1.msra.mxu0 0.0
    %6767 = vmatprep.subr.mxu0 0.0
    %6768 = vmatpush1.msra.mxu0 0.0
    %6769 = vmatprep.subr.mxu0 0.0
    %6770 = vmatpush1.msra.mxu0 0.0
    %6771 = vmatprep.mubr.f32.mxu0 0.0
    %6772 = vmatmul.mubr.f32.gmra.mrb[0].mxu0 %v6634
    %v6773 = vpop.f32.mrb[0].mxu0
    %v6774 = vadd.f32 0.0, %v6773
    %v6775 = vpop.f32.mrb[0].mxu0
    %v6776 = vadd.f32 0.0, %v6775
    %6777 = vdwg.mxu0
    %v6782 = vrot.slane %v6703, 2
    %v6783 = vrot.slane %v6705, 2
    %v6784 = vrot.slane %v6774, 2
    %v6785 = vrot.slane %v6776, 2
    %v6790 = vadd.f32 %v311, %v6782
    %v6791 = vadd.f32 %v313, %v6783
    %v6792 = vadd.f32 %v382, %v6784
    %v6793 = vadd.f32 %v384, %v6785
    %v6794 = vmul.f32 %v6790, 0.5
    %v6795 = vmul.f32 %v6791, 0.5
    %v6796 = vmul.f32 %v6792, 0.5
    %v6797 = vtanh.pop %v6794
    %v6798 = vtanh.pop %v6795
    %v6799 = vtanh.pop %v6796
    %v6800 = vadd.f32 %v6797, 1.0
    %v6801 = vadd.f32 %v6798, 1.0
    %v6802 = vadd.f32 %v6799, 1.0
    %v6803 = vmul.f32 %v6800, 0.5
    %v6804 = vmul.f32 %v6801, 0.5
    %v6805 = vmul.f32 %v6802, 0.5
    %v6806 = vtanh.pop %v6793
    %v6808 = vrot.slane %v5697, 7
    %v6810 = vmul.f32 %v6804, %v6808
    %v6811 = vmul.f32 %v6803, %v6806
    %v6812 = vadd.f32 %v6810, %v6811
    %v6813 = vtanh.pop %v6812
    %v6814 = vmul.f32 %v6805, %v6813
    %v6815 = vmul.f32 %v6319, 0.5
    %v6816 = vtanh.pop %v6815
    %v6817 = vadd.f32 %v6816, 1.0
    %v6818 = vmul.f32 %v6817, 0.5
    %6819 = vmatprep.subr.mxu0 %v2211
    %6820 = vmatpush1.msra.mxu0 %v2210
    %6821 = vmatprep.subr.mxu0 %v2215
    %6822 = vmatpush1.msra.mxu0 %v2214
    %6823 = vmatprep.subr.mxu0 %v2219
    %6824 = vmatpush1.msra.mxu0 %v2218
    %6825 = vmatprep.subr.mxu0 %v2223
    %6826 = vmatpush1.msra.mxu0 %v2222
    %6827 = vmatprep.subr.mxu0 %v2227
    %6828 = vmatpush1.msra.mxu0 %v2226
    %6829 = vmatprep.subr.mxu0 %v2231
    %6830 = vmatpush1.msra.mxu0 %v2230
    %6831 = vmatprep.subr.mxu0 %v2235
    %6832 = vmatpush1.msra.mxu0 %v2234
    %6833 = vmatprep.subr.mxu0 %v2239
    %6834 = vmatpush1.msra.mxu0 %v2238
    %6835 = vmatprep.subr.mxu0 %v2243
    %6836 = vmatpush1.msra.mxu0 %v2242
    %6837 = vmatprep.subr.mxu0 %v2247
    %6838 = vmatpush1.msra.mxu0 %v2246
    %6839 = vmatprep.subr.mxu0 %v2251
    %6840 = vmatpush1.msra.mxu0 %v2250
    %6841 = vmatprep.subr.mxu0 %v2255
    %6842 = vmatpush1.msra.mxu0 %v2254
    %6843 = vmatprep.subr.mxu0 %v2259
    %6844 = vmatpush1.msra.mxu0 %v2258
    %6845 = vmatprep.subr.mxu0 %v2263
    %6846 = vmatpush1.msra.mxu0 %v2262
    %6847 = vmatprep.subr.mxu0 %v2267
    %6848 = vmatpush1.msra.mxu0 %v2266
    %6849 = vmatprep.subr.mxu0 %v2271
    %6850 = vmatpush1.msra.mxu0 %v2270
    %6851 = vmatprep.subr.mxu0 0.0
    %6852 = vmatpush1.msra.mxu0 0.0
    %6853 = vmatprep.subr.mxu0 0.0
    %6854 = vmatpush1.msra.mxu0 0.0
    %6855 = vmatprep.subr.mxu0 0.0
    %6856 = vmatpush1.msra.mxu0 0.0
    %6857 = vmatprep.subr.mxu0 0.0
    %6858 = vmatpush1.msra.mxu0 0.0
    %6859 = vmatprep.subr.mxu0 0.0
    %6860 = vmatpush1.msra.mxu0 0.0
    %6861 = vmatprep.subr.mxu0 0.0
    %6862 = vmatpush1.msra.mxu0 0.0
    %6863 = vmatprep.subr.mxu0 0.0
    %6864 = vmatpush1.msra.mxu0 0.0
    %6865 = vmatprep.subr.mxu0 0.0
    %6866 = vmatpush1.msra.mxu0 0.0
    %6867 = vmatprep.subr.mxu0 0.0
    %6868 = vmatpush1.msra.mxu0 0.0
    %6869 = vmatprep.subr.mxu0 0.0
    %6870 = vmatpush1.msra.mxu0 0.0
    %6871 = vmatprep.subr.mxu0 0.0
    %6872 = vmatpush1.msra.mxu0 0.0
    %6873 = vmatprep.subr.mxu0 0.0
    %6874 = vmatpush1.msra.mxu0 0.0
    %6875 = vmatprep.subr.mxu0 0.0
    %6876 = vmatpush1.msra.mxu0 0.0
    %6877 = vmatprep.subr.mxu0 0.0
    %6878 = vmatpush1.msra.mxu0 0.0
    %6879 = vmatprep.subr.mxu0 0.0
    %6880 = vmatpush1.msra.mxu0 0.0
    %6881 = vmatprep.subr.mxu0 0.0
    %6882 = vmatpush1.msra.mxu0 0.0
    %6883 = vmatprep.mubr.f32.mxu0 0.0
    %6884 = vmatmul.mubr.f32.gmra.mrb[0].mxu0 %v6818
    %v6885 = vpop.f32.mrb[0].mxu0
    %v6886 = vadd.f32 %v2278, %v6885
    %v6887 = vpop.f32.mrb[0].mxu0
    %v6888 = vadd.f32 %v2282, %v6887
    %6889 = vdwg.mxu0
    %6890 = vmatprep.subr.mxu0 %v2213
    %6891 = vmatpush1.msra.mxu0 %v2212
    %6892 = vmatprep.subr.mxu0 %v2217
    %6893 = vmatpush1.msra.mxu0 %v2216
    %6894 = vmatprep.subr.mxu0 %v2221
    %6895 = vmatpush1.msra.mxu0 %v2220
    %6896 = vmatprep.subr.mxu0 %v2225
    %6897 = vmatpush1.msra.mxu0 %v2224
    %6898 = vmatprep.subr.mxu0 %v2229
    %6899 = vmatpush1.msra.mxu0 %v2228
    %6900 = vmatprep.subr.mxu0 %v2233
    %6901 = vmatpush1.msra.mxu0 %v2232
    %6902 = vmatprep.subr.mxu0 %v2237
    %6903 = vmatpush1.msra.mxu0 %v2236
    %6904 = vmatprep.subr.mxu0 %v2241
    %6905 = vmatpush1.msra.mxu0 %v2240
    %6906 = vmatprep.subr.mxu0 %v2245
    %6907 = vmatpush1.msra.mxu0 %v2244
    %6908 = vmatprep.subr.mxu0 %v2249
    %6909 = vmatpush1.msra.mxu0 %v2248
    %6910 = vmatprep.subr.mxu0 %v2253
    %6911 = vmatpush1.msra.mxu0 %v2252
    %6912 = vmatprep.subr.mxu0 %v2257
    %6913 = vmatpush1.msra.mxu0 %v2256
    %6914 = vmatprep.subr.mxu0 %v2261
    %6915 = vmatpush1.msra.mxu0 %v2260
    %6916 = vmatprep.subr.mxu0 %v2265
    %6917 = vmatpush1.msra.mxu0 %v2264
    %6918 = vmatprep.subr.mxu0 %v2269
    %6919 = vmatpush1.msra.mxu0 %v2268
    %6920 = vmatprep.subr.mxu0 %v2273
    %6921 = vmatpush1.msra.mxu0 %v2272
    %6922 = vmatprep.subr.mxu0 0.0
    %6923 = vmatpush1.msra.mxu0 0.0
    %6924 = vmatprep.subr.mxu0 0.0
    %6925 = vmatpush1.msra.mxu0 0.0
    %6926 = vmatprep.subr.mxu0 0.0
    %6927 = vmatpush1.msra.mxu0 0.0
    %6928 = vmatprep.subr.mxu0 0.0
    %6929 = vmatpush1.msra.mxu0 0.0
    %6930 = vmatprep.subr.mxu0 0.0
    %6931 = vmatpush1.msra.mxu0 0.0
    %6932 = vmatprep.subr.mxu0 0.0
    %6933 = vmatpush1.msra.mxu0 0.0
    %6934 = vmatprep.subr.mxu0 0.0
    %6935 = vmatpush1.msra.mxu0 0.0
    %6936 = vmatprep.subr.mxu0 0.0
    %6937 = vmatpush1.msra.mxu0 0.0
    %6938 = vmatprep.subr.mxu0 0.0
    %6939 = vmatpush1.msra.mxu0 0.0
    %6940 = vmatprep.subr.mxu0 0.0
    %6941 = vmatpush1.msra.mxu0 0.0
    %6942 = vmatprep.subr.mxu0 0.0
    %6943 = vmatpush1.msra.mxu0 0.0
    %6944 = vmatprep.subr.mxu0 0.0
    %6945 = vmatpush1.msra.mxu0 0.0
    %6946 = vmatprep.subr.mxu0 0.0
    %6947 = vmatpush1.msra.mxu0 0.0
    %6948 = vmatprep.subr.mxu0 0.0
    %6949 = vmatpush1.msra.mxu0 0.0
    %6950 = vmatprep.subr.mxu0 0.0
    %6951 = vmatpush1.msra.mxu0 0.0
    %6952 = vmatprep.subr.mxu0 0.0
    %6953 = vmatpush1.msra.mxu0 0.0
    %6954 = vmatprep.mubr.f32.mxu0 0.0
    %6955 = vmatmul.mubr.f32.gmra.mrb[0].mxu0 %v6818
    %v6956 = vpop.f32.mrb[0].mxu0
    %v6957 = vadd.f32 %v2286, %v6956
    %v6958 = vpop.f32.mrb[0].mxu0
    %v6959 = vadd.f32 %v2290, %v6958
    %6960 = vdwg.mxu0
    %6961 = vmatprep.subr.mxu0 %v2438
    %6962 = vmatpush1.msra.mxu0 %v2437
    %6963 = vmatprep.subr.mxu0 %v2442
    %6964 = vmatpush1.msra.mxu0 %v2441
    %6965 = vmatprep.subr.mxu0 %v2446
    %6966 = vmatpush1.msra.mxu0 %v2445
    %6967 = vmatprep.subr.mxu0 %v2450
    %6968 = vmatpush1.msra.mxu0 %v2449
    %6969 = vmatprep.subr.mxu0 %v2454
    %6970 = vmatpush1.msra.mxu0 %v2453
    %6971 = vmatprep.subr.mxu0 %v2458
    %6972 = vmatpush1.msra.mxu0 %v2457
    %6973 = vmatprep.subr.mxu0 %v2462
    %6974 = vmatpush1.msra.mxu0 %v2461
    %6975 = vmatprep.subr.mxu0 %v2466
    %6976 = vmatpush1.msra.mxu0 %v2465
    %6977 = vmatprep.subr.mxu0 %v2470
    %6978 = vmatpush1.msra.mxu0 %v2469
    %6979 = vmatprep.subr.mxu0 %v2474
    %6980 = vmatpush1.msra.mxu0 %v2473
    %6981 = vmatprep.subr.mxu0 %v2478
    %6982 = vmatpush1.msra.mxu0 %v2477
    %6983 = vmatprep.subr.mxu0 %v2482
    %6984 = vmatpush1.msra.mxu0 %v2481
    %6985 = vmatprep.subr.mxu0 %v2486
    %6986 = vmatpush1.msra.mxu0 %v2485
    %6987 = vmatprep.subr.mxu0 %v2490
    %6988 = vmatpush1.msra.mxu0 %v2489
    %6989 = vmatprep.subr.mxu0 %v2494
    %6990 = vmatpush1.msra.mxu0 %v2493
    %6991 = vmatprep.subr.mxu0 %v2498
    %6992 = vmatpush1.msra.mxu0 %v2497
    %6993 = vmatprep.subr.mxu0 0.0
    %6994 = vmatpush1.msra.mxu0 0.0
    %6995 = vmatprep.subr.mxu0 0.0
    %6996 = vmatpush1.msra.mxu0 0.0
    %6997 = vmatprep.subr.mxu0 0.0
    %6998 = vmatpush1.msra.mxu0 0.0
    %6999 = vmatprep.subr.mxu0 0.0
    %7000 = vmatpush1.msra.mxu0 0.0
    %7001 = vmatprep.subr.mxu0 0.0
    %7002 = vmatpush1.msra.mxu0 0.0
    %7003 = vmatprep.subr.mxu0 0.0
    %7004 = vmatpush1.msra.mxu0 0.0
    %7005 = vmatprep.subr.mxu0 0.0
    %7006 = vmatpush1.msra.mxu0 0.0
    %7007 = vmatprep.subr.mxu0 0.0
    %7008 = vmatpush1.msra.mxu0 0.0
    %7009 = vmatprep.subr.mxu0 0.0
    %7010 = vmatpush1.msra.mxu0 0.0
    %7011 = vmatprep.subr.mxu0 0.0
    %7012 = vmatpush1.msra.mxu0 0.0
    %7013 = vmatprep.subr.mxu0 0.0
    %7014 = vmatpush1.msra.mxu0 0.0
    %7015 = vmatprep.subr.mxu0 0.0
    %7016 = vmatpush1.msra.mxu0 0.0
    %7017 = vmatprep.subr.mxu0 0.0
    %7018 = vmatpush1.msra.mxu0 0.0
    %7019 = vmatprep.subr.mxu0 0.0
    %7020 = vmatpush1.msra.mxu0 0.0
    %7021 = vmatprep.subr.mxu0 0.0
    %7022 = vmatpush1.msra.mxu0 0.0
    %7023 = vmatprep.subr.mxu0 0.0
    %7024 = vmatpush1.msra.mxu0 0.0
    %7025 = vmatprep.mubr.f32.mxu0 0.0
    %7026 = vmatmul.mubr.f32.gmra.mrb[0].mxu0 %v6009
    %v7027 = vpop.f32.mrb[0].mxu0
    %v7028 = vadd.f32 0.0, %v7027
    %v7029 = vpop.f32.mrb[0].mxu0
    %v7030 = vadd.f32 0.0, %v7029
    %7031 = vdwg.mxu0
    %7032 = vmatprep.subr.mxu0 %v2440
    %7033 = vmatpush1.msra.mxu0 %v2439
    %7034 = vmatprep.subr.mxu0 %v2444
    %7035 = vmatpush1.msra.mxu0 %v2443
    %7036 = vmatprep.subr.mxu0 %v2448
    %7037 = vmatpush1.msra.mxu0 %v2447
    %7038 = vmatprep.subr.mxu0 %v2452
    %7039 = vmatpush1.msra.mxu0 %v2451
    %7040 = vmatprep.subr.mxu0 %v2456
    %7041 = vmatpush1.msra.mxu0 %v2455
    %7042 = vmatprep.subr.mxu0 %v2460
    %7043 = vmatpush1.msra.mxu0 %v2459
    %7044 = vmatprep.subr.mxu0 %v2464
    %7045 = vmatpush1.msra.mxu0 %v2463
    %7046 = vmatprep.subr.mxu0 %v2468
    %7047 = vmatpush1.msra.mxu0 %v2467
    %7048 = vmatprep.subr.mxu0 %v2472
    %7049 = vmatpush1.msra.mxu0 %v2471
    %7050 = vmatprep.subr.mxu0 %v2476
    %7051 = vmatpush1.msra.mxu0 %v2475
    %7052 = vmatprep.subr.mxu0 %v2480
    %7053 = vmatpush1.msra.mxu0 %v2479
    %7054 = vmatprep.subr.mxu0 %v2484
    %7055 = vmatpush1.msra.mxu0 %v2483
    %7056 = vmatprep.subr.mxu0 %v2488
    %7057 = vmatpush1.msra.mxu0 %v2487
    %7058 = vmatprep.subr.mxu0 %v2492
    %7059 = vmatpush1.msra.mxu0 %v2491
    %7060 = vmatprep.subr.mxu0 %v2496
    %7061 = vmatpush1.msra.mxu0 %v2495
    %7062 = vmatprep.subr.mxu0 %v2500
    %7063 = vmatpush1.msra.mxu0 %v2499
    %7064 = vmatprep.subr.mxu0 0.0
    %7065 = vmatpush1.msra.mxu0 0.0
    %7066 = vmatprep.subr.mxu0 0.0
    %7067 = vmatpush1.msra.mxu0 0.0
    %7068 = vmatprep.subr.mxu0 0.0
    %7069 = vmatpush1.msra.mxu0 0.0
    %7070 = vmatprep.subr.mxu0 0.0
    %7071 = vmatpush1.msra.mxu0 0.0
    %7072 = vmatprep.subr.mxu0 0.0
    %7073 = vmatpush1.msra.mxu0 0.0
    %7074 = vmatprep.subr.mxu0 0.0
    %7075 = vmatpush1.msra.mxu0 0.0
    %7076 = vmatprep.subr.mxu0 0.0
    %7077 = vmatpush1.msra.mxu0 0.0
    %7078 = vmatprep.subr.mxu0 0.0
    %7079 = vmatpush1.msra.mxu0 0.0
    %7080 = vmatprep.subr.mxu0 0.0
    %7081 = vmatpush1.msra.mxu0 0.0
    %7082 = vmatprep.subr.mxu0 0.0
    %7083 = vmatpush1.msra.mxu0 0.0
    %7084 = vmatprep.subr.mxu0 0.0
    %7085 = vmatpush1.msra.mxu0 0.0
    %7086 = vmatprep.subr.mxu0 0.0
    %7087 = vmatpush1.msra.mxu0 0.0
    %7088 = vmatprep.subr.mxu0 0.0
    %7089 = vmatpush1.msra.mxu0 0.0
    %7090 = vmatprep.subr.mxu0 0.0
    %7091 = vmatpush1.msra.mxu0 0.0
    %7092 = vmatprep.subr.mxu0 0.0
    %7093 = vmatpush1.msra.mxu0 0.0
    %7094 = vmatprep.subr.mxu0 0.0
    %7095 = vmatpush1.msra.mxu0 0.0
    %7096 = vmatprep.mubr.f32.mxu0 0.0
    %7097 = vmatmul.mubr.f32.gmra.mrb[0].mxu0 %v6009
    %v7098 = vpop.f32.mrb[0].mxu0
    %v7099 = vadd.f32 0.0, %v7098
    %v7100 = vpop.f32.mrb[0].mxu0
    %v7101 = vadd.f32 0.0, %v7100
    %7102 = vdwg.mxu0
    %v7103 = vadd.f32 %v6886, %v7028
    %v7104 = vadd.f32 %v6888, %v7030
    %v7105 = vadd.f32 %v6957, %v7099
    %v7106 = vadd.f32 %v6959, %v7101
    %v7107 = vmul.f32 %v7103, 0.5
    %v7108 = vmul.f32 %v7104, 0.5
    %v7109 = vmul.f32 %v7105, 0.5
    %v7110 = vtanh.pop %v7107
    %v7111 = vtanh.pop %v7108
    %v7112 = vtanh.pop %v7109
    %v7113 = vadd.f32 %v7110, 1.0
    %v7114 = vadd.f32 %v7111, 1.0
    %v7115 = vadd.f32 %v7112, 1.0
    %v7116 = vmul.f32 %v7113, 0.5
    %v7117 = vmul.f32 %v7114, 0.5
    %v7118 = vmul.f32 %v7115, 0.5
    %v7119 = vtanh.pop %v7106
    %v7120 = vmul.f32 %v7117, %v6007
    %v7121 = vmul.f32 %v7116, %v7119
    %v7122 = vadd.f32 %v7120, %v7121
    %v7123 = vtanh.pop %v7122
    %v7124 = vmul.f32 %v7118, %v7123
    %v7125 = vmul.f32 %v6632, 0.5
    %v7126 = vtanh.pop %v7125
    %v7127 = vadd.f32 %v7126, 1.0
    %v7128 = vmul.f32 %v7127, 0.5
    %7129 = vmatprep.subr.mxu0 %v1257
    %7130 = vmatpush1.msra.mxu0 %v1256
    %7131 = vmatprep.subr.mxu0 %v1261
    %7132 = vmatpush1.msra.mxu0 %v1260
    %7133 = vmatprep.subr.mxu0 %v1265
    %7134 = vmatpush1.msra.mxu0 %v1264
    %7135 = vmatprep.subr.mxu0 %v1269
    %7136 = vmatpush1.msra.mxu0 %v1268
    %7137 = vmatprep.subr.mxu0 %v1273
    %7138 = vmatpush1.msra.mxu0 %v1272
    %7139 = vmatprep.subr.mxu0 %v1277
    %7140 = vmatpush1.msra.mxu0 %v1276
    %7141 = vmatprep.subr.mxu0 %v1281
    %7142 = vmatpush1.msra.mxu0 %v1280
    %7143 = vmatprep.subr.mxu0 %v1285
    %7144 = vmatpush1.msra.mxu0 %v1284
    %7145 = vmatprep.subr.mxu0 %v1289
    %7146 = vmatpush1.msra.mxu0 %v1288
    %7147 = vmatprep.subr.mxu0 %v1293
    %7148 = vmatpush1.msra.mxu0 %v1292
    %7149 = vmatprep.subr.mxu0 %v1297
    %7150 = vmatpush1.msra.mxu0 %v1296
    %7151 = vmatprep.subr.mxu0 %v1301
    %7152 = vmatpush1.msra.mxu0 %v1300
    %7153 = vmatprep.subr.mxu0 %v1305
    %7154 = vmatpush1.msra.mxu0 %v1304
    %7155 = vmatprep.subr.mxu0 %v1309
    %7156 = vmatpush1.msra.mxu0 %v1308
    %7157 = vmatprep.subr.mxu0 %v1313
    %7158 = vmatpush1.msra.mxu0 %v1312
    %7159 = vmatprep.subr.mxu0 %v1317
    %7160 = vmatpush1.msra.mxu0 %v1316
    %7161 = vmatprep.subr.mxu0 0.0
    %7162 = vmatpush1.msra.mxu0 0.0
    %7163 = vmatprep.subr.mxu0 0.0
    %7164 = vmatpush1.msra.mxu0 0.0
    %7165 = vmatprep.subr.mxu0 0.0
    %7166 = vmatpush1.msra.mxu0 0.0
    %7167 = vmatprep.subr.mxu0 0.0
    %7168 = vmatpush1.msra.mxu0 0.0
    %7169 = vmatprep.subr.mxu0 0.0
    %7170 = vmatpush1.msra.mxu0 0.0
    %7171 = vmatprep.subr.mxu0 0.0
    %7172 = vmatpush1.msra.mxu0 0.0
    %7173 = vmatprep.subr.mxu0 0.0
    %7174 = vmatpush1.msra.mxu0 0.0
    %7175 = vmatprep.subr.mxu0 0.0
    %7176 = vmatpush1.msra.mxu0 0.0
    %7177 = vmatprep.subr.mxu0 0.0
    %7178 = vmatpush1.msra.mxu0 0.0
    %7179 = vmatprep.subr.mxu0 0.0
    %7180 = vmatpush1.msra.mxu0 0.0
    %7181 = vmatprep.subr.mxu0 0.0
    %7182 = vmatpush1.msra.mxu0 0.0
    %7183 = vmatprep.subr.mxu0 0.0
    %7184 = vmatpush1.msra.mxu0 0.0
    %7185 = vmatprep.subr.mxu0 0.0
    %7186 = vmatpush1.msra.mxu0 0.0
    %7187 = vmatprep.subr.mxu0 0.0
    %7188 = vmatpush1.msra.mxu0 0.0
    %7189 = vmatprep.subr.mxu0 0.0
    %7190 = vmatpush1.msra.mxu0 0.0
    %7191 = vmatprep.subr.mxu0 0.0
    %7192 = vmatpush1.msra.mxu0 0.0
    %7193 = vmatprep.mubr.f32.mxu0 0.0
    %7194 = vmatmul.mubr.f32.gmra.mrb[0].mxu0 %v7128
    %v7195 = vpop.f32.mrb[0].mxu0
    %v7196 = vadd.f32 %v1324, %v7195
    %v7197 = vpop.f32.mrb[0].mxu0
    %v7198 = vadd.f32 %v1328, %v7197
    %7199 = vdwg.mxu0
    %7200 = vmatprep.subr.mxu0 %v1259
    %7201 = vmatpush1.msra.mxu0 %v1258
    %7202 = vmatprep.subr.mxu0 %v1263
    %7203 = vmatpush1.msra.mxu0 %v1262
    %7204 = vmatprep.subr.mxu0 %v1267
    %7205 = vmatpush1.msra.mxu0 %v1266
    %7206 = vmatprep.subr.mxu0 %v1271
    %7207 = vmatpush1.msra.mxu0 %v1270
    %7208 = vmatprep.subr.mxu0 %v1275
    %7209 = vmatpush1.msra.mxu0 %v1274
    %7210 = vmatprep.subr.mxu0 %v1279
    %7211 = vmatpush1.msra.mxu0 %v1278
    %7212 = vmatprep.subr.mxu0 %v1283
    %7213 = vmatpush1.msra.mxu0 %v1282
    %7214 = vmatprep.subr.mxu0 %v1287
    %7215 = vmatpush1.msra.mxu0 %v1286
    %7216 = vmatprep.subr.mxu0 %v1291
    %7217 = vmatpush1.msra.mxu0 %v1290
    %7218 = vmatprep.subr.mxu0 %v1295
    %7219 = vmatpush1.msra.mxu0 %v1294
    %7220 = vmatprep.subr.mxu0 %v1299
    %7221 = vmatpush1.msra.mxu0 %v1298
    %7222 = vmatprep.subr.mxu0 %v1303
    %7223 = vmatpush1.msra.mxu0 %v1302
    %7224 = vmatprep.subr.mxu0 %v1307
    %7225 = vmatpush1.msra.mxu0 %v1306
    %7226 = vmatprep.subr.mxu0 %v1311
    %7227 = vmatpush1.msra.mxu0 %v1310
    %7228 = vmatprep.subr.mxu0 %v1315
    %7229 = vmatpush1.msra.mxu0 %v1314
    %7230 = vmatprep.subr.mxu0 %v1319
    %7231 = vmatpush1.msra.mxu0 %v1318
    %7232 = vmatprep.subr.mxu0 0.0
    %7233 = vmatpush1.msra.mxu0 0.0
    %7234 = vmatprep.subr.mxu0 0.0
    %7235 = vmatpush1.msra.mxu0 0.0
    %7236 = vmatprep.subr.mxu0 0.0
    %7237 = vmatpush1.msra.mxu0 0.0
    %7238 = vmatprep.subr.mxu0 0.0
    %7239 = vmatpush1.msra.mxu0 0.0
    %7240 = vmatprep.subr.mxu0 0.0
    %7241 = vmatpush1.msra.mxu0 0.0
    %7242 = vmatprep.subr.mxu0 0.0
    %7243 = vmatpush1.msra.mxu0 0.0
    %7244 = vmatprep.subr.mxu0 0.0
    %7245 = vmatpush1.msra.mxu0 0.0
    %7246 = vmatprep.subr.mxu0 0.0
    %7247 = vmatpush1.msra.mxu0 0.0
    %7248 = vmatprep.subr.mxu0 0.0
    %7249 = vmatpush1.msra.mxu0 0.0
    %7250 = vmatprep.subr.mxu0 0.0
    %7251 = vmatpush1.msra.mxu0 0.0
    %7252 = vmatprep.subr.mxu0 0.0
    %7253 = vmatpush1.msra.mxu0 0.0
    %7254 = vmatprep.subr.mxu0 0.0
    %7255 = vmatpush1.msra.mxu0 0.0
    %7256 = vmatprep.subr.mxu0 0.0
    %7257 = vmatpush1.msra.mxu0 0.0
    %7258 = vmatprep.subr.mxu0 0.0
    %7259 = vmatpush1.msra.mxu0 0.0
    %7260 = vmatprep.subr.mxu0 0.0
    %7261 = vmatpush1.msra.mxu0 0.0
    %7262 = vmatprep.subr.mxu0 0.0
    %7263 = vmatpush1.msra.mxu0 0.0
    %7264 = vmatprep.mubr.f32.mxu0 0.0
    %7265 = vmatmul.mubr.f32.gmra.mrb[0].mxu0 %v7128
    %v7266 = vpop.f32.mrb[0].mxu0
    %v7267 = vadd.f32 %v1332, %v7266
    %v7268 = vpop.f32.mrb[0].mxu0
    %v7269 = vadd.f32 %v1336, %v7268
    %7270 = vdwg.mxu0
    %7271 = vmatprep.subr.mxu0 %v1484
    %7272 = vmatpush1.msra.mxu0 %v1483
    %7273 = vmatprep.subr.mxu0 %v1488
    %7274 = vmatpush1.msra.mxu0 %v1487
    %7275 = vmatprep.subr.mxu0 %v1492
    %7276 = vmatpush1.msra.mxu0 %v1491
    %7277 = vmatprep.subr.mxu0 %v1496
    %7278 = vmatpush1.msra.mxu0 %v1495
    %7279 = vmatprep.subr.mxu0 %v1500
    %7280 = vmatpush1.msra.mxu0 %v1499
    %7281 = vmatprep.subr.mxu0 %v1504
    %7282 = vmatpush1.msra.mxu0 %v1503
    %7283 = vmatprep.subr.mxu0 %v1508
    %7284 = vmatpush1.msra.mxu0 %v1507
    %7285 = vmatprep.subr.mxu0 %v1512
    %7286 = vmatpush1.msra.mxu0 %v1511
    %7287 = vmatprep.subr.mxu0 %v1516
    %7288 = vmatpush1.msra.mxu0 %v1515
    %7289 = vmatprep.subr.mxu0 %v1520
    %7290 = vmatpush1.msra.mxu0 %v1519
    %7291 = vmatprep.subr.mxu0 %v1524
    %7292 = vmatpush1.msra.mxu0 %v1523
    %7293 = vmatprep.subr.mxu0 %v1528
    %7294 = vmatpush1.msra.mxu0 %v1527
    %7295 = vmatprep.subr.mxu0 %v1532
    %7296 = vmatpush1.msra.mxu0 %v1531
    %7297 = vmatprep.subr.mxu0 %v1536
    %7298 = vmatpush1.msra.mxu0 %v1535
    %7299 = vmatprep.subr.mxu0 %v1540
    %7300 = vmatpush1.msra.mxu0 %v1539
    %7301 = vmatprep.subr.mxu0 %v1544
    %7302 = vmatpush1.msra.mxu0 %v1543
    %7303 = vmatprep.subr.mxu0 0.0
    %7304 = vmatpush1.msra.mxu0 0.0
    %7305 = vmatprep.subr.mxu0 0.0
    %7306 = vmatpush1.msra.mxu0 0.0
    %7307 = vmatprep.subr.mxu0 0.0
    %7308 = vmatpush1.msra.mxu0 0.0
    %7309 = vmatprep.subr.mxu0 0.0
    %7310 = vmatpush1.msra.mxu0 0.0
    %7311 = vmatprep.subr.mxu0 0.0
    %7312 = vmatpush1.msra.mxu0 0.0
    %7313 = vmatprep.subr.mxu0 0.0
    %7314 = vmatpush1.msra.mxu0 0.0
    %7315 = vmatprep.subr.mxu0 0.0
    %7316 = vmatpush1.msra.mxu0 0.0
    %7317 = vmatprep.subr.mxu0 0.0
    %7318 = vmatpush1.msra.mxu0 0.0
    %7319 = vmatprep.subr.mxu0 0.0
    %7320 = vmatpush1.msra.mxu0 0.0
    %7321 = vmatprep.subr.mxu0 0.0
    %7322 = vmatpush1.msra.mxu0 0.0
    %7323 = vmatprep.subr.mxu0 0.0
    %7324 = vmatpush1.msra.mxu0 0.0
    %7325 = vmatprep.subr.mxu0 0.0
    %7326 = vmatpush1.msra.mxu0 0.0
    %7327 = vmatprep.subr.mxu0 0.0
    %7328 = vmatpush1.msra.mxu0 0.0
    %7329 = vmatprep.subr.mxu0 0.0
    %7330 = vmatpush1.msra.mxu0 0.0
    %7331 = vmatprep.subr.mxu0 0.0
    %7332 = vmatpush1.msra.mxu0 0.0
    %7333 = vmatprep.subr.mxu0 0.0
    %7334 = vmatpush1.msra.mxu0 0.0
    %7335 = vmatprep.mubr.f32.mxu0 0.0
    %7336 = vmatmul.mubr.f32.gmra.mrb[0].mxu0 %v6319
    %v7337 = vpop.f32.mrb[0].mxu0
    %v7338 = vadd.f32 0.0, %v7337
    %v7339 = vpop.f32.mrb[0].mxu0
    %v7340 = vadd.f32 0.0, %v7339
    %7341 = vdwg.mxu0
    %7342 = vmatprep.subr.mxu0 %v1486
    %7343 = vmatpush1.msra.mxu0 %v1485
    %7344 = vmatprep.subr.mxu0 %v1490
    %7345 = vmatpush1.msra.mxu0 %v1489
    %7346 = vmatprep.subr.mxu0 %v1494
    %7347 = vmatpush1.msra.mxu0 %v1493
    %7348 = vmatprep.subr.mxu0 %v1498
    %7349 = vmatpush1.msra.mxu0 %v1497
    %7350 = vmatprep.subr.mxu0 %v1502
    %7351 = vmatpush1.msra.mxu0 %v1501
    %7352 = vmatprep.subr.mxu0 %v1506
    %7353 = vmatpush1.msra.mxu0 %v1505
    %7354 = vmatprep.subr.mxu0 %v1510
    %7355 = vmatpush1.msra.mxu0 %v1509
    %7356 = vmatprep.subr.mxu0 %v1514
    %7357 = vmatpush1.msra.mxu0 %v1513
    %7358 = vmatprep.subr.mxu0 %v1518
    %7359 = vmatpush1.msra.mxu0 %v1517
    %7360 = vmatprep.subr.mxu0 %v1522
    %7361 = vmatpush1.msra.mxu0 %v1521
    %7362 = vmatprep.subr.mxu0 %v1526
    %7363 = vmatpush1.msra.mxu0 %v1525
    %7364 = vmatprep.subr.mxu0 %v1530
    %7365 = vmatpush1.msra.mxu0 %v1529
    %7366 = vmatprep.subr.mxu0 %v1534
    %7367 = vmatpush1.msra.mxu0 %v1533
    %7368 = vmatprep.subr.mxu0 %v1538
    %7369 = vmatpush1.msra.mxu0 %v1537
    %7370 = vmatprep.subr.mxu0 %v1542
    %7371 = vmatpush1.msra.mxu0 %v1541
    %7372 = vmatprep.subr.mxu0 %v1546
    %7373 = vmatpush1.msra.mxu0 %v1545
    %7374 = vmatprep.subr.mxu0 0.0
    %7375 = vmatpush1.msra.mxu0 0.0
    %7376 = vmatprep.subr.mxu0 0.0
    %7377 = vmatpush1.msra.mxu0 0.0
    %7378 = vmatprep.subr.mxu0 0.0
    %7379 = vmatpush1.msra.mxu0 0.0
    %7380 = vmatprep.subr.mxu0 0.0
    %7381 = vmatpush1.msra.mxu0 0.0
    %7382 = vmatprep.subr.mxu0 0.0
    %7383 = vmatpush1.msra.mxu0 0.0
    %7384 = vmatprep.subr.mxu0 0.0
    %7385 = vmatpush1.msra.mxu0 0.0
    %7386 = vmatprep.subr.mxu0 0.0
    %7387 = vmatpush1.msra.mxu0 0.0
    %7388 = vmatprep.subr.mxu0 0.0
    %7389 = vmatpush1.msra.mxu0 0.0
    %7390 = vmatprep.subr.mxu0 0.0
    %7391 = vmatpush1.msra.mxu0 0.0
    %7392 = vmatprep.subr.mxu0 0.0
    %7393 = vmatpush1.msra.mxu0 0.0
    %7394 = vmatprep.subr.mxu0 0.0
    %7395 = vmatpush1.msra.mxu0 0.0
    %7396 = vmatprep.subr.mxu0 0.0
    %7397 = vmatpush1.msra.mxu0 0.0
    %7398 = vmatprep.subr.mxu0 0.0
    %7399 = vmatpush1.msra.mxu0 0.0
    %7400 = vmatprep.subr.mxu0 0.0
    %7401 = vmatpush1.msra.mxu0 0.0
    %7402 = vmatprep.subr.mxu0 0.0
    %7403 = vmatpush1.msra.mxu0 0.0
    %7404 = vmatprep.subr.mxu0 0.0
    %7405 = vmatpush1.msra.mxu0 0.0
    %7406 = vmatprep.mubr.f32.mxu0 0.0
    %7407 = vmatmul.mubr.f32.gmra.mrb[0].mxu0 %v6319
    %v7408 = vpop.f32.mrb[0].mxu0
    %v7409 = vadd.f32 0.0, %v7408
    %v7410 = vpop.f32.mrb[0].mxu0
    %v7411 = vadd.f32 0.0, %v7410
    %7412 = vdwg.mxu0
    %v7413 = vadd.f32 %v7196, %v7338
    %v7414 = vadd.f32 %v7198, %v7340
    %v7415 = vadd.f32 %v7267, %v7409
    %v7416 = vadd.f32 %v7269, %v7411
    %v7417 = vmul.f32 %v7413, 0.5
    %v7418 = vmul.f32 %v7414, 0.5
    %v7419 = vmul.f32 %v7415, 0.5
    %v7420 = vtanh.pop %v7417
    %v7421 = vtanh.pop %v7418
    %v7422 = vtanh.pop %v7419
    %v7423 = vadd.f32 %v7420, 1.0
    %v7424 = vadd.f32 %v7421, 1.0
    %v7425 = vadd.f32 %v7422, 1.0
    %v7426 = vmul.f32 %v7423, 0.5
    %v7427 = vmul.f32 %v7424, 0.5
    %v7428 = vmul.f32 %v7425, 0.5
    %v7429 = vtanh.pop %v7416
    %v7430 = vmul.f32 %v7427, %v6317
    %v7431 = vmul.f32 %v7426, %v7429
    %v7432 = vadd.f32 %v7430, %v7431
    %v7433 = vtanh.pop %v7432
    %v7434 = vmul.f32 %v7428, %v7433
    %v7435 = vmul.f32 %v6814, 0.5
    %v7436 = vtanh.pop %v7435
    %v7437 = vadd.f32 %v7436, 1.0
    %v7438 = vmul.f32 %v7437, 0.5
    %v7440 = vrot.slane %v7438, 6
    %7442 = vmatprep.subr.mxu0 %v619
    %7443 = vmatpush1.msra.mxu0 %v618
    %7444 = vmatprep.subr.mxu0 %v623
    %7445 = vmatpush1.msra.mxu0 %v622
    %7446 = vmatprep.subr.mxu0 %v627
    %7447 = vmatpush1.msra.mxu0 %v626
    %7448 = vmatprep.subr.mxu0 %v631
    %7449 = vmatpush1.msra.mxu0 %v630
    %7450 = vmatprep.subr.mxu0 %v635
    %7451 = vmatpush1.msra.mxu0 %v634
    %7452 = vmatprep.subr.mxu0 %v639
    %7453 = vmatpush1.msra.mxu0 %v638
    %7454 = vmatprep.subr.mxu0 %v643
    %7455 = vmatpush1.msra.mxu0 %v642
    %7456 = vmatprep.subr.mxu0 %v647
    %7457 = vmatpush1.msra.mxu0 %v646
    %7458 = vmatprep.subr.mxu0 %v651
    %7459 = vmatpush1.msra.mxu0 %v650
    %7460 = vmatprep.subr.mxu0 %v655
    %7461 = vmatpush1.msra.mxu0 %v654
    %7462 = vmatprep.subr.mxu0 %v659
    %7463 = vmatpush1.msra.mxu0 %v658
    %7464 = vmatprep.subr.mxu0 %v663
    %7465 = vmatpush1.msra.mxu0 %v662
    %7466 = vmatprep.subr.mxu0 %v667
    %7467 = vmatpush1.msra.mxu0 %v666
    %7468 = vmatprep.subr.mxu0 %v671
    %7469 = vmatpush1.msra.mxu0 %v670
    %7470 = vmatprep.subr.mxu0 %v675
    %7471 = vmatpush1.msra.mxu0 %v674
    %7472 = vmatprep.subr.mxu0 %v679
    %7473 = vmatpush1.msra.mxu0 %v678
    %7474 = vmatprep.subr.mxu0 0.0
    %7475 = vmatpush1.msra.mxu0 0.0
    %7476 = vmatprep.subr.mxu0 0.0
    %7477 = vmatpush1.msra.mxu0 0.0
    %7478 = vmatprep.subr.mxu0 0.0
    %7479 = vmatpush1.msra.mxu0 0.0
    %7480 = vmatprep.subr.mxu0 0.0
    %7481 = vmatpush1.msra.mxu0 0.0
    %7482 = vmatprep.subr.mxu0 0.0
    %7483 = vmatpush1.msra.mxu0 0.0
    %7484 = vmatprep.subr.mxu0 0.0
    %7485 = vmatpush1.msra.mxu0 0.0
    %7486 = vmatprep.subr.mxu0 0.0
    %7487 = vmatpush1.msra.mxu0 0.0
    %7488 = vmatprep.subr.mxu0 0.0
    %7489 = vmatpush1.msra.mxu0 0.0
    %7490 = vmatprep.subr.mxu0 0.0
    %7491 = vmatpush1.msra.mxu0 0.0
    %7492 = vmatprep.subr.mxu0 0.0
    %7493 = vmatpush1.msra.mxu0 0.0
    %7494 = vmatprep.subr.mxu0 0.0
    %7495 = vmatpush1.msra.mxu0 0.0
    %7496 = vmatprep.subr.mxu0 0.0
    %7497 = vmatpush1.msra.mxu0 0.0
    %7498 = vmatprep.subr.mxu0 0.0
    %7499 = vmatpush1.msra.mxu0 0.0
    %7500 = vmatprep.subr.mxu0 0.0
    %7501 = vmatpush1.msra.mxu0 0.0
    %7502 = vmatprep.subr.mxu0 0.0
    %7503 = vmatpush1.msra.mxu0 0.0
    %7504 = vmatprep.subr.mxu0 0.0
    %7505 = vmatpush1.msra.mxu0 0.0
    %7506 = vmatprep.mubr.f32.mxu0 0.0
    %7507 = vmatmul.mubr.f32.gmra.mrb[0].mxu0 %v7440
    %v7508 = vpop.f32.mrb[0].mxu0
    %v7509 = vadd.f32 %v686, %v7508
    %v7510 = vpop.f32.mrb[0].mxu0
    %v7511 = vadd.f32 %v690, %v7510
    %7512 = vdwg.mxu0
    %7513 = vmatprep.subr.mxu0 %v621
    %7514 = vmatpush1.msra.mxu0 %v620
    %7515 = vmatprep.subr.mxu0 %v625
    %7516 = vmatpush1.msra.mxu0 %v624
    %7517 = vmatprep.subr.mxu0 %v629
    %7518 = vmatpush1.msra.mxu0 %v628
    %7519 = vmatprep.subr.mxu0 %v633
    %7520 = vmatpush1.msra.mxu0 %v632
    %7521 = vmatprep.subr.mxu0 %v637
    %7522 = vmatpush1.msra.mxu0 %v636
    %7523 = vmatprep.subr.mxu0 %v641
    %7524 = vmatpush1.msra.mxu0 %v640
    %7525 = vmatprep.subr.mxu0 %v645
    %7526 = vmatpush1.msra.mxu0 %v644
    %7527 = vmatprep.subr.mxu0 %v649
    %7528 = vmatpush1.msra.mxu0 %v648
    %7529 = vmatprep.subr.mxu0 %v653
    %7530 = vmatpush1.msra.mxu0 %v652
    %7531 = vmatprep.subr.mxu0 %v657
    %7532 = vmatpush1.msra.mxu0 %v656
    %7533 = vmatprep.subr.mxu0 %v661
    %7534 = vmatpush1.msra.mxu0 %v660
    %7535 = vmatprep.subr.mxu0 %v665
    %7536 = vmatpush1.msra.mxu0 %v664
    %7537 = vmatprep.subr.mxu0 %v669
    %7538 = vmatpush1.msra.mxu0 %v668
    %7539 = vmatprep.subr.mxu0 %v673
    %7540 = vmatpush1.msra.mxu0 %v672
    %7541 = vmatprep.subr.mxu0 %v677
    %7542 = vmatpush1.msra.mxu0 %v676
    %7543 = vmatprep.subr.mxu0 %v681
    %7544 = vmatpush1.msra.mxu0 %v680
    %7545 = vmatprep.subr.mxu0 0.0
    %7546 = vmatpush1.msra.mxu0 0.0
    %7547 = vmatprep.subr.mxu0 0.0
    %7548 = vmatpush1.msra.mxu0 0.0
    %7549 = vmatprep.subr.mxu0 0.0
    %7550 = vmatpush1.msra.mxu0 0.0
    %7551 = vmatprep.subr.mxu0 0.0
    %7552 = vmatpush1.msra.mxu0 0.0
    %7553 = vmatprep.subr.mxu0 0.0
    %7554 = vmatpush1.msra.mxu0 0.0
    %7555 = vmatprep.subr.mxu0 0.0
    %7556 = vmatpush1.msra.mxu0 0.0
    %7557 = vmatprep.subr.mxu0 0.0
    %7558 = vmatpush1.msra.mxu0 0.0
    %7559 = vmatprep.subr.mxu0 0.0
    %7560 = vmatpush1.msra.mxu0 0.0
    %7561 = vmatprep.subr.mxu0 0.0
    %7562 = vmatpush1.msra.mxu0 0.0
    %7563 = vmatprep.subr.mxu0 0.0
    %7564 = vmatpush1.msra.mxu0 0.0
    %7565 = vmatprep.subr.mxu0 0.0
    %7566 = vmatpush1.msra.mxu0 0.0
    %7567 = vmatprep.subr.mxu0 0.0
    %7568 = vmatpush1.msra.mxu0 0.0
    %7569 = vmatprep.subr.mxu0 0.0
    %7570 = vmatpush1.msra.mxu0 0.0
    %7571 = vmatprep.subr.mxu0 0.0
    %7572 = vmatpush1.msra.mxu0 0.0
    %7573 = vmatprep.subr.mxu0 0.0
    %7574 = vmatpush1.msra.mxu0 0.0
    %7575 = vmatprep.subr.mxu0 0.0
    %7576 = vmatpush1.msra.mxu0 0.0
    %7577 = vmatprep.mubr.f32.mxu0 0.0
    %7578 = vmatmul.mubr.f32.gmra.mrb[0].mxu0 %v7440
    %v7579 = vpop.f32.mrb[0].mxu0
    %v7580 = vadd.f32 %v694, %v7579
    %v7581 = vpop.f32.mrb[0].mxu0
    %v7582 = vadd.f32 %v698, %v7581
    %7583 = vdwg.mxu0
    %7584 = vmatprep.subr.mxu0 %v846
    %7585 = vmatpush1.msra.mxu0 %v845
    %7586 = vmatprep.subr.mxu0 %v850
    %7587 = vmatpush1.msra.mxu0 %v849
    %7588 = vmatprep.subr.mxu0 %v854
    %7589 = vmatpush1.msra.mxu0 %v853
    %7590 = vmatprep.subr.mxu0 %v858
    %7591 = vmatpush1.msra.mxu0 %v857
    %7592 = vmatprep.subr.mxu0 %v862
    %7593 = vmatpush1.msra.mxu0 %v861
    %7594 = vmatprep.subr.mxu0 %v866
    %7595 = vmatpush1.msra.mxu0 %v865
    %7596 = vmatprep.subr.mxu0 %v870
    %7597 = vmatpush1.msra.mxu0 %v869
    %7598 = vmatprep.subr.mxu0 %v874
    %7599 = vmatpush1.msra.mxu0 %v873
    %7600 = vmatprep.subr.mxu0 %v878
    %7601 = vmatpush1.msra.mxu0 %v877
    %7602 = vmatprep.subr.mxu0 %v882
    %7603 = vmatpush1.msra.mxu0 %v881
    %7604 = vmatprep.subr.mxu0 %v886
    %7605 = vmatpush1.msra.mxu0 %v885
    %7606 = vmatprep.subr.mxu0 %v890
    %7607 = vmatpush1.msra.mxu0 %v889
    %7608 = vmatprep.subr.mxu0 %v894
    %7609 = vmatpush1.msra.mxu0 %v893
    %7610 = vmatprep.subr.mxu0 %v898
    %7611 = vmatpush1.msra.mxu0 %v897
    %7612 = vmatprep.subr.mxu0 %v902
    %7613 = vmatpush1.msra.mxu0 %v901
    %7614 = vmatprep.subr.mxu0 %v906
    %7615 = vmatpush1.msra.mxu0 %v905
    %7616 = vmatprep.subr.mxu0 0.0
    %7617 = vmatpush1.msra.mxu0 0.0
    %7618 = vmatprep.subr.mxu0 0.0
    %7619 = vmatpush1.msra.mxu0 0.0
    %7620 = vmatprep.subr.mxu0 0.0
    %7621 = vmatpush1.msra.mxu0 0.0
    %7622 = vmatprep.subr.mxu0 0.0
    %7623 = vmatpush1.msra.mxu0 0.0
    %7624 = vmatprep.subr.mxu0 0.0
    %7625 = vmatpush1.msra.mxu0 0.0
    %7626 = vmatprep.subr.mxu0 0.0
    %7627 = vmatpush1.msra.mxu0 0.0
    %7628 = vmatprep.subr.mxu0 0.0
    %7629 = vmatpush1.msra.mxu0 0.0
    %7630 = vmatprep.subr.mxu0 0.0
    %7631 = vmatpush1.msra.mxu0 0.0
    %7632 = vmatprep.subr.mxu0 0.0
    %7633 = vmatpush1.msra.mxu0 0.0
    %7634 = vmatprep.subr.mxu0 0.0
    %7635 = vmatpush1.msra.mxu0 0.0
    %7636 = vmatprep.subr.mxu0 0.0
    %7637 = vmatpush1.msra.mxu0 0.0
    %7638 = vmatprep.subr.mxu0 0.0
    %7639 = vmatpush1.msra.mxu0 0.0
    %7640 = vmatprep.subr.mxu0 0.0
    %7641 = vmatpush1.msra.mxu0 0.0
    %7642 = vmatprep.subr.mxu0 0.0
    %7643 = vmatpush1.msra.mxu0 0.0
    %7644 = vmatprep.subr.mxu0 0.0
    %7645 = vmatpush1.msra.mxu0 0.0
    %7646 = vmatprep.subr.mxu0 0.0
    %7647 = vmatpush1.msra.mxu0 0.0
    %7648 = vmatprep.mubr.f32.mxu0 0.0
    %7649 = vmatmul.mubr.f32.gmra.mrb[0].mxu0 %v6632
    %v7650 = vpop.f32.mrb[0].mxu0
    %v7651 = vadd.f32 0.0, %v7650
    %v7652 = vpop.f32.mrb[0].mxu0
    %v7653 = vadd.f32 0.0, %v7652
    %7654 = vdwg.mxu0
    %7655 = vmatprep.subr.mxu0 %v848
    %7656 = vmatpush1.msra.mxu0 %v847
    %7657 = vmatprep.subr.mxu0 %v852
    %7658 = vmatpush1.msra.mxu0 %v851
    %7659 = vmatprep.subr.mxu0 %v856
    %7660 = vmatpush1.msra.mxu0 %v855
    %7661 = vmatprep.subr.mxu0 %v860
    %7662 = vmatpush1.msra.mxu0 %v859
    %7663 = vmatprep.subr.mxu0 %v864
    %7664 = vmatpush1.msra.mxu0 %v863
    %7665 = vmatprep.subr.mxu0 %v868
    %7666 = vmatpush1.msra.mxu0 %v867
    %7667 = vmatprep.subr.mxu0 %v872
    %7668 = vmatpush1.msra.mxu0 %v871
    %7669 = vmatprep.subr.mxu0 %v876
    %7670 = vmatpush1.msra.mxu0 %v875
    %7671 = vmatprep.subr.mxu0 %v880
    %7672 = vmatpush1.msra.mxu0 %v879
    %7673 = vmatprep.subr.mxu0 %v884
    %7674 = vmatpush1.msra.mxu0 %v883
    %7675 = vmatprep.subr.mxu0 %v888
    %7676 = vmatpush1.msra.mxu0 %v887
    %7677 = vmatprep.subr.mxu0 %v892
    %7678 = vmatpush1.msra.mxu0 %v891
    %7679 = vmatprep.subr.mxu0 %v896
    %7680 = vmatpush1.msra.mxu0 %v895
    %7681 = vmatprep.subr.mxu0 %v900
    %7682 = vmatpush1.msra.mxu0 %v899
    %7683 = vmatprep.subr.mxu0 %v904
    %7684 = vmatpush1.msra.mxu0 %v903
    %7685 = vmatprep.subr.mxu0 %v908
    %7686 = vmatpush1.msra.mxu0 %v907
    %7687 = vmatprep.subr.mxu0 0.0
    %7688 = vmatpush1.msra.mxu0 0.0
    %7689 = vmatprep.subr.mxu0 0.0
    %7690 = vmatpush1.msra.mxu0 0.0
    %7691 = vmatprep.subr.mxu0 0.0
    %7692 = vmatpush1.msra.mxu0 0.0
    %7693 = vmatprep.subr.mxu0 0.0
    %7694 = vmatpush1.msra.mxu0 0.0
    %7695 = vmatprep.subr.mxu0 0.0
    %7696 = vmatpush1.msra.mxu0 0.0
    %7697 = vmatprep.subr.mxu0 0.0
    %7698 = vmatpush1.msra.mxu0 0.0
    %7699 = vmatprep.subr.mxu0 0.0
    %7700 = vmatpush1.msra.mxu0 0.0
    %7701 = vmatprep.subr.mxu0 0.0
    %7702 = vmatpush1.msra.mxu0 0.0
    %7703 = vmatprep.subr.mxu0 0.0
    %7704 = vmatpush1.msra.mxu0 0.0
    %7705 = vmatprep.subr.mxu0 0.0
    %7706 = vmatpush1.msra.mxu0 0.0
    %7707 = vmatprep.subr.mxu0 0.0
    %7708 = vmatpush1.msra.mxu0 0.0
    %7709 = vmatprep.subr.mxu0 0.0
    %7710 = vmatpush1.msra.mxu0 0.0
    %7711 = vmatprep.subr.mxu0 0.0
    %7712 = vmatpush1.msra.mxu0 0.0
    %7713 = vmatprep.subr.mxu0 0.0
    %7714 = vmatpush1.msra.mxu0 0.0
    %7715 = vmatprep.subr.mxu0 0.0
    %7716 = vmatpush1.msra.mxu0 0.0
    %7717 = vmatprep.subr.mxu0 0.0
    %7718 = vmatpush1.msra.mxu0 0.0
    %7719 = vmatprep.mubr.f32.mxu0 0.0
    %7720 = vmatmul.mubr.f32.gmra.mrb[0].mxu0 %v6632
    %v7721 = vpop.f32.mrb[0].mxu0
    %v7722 = vadd.f32 0.0, %v7721
    %v7723 = vpop.f32.mrb[0].mxu0
    %v7724 = vadd.f32 0.0, %v7723
    %7725 = vdwg.mxu0
    %v7726 = vadd.f32 %v7509, %v7651
    %v7727 = vadd.f32 %v7511, %v7653
    %v7728 = vadd.f32 %v7580, %v7722
    %v7729 = vadd.f32 %v7582, %v7724
    %v7730 = vmul.f32 %v7726, 0.5
    %v7731 = vmul.f32 %v7727, 0.5
    %v7732 = vmul.f32 %v7728, 0.5
    %v7733 = vtanh.pop %v7730
    %v7734 = vtanh.pop %v7731
    %v7735 = vtanh.pop %v7732
    %v7736 = vadd.f32 %v7733, 1.0
    %v7737 = vadd.f32 %v7734, 1.0
    %v7738 = vadd.f32 %v7735, 1.0
    %v7739 = vmul.f32 %v7736, 0.5
    %v7740 = vmul.f32 %v7737, 0.5
    %v7741 = vmul.f32 %v7738, 0.5
    %v7742 = vtanh.pop %v7729
    %v7743 = vmul.f32 %v7740, %v6630
    %v7744 = vmul.f32 %v7739, %v7742
    %v7745 = vadd.f32 %v7743, %v7744
    %v7746 = vtanh.pop %v7745
    %v7747 = vmul.f32 %v7741, %v7746
    %v7749 = vrot.slane %v6814, 6
    %7751 = vmatprep.subr.mxu0 %v387
    %7752 = vmatpush1.msra.mxu0 %v386
    %7753 = vmatprep.subr.mxu0 %v391
    %7754 = vmatpush1.msra.mxu0 %v390
    %7755 = vmatprep.subr.mxu0 %v395
    %7756 = vmatpush1.msra.mxu0 %v394
    %7757 = vmatprep.subr.mxu0 %v399
    %7758 = vmatpush1.msra.mxu0 %v398
    %7759 = vmatprep.subr.mxu0 %v403
    %7760 = vmatpush1.msra.mxu0 %v402
    %7761 = vmatprep.subr.mxu0 %v407
    %7762 = vmatpush1.msra.mxu0 %v406
    %7763 = vmatprep.subr.mxu0 %v411
    %7764 = vmatpush1.msra.mxu0 %v410
    %7765 = vmatprep.subr.mxu0 %v415
    %7766 = vmatpush1.msra.mxu0 %v414
    %7767 = vmatprep.subr.mxu0 %v419
    %7768 = vmatpush1.msra.mxu0 %v418
    %7769 = vmatprep.subr.mxu0 %v423
    %7770 = vmatpush1.msra.mxu0 %v422
    %7771 = vmatprep.subr.mxu0 %v427
    %7772 = vmatpush1.msra.mxu0 %v426
    %7773 = vmatprep.subr.mxu0 %v431
    %7774 = vmatpush1.msra.mxu0 %v430
    %7775 = vmatprep.subr.mxu0 %v435
    %7776 = vmatpush1.msra.mxu0 %v434
    %7777 = vmatprep.subr.mxu0 %v439
    %7778 = vmatpush1.msra.mxu0 %v438
    %7779 = vmatprep.subr.mxu0 %v443
    %7780 = vmatpush1.msra.mxu0 %v442
    %7781 = vmatprep.subr.mxu0 %v447
    %7782 = vmatpush1.msra.mxu0 %v446
    %7783 = vmatprep.subr.mxu0 0.0
    %7784 = vmatpush1.msra.mxu0 0.0
    %7785 = vmatprep.subr.mxu0 0.0
    %7786 = vmatpush1.msra.mxu0 0.0
    %7787 = vmatprep.subr.mxu0 0.0
    %7788 = vmatpush1.msra.mxu0 0.0
    %7789 = vmatprep.subr.mxu0 0.0
    %7790 = vmatpush1.msra.mxu0 0.0
    %7791 = vmatprep.subr.mxu0 0.0
    %7792 = vmatpush1.msra.mxu0 0.0
    %7793 = vmatprep.subr.mxu0 0.0
    %7794 = vmatpush1.msra.mxu0 0.0
    %7795 = vmatprep.subr.mxu0 0.0
    %7796 = vmatpush1.msra.mxu0 0.0
    %7797 = vmatprep.subr.mxu0 0.0
    %7798 = vmatpush1.msra.mxu0 0.0
    %7799 = vmatprep.subr.mxu0 0.0
    %7800 = vmatpush1.msra.mxu0 0.0
    %7801 = vmatprep.subr.mxu0 0.0
    %7802 = vmatpush1.msra.mxu0 0.0
    %7803 = vmatprep.subr.mxu0 0.0
    %7804 = vmatpush1.msra.mxu0 0.0
    %7805 = vmatprep.subr.mxu0 0.0
    %7806 = vmatpush1.msra.mxu0 0.0
    %7807 = vmatprep.subr.mxu0 0.0
    %7808 = vmatpush1.msra.mxu0 0.0
    %7809 = vmatprep.subr.mxu0 0.0
    %7810 = vmatpush1.msra.mxu0 0.0
    %7811 = vmatprep.subr.mxu0 0.0
    %7812 = vmatpush1.msra.mxu0 0.0
    %7813 = vmatprep.subr.mxu0 0.0
    %7814 = vmatpush1.msra.mxu0 0.0
    %7815 = vmatprep.mubr.f32.mxu0 0.0
    %7816 = vmatmul.mubr.f32.gmra.mrb[0].mxu0 %v7749
    %v7817 = vpop.f32.mrb[0].mxu0
    %v7818 = vadd.f32 0.0, %v7817
    %v7819 = vpop.f32.mrb[0].mxu0
    %v7820 = vadd.f32 0.0, %v7819
    %7821 = vdwg.mxu0
    %7822 = vmatprep.subr.mxu0 %v389
    %7823 = vmatpush1.msra.mxu0 %v388
    %7824 = vmatprep.subr.mxu0 %v393
    %7825 = vmatpush1.msra.mxu0 %v392
    %7826 = vmatprep.subr.mxu0 %v397
    %7827 = vmatpush1.msra.mxu0 %v396
    %7828 = vmatprep.subr.mxu0 %v401
    %7829 = vmatpush1.msra.mxu0 %v400
    %7830 = vmatprep.subr.mxu0 %v405
    %7831 = vmatpush1.msra.mxu0 %v404
    %7832 = vmatprep.subr.mxu0 %v409
    %7833 = vmatpush1.msra.mxu0 %v408
    %7834 = vmatprep.subr.mxu0 %v413
    %7835 = vmatpush1.msra.mxu0 %v412
    %7836 = vmatprep.subr.mxu0 %v417
    %7837 = vmatpush1.msra.mxu0 %v416
    %7838 = vmatprep.subr.mxu0 %v421
    %7839 = vmatpush1.msra.mxu0 %v420
    %7840 = vmatprep.subr.mxu0 %v425
    %7841 = vmatpush1.msra.mxu0 %v424
    %7842 = vmatprep.subr.mxu0 %v429
    %7843 = vmatpush1.msra.mxu0 %v428
    %7844 = vmatprep.subr.mxu0 %v433
    %7845 = vmatpush1.msra.mxu0 %v432
    %7846 = vmatprep.subr.mxu0 %v437
    %7847 = vmatpush1.msra.mxu0 %v436
    %7848 = vmatprep.subr.mxu0 %v441
    %7849 = vmatpush1.msra.mxu0 %v440
    %7850 = vmatprep.subr.mxu0 %v445
    %7851 = vmatpush1.msra.mxu0 %v444
    %7852 = vmatprep.subr.mxu0 %v449
    %7853 = vmatpush1.msra.mxu0 %v448
    %7854 = vmatprep.subr.mxu0 0.0
    %7855 = vmatpush1.msra.mxu0 0.0
    %7856 = vmatprep.subr.mxu0 0.0
    %7857 = vmatpush1.msra.mxu0 0.0
    %7858 = vmatprep.subr.mxu0 0.0
    %7859 = vmatpush1.msra.mxu0 0.0
    %7860 = vmatprep.subr.mxu0 0.0
    %7861 = vmatpush1.msra.mxu0 0.0
    %7862 = vmatprep.subr.mxu0 0.0
    %7863 = vmatpush1.msra.mxu0 0.0
    %7864 = vmatprep.subr.mxu0 0.0
    %7865 = vmatpush1.msra.mxu0 0.0
    %7866 = vmatprep.subr.mxu0 0.0
    %7867 = vmatpush1.msra.mxu0 0.0
    %7868 = vmatprep.subr.mxu0 0.0
    %7869 = vmatpush1.msra.mxu0 0.0
    %7870 = vmatprep.subr.mxu0 0.0
    %7871 = vmatpush1.msra.mxu0 0.0
    %7872 = vmatprep.subr.mxu0 0.0
    %7873 = vmatpush1.msra.mxu0 0.0
    %7874 = vmatprep.subr.mxu0 0.0
    %7875 = vmatpush1.msra.mxu0 0.0
    %7876 = vmatprep.subr.mxu0 0.0
    %7877 = vmatpush1.msra.mxu0 0.0
    %7878 = vmatprep.subr.mxu0 0.0
    %7879 = vmatpush1.msra.mxu0 0.0
    %7880 = vmatprep.subr.mxu0 0.0
    %7881 = vmatpush1.msra.mxu0 0.0
    %7882 = vmatprep.subr.mxu0 0.0
    %7883 = vmatpush1.msra.mxu0 0.0
    %7884 = vmatprep.subr.mxu0 0.0
    %7885 = vmatpush1.msra.mxu0 0.0
    %7886 = vmatprep.mubr.f32.mxu0 0.0
    %7887 = vmatmul.mubr.f32.gmra.mrb[0].mxu0 %v7749
    %v7888 = vpop.f32.mrb[0].mxu0
    %v7889 = vadd.f32 0.0, %v7888
    %v7890 = vpop.f32.mrb[0].mxu0
    %v7891 = vadd.f32 0.0, %v7890
    %7892 = vdwg.mxu0
    %v7897 = vrot.slane %v7818, 1
    %v7898 = vrot.slane %v7820, 1
    %v7899 = vrot.slane %v7889, 1
    %v7900 = vrot.slane %v7891, 1
    %v7905 = vadd.f32 %v311, %v7897
    %v7906 = vadd.f32 %v313, %v7898
    %v7907 = vadd.f32 %v382, %v7899
    %v7908 = vadd.f32 %v384, %v7900
    %v7909 = vmul.f32 %v7905, 0.5
    %v7910 = vmul.f32 %v7906, 0.5
    %v7911 = vmul.f32 %v7907, 0.5
    %v7912 = vtanh.pop %v7909
    %v7913 = vtanh.pop %v7910
    %v7914 = vtanh.pop %v7911
    %v7915 = vadd.f32 %v7912, 1.0
    %v7916 = vadd.f32 %v7913, 1.0
    %v7917 = vadd.f32 %v7914, 1.0
    %v7918 = vmul.f32 %v7915, 0.5
    %v7919 = vmul.f32 %v7916, 0.5
    %v7920 = vmul.f32 %v7917, 0.5
    %v7921 = vtanh.pop %v7908
    %v7923 = vrot.slane %v6812, 7
    %v7925 = vmul.f32 %v7919, %v7923
    %v7926 = vmul.f32 %v7918, %v7921
    %v7927 = vadd.f32 %v7925, %v7926
    %v7928 = vtanh.pop %v7927
    %v7929 = vmul.f32 %v7920, %v7928
    %v7930 = vmul.f32 %v7434, 0.5
    %v7931 = vtanh.pop %v7930
    %v7932 = vadd.f32 %v7931, 1.0
    %v7933 = vmul.f32 %v7932, 0.5
    %7934 = vmatprep.subr.mxu0 %v2211
    %7935 = vmatpush1.msra.mxu0 %v2210
    %7936 = vmatprep.subr.mxu0 %v2215
    %7937 = vmatpush1.msra.mxu0 %v2214
    %7938 = vmatprep.subr.mxu0 %v2219
    %7939 = vmatpush1.msra.mxu0 %v2218
    %7940 = vmatprep.subr.mxu0 %v2223
    %7941 = vmatpush1.msra.mxu0 %v2222
    %7942 = vmatprep.subr.mxu0 %v2227
    %7943 = vmatpush1.msra.mxu0 %v2226
    %7944 = vmatprep.subr.mxu0 %v2231
    %7945 = vmatpush1.msra.mxu0 %v2230
    %7946 = vmatprep.subr.mxu0 %v2235
    %7947 = vmatpush1.msra.mxu0 %v2234
    %7948 = vmatprep.subr.mxu0 %v2239
    %7949 = vmatpush1.msra.mxu0 %v2238
    %7950 = vmatprep.subr.mxu0 %v2243
    %7951 = vmatpush1.msra.mxu0 %v2242
    %7952 = vmatprep.subr.mxu0 %v2247
    %7953 = vmatpush1.msra.mxu0 %v2246
    %7954 = vmatprep.subr.mxu0 %v2251
    %7955 = vmatpush1.msra.mxu0 %v2250
    %7956 = vmatprep.subr.mxu0 %v2255
    %7957 = vmatpush1.msra.mxu0 %v2254
    %7958 = vmatprep.subr.mxu0 %v2259
    %7959 = vmatpush1.msra.mxu0 %v2258
    %7960 = vmatprep.subr.mxu0 %v2263
    %7961 = vmatpush1.msra.mxu0 %v2262
    %7962 = vmatprep.subr.mxu0 %v2267
    %7963 = vmatpush1.msra.mxu0 %v2266
    %7964 = vmatprep.subr.mxu0 %v2271
    %7965 = vmatpush1.msra.mxu0 %v2270
    %7966 = vmatprep.subr.mxu0 0.0
    %7967 = vmatpush1.msra.mxu0 0.0
    %7968 = vmatprep.subr.mxu0 0.0
    %7969 = vmatpush1.msra.mxu0 0.0
    %7970 = vmatprep.subr.mxu0 0.0
    %7971 = vmatpush1.msra.mxu0 0.0
    %7972 = vmatprep.subr.mxu0 0.0
    %7973 = vmatpush1.msra.mxu0 0.0
    %7974 = vmatprep.subr.mxu0 0.0
    %7975 = vmatpush1.msra.mxu0 0.0
    %7976 = vmatprep.subr.mxu0 0.0
    %7977 = vmatpush1.msra.mxu0 0.0
    %7978 = vmatprep.subr.mxu0 0.0
    %7979 = vmatpush1.msra.mxu0 0.0
    %7980 = vmatprep.subr.mxu0 0.0
    %7981 = vmatpush1.msra.mxu0 0.0
    %7982 = vmatprep.subr.mxu0 0.0
    %7983 = vmatpush1.msra.mxu0 0.0
    %7984 = vmatprep.subr.mxu0 0.0
    %7985 = vmatpush1.msra.mxu0 0.0
    %7986 = vmatprep.subr.mxu0 0.0
    %7987 = vmatpush1.msra.mxu0 0.0
    %7988 = vmatprep.subr.mxu0 0.0
    %7989 = vmatpush1.msra.mxu0 0.0
    %7990 = vmatprep.subr.mxu0 0.0
    %7991 = vmatpush1.msra.mxu0 0.0
    %7992 = vmatprep.subr.mxu0 0.0
    %7993 = vmatpush1.msra.mxu0 0.0
    %7994 = vmatprep.subr.mxu0 0.0
    %7995 = vmatpush1.msra.mxu0 0.0
    %7996 = vmatprep.subr.mxu0 0.0
    %7997 = vmatpush1.msra.mxu0 0.0
    %7998 = vmatprep.mubr.f32.mxu0 0.0
    %7999 = vmatmul.mubr.f32.gmra.mrb[0].mxu0 %v7933
    %v8000 = vpop.f32.mrb[0].mxu0
    %v8001 = vadd.f32 %v2278, %v8000
    %v8002 = vpop.f32.mrb[0].mxu0
    %v8003 = vadd.f32 %v2282, %v8002
    %8004 = vdwg.mxu0
    %8005 = vmatprep.subr.mxu0 %v2213
    %8006 = vmatpush1.msra.mxu0 %v2212
    %8007 = vmatprep.subr.mxu0 %v2217
    %8008 = vmatpush1.msra.mxu0 %v2216
    %8009 = vmatprep.subr.mxu0 %v2221
    %8010 = vmatpush1.msra.mxu0 %v2220
    %8011 = vmatprep.subr.mxu0 %v2225
    %8012 = vmatpush1.msra.mxu0 %v2224
    %8013 = vmatprep.subr.mxu0 %v2229
    %8014 = vmatpush1.msra.mxu0 %v2228
    %8015 = vmatprep.subr.mxu0 %v2233
    %8016 = vmatpush1.msra.mxu0 %v2232
    %8017 = vmatprep.subr.mxu0 %v2237
    %8018 = vmatpush1.msra.mxu0 %v2236
    %8019 = vmatprep.subr.mxu0 %v2241
    %8020 = vmatpush1.msra.mxu0 %v2240
    %8021 = vmatprep.subr.mxu0 %v2245
    %8022 = vmatpush1.msra.mxu0 %v2244
    %8023 = vmatprep.subr.mxu0 %v2249
    %8024 = vmatpush1.msra.mxu0 %v2248
    %8025 = vmatprep.subr.mxu0 %v2253
    %8026 = vmatpush1.msra.mxu0 %v2252
    %8027 = vmatprep.subr.mxu0 %v2257
    %8028 = vmatpush1.msra.mxu0 %v2256
    %8029 = vmatprep.subr.mxu0 %v2261
    %8030 = vmatpush1.msra.mxu0 %v2260
    %8031 = vmatprep.subr.mxu0 %v2265
    %8032 = vmatpush1.msra.mxu0 %v2264
    %8033 = vmatprep.subr.mxu0 %v2269
    %8034 = vmatpush1.msra.mxu0 %v2268
    %8035 = vmatprep.subr.mxu0 %v2273
    %8036 = vmatpush1.msra.mxu0 %v2272
    %8037 = vmatprep.subr.mxu0 0.0
    %8038 = vmatpush1.msra.mxu0 0.0
    %8039 = vmatprep.subr.mxu0 0.0
    %8040 = vmatpush1.msra.mxu0 0.0
    %8041 = vmatprep.subr.mxu0 0.0
    %8042 = vmatpush1.msra.mxu0 0.0
    %8043 = vmatprep.subr.mxu0 0.0
    %8044 = vmatpush1.msra.mxu0 0.0
    %8045 = vmatprep.subr.mxu0 0.0
    %8046 = vmatpush1.msra.mxu0 0.0
    %8047 = vmatprep.subr.mxu0 0.0
    %8048 = vmatpush1.msra.mxu0 0.0
    %8049 = vmatprep.subr.mxu0 0.0
    %8050 = vmatpush1.msra.mxu0 0.0
    %8051 = vmatprep.subr.mxu0 0.0
    %8052 = vmatpush1.msra.mxu0 0.0
    %8053 = vmatprep.subr.mxu0 0.0
    %8054 = vmatpush1.msra.mxu0 0.0
    %8055 = vmatprep.subr.mxu0 0.0
    %8056 = vmatpush1.msra.mxu0 0.0
    %8057 = vmatprep.subr.mxu0 0.0
    %8058 = vmatpush1.msra.mxu0 0.0
    %8059 = vmatprep.subr.mxu0 0.0
    %8060 = vmatpush1.msra.mxu0 0.0
    %8061 = vmatprep.subr.mxu0 0.0
    %8062 = vmatpush1.msra.mxu0 0.0
    %8063 = vmatprep.subr.mxu0 0.0
    %8064 = vmatpush1.msra.mxu0 0.0
    %8065 = vmatprep.subr.mxu0 0.0
    %8066 = vmatpush1.msra.mxu0 0.0
    %8067 = vmatprep.subr.mxu0 0.0
    %8068 = vmatpush1.msra.mxu0 0.0
    %8069 = vmatprep.mubr.f32.mxu0 0.0
    %8070 = vmatmul.mubr.f32.gmra.mrb[0].mxu0 %v7933
    %v8071 = vpop.f32.mrb[0].mxu0
    %v8072 = vadd.f32 %v2286, %v8071
    %v8073 = vpop.f32.mrb[0].mxu0
    %v8074 = vadd.f32 %v2290, %v8073
    %8075 = vdwg.mxu0
    %8076 = vmatprep.subr.mxu0 %v2438
    %8077 = vmatpush1.msra.mxu0 %v2437
    %8078 = vmatprep.subr.mxu0 %v2442
    %8079 = vmatpush1.msra.mxu0 %v2441
    %8080 = vmatprep.subr.mxu0 %v2446
    %8081 = vmatpush1.msra.mxu0 %v2445
    %8082 = vmatprep.subr.mxu0 %v2450
    %8083 = vmatpush1.msra.mxu0 %v2449
    %8084 = vmatprep.subr.mxu0 %v2454
    %8085 = vmatpush1.msra.mxu0 %v2453
    %8086 = vmatprep.subr.mxu0 %v2458
    %8087 = vmatpush1.msra.mxu0 %v2457
    %8088 = vmatprep.subr.mxu0 %v2462
    %8089 = vmatpush1.msra.mxu0 %v2461
    %8090 = vmatprep.subr.mxu0 %v2466
    %8091 = vmatpush1.msra.mxu0 %v2465
    %8092 = vmatprep.subr.mxu0 %v2470
    %8093 = vmatpush1.msra.mxu0 %v2469
    %8094 = vmatprep.subr.mxu0 %v2474
    %8095 = vmatpush1.msra.mxu0 %v2473
    %8096 = vmatprep.subr.mxu0 %v2478
    %8097 = vmatpush1.msra.mxu0 %v2477
    %8098 = vmatprep.subr.mxu0 %v2482
    %8099 = vmatpush1.msra.mxu0 %v2481
    %8100 = vmatprep.subr.mxu0 %v2486
    %8101 = vmatpush1.msra.mxu0 %v2485
    %8102 = vmatprep.subr.mxu0 %v2490
    %8103 = vmatpush1.msra.mxu0 %v2489
    %8104 = vmatprep.subr.mxu0 %v2494
    %8105 = vmatpush1.msra.mxu0 %v2493
    %8106 = vmatprep.subr.mxu0 %v2498
    %8107 = vmatpush1.msra.mxu0 %v2497
    %8108 = vmatprep.subr.mxu0 0.0
    %8109 = vmatpush1.msra.mxu0 0.0
    %8110 = vmatprep.subr.mxu0 0.0
    %8111 = vmatpush1.msra.mxu0 0.0
    %8112 = vmatprep.subr.mxu0 0.0
    %8113 = vmatpush1.msra.mxu0 0.0
    %8114 = vmatprep.subr.mxu0 0.0
    %8115 = vmatpush1.msra.mxu0 0.0
    %8116 = vmatprep.subr.mxu0 0.0
    %8117 = vmatpush1.msra.mxu0 0.0
    %8118 = vmatprep.subr.mxu0 0.0
    %8119 = vmatpush1.msra.mxu0 0.0
    %8120 = vmatprep.subr.mxu0 0.0
    %8121 = vmatpush1.msra.mxu0 0.0
    %8122 = vmatprep.subr.mxu0 0.0
    %8123 = vmatpush1.msra.mxu0 0.0
    %8124 = vmatprep.subr.mxu0 0.0
    %8125 = vmatpush1.msra.mxu0 0.0
    %8126 = vmatprep.subr.mxu0 0.0
    %8127 = vmatpush1.msra.mxu0 0.0
    %8128 = vmatprep.subr.mxu0 0.0
    %8129 = vmatpush1.msra.mxu0 0.0
    %8130 = vmatprep.subr.mxu0 0.0
    %8131 = vmatpush1.msra.mxu0 0.0
    %8132 = vmatprep.subr.mxu0 0.0
    %8133 = vmatpush1.msra.mxu0 0.0
    %8134 = vmatprep.subr.mxu0 0.0
    %8135 = vmatpush1.msra.mxu0 0.0
    %8136 = vmatprep.subr.mxu0 0.0
    %8137 = vmatpush1.msra.mxu0 0.0
    %8138 = vmatprep.subr.mxu0 0.0
    %8139 = vmatpush1.msra.mxu0 0.0
    %8140 = vmatprep.mubr.f32.mxu0 0.0
    %8141 = vmatmul.mubr.f32.gmra.mrb[0].mxu0 %v7124
    %v8142 = vpop.f32.mrb[0].mxu0
    %v8143 = vadd.f32 0.0, %v8142
    %v8144 = vpop.f32.mrb[0].mxu0
    %v8145 = vadd.f32 0.0, %v8144
    %8146 = vdwg.mxu0
    %8147 = vmatprep.subr.mxu0 %v2440
    %8148 = vmatpush1.msra.mxu0 %v2439
    %8149 = vmatprep.subr.mxu0 %v2444
    %8150 = vmatpush1.msra.mxu0 %v2443
    %8151 = vmatprep.subr.mxu0 %v2448
    %8152 = vmatpush1.msra.mxu0 %v2447
    %8153 = vmatprep.subr.mxu0 %v2452
    %8154 = vmatpush1.msra.mxu0 %v2451
    %8155 = vmatprep.subr.mxu0 %v2456
    %8156 = vmatpush1.msra.mxu0 %v2455
    %8157 = vmatprep.subr.mxu0 %v2460
    %8158 = vmatpush1.msra.mxu0 %v2459
    %8159 = vmatprep.subr.mxu0 %v2464
    %8160 = vmatpush1.msra.mxu0 %v2463
    %8161 = vmatprep.subr.mxu0 %v2468
    %8162 = vmatpush1.msra.mxu0 %v2467
    %8163 = vmatprep.subr.mxu0 %v2472
    %8164 = vmatpush1.msra.mxu0 %v2471
    %8165 = vmatprep.subr.mxu0 %v2476
    %8166 = vmatpush1.msra.mxu0 %v2475
    %8167 = vmatprep.subr.mxu0 %v2480
    %8168 = vmatpush1.msra.mxu0 %v2479
    %8169 = vmatprep.subr.mxu0 %v2484
    %8170 = vmatpush1.msra.mxu0 %v2483
    %8171 = vmatprep.subr.mxu0 %v2488
    %8172 = vmatpush1.msra.mxu0 %v2487
    %8173 = vmatprep.subr.mxu0 %v2492
    %8174 = vmatpush1.msra.mxu0 %v2491
    %8175 = vmatprep.subr.mxu0 %v2496
    %8176 = vmatpush1.msra.mxu0 %v2495
    %8177 = vmatprep.subr.mxu0 %v2500
    %8178 = vmatpush1.msra.mxu0 %v2499
    %8179 = vmatprep.subr.mxu0 0.0
    %8180 = vmatpush1.msra.mxu0 0.0
    %8181 = vmatprep.subr.mxu0 0.0
    %8182 = vmatpush1.msra.mxu0 0.0
    %8183 = vmatprep.subr.mxu0 0.0
    %8184 = vmatpush1.msra.mxu0 0.0
    %8185 = vmatprep.subr.mxu0 0.0
    %8186 = vmatpush1.msra.mxu0 0.0
    %8187 = vmatprep.subr.mxu0 0.0
    %8188 = vmatpush1.msra.mxu0 0.0
    %8189 = vmatprep.subr.mxu0 0.0
    %8190 = vmatpush1.msra.mxu0 0.0
    %8191 = vmatprep.subr.mxu0 0.0
    %8192 = vmatpush1.msra.mxu0 0.0
    %8193 = vmatprep.subr.mxu0 0.0
    %8194 = vmatpush1.msra.mxu0 0.0
    %8195 = vmatprep.subr.mxu0 0.0
    %8196 = vmatpush1.msra.mxu0 0.0
    %8197 = vmatprep.subr.mxu0 0.0
    %8198 = vmatpush1.msra.mxu0 0.0
    %8199 = vmatprep.subr.mxu0 0.0
    %8200 = vmatpush1.msra.mxu0 0.0
    %8201 = vmatprep.subr.mxu0 0.0
    %8202 = vmatpush1.msra.mxu0 0.0
    %8203 = vmatprep.subr.mxu0 0.0
    %8204 = vmatpush1.msra.mxu0 0.0
    %8205 = vmatprep.subr.mxu0 0.0
    %8206 = vmatpush1.msra.mxu0 0.0
    %8207 = vmatprep.subr.mxu0 0.0
    %8208 = vmatpush1.msra.mxu0 0.0
    %8209 = vmatprep.subr.mxu0 0.0
    %8210 = vmatpush1.msra.mxu0 0.0
    %8211 = vmatprep.mubr.f32.mxu0 0.0
    %8212 = vmatmul.mubr.f32.gmra.mrb[0].mxu0 %v7124
    %v8213 = vpop.f32.mrb[0].mxu0
    %v8214 = vadd.f32 0.0, %v8213
    %v8215 = vpop.f32.mrb[0].mxu0
    %v8216 = vadd.f32 0.0, %v8215
    %8217 = vdwg.mxu0
    %v8218 = vadd.f32 %v8001, %v8143
    %v8219 = vadd.f32 %v8003, %v8145
    %v8220 = vadd.f32 %v8072, %v8214
    %v8221 = vadd.f32 %v8074, %v8216
    %v8222 = vmul.f32 %v8218, 0.5
    %v8223 = vmul.f32 %v8219, 0.5
    %v8224 = vmul.f32 %v8220, 0.5
    %v8225 = vtanh.pop %v8222
    %v8226 = vtanh.pop %v8223
    %v8227 = vtanh.pop %v8224
    %v8228 = vadd.f32 %v8225, 1.0
    %v8229 = vadd.f32 %v8226, 1.0
    %v8230 = vadd.f32 %v8227, 1.0
    %v8231 = vmul.f32 %v8228, 0.5
    %v8232 = vmul.f32 %v8229, 0.5
    %v8233 = vmul.f32 %v8230, 0.5
    %v8234 = vtanh.pop %v8221
    %v8235 = vmul.f32 %v8232, %v7122
    %v8236 = vmul.f32 %v8231, %v8234
    %v8237 = vadd.f32 %v8235, %v8236
    %v8238 = vtanh.pop %v8237
    %v8239 = vmul.f32 %v8233, %v8238
    %v8240 = vmul.f32 %v7747, 0.5
    %v8241 = vtanh.pop %v8240
    %v8242 = vadd.f32 %v8241, 1.0
    %v8243 = vmul.f32 %v8242, 0.5
    %8244 = vmatprep.subr.mxu0 %v1257
    %8245 = vmatpush1.msra.mxu0 %v1256
    %8246 = vmatprep.subr.mxu0 %v1261
    %8247 = vmatpush1.msra.mxu0 %v1260
    %8248 = vmatprep.subr.mxu0 %v1265
    %8249 = vmatpush1.msra.mxu0 %v1264
    %8250 = vmatprep.subr.mxu0 %v1269
    %8251 = vmatpush1.msra.mxu0 %v1268
    %8252 = vmatprep.subr.mxu0 %v1273
    %8253 = vmatpush1.msra.mxu0 %v1272
    %8254 = vmatprep.subr.mxu0 %v1277
    %8255 = vmatpush1.msra.mxu0 %v1276
    %8256 = vmatprep.subr.mxu0 %v1281
    %8257 = vmatpush1.msra.mxu0 %v1280
    %8258 = vmatprep.subr.mxu0 %v1285
    %8259 = vmatpush1.msra.mxu0 %v1284
    %8260 = vmatprep.subr.mxu0 %v1289
    %8261 = vmatpush1.msra.mxu0 %v1288
    %8262 = vmatprep.subr.mxu0 %v1293
    %8263 = vmatpush1.msra.mxu0 %v1292
    %8264 = vmatprep.subr.mxu0 %v1297
    %8265 = vmatpush1.msra.mxu0 %v1296
    %8266 = vmatprep.subr.mxu0 %v1301
    %8267 = vmatpush1.msra.mxu0 %v1300
    %8268 = vmatprep.subr.mxu0 %v1305
    %8269 = vmatpush1.msra.mxu0 %v1304
    %8270 = vmatprep.subr.mxu0 %v1309
    %8271 = vmatpush1.msra.mxu0 %v1308
    %8272 = vmatprep.subr.mxu0 %v1313
    %8273 = vmatpush1.msra.mxu0 %v1312
    %8274 = vmatprep.subr.mxu0 %v1317
    %8275 = vmatpush1.msra.mxu0 %v1316
    %8276 = vmatprep.subr.mxu0 0.0
    %8277 = vmatpush1.msra.mxu0 0.0
    %8278 = vmatprep.subr.mxu0 0.0
    %8279 = vmatpush1.msra.mxu0 0.0
    %8280 = vmatprep.subr.mxu0 0.0
    %8281 = vmatpush1.msra.mxu0 0.0
    %8282 = vmatprep.subr.mxu0 0.0
    %8283 = vmatpush1.msra.mxu0 0.0
    %8284 = vmatprep.subr.mxu0 0.0
    %8285 = vmatpush1.msra.mxu0 0.0
    %8286 = vmatprep.subr.mxu0 0.0
    %8287 = vmatpush1.msra.mxu0 0.0
    %8288 = vmatprep.subr.mxu0 0.0
    %8289 = vmatpush1.msra.mxu0 0.0
    %8290 = vmatprep.subr.mxu0 0.0
    %8291 = vmatpush1.msra.mxu0 0.0
    %8292 = vmatprep.subr.mxu0 0.0
    %8293 = vmatpush1.msra.mxu0 0.0
    %8294 = vmatprep.subr.mxu0 0.0
    %8295 = vmatpush1.msra.mxu0 0.0
    %8296 = vmatprep.subr.mxu0 0.0
    %8297 = vmatpush1.msra.mxu0 0.0
    %8298 = vmatprep.subr.mxu0 0.0
    %8299 = vmatpush1.msra.mxu0 0.0
    %8300 = vmatprep.subr.mxu0 0.0
    %8301 = vmatpush1.msra.mxu0 0.0
    %8302 = vmatprep.subr.mxu0 0.0
    %8303 = vmatpush1.msra.mxu0 0.0
    %8304 = vmatprep.subr.mxu0 0.0
    %8305 = vmatpush1.msra.mxu0 0.0
    %8306 = vmatprep.subr.mxu0 0.0
    %8307 = vmatpush1.msra.mxu0 0.0
    %8308 = vmatprep.mubr.f32.mxu0 0.0
    %8309 = vmatmul.mubr.f32.gmra.mrb[0].mxu0 %v8243
    %v8310 = vpop.f32.mrb[0].mxu0
    %v8311 = vadd.f32 %v1324, %v8310
    %v8312 = vpop.f32.mrb[0].mxu0
    %v8313 = vadd.f32 %v1328, %v8312
    %8314 = vdwg.mxu0
    %8315 = vmatprep.subr.mxu0 %v1259
    %8316 = vmatpush1.msra.mxu0 %v1258
    %8317 = vmatprep.subr.mxu0 %v1263
    %8318 = vmatpush1.msra.mxu0 %v1262
    %8319 = vmatprep.subr.mxu0 %v1267
    %8320 = vmatpush1.msra.mxu0 %v1266
    %8321 = vmatprep.subr.mxu0 %v1271
    %8322 = vmatpush1.msra.mxu0 %v1270
    %8323 = vmatprep.subr.mxu0 %v1275
    %8324 = vmatpush1.msra.mxu0 %v1274
    %8325 = vmatprep.subr.mxu0 %v1279
    %8326 = vmatpush1.msra.mxu0 %v1278
    %8327 = vmatprep.subr.mxu0 %v1283
    %8328 = vmatpush1.msra.mxu0 %v1282
    %8329 = vmatprep.subr.mxu0 %v1287
    %8330 = vmatpush1.msra.mxu0 %v1286
    %8331 = vmatprep.subr.mxu0 %v1291
    %8332 = vmatpush1.msra.mxu0 %v1290
    %8333 = vmatprep.subr.mxu0 %v1295
    %8334 = vmatpush1.msra.mxu0 %v1294
    %8335 = vmatprep.subr.mxu0 %v1299
    %8336 = vmatpush1.msra.mxu0 %v1298
    %8337 = vmatprep.subr.mxu0 %v1303
    %8338 = vmatpush1.msra.mxu0 %v1302
    %8339 = vmatprep.subr.mxu0 %v1307
    %8340 = vmatpush1.msra.mxu0 %v1306
    %8341 = vmatprep.subr.mxu0 %v1311
    %8342 = vmatpush1.msra.mxu0 %v1310
    %8343 = vmatprep.subr.mxu0 %v1315
    %8344 = vmatpush1.msra.mxu0 %v1314
    %8345 = vmatprep.subr.mxu0 %v1319
    %8346 = vmatpush1.msra.mxu0 %v1318
    %8347 = vmatprep.subr.mxu0 0.0
    %8348 = vmatpush1.msra.mxu0 0.0
    %8349 = vmatprep.subr.mxu0 0.0
    %8350 = vmatpush1.msra.mxu0 0.0
    %8351 = vmatprep.subr.mxu0 0.0
    %8352 = vmatpush1.msra.mxu0 0.0
    %8353 = vmatprep.subr.mxu0 0.0
    %8354 = vmatpush1.msra.mxu0 0.0
    %8355 = vmatprep.subr.mxu0 0.0
    %8356 = vmatpush1.msra.mxu0 0.0
    %8357 = vmatprep.subr.mxu0 0.0
    %8358 = vmatpush1.msra.mxu0 0.0
    %8359 = vmatprep.subr.mxu0 0.0
    %8360 = vmatpush1.msra.mxu0 0.0
    %8361 = vmatprep.subr.mxu0 0.0
    %8362 = vmatpush1.msra.mxu0 0.0
    %8363 = vmatprep.subr.mxu0 0.0
    %8364 = vmatpush1.msra.mxu0 0.0
    %8365 = vmatprep.subr.mxu0 0.0
    %8366 = vmatpush1.msra.mxu0 0.0
    %8367 = vmatprep.subr.mxu0 0.0
    %8368 = vmatpush1.msra.mxu0 0.0
    %8369 = vmatprep.subr.mxu0 0.0
    %8370 = vmatpush1.msra.mxu0 0.0
    %8371 = vmatprep.subr.mxu0 0.0
    %8372 = vmatpush1.msra.mxu0 0.0
    %8373 = vmatprep.subr.mxu0 0.0
    %8374 = vmatpush1.msra.mxu0 0.0
    %8375 = vmatprep.subr.mxu0 0.0
    %8376 = vmatpush1.msra.mxu0 0.0
    %8377 = vmatprep.subr.mxu0 0.0
    %8378 = vmatpush1.msra.mxu0 0.0
    %8379 = vmatprep.mubr.f32.mxu0 0.0
    %8380 = vmatmul.mubr.f32.gmra.mrb[0].mxu0 %v8243
    %v8381 = vpop.f32.mrb[0].mxu0
    %v8382 = vadd.f32 %v1332, %v8381
    %v8383 = vpop.f32.mrb[0].mxu0
    %v8384 = vadd.f32 %v1336, %v8383
    %8385 = vdwg.mxu0
    %8386 = vmatprep.subr.mxu0 %v1484
    %8387 = vmatpush1.msra.mxu0 %v1483
    %8388 = vmatprep.subr.mxu0 %v1488
    %8389 = vmatpush1.msra.mxu0 %v1487
    %8390 = vmatprep.subr.mxu0 %v1492
    %8391 = vmatpush1.msra.mxu0 %v1491
    %8392 = vmatprep.subr.mxu0 %v1496
    %8393 = vmatpush1.msra.mxu0 %v1495
    %8394 = vmatprep.subr.mxu0 %v1500
    %8395 = vmatpush1.msra.mxu0 %v1499
    %8396 = vmatprep.subr.mxu0 %v1504
    %8397 = vmatpush1.msra.mxu0 %v1503
    %8398 = vmatprep.subr.mxu0 %v1508
    %8399 = vmatpush1.msra.mxu0 %v1507
    %8400 = vmatprep.subr.mxu0 %v1512
    %8401 = vmatpush1.msra.mxu0 %v1511
    %8402 = vmatprep.subr.mxu0 %v1516
    %8403 = vmatpush1.msra.mxu0 %v1515
    %8404 = vmatprep.subr.mxu0 %v1520
    %8405 = vmatpush1.msra.mxu0 %v1519
    %8406 = vmatprep.subr.mxu0 %v1524
    %8407 = vmatpush1.msra.mxu0 %v1523
    %8408 = vmatprep.subr.mxu0 %v1528
    %8409 = vmatpush1.msra.mxu0 %v1527
    %8410 = vmatprep.subr.mxu0 %v1532
    %8411 = vmatpush1.msra.mxu0 %v1531
    %8412 = vmatprep.subr.mxu0 %v1536
    %8413 = vmatpush1.msra.mxu0 %v1535
    %8414 = vmatprep.subr.mxu0 %v1540
    %8415 = vmatpush1.msra.mxu0 %v1539
    %8416 = vmatprep.subr.mxu0 %v1544
    %8417 = vmatpush1.msra.mxu0 %v1543
    %8418 = vmatprep.subr.mxu0 0.0
    %8419 = vmatpush1.msra.mxu0 0.0
    %8420 = vmatprep.subr.mxu0 0.0
    %8421 = vmatpush1.msra.mxu0 0.0
    %8422 = vmatprep.subr.mxu0 0.0
    %8423 = vmatpush1.msra.mxu0 0.0
    %8424 = vmatprep.subr.mxu0 0.0
    %8425 = vmatpush1.msra.mxu0 0.0
    %8426 = vmatprep.subr.mxu0 0.0
    %8427 = vmatpush1.msra.mxu0 0.0
    %8428 = vmatprep.subr.mxu0 0.0
    %8429 = vmatpush1.msra.mxu0 0.0
    %8430 = vmatprep.subr.mxu0 0.0
    %8431 = vmatpush1.msra.mxu0 0.0
    %8432 = vmatprep.subr.mxu0 0.0
    %8433 = vmatpush1.msra.mxu0 0.0
    %8434 = vmatprep.subr.mxu0 0.0
    %8435 = vmatpush1.msra.mxu0 0.0
    %8436 = vmatprep.subr.mxu0 0.0
    %8437 = vmatpush1.msra.mxu0 0.0
    %8438 = vmatprep.subr.mxu0 0.0
    %8439 = vmatpush1.msra.mxu0 0.0
    %8440 = vmatprep.subr.mxu0 0.0
    %8441 = vmatpush1.msra.mxu0 0.0
    %8442 = vmatprep.subr.mxu0 0.0
    %8443 = vmatpush1.msra.mxu0 0.0
    %8444 = vmatprep.subr.mxu0 0.0
    %8445 = vmatpush1.msra.mxu0 0.0
    %8446 = vmatprep.subr.mxu0 0.0
    %8447 = vmatpush1.msra.mxu0 0.0
    %8448 = vmatprep.subr.mxu0 0.0
    %8449 = vmatpush1.msra.mxu0 0.0
    %8450 = vmatprep.mubr.f32.mxu0 0.0
    %8451 = vmatmul.mubr.f32.gmra.mrb[0].mxu0 %v7434
    %v8452 = vpop.f32.mrb[0].mxu0
    %v8453 = vadd.f32 0.0, %v8452
    %v8454 = vpop.f32.mrb[0].mxu0
    %v8455 = vadd.f32 0.0, %v8454
    %8456 = vdwg.mxu0
    %8457 = vmatprep.subr.mxu0 %v1486
    %8458 = vmatpush1.msra.mxu0 %v1485
    %8459 = vmatprep.subr.mxu0 %v1490
    %8460 = vmatpush1.msra.mxu0 %v1489
    %8461 = vmatprep.subr.mxu0 %v1494
    %8462 = vmatpush1.msra.mxu0 %v1493
    %8463 = vmatprep.subr.mxu0 %v1498
    %8464 = vmatpush1.msra.mxu0 %v1497
    %8465 = vmatprep.subr.mxu0 %v1502
    %8466 = vmatpush1.msra.mxu0 %v1501
    %8467 = vmatprep.subr.mxu0 %v1506
    %8468 = vmatpush1.msra.mxu0 %v1505
    %8469 = vmatprep.subr.mxu0 %v1510
    %8470 = vmatpush1.msra.mxu0 %v1509
    %8471 = vmatprep.subr.mxu0 %v1514
    %8472 = vmatpush1.msra.mxu0 %v1513
    %8473 = vmatprep.subr.mxu0 %v1518
    %8474 = vmatpush1.msra.mxu0 %v1517
    %8475 = vmatprep.subr.mxu0 %v1522
    %8476 = vmatpush1.msra.mxu0 %v1521
    %8477 = vmatprep.subr.mxu0 %v1526
    %8478 = vmatpush1.msra.mxu0 %v1525
    %8479 = vmatprep.subr.mxu0 %v1530
    %8480 = vmatpush1.msra.mxu0 %v1529
    %8481 = vmatprep.subr.mxu0 %v1534
    %8482 = vmatpush1.msra.mxu0 %v1533
    %8483 = vmatprep.subr.mxu0 %v1538
    %8484 = vmatpush1.msra.mxu0 %v1537
    %8485 = vmatprep.subr.mxu0 %v1542
    %8486 = vmatpush1.msra.mxu0 %v1541
    %8487 = vmatprep.subr.mxu0 %v1546
    %8488 = vmatpush1.msra.mxu0 %v1545
    %8489 = vmatprep.subr.mxu0 0.0
    %8490 = vmatpush1.msra.mxu0 0.0
    %8491 = vmatprep.subr.mxu0 0.0
    %8492 = vmatpush1.msra.mxu0 0.0
    %8493 = vmatprep.subr.mxu0 0.0
    %8494 = vmatpush1.msra.mxu0 0.0
    %8495 = vmatprep.subr.mxu0 0.0
    %8496 = vmatpush1.msra.mxu0 0.0
    %8497 = vmatprep.subr.mxu0 0.0
    %8498 = vmatpush1.msra.mxu0 0.0
    %8499 = vmatprep.subr.mxu0 0.0
    %8500 = vmatpush1.msra.mxu0 0.0
    %8501 = vmatprep.subr.mxu0 0.0
    %8502 = vmatpush1.msra.mxu0 0.0
    %8503 = vmatprep.subr.mxu0 0.0
    %8504 = vmatpush1.msra.mxu0 0.0
    %8505 = vmatprep.subr.mxu0 0.0
    %8506 = vmatpush1.msra.mxu0 0.0
    %8507 = vmatprep.subr.mxu0 0.0
    %8508 = vmatpush1.msra.mxu0 0.0
    %8509 = vmatprep.subr.mxu0 0.0
    %8510 = vmatpush1.msra.mxu0 0.0
    %8511 = vmatprep.subr.mxu0 0.0
    %8512 = vmatpush1.msra.mxu0 0.0
    %8513 = vmatprep.subr.mxu0 0.0
    %8514 = vmatpush1.msra.mxu0 0.0
    %8515 = vmatprep.subr.mxu0 0.0
    %8516 = vmatpush1.msra.mxu0 0.0
    %8517 = vmatprep.subr.mxu0 0.0
    %8518 = vmatpush1.msra.mxu0 0.0
    %8519 = vmatprep.subr.mxu0 0.0
    %8520 = vmatpush1.msra.mxu0 0.0
    %8521 = vmatprep.mubr.f32.mxu0 0.0
    %8522 = vmatmul.mubr.f32.gmra.mrb[0].mxu0 %v7434
    %v8523 = vpop.f32.mrb[0].mxu0
    %v8524 = vadd.f32 0.0, %v8523
    %v8525 = vpop.f32.mrb[0].mxu0
    %v8526 = vadd.f32 0.0, %v8525
    %8527 = vdwg.mxu0
    %v8528 = vadd.f32 %v8311, %v8453
    %v8529 = vadd.f32 %v8313, %v8455
    %v8530 = vadd.f32 %v8382, %v8524
    %v8531 = vadd.f32 %v8384, %v8526
    %v8532 = vmul.f32 %v8528, 0.5
    %v8533 = vmul.f32 %v8529, 0.5
    %v8534 = vmul.f32 %v8530, 0.5
    %v8535 = vtanh.pop %v8532
    %v8536 = vtanh.pop %v8533
    %v8537 = vtanh.pop %v8534
    %v8538 = vadd.f32 %v8535, 1.0
    %v8539 = vadd.f32 %v8536, 1.0
    %v8540 = vadd.f32 %v8537, 1.0
    %v8541 = vmul.f32 %v8538, 0.5
    %v8542 = vmul.f32 %v8539, 0.5
    %v8543 = vmul.f32 %v8540, 0.5
    %v8544 = vtanh.pop %v8531
    %v8545 = vmul.f32 %v8542, %v7432
    %v8546 = vmul.f32 %v8541, %v8544
    %v8547 = vadd.f32 %v8545, %v8546
    %v8548 = vtanh.pop %v8547
    %v8549 = vmul.f32 %v8543, %v8548
    %v8550 = vmul.f32 %v7929, 0.5
    %v8551 = vtanh.pop %v8550
    %v8552 = vadd.f32 %v8551, 1.0
    %v8553 = vmul.f32 %v8552, 0.5
    %v8555 = vrot.slane %v8553, 7
    %8557 = vmatprep.subr.mxu0 %v619
    %8558 = vmatpush1.msra.mxu0 %v618
    %8559 = vmatprep.subr.mxu0 %v623
    %8560 = vmatpush1.msra.mxu0 %v622
    %8561 = vmatprep.subr.mxu0 %v627
    %8562 = vmatpush1.msra.mxu0 %v626
    %8563 = vmatprep.subr.mxu0 %v631
    %8564 = vmatpush1.msra.mxu0 %v630
    %8565 = vmatprep.subr.mxu0 %v635
    %8566 = vmatpush1.msra.mxu0 %v634
    %8567 = vmatprep.subr.mxu0 %v639
    %8568 = vmatpush1.msra.mxu0 %v638
    %8569 = vmatprep.subr.mxu0 %v643
    %8570 = vmatpush1.msra.mxu0 %v642
    %8571 = vmatprep.subr.mxu0 %v647
    %8572 = vmatpush1.msra.mxu0 %v646
    %8573 = vmatprep.subr.mxu0 %v651
    %8574 = vmatpush1.msra.mxu0 %v650
    %8575 = vmatprep.subr.mxu0 %v655
    %8576 = vmatpush1.msra.mxu0 %v654
    %8577 = vmatprep.subr.mxu0 %v659
    %8578 = vmatpush1.msra.mxu0 %v658
    %8579 = vmatprep.subr.mxu0 %v663
    %8580 = vmatpush1.msra.mxu0 %v662
    %8581 = vmatprep.subr.mxu0 %v667
    %8582 = vmatpush1.msra.mxu0 %v666
    %8583 = vmatprep.subr.mxu0 %v671
    %8584 = vmatpush1.msra.mxu0 %v670
    %8585 = vmatprep.subr.mxu0 %v675
    %8586 = vmatpush1.msra.mxu0 %v674
    %8587 = vmatprep.subr.mxu0 %v679
    %8588 = vmatpush1.msra.mxu0 %v678
    %8589 = vmatprep.subr.mxu0 0.0
    %8590 = vmatpush1.msra.mxu0 0.0
    %8591 = vmatprep.subr.mxu0 0.0
    %8592 = vmatpush1.msra.mxu0 0.0
    %8593 = vmatprep.subr.mxu0 0.0
    %8594 = vmatpush1.msra.mxu0 0.0
    %8595 = vmatprep.subr.mxu0 0.0
    %8596 = vmatpush1.msra.mxu0 0.0
    %8597 = vmatprep.subr.mxu0 0.0
    %8598 = vmatpush1.msra.mxu0 0.0
    %8599 = vmatprep.subr.mxu0 0.0
    %8600 = vmatpush1.msra.mxu0 0.0
    %8601 = vmatprep.subr.mxu0 0.0
    %8602 = vmatpush1.msra.mxu0 0.0
    %8603 = vmatprep.subr.mxu0 0.0
    %8604 = vmatpush1.msra.mxu0 0.0
    %8605 = vmatprep.subr.mxu0 0.0
    %8606 = vmatpush1.msra.mxu0 0.0
    %8607 = vmatprep.subr.mxu0 0.0
    %8608 = vmatpush1.msra.mxu0 0.0
    %8609 = vmatprep.subr.mxu0 0.0
    %8610 = vmatpush1.msra.mxu0 0.0
    %8611 = vmatprep.subr.mxu0 0.0
    %8612 = vmatpush1.msra.mxu0 0.0
    %8613 = vmatprep.subr.mxu0 0.0
    %8614 = vmatpush1.msra.mxu0 0.0
    %8615 = vmatprep.subr.mxu0 0.0
    %8616 = vmatpush1.msra.mxu0 0.0
    %8617 = vmatprep.subr.mxu0 0.0
    %8618 = vmatpush1.msra.mxu0 0.0
    %8619 = vmatprep.subr.mxu0 0.0
    %8620 = vmatpush1.msra.mxu0 0.0
    %8621 = vmatprep.mubr.f32.mxu0 0.0
    %8622 = vmatmul.mubr.f32.gmra.mrb[0].mxu0 %v8555
    %v8623 = vpop.f32.mrb[0].mxu0
    %v8624 = vadd.f32 %v686, %v8623
    %v8625 = vpop.f32.mrb[0].mxu0
    %v8626 = vadd.f32 %v690, %v8625
    %8627 = vdwg.mxu0
    %8628 = vmatprep.subr.mxu0 %v621
    %8629 = vmatpush1.msra.mxu0 %v620
    %8630 = vmatprep.subr.mxu0 %v625
    %8631 = vmatpush1.msra.mxu0 %v624
    %8632 = vmatprep.subr.mxu0 %v629
    %8633 = vmatpush1.msra.mxu0 %v628
    %8634 = vmatprep.subr.mxu0 %v633
    %8635 = vmatpush1.msra.mxu0 %v632
    %8636 = vmatprep.subr.mxu0 %v637
    %8637 = vmatpush1.msra.mxu0 %v636
    %8638 = vmatprep.subr.mxu0 %v641
    %8639 = vmatpush1.msra.mxu0 %v640
    %8640 = vmatprep.subr.mxu0 %v645
    %8641 = vmatpush1.msra.mxu0 %v644
    %8642 = vmatprep.subr.mxu0 %v649
    %8643 = vmatpush1.msra.mxu0 %v648
    %8644 = vmatprep.subr.mxu0 %v653
    %8645 = vmatpush1.msra.mxu0 %v652
    %8646 = vmatprep.subr.mxu0 %v657
    %8647 = vmatpush1.msra.mxu0 %v656
    %8648 = vmatprep.subr.mxu0 %v661
    %8649 = vmatpush1.msra.mxu0 %v660
    %8650 = vmatprep.subr.mxu0 %v665
    %8651 = vmatpush1.msra.mxu0 %v664
    %8652 = vmatprep.subr.mxu0 %v669
    %8653 = vmatpush1.msra.mxu0 %v668
    %8654 = vmatprep.subr.mxu0 %v673
    %8655 = vmatpush1.msra.mxu0 %v672
    %8656 = vmatprep.subr.mxu0 %v677
    %8657 = vmatpush1.msra.mxu0 %v676
    %8658 = vmatprep.subr.mxu0 %v681
    %8659 = vmatpush1.msra.mxu0 %v680
    %8660 = vmatprep.subr.mxu0 0.0
    %8661 = vmatpush1.msra.mxu0 0.0
    %8662 = vmatprep.subr.mxu0 0.0
    %8663 = vmatpush1.msra.mxu0 0.0
    %8664 = vmatprep.subr.mxu0 0.0
    %8665 = vmatpush1.msra.mxu0 0.0
    %8666 = vmatprep.subr.mxu0 0.0
    %8667 = vmatpush1.msra.mxu0 0.0
    %8668 = vmatprep.subr.mxu0 0.0
    %8669 = vmatpush1.msra.mxu0 0.0
    %8670 = vmatprep.subr.mxu0 0.0
    %8671 = vmatpush1.msra.mxu0 0.0
    %8672 = vmatprep.subr.mxu0 0.0
    %8673 = vmatpush1.msra.mxu0 0.0
    %8674 = vmatprep.subr.mxu0 0.0
    %8675 = vmatpush1.msra.mxu0 0.0
    %8676 = vmatprep.subr.mxu0 0.0
    %8677 = vmatpush1.msra.mxu0 0.0
    %8678 = vmatprep.subr.mxu0 0.0
    %8679 = vmatpush1.msra.mxu0 0.0
    %8680 = vmatprep.subr.mxu0 0.0
    %8681 = vmatpush1.msra.mxu0 0.0
    %8682 = vmatprep.subr.mxu0 0.0
    %8683 = vmatpush1.msra.mxu0 0.0
    %8684 = vmatprep.subr.mxu0 0.0
    %8685 = vmatpush1.msra.mxu0 0.0
    %8686 = vmatprep.subr.mxu0 0.0
    %8687 = vmatpush1.msra.mxu0 0.0
    %8688 = vmatprep.subr.mxu0 0.0
    %8689 = vmatpush1.msra.mxu0 0.0
    %8690 = vmatprep.subr.mxu0 0.0
    %8691 = vmatpush1.msra.mxu0 0.0
    %8692 = vmatprep.mubr.f32.mxu0 0.0
    %8693 = vmatmul.mubr.f32.gmra.mrb[0].mxu0 %v8555
    %v8694 = vpop.f32.mrb[0].mxu0
    %v8695 = vadd.f32 %v694, %v8694
    %v8696 = vpop.f32.mrb[0].mxu0
    %v8697 = vadd.f32 %v698, %v8696
    %8698 = vdwg.mxu0
    %8699 = vmatprep.subr.mxu0 %v846
    %8700 = vmatpush1.msra.mxu0 %v845
    %8701 = vmatprep.subr.mxu0 %v850
    %8702 = vmatpush1.msra.mxu0 %v849
    %8703 = vmatprep.subr.mxu0 %v854
    %8704 = vmatpush1.msra.mxu0 %v853
    %8705 = vmatprep.subr.mxu0 %v858
    %8706 = vmatpush1.msra.mxu0 %v857
    %8707 = vmatprep.subr.mxu0 %v862
    %8708 = vmatpush1.msra.mxu0 %v861
    %8709 = vmatprep.subr.mxu0 %v866
    %8710 = vmatpush1.msra.mxu0 %v865
    %8711 = vmatprep.subr.mxu0 %v870
    %8712 = vmatpush1.msra.mxu0 %v869
    %8713 = vmatprep.subr.mxu0 %v874
    %8714 = vmatpush1.msra.mxu0 %v873
    %8715 = vmatprep.subr.mxu0 %v878
    %8716 = vmatpush1.msra.mxu0 %v877
    %8717 = vmatprep.subr.mxu0 %v882
    %8718 = vmatpush1.msra.mxu0 %v881
    %8719 = vmatprep.subr.mxu0 %v886
    %8720 = vmatpush1.msra.mxu0 %v885
    %8721 = vmatprep.subr.mxu0 %v890
    %8722 = vmatpush1.msra.mxu0 %v889
    %8723 = vmatprep.subr.mxu0 %v894
    %8724 = vmatpush1.msra.mxu0 %v893
    %8725 = vmatprep.subr.mxu0 %v898
    %8726 = vmatpush1.msra.mxu0 %v897
    %8727 = vmatprep.subr.mxu0 %v902
    %8728 = vmatpush1.msra.mxu0 %v901
    %8729 = vmatprep.subr.mxu0 %v906
    %8730 = vmatpush1.msra.mxu0 %v905
    %8731 = vmatprep.subr.mxu0 0.0
    %8732 = vmatpush1.msra.mxu0 0.0
    %8733 = vmatprep.subr.mxu0 0.0
    %8734 = vmatpush1.msra.mxu0 0.0
    %8735 = vmatprep.subr.mxu0 0.0
    %8736 = vmatpush1.msra.mxu0 0.0
    %8737 = vmatprep.subr.mxu0 0.0
    %8738 = vmatpush1.msra.mxu0 0.0
    %8739 = vmatprep.subr.mxu0 0.0
    %8740 = vmatpush1.msra.mxu0 0.0
    %8741 = vmatprep.subr.mxu0 0.0
    %8742 = vmatpush1.msra.mxu0 0.0
    %8743 = vmatprep.subr.mxu0 0.0
    %8744 = vmatpush1.msra.mxu0 0.0
    %8745 = vmatprep.subr.mxu0 0.0
    %8746 = vmatpush1.msra.mxu0 0.0
    %8747 = vmatprep.subr.mxu0 0.0
    %8748 = vmatpush1.msra.mxu0 0.0
    %8749 = vmatprep.subr.mxu0 0.0
    %8750 = vmatpush1.msra.mxu0 0.0
    %8751 = vmatprep.subr.mxu0 0.0
    %8752 = vmatpush1.msra.mxu0 0.0
    %8753 = vmatprep.subr.mxu0 0.0
    %8754 = vmatpush1.msra.mxu0 0.0
    %8755 = vmatprep.subr.mxu0 0.0
    %8756 = vmatpush1.msra.mxu0 0.0
    %8757 = vmatprep.subr.mxu0 0.0
    %8758 = vmatpush1.msra.mxu0 0.0
    %8759 = vmatprep.subr.mxu0 0.0
    %8760 = vmatpush1.msra.mxu0 0.0
    %8761 = vmatprep.subr.mxu0 0.0
    %8762 = vmatpush1.msra.mxu0 0.0
    %8763 = vmatprep.mubr.f32.mxu0 0.0
    %8764 = vmatmul.mubr.f32.gmra.mrb[0].mxu0 %v7747
    %v8765 = vpop.f32.mrb[0].mxu0
    %v8766 = vadd.f32 0.0, %v8765
    %v8767 = vpop.f32.mrb[0].mxu0
    %v8768 = vadd.f32 0.0, %v8767
    %8769 = vdwg.mxu0
    %8770 = vmatprep.subr.mxu0 %v848
    %8771 = vmatpush1.msra.mxu0 %v847
    %8772 = vmatprep.subr.mxu0 %v852
    %8773 = vmatpush1.msra.mxu0 %v851
    %8774 = vmatprep.subr.mxu0 %v856
    %8775 = vmatpush1.msra.mxu0 %v855
    %8776 = vmatprep.subr.mxu0 %v860
    %8777 = vmatpush1.msra.mxu0 %v859
    %8778 = vmatprep.subr.mxu0 %v864
    %8779 = vmatpush1.msra.mxu0 %v863
    %8780 = vmatprep.subr.mxu0 %v868
    %8781 = vmatpush1.msra.mxu0 %v867
    %8782 = vmatprep.subr.mxu0 %v872
    %8783 = vmatpush1.msra.mxu0 %v871
    %8784 = vmatprep.subr.mxu0 %v876
    %8785 = vmatpush1.msra.mxu0 %v875
    %8786 = vmatprep.subr.mxu0 %v880
    %8787 = vmatpush1.msra.mxu0 %v879
    %8788 = vmatprep.subr.mxu0 %v884
    %8789 = vmatpush1.msra.mxu0 %v883
    %8790 = vmatprep.subr.mxu0 %v888
    %8791 = vmatpush1.msra.mxu0 %v887
    %8792 = vmatprep.subr.mxu0 %v892
    %8793 = vmatpush1.msra.mxu0 %v891
    %8794 = vmatprep.subr.mxu0 %v896
    %8795 = vmatpush1.msra.mxu0 %v895
    %8796 = vmatprep.subr.mxu0 %v900
    %8797 = vmatpush1.msra.mxu0 %v899
    %8798 = vmatprep.subr.mxu0 %v904
    %8799 = vmatpush1.msra.mxu0 %v903
    %8800 = vmatprep.subr.mxu0 %v908
    %8801 = vmatpush1.msra.mxu0 %v907
    %8802 = vmatprep.subr.mxu0 0.0
    %8803 = vmatpush1.msra.mxu0 0.0
    %8804 = vmatprep.subr.mxu0 0.0
    %8805 = vmatpush1.msra.mxu0 0.0
    %8806 = vmatprep.subr.mxu0 0.0
    %8807 = vmatpush1.msra.mxu0 0.0
    %8808 = vmatprep.subr.mxu0 0.0
    %8809 = vmatpush1.msra.mxu0 0.0
    %8810 = vmatprep.subr.mxu0 0.0
    %8811 = vmatpush1.msra.mxu0 0.0
    %8812 = vmatprep.subr.mxu0 0.0
    %8813 = vmatpush1.msra.mxu0 0.0
    %8814 = vmatprep.subr.mxu0 0.0
    %8815 = vmatpush1.msra.mxu0 0.0
    %8816 = vmatprep.subr.mxu0 0.0
    %8817 = vmatpush1.msra.mxu0 0.0
    %8818 = vmatprep.subr.mxu0 0.0
    %8819 = vmatpush1.msra.mxu0 0.0
    %8820 = vmatprep.subr.mxu0 0.0
    %8821 = vmatpush1.msra.mxu0 0.0
    %8822 = vmatprep.subr.mxu0 0.0
    %8823 = vmatpush1.msra.mxu0 0.0
    %8824 = vmatprep.subr.mxu0 0.0
    %8825 = vmatpush1.msra.mxu0 0.0
    %8826 = vmatprep.subr.mxu0 0.0
    %8827 = vmatpush1.msra.mxu0 0.0
    %8828 = vmatprep.subr.mxu0 0.0
    %8829 = vmatpush1.msra.mxu0 0.0
    %8830 = vmatprep.subr.mxu0 0.0
    %8831 = vmatpush1.msra.mxu0 0.0
    %8832 = vmatprep.subr.mxu0 0.0
    %8833 = vmatpush1.msra.mxu0 0.0
    %8834 = vmatprep.mubr.f32.mxu0 0.0
    %8835 = vmatmul.mubr.f32.gmra.mrb[0].mxu0 %v7747
    %v8836 = vpop.f32.mrb[0].mxu0
    %v8837 = vadd.f32 0.0, %v8836
    %v8838 = vpop.f32.mrb[0].mxu0
    %v8839 = vadd.f32 0.0, %v8838
    %8840 = vdwg.mxu0
    %v8841 = vadd.f32 %v8624, %v8766
    %v8842 = vadd.f32 %v8626, %v8768
    %v8843 = vadd.f32 %v8695, %v8837
    %v8844 = vadd.f32 %v8697, %v8839
    %v8845 = vmul.f32 %v8841, 0.5
    %v8846 = vmul.f32 %v8842, 0.5
    %v8847 = vmul.f32 %v8843, 0.5
    %v8848 = vtanh.pop %v8845
    %v8849 = vtanh.pop %v8846
    %v8850 = vtanh.pop %v8847
    %v8851 = vadd.f32 %v8848, 1.0
    %v8852 = vadd.f32 %v8849, 1.0
    %v8853 = vadd.f32 %v8850, 1.0
    %v8854 = vmul.f32 %v8851, 0.5
    %v8855 = vmul.f32 %v8852, 0.5
    %v8856 = vmul.f32 %v8853, 0.5
    %v8857 = vtanh.pop %v8844
    %v8858 = vmul.f32 %v8855, %v7745
    %v8859 = vmul.f32 %v8854, %v8857
    %v8860 = vadd.f32 %v8858, %v8859
    %v8861 = vtanh.pop %v8860
    %v8862 = vmul.f32 %v8856, %v8861
    %v8863 = vmul.f32 %v8549, 0.5
    %v8864 = vtanh.pop %v8863
    %v8865 = vadd.f32 %v8864, 1.0
    %v8866 = vmul.f32 %v8865, 0.5
    %8867 = vmatprep.subr.mxu0 %v2211
    %8868 = vmatpush1.msra.mxu0 %v2210
    %8869 = vmatprep.subr.mxu0 %v2215
    %8870 = vmatpush1.msra.mxu0 %v2214
    %8871 = vmatprep.subr.mxu0 %v2219
    %8872 = vmatpush1.msra.mxu0 %v2218
    %8873 = vmatprep.subr.mxu0 %v2223
    %8874 = vmatpush1.msra.mxu0 %v2222
    %8875 = vmatprep.subr.mxu0 %v2227
    %8876 = vmatpush1.msra.mxu0 %v2226
    %8877 = vmatprep.subr.mxu0 %v2231
    %8878 = vmatpush1.msra.mxu0 %v2230
    %8879 = vmatprep.subr.mxu0 %v2235
    %8880 = vmatpush1.msra.mxu0 %v2234
    %8881 = vmatprep.subr.mxu0 %v2239
    %8882 = vmatpush1.msra.mxu0 %v2238
    %8883 = vmatprep.subr.mxu0 %v2243
    %8884 = vmatpush1.msra.mxu0 %v2242
    %8885 = vmatprep.subr.mxu0 %v2247
    %8886 = vmatpush1.msra.mxu0 %v2246
    %8887 = vmatprep.subr.mxu0 %v2251
    %8888 = vmatpush1.msra.mxu0 %v2250
    %8889 = vmatprep.subr.mxu0 %v2255
    %8890 = vmatpush1.msra.mxu0 %v2254
    %8891 = vmatprep.subr.mxu0 %v2259
    %8892 = vmatpush1.msra.mxu0 %v2258
    %8893 = vmatprep.subr.mxu0 %v2263
    %8894 = vmatpush1.msra.mxu0 %v2262
    %8895 = vmatprep.subr.mxu0 %v2267
    %8896 = vmatpush1.msra.mxu0 %v2266
    %8897 = vmatprep.subr.mxu0 %v2271
    %8898 = vmatpush1.msra.mxu0 %v2270
    %8899 = vmatprep.subr.mxu0 0.0
    %8900 = vmatpush1.msra.mxu0 0.0
    %8901 = vmatprep.subr.mxu0 0.0
    %8902 = vmatpush1.msra.mxu0 0.0
    %8903 = vmatprep.subr.mxu0 0.0
    %8904 = vmatpush1.msra.mxu0 0.0
    %8905 = vmatprep.subr.mxu0 0.0
    %8906 = vmatpush1.msra.mxu0 0.0
    %8907 = vmatprep.subr.mxu0 0.0
    %8908 = vmatpush1.msra.mxu0 0.0
    %8909 = vmatprep.subr.mxu0 0.0
    %8910 = vmatpush1.msra.mxu0 0.0
    %8911 = vmatprep.subr.mxu0 0.0
    %8912 = vmatpush1.msra.mxu0 0.0
    %8913 = vmatprep.subr.mxu0 0.0
    %8914 = vmatpush1.msra.mxu0 0.0
    %8915 = vmatprep.subr.mxu0 0.0
    %8916 = vmatpush1.msra.mxu0 0.0
    %8917 = vmatprep.subr.mxu0 0.0
    %8918 = vmatpush1.msra.mxu0 0.0
    %8919 = vmatprep.subr.mxu0 0.0
    %8920 = vmatpush1.msra.mxu0 0.0
    %8921 = vmatprep.subr.mxu0 0.0
    %8922 = vmatpush1.msra.mxu0 0.0
    %8923 = vmatprep.subr.mxu0 0.0
    %8924 = vmatpush1.msra.mxu0 0.0
    %8925 = vmatprep.subr.mxu0 0.0
    %8926 = vmatpush1.msra.mxu0 0.0
    %8927 = vmatprep.subr.mxu0 0.0
    %8928 = vmatpush1.msra.mxu0 0.0
    %8929 = vmatprep.subr.mxu0 0.0
    %8930 = vmatpush1.msra.mxu0 0.0
    %8931 = vmatprep.mubr.f32.mxu0 0.0
    %8932 = vmatmul.mubr.f32.gmra.mrb[0].mxu0 %v8866
    %v8933 = vpop.f32.mrb[0].mxu0
    %v8934 = vadd.f32 %v2278, %v8933
    %v8935 = vpop.f32.mrb[0].mxu0
    %v8936 = vadd.f32 %v2282, %v8935
    %8937 = vdwg.mxu0
    %8938 = vmatprep.subr.mxu0 %v2213
    %8939 = vmatpush1.msra.mxu0 %v2212
    %8940 = vmatprep.subr.mxu0 %v2217
    %8941 = vmatpush1.msra.mxu0 %v2216
    %8942 = vmatprep.subr.mxu0 %v2221
    %8943 = vmatpush1.msra.mxu0 %v2220
    %8944 = vmatprep.subr.mxu0 %v2225
    %8945 = vmatpush1.msra.mxu0 %v2224
    %8946 = vmatprep.subr.mxu0 %v2229
    %8947 = vmatpush1.msra.mxu0 %v2228
    %8948 = vmatprep.subr.mxu0 %v2233
    %8949 = vmatpush1.msra.mxu0 %v2232
    %8950 = vmatprep.subr.mxu0 %v2237
    %8951 = vmatpush1.msra.mxu0 %v2236
    %8952 = vmatprep.subr.mxu0 %v2241
    %8953 = vmatpush1.msra.mxu0 %v2240
    %8954 = vmatprep.subr.mxu0 %v2245
    %8955 = vmatpush1.msra.mxu0 %v2244
    %8956 = vmatprep.subr.mxu0 %v2249
    %8957 = vmatpush1.msra.mxu0 %v2248
    %8958 = vmatprep.subr.mxu0 %v2253
    %8959 = vmatpush1.msra.mxu0 %v2252
    %8960 = vmatprep.subr.mxu0 %v2257
    %8961 = vmatpush1.msra.mxu0 %v2256
    %8962 = vmatprep.subr.mxu0 %v2261
    %8963 = vmatpush1.msra.mxu0 %v2260
    %8964 = vmatprep.subr.mxu0 %v2265
    %8965 = vmatpush1.msra.mxu0 %v2264
    %8966 = vmatprep.subr.mxu0 %v2269
    %8967 = vmatpush1.msra.mxu0 %v2268
    %8968 = vmatprep.subr.mxu0 %v2273
    %8969 = vmatpush1.msra.mxu0 %v2272
    %8970 = vmatprep.subr.mxu0 0.0
    %8971 = vmatpush1.msra.mxu0 0.0
    %8972 = vmatprep.subr.mxu0 0.0
    %8973 = vmatpush1.msra.mxu0 0.0
    %8974 = vmatprep.subr.mxu0 0.0
    %8975 = vmatpush1.msra.mxu0 0.0
    %8976 = vmatprep.subr.mxu0 0.0
    %8977 = vmatpush1.msra.mxu0 0.0
    %8978 = vmatprep.subr.mxu0 0.0
    %8979 = vmatpush1.msra.mxu0 0.0
    %8980 = vmatprep.subr.mxu0 0.0
    %8981 = vmatpush1.msra.mxu0 0.0
    %8982 = vmatprep.subr.mxu0 0.0
    %8983 = vmatpush1.msra.mxu0 0.0
    %8984 = vmatprep.subr.mxu0 0.0
    %8985 = vmatpush1.msra.mxu0 0.0
    %8986 = vmatprep.subr.mxu0 0.0
    %8987 = vmatpush1.msra.mxu0 0.0
    %8988 = vmatprep.subr.mxu0 0.0
    %8989 = vmatpush1.msra.mxu0 0.0
    %8990 = vmatprep.subr.mxu0 0.0
    %8991 = vmatpush1.msra.mxu0 0.0
    %8992 = vmatprep.subr.mxu0 0.0
    %8993 = vmatpush1.msra.mxu0 0.0
    %8994 = vmatprep.subr.mxu0 0.0
    %8995 = vmatpush1.msra.mxu0 0.0
    %8996 = vmatprep.subr.mxu0 0.0
    %8997 = vmatpush1.msra.mxu0 0.0
    %8998 = vmatprep.subr.mxu0 0.0
    %8999 = vmatpush1.msra.mxu0 0.0
    %9000 = vmatprep.subr.mxu0 0.0
    %9001 = vmatpush1.msra.mxu0 0.0
    %9002 = vmatprep.mubr.f32.mxu0 0.0
    %9003 = vmatmul.mubr.f32.gmra.mrb[0].mxu0 %v8866
    %v9004 = vpop.f32.mrb[0].mxu0
    %v9005 = vadd.f32 %v2286, %v9004
    %v9006 = vpop.f32.mrb[0].mxu0
    %v9007 = vadd.f32 %v2290, %v9006
    %9008 = vdwg.mxu0
    %9009 = vmatprep.subr.mxu0 %v2438
    %9010 = vmatpush1.msra.mxu0 %v2437
    %9011 = vmatprep.subr.mxu0 %v2442
    %9012 = vmatpush1.msra.mxu0 %v2441
    %9013 = vmatprep.subr.mxu0 %v2446
    %9014 = vmatpush1.msra.mxu0 %v2445
    %9015 = vmatprep.subr.mxu0 %v2450
    %9016 = vmatpush1.msra.mxu0 %v2449
    %9017 = vmatprep.subr.mxu0 %v2454
    %9018 = vmatpush1.msra.mxu0 %v2453
    %9019 = vmatprep.subr.mxu0 %v2458
    %9020 = vmatpush1.msra.mxu0 %v2457
    %9021 = vmatprep.subr.mxu0 %v2462
    %9022 = vmatpush1.msra.mxu0 %v2461
    %9023 = vmatprep.subr.mxu0 %v2466
    %9024 = vmatpush1.msra.mxu0 %v2465
    %9025 = vmatprep.subr.mxu0 %v2470
    %9026 = vmatpush1.msra.mxu0 %v2469
    %9027 = vmatprep.subr.mxu0 %v2474
    %9028 = vmatpush1.msra.mxu0 %v2473
    %9029 = vmatprep.subr.mxu0 %v2478
    %9030 = vmatpush1.msra.mxu0 %v2477
    %9031 = vmatprep.subr.mxu0 %v2482
    %9032 = vmatpush1.msra.mxu0 %v2481
    %9033 = vmatprep.subr.mxu0 %v2486
    %9034 = vmatpush1.msra.mxu0 %v2485
    %9035 = vmatprep.subr.mxu0 %v2490
    %9036 = vmatpush1.msra.mxu0 %v2489
    %9037 = vmatprep.subr.mxu0 %v2494
    %9038 = vmatpush1.msra.mxu0 %v2493
    %9039 = vmatprep.subr.mxu0 %v2498
    %9040 = vmatpush1.msra.mxu0 %v2497
    %9041 = vmatprep.subr.mxu0 0.0
    %9042 = vmatpush1.msra.mxu0 0.0
    %9043 = vmatprep.subr.mxu0 0.0
    %9044 = vmatpush1.msra.mxu0 0.0
    %9045 = vmatprep.subr.mxu0 0.0
    %9046 = vmatpush1.msra.mxu0 0.0
    %9047 = vmatprep.subr.mxu0 0.0
    %9048 = vmatpush1.msra.mxu0 0.0
    %9049 = vmatprep.subr.mxu0 0.0
    %9050 = vmatpush1.msra.mxu0 0.0
    %9051 = vmatprep.subr.mxu0 0.0
    %9052 = vmatpush1.msra.mxu0 0.0
    %9053 = vmatprep.subr.mxu0 0.0
    %9054 = vmatpush1.msra.mxu0 0.0
    %9055 = vmatprep.subr.mxu0 0.0
    %9056 = vmatpush1.msra.mxu0 0.0
    %9057 = vmatprep.subr.mxu0 0.0
    %9058 = vmatpush1.msra.mxu0 0.0
    %9059 = vmatprep.subr.mxu0 0.0
    %9060 = vmatpush1.msra.mxu0 0.0
    %9061 = vmatprep.subr.mxu0 0.0
    %9062 = vmatpush1.msra.mxu0 0.0
    %9063 = vmatprep.subr.mxu0 0.0
    %9064 = vmatpush1.msra.mxu0 0.0
    %9065 = vmatprep.subr.mxu0 0.0
    %9066 = vmatpush1.msra.mxu0 0.0
    %9067 = vmatprep.subr.mxu0 0.0
    %9068 = vmatpush1.msra.mxu0 0.0
    %9069 = vmatprep.subr.mxu0 0.0
    %9070 = vmatpush1.msra.mxu0 0.0
    %9071 = vmatprep.subr.mxu0 0.0
    %9072 = vmatpush1.msra.mxu0 0.0
    %9073 = vmatprep.mubr.f32.mxu0 0.0
    %9074 = vmatmul.mubr.f32.gmra.mrb[0].mxu0 %v8239
    %v9075 = vpop.f32.mrb[0].mxu0
    %v9076 = vadd.f32 0.0, %v9075
    %v9077 = vpop.f32.mrb[0].mxu0
    %v9078 = vadd.f32 0.0, %v9077
    %9079 = vdwg.mxu0
    %9080 = vmatprep.subr.mxu0 %v2440
    %9081 = vmatpush1.msra.mxu0 %v2439
    %9082 = vmatprep.subr.mxu0 %v2444
    %9083 = vmatpush1.msra.mxu0 %v2443
    %9084 = vmatprep.subr.mxu0 %v2448
    %9085 = vmatpush1.msra.mxu0 %v2447
    %9086 = vmatprep.subr.mxu0 %v2452
    %9087 = vmatpush1.msra.mxu0 %v2451
    %9088 = vmatprep.subr.mxu0 %v2456
    %9089 = vmatpush1.msra.mxu0 %v2455
    %9090 = vmatprep.subr.mxu0 %v2460
    %9091 = vmatpush1.msra.mxu0 %v2459
    %9092 = vmatprep.subr.mxu0 %v2464
    %9093 = vmatpush1.msra.mxu0 %v2463
    %9094 = vmatprep.subr.mxu0 %v2468
    %9095 = vmatpush1.msra.mxu0 %v2467
    %9096 = vmatprep.subr.mxu0 %v2472
    %9097 = vmatpush1.msra.mxu0 %v2471
    %9098 = vmatprep.subr.mxu0 %v2476
    %9099 = vmatpush1.msra.mxu0 %v2475
    %9100 = vmatprep.subr.mxu0 %v2480
    %9101 = vmatpush1.msra.mxu0 %v2479
    %9102 = vmatprep.subr.mxu0 %v2484
    %9103 = vmatpush1.msra.mxu0 %v2483
    %9104 = vmatprep.subr.mxu0 %v2488
    %9105 = vmatpush1.msra.mxu0 %v2487
    %9106 = vmatprep.subr.mxu0 %v2492
    %9107 = vmatpush1.msra.mxu0 %v2491
    %9108 = vmatprep.subr.mxu0 %v2496
    %9109 = vmatpush1.msra.mxu0 %v2495
    %9110 = vmatprep.subr.mxu0 %v2500
    %9111 = vmatpush1.msra.mxu0 %v2499
    %9112 = vmatprep.subr.mxu0 0.0
    %9113 = vmatpush1.msra.mxu0 0.0
    %9114 = vmatprep.subr.mxu0 0.0
    %9115 = vmatpush1.msra.mxu0 0.0
    %9116 = vmatprep.subr.mxu0 0.0
    %9117 = vmatpush1.msra.mxu0 0.0
    %9118 = vmatprep.subr.mxu0 0.0
    %9119 = vmatpush1.msra.mxu0 0.0
    %9120 = vmatprep.subr.mxu0 0.0
    %9121 = vmatpush1.msra.mxu0 0.0
    %9122 = vmatprep.subr.mxu0 0.0
    %9123 = vmatpush1.msra.mxu0 0.0
    %9124 = vmatprep.subr.mxu0 0.0
    %9125 = vmatpush1.msra.mxu0 0.0
    %9126 = vmatprep.subr.mxu0 0.0
    %9127 = vmatpush1.msra.mxu0 0.0
    %9128 = vmatprep.subr.mxu0 0.0
    %9129 = vmatpush1.msra.mxu0 0.0
    %9130 = vmatprep.subr.mxu0 0.0
    %9131 = vmatpush1.msra.mxu0 0.0
    %9132 = vmatprep.subr.mxu0 0.0
    %9133 = vmatpush1.msra.mxu0 0.0
    %9134 = vmatprep.subr.mxu0 0.0
    %9135 = vmatpush1.msra.mxu0 0.0
    %9136 = vmatprep.subr.mxu0 0.0
    %9137 = vmatpush1.msra.mxu0 0.0
    %9138 = vmatprep.subr.mxu0 0.0
    %9139 = vmatpush1.msra.mxu0 0.0
    %9140 = vmatprep.subr.mxu0 0.0
    %9141 = vmatpush1.msra.mxu0 0.0
    %9142 = vmatprep.subr.mxu0 0.0
    %9143 = vmatpush1.msra.mxu0 0.0
    %9144 = vmatprep.mubr.f32.mxu0 0.0
    %9145 = vmatmul.mubr.f32.gmra.mrb[0].mxu0 %v8239
    %v9146 = vpop.f32.mrb[0].mxu0
    %v9147 = vadd.f32 0.0, %v9146
    %v9148 = vpop.f32.mrb[0].mxu0
    %v9149 = vadd.f32 0.0, %v9148
    %9150 = vdwg.mxu0
    %v9151 = vadd.f32 %v8934, %v9076
    %v9152 = vadd.f32 %v8936, %v9078
    %v9153 = vadd.f32 %v9005, %v9147
    %v9154 = vadd.f32 %v9007, %v9149
    %v9155 = vmul.f32 %v9151, 0.5
    %v9156 = vmul.f32 %v9152, 0.5
    %v9157 = vmul.f32 %v9153, 0.5
    %v9158 = vtanh.pop %v9155
    %v9159 = vtanh.pop %v9156
    %v9160 = vtanh.pop %v9157
    %v9161 = vadd.f32 %v9158, 1.0
    %v9162 = vadd.f32 %v9159, 1.0
    %v9163 = vadd.f32 %v9160, 1.0
    %v9164 = vmul.f32 %v9161, 0.5
    %v9165 = vmul.f32 %v9162, 0.5
    %v9166 = vmul.f32 %v9163, 0.5
    %v9167 = vtanh.pop %v9154
    %v9168 = vmul.f32 %v9165, %v8237
    %v9169 = vmul.f32 %v9164, %v9167
    %v9170 = vadd.f32 %v9168, %v9169
    %v9171 = vtanh.pop %v9170
    %v9172 = vmul.f32 %v9166, %v9171
    %v9173 = vmul.f32 %v8862, 0.5
    %v9174 = vtanh.pop %v9173
    %v9175 = vadd.f32 %v9174, 1.0
    %v9176 = vmul.f32 %v9175, 0.5
    %9177 = vmatprep.subr.mxu0 %v1257
    %9178 = vmatpush1.msra.mxu0 %v1256
    %9179 = vmatprep.subr.mxu0 %v1261
    %9180 = vmatpush1.msra.mxu0 %v1260
    %9181 = vmatprep.subr.mxu0 %v1265
    %9182 = vmatpush1.msra.mxu0 %v1264
    %9183 = vmatprep.subr.mxu0 %v1269
    %9184 = vmatpush1.msra.mxu0 %v1268
    %9185 = vmatprep.subr.mxu0 %v1273
    %9186 = vmatpush1.msra.mxu0 %v1272
    %9187 = vmatprep.subr.mxu0 %v1277
    %9188 = vmatpush1.msra.mxu0 %v1276
    %9189 = vmatprep.subr.mxu0 %v1281
    %9190 = vmatpush1.msra.mxu0 %v1280
    %9191 = vmatprep.subr.mxu0 %v1285
    %9192 = vmatpush1.msra.mxu0 %v1284
    %9193 = vmatprep.subr.mxu0 %v1289
    %9194 = vmatpush1.msra.mxu0 %v1288
    %9195 = vmatprep.subr.mxu0 %v1293
    %9196 = vmatpush1.msra.mxu0 %v1292
    %9197 = vmatprep.subr.mxu0 %v1297
    %9198 = vmatpush1.msra.mxu0 %v1296
    %9199 = vmatprep.subr.mxu0 %v1301
    %9200 = vmatpush1.msra.mxu0 %v1300
    %9201 = vmatprep.subr.mxu0 %v1305
    %9202 = vmatpush1.msra.mxu0 %v1304
    %9203 = vmatprep.subr.mxu0 %v1309
    %9204 = vmatpush1.msra.mxu0 %v1308
    %9205 = vmatprep.subr.mxu0 %v1313
    %9206 = vmatpush1.msra.mxu0 %v1312
    %9207 = vmatprep.subr.mxu0 %v1317
    %9208 = vmatpush1.msra.mxu0 %v1316
    %9209 = vmatprep.subr.mxu0 0.0
    %9210 = vmatpush1.msra.mxu0 0.0
    %9211 = vmatprep.subr.mxu0 0.0
    %9212 = vmatpush1.msra.mxu0 0.0
    %9213 = vmatprep.subr.mxu0 0.0
    %9214 = vmatpush1.msra.mxu0 0.0
    %9215 = vmatprep.subr.mxu0 0.0
    %9216 = vmatpush1.msra.mxu0 0.0
    %9217 = vmatprep.subr.mxu0 0.0
    %9218 = vmatpush1.msra.mxu0 0.0
    %9219 = vmatprep.subr.mxu0 0.0
    %9220 = vmatpush1.msra.mxu0 0.0
    %9221 = vmatprep.subr.mxu0 0.0
    %9222 = vmatpush1.msra.mxu0 0.0
    %9223 = vmatprep.subr.mxu0 0.0
    %9224 = vmatpush1.msra.mxu0 0.0
    %9225 = vmatprep.subr.mxu0 0.0
    %9226 = vmatpush1.msra.mxu0 0.0
    %9227 = vmatprep.subr.mxu0 0.0
    %9228 = vmatpush1.msra.mxu0 0.0
    %9229 = vmatprep.subr.mxu0 0.0
    %9230 = vmatpush1.msra.mxu0 0.0
    %9231 = vmatprep.subr.mxu0 0.0
    %9232 = vmatpush1.msra.mxu0 0.0
    %9233 = vmatprep.subr.mxu0 0.0
    %9234 = vmatpush1.msra.mxu0 0.0
    %9235 = vmatprep.subr.mxu0 0.0
    %9236 = vmatpush1.msra.mxu0 0.0
    %9237 = vmatprep.subr.mxu0 0.0
    %9238 = vmatpush1.msra.mxu0 0.0
    %9239 = vmatprep.subr.mxu0 0.0
    %9240 = vmatpush1.msra.mxu0 0.0
    %9241 = vmatprep.mubr.f32.mxu0 0.0
    %9242 = vmatmul.mubr.f32.gmra.mrb[0].mxu0 %v9176
    %v9243 = vpop.f32.mrb[0].mxu0
    %v9244 = vadd.f32 %v1324, %v9243
    %v9245 = vpop.f32.mrb[0].mxu0
    %v9246 = vadd.f32 %v1328, %v9245
    %9247 = vdwg.mxu0
    %9248 = vmatprep.subr.mxu0 %v1259
    %9249 = vmatpush1.msra.mxu0 %v1258
    %9250 = vmatprep.subr.mxu0 %v1263
    %9251 = vmatpush1.msra.mxu0 %v1262
    %9252 = vmatprep.subr.mxu0 %v1267
    %9253 = vmatpush1.msra.mxu0 %v1266
    %9254 = vmatprep.subr.mxu0 %v1271
    %9255 = vmatpush1.msra.mxu0 %v1270
    %9256 = vmatprep.subr.mxu0 %v1275
    %9257 = vmatpush1.msra.mxu0 %v1274
    %9258 = vmatprep.subr.mxu0 %v1279
    %9259 = vmatpush1.msra.mxu0 %v1278
    %9260 = vmatprep.subr.mxu0 %v1283
    %9261 = vmatpush1.msra.mxu0 %v1282
    %9262 = vmatprep.subr.mxu0 %v1287
    %9263 = vmatpush1.msra.mxu0 %v1286
    %9264 = vmatprep.subr.mxu0 %v1291
    %9265 = vmatpush1.msra.mxu0 %v1290
    %9266 = vmatprep.subr.mxu0 %v1295
    %9267 = vmatpush1.msra.mxu0 %v1294
    %9268 = vmatprep.subr.mxu0 %v1299
    %9269 = vmatpush1.msra.mxu0 %v1298
    %9270 = vmatprep.subr.mxu0 %v1303
    %9271 = vmatpush1.msra.mxu0 %v1302
    %9272 = vmatprep.subr.mxu0 %v1307
    %9273 = vmatpush1.msra.mxu0 %v1306
    %9274 = vmatprep.subr.mxu0 %v1311
    %9275 = vmatpush1.msra.mxu0 %v1310
    %9276 = vmatprep.subr.mxu0 %v1315
    %9277 = vmatpush1.msra.mxu0 %v1314
    %9278 = vmatprep.subr.mxu0 %v1319
    %9279 = vmatpush1.msra.mxu0 %v1318
    %9280 = vmatprep.subr.mxu0 0.0
    %9281 = vmatpush1.msra.mxu0 0.0
    %9282 = vmatprep.subr.mxu0 0.0
    %9283 = vmatpush1.msra.mxu0 0.0
    %9284 = vmatprep.subr.mxu0 0.0
    %9285 = vmatpush1.msra.mxu0 0.0
    %9286 = vmatprep.subr.mxu0 0.0
    %9287 = vmatpush1.msra.mxu0 0.0
    %9288 = vmatprep.subr.mxu0 0.0
    %9289 = vmatpush1.msra.mxu0 0.0
    %9290 = vmatprep.subr.mxu0 0.0
    %9291 = vmatpush1.msra.mxu0 0.0
    %9292 = vmatprep.subr.mxu0 0.0
    %9293 = vmatpush1.msra.mxu0 0.0
    %9294 = vmatprep.subr.mxu0 0.0
    %9295 = vmatpush1.msra.mxu0 0.0
    %9296 = vmatprep.subr.mxu0 0.0
    %9297 = vmatpush1.msra.mxu0 0.0
    %9298 = vmatprep.subr.mxu0 0.0
    %9299 = vmatpush1.msra.mxu0 0.0
    %9300 = vmatprep.subr.mxu0 0.0
    %9301 = vmatpush1.msra.mxu0 0.0
    %9302 = vmatprep.subr.mxu0 0.0
    %9303 = vmatpush1.msra.mxu0 0.0
    %9304 = vmatprep.subr.mxu0 0.0
    %9305 = vmatpush1.msra.mxu0 0.0
    %9306 = vmatprep.subr.mxu0 0.0
    %9307 = vmatpush1.msra.mxu0 0.0
    %9308 = vmatprep.subr.mxu0 0.0
    %9309 = vmatpush1.msra.mxu0 0.0
    %9310 = vmatprep.subr.mxu0 0.0
    %9311 = vmatpush1.msra.mxu0 0.0
    %9312 = vmatprep.mubr.f32.mxu0 0.0
    %9313 = vmatmul.mubr.f32.gmra.mrb[0].mxu0 %v9176
    %v9314 = vpop.f32.mrb[0].mxu0
    %v9315 = vadd.f32 %v1332, %v9314
    %v9316 = vpop.f32.mrb[0].mxu0
    %v9317 = vadd.f32 %v1336, %v9316
    %9318 = vdwg.mxu0
    %9319 = vmatprep.subr.mxu0 %v1484
    %9320 = vmatpush1.msra.mxu0 %v1483
    %9321 = vmatprep.subr.mxu0 %v1488
    %9322 = vmatpush1.msra.mxu0 %v1487
    %9323 = vmatprep.subr.mxu0 %v1492
    %9324 = vmatpush1.msra.mxu0 %v1491
    %9325 = vmatprep.subr.mxu0 %v1496
    %9326 = vmatpush1.msra.mxu0 %v1495
    %9327 = vmatprep.subr.mxu0 %v1500
    %9328 = vmatpush1.msra.mxu0 %v1499
    %9329 = vmatprep.subr.mxu0 %v1504
    %9330 = vmatpush1.msra.mxu0 %v1503
    %9331 = vmatprep.subr.mxu0 %v1508
    %9332 = vmatpush1.msra.mxu0 %v1507
    %9333 = vmatprep.subr.mxu0 %v1512
    %9334 = vmatpush1.msra.mxu0 %v1511
    %9335 = vmatprep.subr.mxu0 %v1516
    %9336 = vmatpush1.msra.mxu0 %v1515
    %9337 = vmatprep.subr.mxu0 %v1520
    %9338 = vmatpush1.msra.mxu0 %v1519
    %9339 = vmatprep.subr.mxu0 %v1524
    %9340 = vmatpush1.msra.mxu0 %v1523
    %9341 = vmatprep.subr.mxu0 %v1528
    %9342 = vmatpush1.msra.mxu0 %v1527
    %9343 = vmatprep.subr.mxu0 %v1532
    %9344 = vmatpush1.msra.mxu0 %v1531
    %9345 = vmatprep.subr.mxu0 %v1536
    %9346 = vmatpush1.msra.mxu0 %v1535
    %9347 = vmatprep.subr.mxu0 %v1540
    %9348 = vmatpush1.msra.mxu0 %v1539
    %9349 = vmatprep.subr.mxu0 %v1544
    %9350 = vmatpush1.msra.mxu0 %v1543
    %9351 = vmatprep.subr.mxu0 0.0
    %9352 = vmatpush1.msra.mxu0 0.0
    %9353 = vmatprep.subr.mxu0 0.0
    %9354 = vmatpush1.msra.mxu0 0.0
    %9355 = vmatprep.subr.mxu0 0.0
    %9356 = vmatpush1.msra.mxu0 0.0
    %9357 = vmatprep.subr.mxu0 0.0
    %9358 = vmatpush1.msra.mxu0 0.0
    %9359 = vmatprep.subr.mxu0 0.0
    %9360 = vmatpush1.msra.mxu0 0.0
    %9361 = vmatprep.subr.mxu0 0.0
    %9362 = vmatpush1.msra.mxu0 0.0
    %9363 = vmatprep.subr.mxu0 0.0
    %9364 = vmatpush1.msra.mxu0 0.0
    %9365 = vmatprep.subr.mxu0 0.0
    %9366 = vmatpush1.msra.mxu0 0.0
    %9367 = vmatprep.subr.mxu0 0.0
    %9368 = vmatpush1.msra.mxu0 0.0
    %9369 = vmatprep.subr.mxu0 0.0
    %9370 = vmatpush1.msra.mxu0 0.0
    %9371 = vmatprep.subr.mxu0 0.0
    %9372 = vmatpush1.msra.mxu0 0.0
    %9373 = vmatprep.subr.mxu0 0.0
    %9374 = vmatpush1.msra.mxu0 0.0
    %9375 = vmatprep.subr.mxu0 0.0
    %9376 = vmatpush1.msra.mxu0 0.0
    %9377 = vmatprep.subr.mxu0 0.0
    %9378 = vmatpush1.msra.mxu0 0.0
    %9379 = vmatprep.subr.mxu0 0.0
    %9380 = vmatpush1.msra.mxu0 0.0
    %9381 = vmatprep.subr.mxu0 0.0
    %9382 = vmatpush1.msra.mxu0 0.0
    %9383 = vmatprep.mubr.f32.mxu0 0.0
    %9384 = vmatmul.mubr.f32.gmra.mrb[0].mxu0 %v8549
    %v9385 = vpop.f32.mrb[0].mxu0
    %v9386 = vadd.f32 0.0, %v9385
    %v9387 = vpop.f32.mrb[0].mxu0
    %v9388 = vadd.f32 0.0, %v9387
    %9389 = vdwg.mxu0
    %9390 = vmatprep.subr.mxu0 %v1486
    %9391 = vmatpush1.msra.mxu0 %v1485
    %9392 = vmatprep.subr.mxu0 %v1490
    %9393 = vmatpush1.msra.mxu0 %v1489
    %9394 = vmatprep.subr.mxu0 %v1494
    %9395 = vmatpush1.msra.mxu0 %v1493
    %9396 = vmatprep.subr.mxu0 %v1498
    %9397 = vmatpush1.msra.mxu0 %v1497
    %9398 = vmatprep.subr.mxu0 %v1502
    %9399 = vmatpush1.msra.mxu0 %v1501
    %9400 = vmatprep.subr.mxu0 %v1506
    %9401 = vmatpush1.msra.mxu0 %v1505
    %9402 = vmatprep.subr.mxu0 %v1510
    %9403 = vmatpush1.msra.mxu0 %v1509
    %9404 = vmatprep.subr.mxu0 %v1514
    %9405 = vmatpush1.msra.mxu0 %v1513
    %9406 = vmatprep.subr.mxu0 %v1518
    %9407 = vmatpush1.msra.mxu0 %v1517
    %9408 = vmatprep.subr.mxu0 %v1522
    %9409 = vmatpush1.msra.mxu0 %v1521
    %9410 = vmatprep.subr.mxu0 %v1526
    %9411 = vmatpush1.msra.mxu0 %v1525
    %9412 = vmatprep.subr.mxu0 %v1530
    %9413 = vmatpush1.msra.mxu0 %v1529
    %9414 = vmatprep.subr.mxu0 %v1534
    %9415 = vmatpush1.msra.mxu0 %v1533
    %9416 = vmatprep.subr.mxu0 %v1538
    %9417 = vmatpush1.msra.mxu0 %v1537
    %9418 = vmatprep.subr.mxu0 %v1542
    %9419 = vmatpush1.msra.mxu0 %v1541
    %9420 = vmatprep.subr.mxu0 %v1546
    %9421 = vmatpush1.msra.mxu0 %v1545
    %9422 = vmatprep.subr.mxu0 0.0
    %9423 = vmatpush1.msra.mxu0 0.0
    %9424 = vmatprep.subr.mxu0 0.0
    %9425 = vmatpush1.msra.mxu0 0.0
    %9426 = vmatprep.subr.mxu0 0.0
    %9427 = vmatpush1.msra.mxu0 0.0
    %9428 = vmatprep.subr.mxu0 0.0
    %9429 = vmatpush1.msra.mxu0 0.0
    %9430 = vmatprep.subr.mxu0 0.0
    %9431 = vmatpush1.msra.mxu0 0.0
    %9432 = vmatprep.subr.mxu0 0.0
    %9433 = vmatpush1.msra.mxu0 0.0
    %9434 = vmatprep.subr.mxu0 0.0
    %9435 = vmatpush1.msra.mxu0 0.0
    %9436 = vmatprep.subr.mxu0 0.0
    %9437 = vmatpush1.msra.mxu0 0.0
    %9438 = vmatprep.subr.mxu0 0.0
    %9439 = vmatpush1.msra.mxu0 0.0
    %9440 = vmatprep.subr.mxu0 0.0
    %9441 = vmatpush1.msra.mxu0 0.0
    %9442 = vmatprep.subr.mxu0 0.0
    %9443 = vmatpush1.msra.mxu0 0.0
    %9444 = vmatprep.subr.mxu0 0.0
    %9445 = vmatpush1.msra.mxu0 0.0
    %9446 = vmatprep.subr.mxu0 0.0
    %9447 = vmatpush1.msra.mxu0 0.0
    %9448 = vmatprep.subr.mxu0 0.0
    %9449 = vmatpush1.msra.mxu0 0.0
    %9450 = vmatprep.subr.mxu0 0.0
    %9451 = vmatpush1.msra.mxu0 0.0
    %9452 = vmatprep.subr.mxu0 0.0
    %9453 = vmatpush1.msra.mxu0 0.0
    %9454 = vmatprep.mubr.f32.mxu0 0.0
    %9455 = vmatmul.mubr.f32.gmra.mrb[0].mxu0 %v8549
    %v9456 = vpop.f32.mrb[0].mxu0
    %v9457 = vadd.f32 0.0, %v9456
    %v9458 = vpop.f32.mrb[0].mxu0
    %v9459 = vadd.f32 0.0, %v9458
    %9460 = vdwg.mxu0
    %v9461 = vadd.f32 %v9244, %v9386
    %v9462 = vadd.f32 %v9246, %v9388
    %v9463 = vadd.f32 %v9315, %v9457
    %v9464 = vadd.f32 %v9317, %v9459
    %v9465 = vmul.f32 %v9461, 0.5
    %v9466 = vmul.f32 %v9462, 0.5
    %v9467 = vmul.f32 %v9463, 0.5
    %v9468 = vtanh.pop %v9465
    %v9469 = vtanh.pop %v9466
    %v9470 = vtanh.pop %v9467
    %v9471 = vadd.f32 %v9468, 1.0
    %v9472 = vadd.f32 %v9469, 1.0
    %v9473 = vadd.f32 %v9470, 1.0
    %v9474 = vmul.f32 %v9471, 0.5
    %v9475 = vmul.f32 %v9472, 0.5
    %v9476 = vmul.f32 %v9473, 0.5
    %v9477 = vtanh.pop %v9464
    %v9478 = vmul.f32 %v9475, %v8547
    %v9479 = vmul.f32 %v9474, %v9477
    %v9480 = vadd.f32 %v9478, %v9479
    %v9481 = vtanh.pop %v9480
    %v9482 = vmul.f32 %v9476, %v9481
    %v9483 = vmul.f32 %v9482, 0.5
    %v9484 = vtanh.pop %v9483
    %v9485 = vadd.f32 %v9484, 1.0
    %v9486 = vmul.f32 %v9485, 0.5
    %9487 = vmatprep.subr.mxu0 %v2211
    %9488 = vmatpush1.msra.mxu0 %v2210
    %9489 = vmatprep.subr.mxu0 %v2215
    %9490 = vmatpush1.msra.mxu0 %v2214
    %9491 = vmatprep.subr.mxu0 %v2219
    %9492 = vmatpush1.msra.mxu0 %v2218
    %9493 = vmatprep.subr.mxu0 %v2223
    %9494 = vmatpush1.msra.mxu0 %v2222
    %9495 = vmatprep.subr.mxu0 %v2227
    %9496 = vmatpush1.msra.mxu0 %v2226
    %9497 = vmatprep.subr.mxu0 %v2231
    %9498 = vmatpush1.msra.mxu0 %v2230
    %9499 = vmatprep.subr.mxu0 %v2235
    %9500 = vmatpush1.msra.mxu0 %v2234
    %9501 = vmatprep.subr.mxu0 %v2239
    %9502 = vmatpush1.msra.mxu0 %v2238
    %9503 = vmatprep.subr.mxu0 %v2243
    %9504 = vmatpush1.msra.mxu0 %v2242
    %9505 = vmatprep.subr.mxu0 %v2247
    %9506 = vmatpush1.msra.mxu0 %v2246
    %9507 = vmatprep.subr.mxu0 %v2251
    %9508 = vmatpush1.msra.mxu0 %v2250
    %9509 = vmatprep.subr.mxu0 %v2255
    %9510 = vmatpush1.msra.mxu0 %v2254
    %9511 = vmatprep.subr.mxu0 %v2259
    %9512 = vmatpush1.msra.mxu0 %v2258
    %9513 = vmatprep.subr.mxu0 %v2263
    %9514 = vmatpush1.msra.mxu0 %v2262
    %9515 = vmatprep.subr.mxu0 %v2267
    %9516 = vmatpush1.msra.mxu0 %v2266
    %9517 = vmatprep.subr.mxu0 %v2271
    %9518 = vmatpush1.msra.mxu0 %v2270
    %9519 = vmatprep.subr.mxu0 0.0
    %9520 = vmatpush1.msra.mxu0 0.0
    %9521 = vmatprep.subr.mxu0 0.0
    %9522 = vmatpush1.msra.mxu0 0.0
    %9523 = vmatprep.subr.mxu0 0.0
    %9524 = vmatpush1.msra.mxu0 0.0
    %9525 = vmatprep.subr.mxu0 0.0
    %9526 = vmatpush1.msra.mxu0 0.0
    %9527 = vmatprep.subr.mxu0 0.0
    %9528 = vmatpush1.msra.mxu0 0.0
    %9529 = vmatprep.subr.mxu0 0.0
    %9530 = vmatpush1.msra.mxu0 0.0
    %9531 = vmatprep.subr.mxu0 0.0
    %9532 = vmatpush1.msra.mxu0 0.0
    %9533 = vmatprep.subr.mxu0 0.0
    %9534 = vmatpush1.msra.mxu0 0.0
    %9535 = vmatprep.subr.mxu0 0.0
    %9536 = vmatpush1.msra.mxu0 0.0
    %9537 = vmatprep.subr.mxu0 0.0
    %9538 = vmatpush1.msra.mxu0 0.0
    %9539 = vmatprep.subr.mxu0 0.0
    %9540 = vmatpush1.msra.mxu0 0.0
    %9541 = vmatprep.subr.mxu0 0.0
    %9542 = vmatpush1.msra.mxu0 0.0
    %9543 = vmatprep.subr.mxu0 0.0
    %9544 = vmatpush1.msra.mxu0 0.0
    %9545 = vmatprep.subr.mxu0 0.0
    %9546 = vmatpush1.msra.mxu0 0.0
    %9547 = vmatprep.subr.mxu0 0.0
    %9548 = vmatpush1.msra.mxu0 0.0
    %9549 = vmatprep.subr.mxu0 0.0
    %9550 = vmatpush1.msra.mxu0 0.0
    %9551 = vmatprep.mubr.f32.mxu0 0.0
    %9552 = vmatmul.mubr.f32.gmra.mrb[0].mxu0 %v9486
    %v9553 = vpop.f32.mrb[0].mxu0
    %v9554 = vadd.f32 %v2278, %v9553
    %v9555 = vpop.f32.mrb[0].mxu0
    %v9556 = vadd.f32 %v2282, %v9555
    %9557 = vdwg.mxu0
    %9558 = vmatprep.subr.mxu0 %v2213
    %9559 = vmatpush1.msra.mxu0 %v2212
    %9560 = vmatprep.subr.mxu0 %v2217
    %9561 = vmatpush1.msra.mxu0 %v2216
    %9562 = vmatprep.subr.mxu0 %v2221
    %9563 = vmatpush1.msra.mxu0 %v2220
    %9564 = vmatprep.subr.mxu0 %v2225
    %9565 = vmatpush1.msra.mxu0 %v2224
    %9566 = vmatprep.subr.mxu0 %v2229
    %9567 = vmatpush1.msra.mxu0 %v2228
    %9568 = vmatprep.subr.mxu0 %v2233
    %9569 = vmatpush1.msra.mxu0 %v2232
    %9570 = vmatprep.subr.mxu0 %v2237
    %9571 = vmatpush1.msra.mxu0 %v2236
    %9572 = vmatprep.subr.mxu0 %v2241
    %9573 = vmatpush1.msra.mxu0 %v2240
    %9574 = vmatprep.subr.mxu0 %v2245
    %9575 = vmatpush1.msra.mxu0 %v2244
    %9576 = vmatprep.subr.mxu0 %v2249
    %9577 = vmatpush1.msra.mxu0 %v2248
    %9578 = vmatprep.subr.mxu0 %v2253
    %9579 = vmatpush1.msra.mxu0 %v2252
    %9580 = vmatprep.subr.mxu0 %v2257
    %9581 = vmatpush1.msra.mxu0 %v2256
    %9582 = vmatprep.subr.mxu0 %v2261
    %9583 = vmatpush1.msra.mxu0 %v2260
    %9584 = vmatprep.subr.mxu0 %v2265
    %9585 = vmatpush1.msra.mxu0 %v2264
    %9586 = vmatprep.subr.mxu0 %v2269
    %9587 = vmatpush1.msra.mxu0 %v2268
    %9588 = vmatprep.subr.mxu0 %v2273
    %9589 = vmatpush1.msra.mxu0 %v2272
    %9590 = vmatprep.subr.mxu0 0.0
    %9591 = vmatpush1.msra.mxu0 0.0
    %9592 = vmatprep.subr.mxu0 0.0
    %9593 = vmatpush1.msra.mxu0 0.0
    %9594 = vmatprep.subr.mxu0 0.0
    %9595 = vmatpush1.msra.mxu0 0.0
    %9596 = vmatprep.subr.mxu0 0.0
    %9597 = vmatpush1.msra.mxu0 0.0
    %9598 = vmatprep.subr.mxu0 0.0
    %9599 = vmatpush1.msra.mxu0 0.0
    %9600 = vmatprep.subr.mxu0 0.0
    %9601 = vmatpush1.msra.mxu0 0.0
    %9602 = vmatprep.subr.mxu0 0.0
    %9603 = vmatpush1.msra.mxu0 0.0
    %9604 = vmatprep.subr.mxu0 0.0
    %9605 = vmatpush1.msra.mxu0 0.0
    %9606 = vmatprep.subr.mxu0 0.0
    %9607 = vmatpush1.msra.mxu0 0.0
    %9608 = vmatprep.subr.mxu0 0.0
    %9609 = vmatpush1.msra.mxu0 0.0
    %9610 = vmatprep.subr.mxu0 0.0
    %9611 = vmatpush1.msra.mxu0 0.0
    %9612 = vmatprep.subr.mxu0 0.0
    %9613 = vmatpush1.msra.mxu0 0.0
    %9614 = vmatprep.subr.mxu0 0.0
    %9615 = vmatpush1.msra.mxu0 0.0
    %9616 = vmatprep.subr.mxu0 0.0
    %9617 = vmatpush1.msra.mxu0 0.0
    %9618 = vmatprep.subr.mxu0 0.0
    %9619 = vmatpush1.msra.mxu0 0.0
    %9620 = vmatprep.subr.mxu0 0.0
    %9621 = vmatpush1.msra.mxu0 0.0
    %9622 = vmatprep.mubr.f32.mxu0 0.0
    %9623 = vmatmul.mubr.f32.gmra.mrb[0].mxu0 %v9486
    %v9624 = vpop.f32.mrb[0].mxu0
    %v9625 = vadd.f32 %v2286, %v9624
    %v9626 = vpop.f32.mrb[0].mxu0
    %v9627 = vadd.f32 %v2290, %v9626
    %9628 = vdwg.mxu0
    %9629 = vmatprep.subr.mxu0 %v2438
    %9630 = vmatpush1.msra.mxu0 %v2437
    %9631 = vmatprep.subr.mxu0 %v2442
    %9632 = vmatpush1.msra.mxu0 %v2441
    %9633 = vmatprep.subr.mxu0 %v2446
    %9634 = vmatpush1.msra.mxu0 %v2445
    %9635 = vmatprep.subr.mxu0 %v2450
    %9636 = vmatpush1.msra.mxu0 %v2449
    %9637 = vmatprep.subr.mxu0 %v2454
    %9638 = vmatpush1.msra.mxu0 %v2453
    %9639 = vmatprep.subr.mxu0 %v2458
    %9640 = vmatpush1.msra.mxu0 %v2457
    %9641 = vmatprep.subr.mxu0 %v2462
    %9642 = vmatpush1.msra.mxu0 %v2461
    %9643 = vmatprep.subr.mxu0 %v2466
    %9644 = vmatpush1.msra.mxu0 %v2465
    %9645 = vmatprep.subr.mxu0 %v2470
    %9646 = vmatpush1.msra.mxu0 %v2469
    %9647 = vmatprep.subr.mxu0 %v2474
    %9648 = vmatpush1.msra.mxu0 %v2473
    %9649 = vmatprep.subr.mxu0 %v2478
    %9650 = vmatpush1.msra.mxu0 %v2477
    %9651 = vmatprep.subr.mxu0 %v2482
    %9652 = vmatpush1.msra.mxu0 %v2481
    %9653 = vmatprep.subr.mxu0 %v2486
    %9654 = vmatpush1.msra.mxu0 %v2485
    %9655 = vmatprep.subr.mxu0 %v2490
    %9656 = vmatpush1.msra.mxu0 %v2489
    %9657 = vmatprep.subr.mxu0 %v2494
    %9658 = vmatpush1.msra.mxu0 %v2493
    %9659 = vmatprep.subr.mxu0 %v2498
    %9660 = vmatpush1.msra.mxu0 %v2497
    %9661 = vmatprep.subr.mxu0 0.0
    %9662 = vmatpush1.msra.mxu0 0.0
    %9663 = vmatprep.subr.mxu0 0.0
    %9664 = vmatpush1.msra.mxu0 0.0
    %9665 = vmatprep.subr.mxu0 0.0
    %9666 = vmatpush1.msra.mxu0 0.0
    %9667 = vmatprep.subr.mxu0 0.0
    %9668 = vmatpush1.msra.mxu0 0.0
    %9669 = vmatprep.subr.mxu0 0.0
    %9670 = vmatpush1.msra.mxu0 0.0
    %9671 = vmatprep.subr.mxu0 0.0
    %9672 = vmatpush1.msra.mxu0 0.0
    %9673 = vmatprep.subr.mxu0 0.0
    %9674 = vmatpush1.msra.mxu0 0.0
    %9675 = vmatprep.subr.mxu0 0.0
    %9676 = vmatpush1.msra.mxu0 0.0
    %9677 = vmatprep.subr.mxu0 0.0
    %9678 = vmatpush1.msra.mxu0 0.0
    %9679 = vmatprep.subr.mxu0 0.0
    %9680 = vmatpush1.msra.mxu0 0.0
    %9681 = vmatprep.subr.mxu0 0.0
    %9682 = vmatpush1.msra.mxu0 0.0
    %9683 = vmatprep.subr.mxu0 0.0
    %9684 = vmatpush1.msra.mxu0 0.0
    %9685 = vmatprep.subr.mxu0 0.0
    %9686 = vmatpush1.msra.mxu0 0.0
    %9687 = vmatprep.subr.mxu0 0.0
    %9688 = vmatpush1.msra.mxu0 0.0
    %9689 = vmatprep.subr.mxu0 0.0
    %9690 = vmatpush1.msra.mxu0 0.0
    %9691 = vmatprep.subr.mxu0 0.0
    %9692 = vmatpush1.msra.mxu0 0.0
    %9693 = vmatprep.mubr.f32.mxu0 0.0
    %9694 = vmatmul.mubr.f32.gmra.mrb[0].mxu0 %v9172
    %v9695 = vpop.f32.mrb[0].mxu0
    %v9696 = vadd.f32 0.0, %v9695
    %v9697 = vpop.f32.mrb[0].mxu0
    %v9698 = vadd.f32 0.0, %v9697
    %9699 = vdwg.mxu0
    %9700 = vmatprep.subr.mxu0 %v2440
    %9701 = vmatpush1.msra.mxu0 %v2439
    %9702 = vmatprep.subr.mxu0 %v2444
    %9703 = vmatpush1.msra.mxu0 %v2443
    %9704 = vmatprep.subr.mxu0 %v2448
    %9705 = vmatpush1.msra.mxu0 %v2447
    %9706 = vmatprep.subr.mxu0 %v2452
    %9707 = vmatpush1.msra.mxu0 %v2451
    %9708 = vmatprep.subr.mxu0 %v2456
    %9709 = vmatpush1.msra.mxu0 %v2455
    %9710 = vmatprep.subr.mxu0 %v2460
    %9711 = vmatpush1.msra.mxu0 %v2459
    %9712 = vmatprep.subr.mxu0 %v2464
    %9713 = vmatpush1.msra.mxu0 %v2463
    %9714 = vmatprep.subr.mxu0 %v2468
    %9715 = vmatpush1.msra.mxu0 %v2467
    %9716 = vmatprep.subr.mxu0 %v2472
    %9717 = vmatpush1.msra.mxu0 %v2471
    %9718 = vmatprep.subr.mxu0 %v2476
    %9719 = vmatpush1.msra.mxu0 %v2475
    %9720 = vmatprep.subr.mxu0 %v2480
    %9721 = vmatpush1.msra.mxu0 %v2479
    %9722 = vmatprep.subr.mxu0 %v2484
    %9723 = vmatpush1.msra.mxu0 %v2483
    %9724 = vmatprep.subr.mxu0 %v2488
    %9725 = vmatpush1.msra.mxu0 %v2487
    %9726 = vmatprep.subr.mxu0 %v2492
    %9727 = vmatpush1.msra.mxu0 %v2491
    %9728 = vmatprep.subr.mxu0 %v2496
    %9729 = vmatpush1.msra.mxu0 %v2495
    %9730 = vmatprep.subr.mxu0 %v2500
    %9731 = vmatpush1.msra.mxu0 %v2499
    %9732 = vmatprep.subr.mxu0 0.0
    %9733 = vmatpush1.msra.mxu0 0.0
    %9734 = vmatprep.subr.mxu0 0.0
    %9735 = vmatpush1.msra.mxu0 0.0
    %9736 = vmatprep.subr.mxu0 0.0
    %9737 = vmatpush1.msra.mxu0 0.0
    %9738 = vmatprep.subr.mxu0 0.0
    %9739 = vmatpush1.msra.mxu0 0.0
    %9740 = vmatprep.subr.mxu0 0.0
    %9741 = vmatpush1.msra.mxu0 0.0
    %9742 = vmatprep.subr.mxu0 0.0
    %9743 = vmatpush1.msra.mxu0 0.0
    %9744 = vmatprep.subr.mxu0 0.0
    %9745 = vmatpush1.msra.mxu0 0.0
    %9746 = vmatprep.subr.mxu0 0.0
    %9747 = vmatpush1.msra.mxu0 0.0
    %9748 = vmatprep.subr.mxu0 0.0
    %9749 = vmatpush1.msra.mxu0 0.0
    %9750 = vmatprep.subr.mxu0 0.0
    %9751 = vmatpush1.msra.mxu0 0.0
    %9752 = vmatprep.subr.mxu0 0.0
    %9753 = vmatpush1.msra.mxu0 0.0
    %9754 = vmatprep.subr.mxu0 0.0
    %9755 = vmatpush1.msra.mxu0 0.0
    %9756 = vmatprep.subr.mxu0 0.0
    %9757 = vmatpush1.msra.mxu0 0.0
    %9758 = vmatprep.subr.mxu0 0.0
    %9759 = vmatpush1.msra.mxu0 0.0
    %9760 = vmatprep.subr.mxu0 0.0
    %9761 = vmatpush1.msra.mxu0 0.0
    %9762 = vmatprep.subr.mxu0 0.0
    %9763 = vmatpush1.msra.mxu0 0.0
    %9764 = vmatprep.mubr.f32.mxu0 0.0
    %9765 = vmatmul.mubr.f32.gmra.mrb[0].mxu0 %v9172
    %v9766 = vpop.f32.mrb[0].mxu0
    %v9767 = vadd.f32 0.0, %v9766
    %v9768 = vpop.f32.mrb[0].mxu0
    %v9769 = vadd.f32 0.0, %v9768
    %9770 = vdwg.mxu0
    %v9771 = vadd.f32 %v9554, %v9696
    %v9772 = vadd.f32 %v9556, %v9698
    %v9773 = vadd.f32 %v9625, %v9767
    %v9774 = vadd.f32 %v9627, %v9769
    %v9775 = vmul.f32 %v9771, 0.5
    %v9776 = vmul.f32 %v9772, 0.5
    %v9777 = vmul.f32 %v9773, 0.5
    %v9778 = vtanh.pop %v9775
    %v9779 = vtanh.pop %v9776
    %v9780 = vtanh.pop %v9777
    %v9781 = vadd.f32 %v9778, 1.0
    %v9782 = vadd.f32 %v9779, 1.0
    %v9783 = vadd.f32 %v9780, 1.0
    %v9784 = vmul.f32 %v9781, 0.5
    %v9785 = vmul.f32 %v9782, 0.5
    %v9786 = vmul.f32 %v9783, 0.5
    %v9787 = vtanh.pop %v9774
    %v9788 = vmul.f32 %v9785, %v9170
    %v9789 = vmul.f32 %v9784, %v9787
    %v9790 = vadd.f32 %v9788, %v9789
    %v9791 = vtanh.pop %v9790
    %v9792 = vmul.f32 %v9786, %v9791
    %v9793 = vtanh.pop %v9792
    %9794 = vst [vmem:[#allocation16] sm:$0x1] %v9793
    // Predicated region
    $region86: #{encoder_forward.1} parent=1 // pred_check
      _
    $region87: #{encoder_forward.1} parent=1 // pred_check_branch
      %9796 = sbr.rel (0) target = $region89
    $region88: #{encoder_forward.1} parent=1 // pred_region
      %s9798 = ssub.s32 16, 16
      %9799 = vsyncadd [#allocation4], %s9798
      %s9801 = sshll.u32 [#allocation16], 4
      %s9802 = int_to_ptr.vmem [resolvable:$true] %s9801
      %9804 = dma.vmem_to_hbm [thread:$0]  %s9802, 16, %s13, [#allocation4]
    $region89: #{encoder_forward.1} parent=1 // pred_fallthru
      _
    // Predicated region
    $region90: #{encoder_forward.1} parent=1 // pred_check
      _
    $region91: #{encoder_forward.1} parent=1 // pred_check_branch
      %9806 = sbr.rel (0) target = $region93
    $region92: #{encoder_forward.1} parent=1 // pred_region
      %9807 = dma.done [#allocation4], 16
    $region93: #{encoder_forward.1} parent=1 // pred_fallthru
      _
    %9808 = vsyncpa [#allocation3], 1
    %9809 = vsyncpa [#allocation6], 1
    %9810 = vsyncpa [#allocation9], 1
    %9811 = vsyncpa [#allocation12], 1
    %9812 = vsyncpa [#allocation15], 1
    %9813 = vsyncpa [#allocation4], 1

</llo_original>
